<compile_context>
chip_gen: v6e
topology: v6e:2x2x1
jax: 0.10.0
libtpu: 0.0.40
codegen_flags: <defaults>
</compile_context>

<pallas_src>
import jax
import jax.numpy as jnp
from jax.experimental import pallas as pl
from jax.experimental.pallas import tpu as pltpu


def _dni_conv2d_kernel(x_ref, w1_ref, b1_ref, w2_ref, b2_ref, w3_ref, b3_ref,
                       o_ref, pad, col):
    # x_ref : (B_t, H, W, c_in)        unpadded input channels
    # wN_ref: (K_pad, CoutN)           bf16 BN-folded weights, im2col layout
    #                                  (K_pad = 10*hidden; last tap is zero)
    # bN_ref: (1, CoutN)               f32 BN-folded biases
    # o_ref : (B_t, H*W, c_out_pad)    lane-dense f32 output
    # pad   : (B_t, H+2, W+2, hidden)  f32 halo-padded activation scratch
    # col   : (B_t*H*W, K_pad)         bf16 im2col scratch (reused by all layers)
    B_t, Hp, Wp, hidden = pad.shape
    H, W = Hp - 2, Wp - 2
    c_in = x_ref.shape[-1]
    M = B_t * H * W

    # Zero the whole pad scratch once per grid step: supplies the SAME-conv halo
    # for all three layers AND the layer-1 zero channels c_in..hidden (x arrives
    # unpadded from HBM).  Layers 2/3 fully overwrite the interior, so the halo
    # stays valid without re-zeroing.
    pad[...] = jnp.zeros(pad.shape, pad.dtype)
    pad[:, 1:H + 1, 1:W + 1, :c_in] = x_ref[...].astype(pad.dtype)

    def conv3x3(w_ref, b_ref, relu):
        # im2col: col[(b,y,x), t*hidden + c] = pad[b, y+dy, x+dx, c], t = 3*dy+dx.
        # Slabs are cast to bf16 and written in 128-lane PAIRS so every col store
        # is a full-width, unmasked vst (5 stores/layer instead of 9 masked ones).
        slabs = []
        for dy in range(3):
            for dx in range(3):
                slabs.append(pad[:, dy:dy + H, dx:dx + W, :]
                             .reshape(M, hidden).astype(col.dtype))
        slabs.append(jnp.zeros((M, hidden), col.dtype))   # zero tap 9 (K padding)
        for p in range(5):
            col[:, 2 * p * hidden:(2 * p + 2) * hidden] = jnp.concatenate(
                slabs[2 * p:2 * p + 2], axis=-1)
        # Single MXU matmul per layer: bf16 operands, f32 accumulation,
        # fused f32 bias + optional ReLU epilogue.
        acc = jnp.dot(col[...], w_ref[...], preferred_element_type=jnp.float32)
        acc = acc + b_ref[...]
        if relu:
            acc = jnp.maximum(acc, 0.0)
        return acc                                          # (M, CoutN) f32

    h1 = conv3x3(w1_ref, b1_ref, True)                      # conv + BN + ReLU
    pad[:, 1:H + 1, 1:W + 1, :] = h1.reshape(B_t, H, W, hidden)
    h2 = conv3x3(w2_ref, b2_ref, True)                      # conv + BN + ReLU
    pad[:, 1:H + 1, 1:W + 1, :] = h2.reshape(B_t, H, W, hidden)
    h3 = conv3x3(w3_ref, b3_ref, False)                     # conv only
    o_ref[...] = h3.reshape(B_t, H * W, o_ref.shape[-1]).astype(o_ref.dtype)


def _fold_bn(w_oihw, b, gamma, beta, mean, var, eps=1e-5):
    """Fold eval-mode BatchNorm into conv weight (-> HWIO layout) and bias."""
    scale = gamma / jnp.sqrt(var + eps)                     # (Cout,)
    w_hwio = jnp.transpose(w_oihw, (2, 3, 1, 0))            # (3,3,Cin,Cout)
    w_eff = w_hwio * scale[None, None, None, :]
    b_eff = scale * (b - mean) + beta
    return w_eff.astype(jnp.float32), b_eff.astype(jnp.float32)


def dni_conv2d_forward(x_nchw, params, *, batch_tile=None):
    """Pallas forward for dni_Conv2d (conditioned=False, eval-mode BatchNorm)."""
    eps = 1e-5
    w1, b1 = _fold_bn(params['w1'], params['b1'], params['g1'], params['be1'],
                      params['m1'], params['v1'], eps)
    w2, b2 = _fold_bn(params['w2'], params['b2'], params['g2'], params['be2'],
                      params['m2'], params['v2'], eps)
    w3 = jnp.transpose(params['w3'], (2, 3, 1, 0)).astype(jnp.float32)   # HWIO
    b3 = params['b3'].astype(jnp.float32)

    x_nhwc = jnp.transpose(x_nchw, (0, 2, 3, 1)).astype(jnp.float32)
    N, H, W, c_in = x_nhwc.shape
    hidden = w1.shape[-1]
    c_out = w3.shape[-1]
    assert c_in <= hidden, "layer-1 weight channel padding assumes c_in <= hidden"
    c_out_pad = max(128, ((c_out + 127) // 128) * 128)      # lane-dense output
    n_taps = 9
    k_pad = (n_taps + 1) * hidden       # extra zero tap -> all col stores paired

    # im2col weight layout: (3,3,Cin,Cout) -> (9*Cin, Cout), row = (3*dy+dx)*Cin+c.
    # Layer-1 Cin is zero-padded to `hidden` ON THE WEIGHT ONLY; the activation
    # zeros come from the in-kernel pad scratch (x stays unpadded in HBM).
    w1 = jnp.pad(w1, ((0, 0), (0, 0), (0, hidden - c_in), (0, 0)))
    w1 = w1.reshape(n_taps * hidden, hidden)
    w2 = w2.reshape(n_taps * hidden, hidden)
    w3 = jnp.pad(w3.reshape(n_taps * hidden, c_out),
                 ((0, 0), (0, c_out_pad - c_out)))
    # Zero rows for the K-padding tap, then bf16 for the native MXU path.
    k_extra = k_pad - n_taps * hidden
    w1 = jnp.pad(w1, ((0, k_extra), (0, 0))).astype(jnp.bfloat16)
    w2 = jnp.pad(w2, ((0, k_extra), (0, 0))).astype(jnp.bfloat16)
    w3 = jnp.pad(w3, ((0, k_extra), (0, 0))).astype(jnp.bfloat16)

    b1 = b1.reshape(1, hidden)
    b2 = b2.reshape(1, hidden)
    b3 = jnp.pad(b3, (0, c_out_pad - c_out)).reshape(1, c_out_pad)

    # Fold batch elements into the matmul M dim (target M ~ 512-1024) while
    # keeping >= 2 grid steps on the parallel axis (both v7x TensorCores busy).
    if batch_tile is None:
        target = max(1, 1024 // (H * W))
        batch_tile = 1
        for bt in range(1, N + 1):
            if N % bt == 0 and bt <= target and (N == 1 or N // bt >= 2):
                batch_tile = bt
    B_t = batch_tile
    assert N % B_t == 0

    out_flat = pl.pallas_call(
        _dni_conv2d_kernel,
        out_shape=jax.ShapeDtypeStruct((N, H * W, c_out_pad), jnp.float32),
        grid_spec=pltpu.PrefetchScalarGridSpec(
            num_scalar_prefetch=0,
            grid=(N // B_t,),
            in_specs=[
                pl.BlockSpec((B_t, H, W, c_in), lambda n: (n, 0, 0, 0)),
                pl.BlockSpec((k_pad, hidden), lambda n: (0, 0)),      # w1
                pl.BlockSpec((1, hidden), lambda n: (0, 0)),          # b1
                pl.BlockSpec((k_pad, hidden), lambda n: (0, 0)),      # w2
                pl.BlockSpec((1, hidden), lambda n: (0, 0)),          # b2
                pl.BlockSpec((k_pad, c_out_pad), lambda n: (0, 0)),   # w3
                pl.BlockSpec((1, c_out_pad), lambda n: (0, 0)),       # b3
            ],
            out_specs=pl.BlockSpec((B_t, H * W, c_out_pad), lambda n: (n, 0, 0)),
            scratch_shapes=[
                pltpu.VMEM((B_t, H + 2, W + 2, hidden), jnp.float32),  # pad
                pltpu.VMEM((B_t * H * W, k_pad), jnp.bfloat16),        # im2col
            ],
        ),
        compiler_params=pltpu.CompilerParams(
            dimension_semantics=("parallel",),           # batch tiles independent
            vmem_limit_bytes=32 * 1024 * 1024),
    )(x_nhwc, w1, b1, w2, b2, w3, b3)

    out = out_flat.reshape(N, H, W, c_out_pad)[..., :c_out]
    return jnp.transpose(out, (0, 3, 1, 2))              # back to NCHW


def reference_forward(x_nchw, p):
    """Pure-JAX reference mirroring the PyTorch module (eval-mode BN), f32."""
    eps = 1e-5

    def conv(x, w_oihw, b):
        y = jax.lax.conv_general_dilated(
            x, w_oihw, (1, 1), 'SAME',
            dimension_numbers=('NCHW', 'OIHW', 'NCHW'),
            precision=jax.lax.Precision.HIGHEST)
        return y + b[None, :, None, None]

    def bn(x, g, be, m, v):
        return (g[None, :, None, None] * (x - m[None, :, None, None])
                / jnp.sqrt(v[None, :, None, None] + eps)
                + be[None, :, None, None])

    h = jax.nn.relu(bn(conv(x_nchw, p['w1'], p['b1']),
                       p['g1'], p['be1'], p['m1'], p['v1']))
    h = jax.nn.relu(bn(conv(h, p['w2'], p['b2']),
                       p['g2'], p['be2'], p['m2'], p['v2']))
    return conv(h, p['w3'], p['b3'])


def make_params(key, input_dims=4, hidden=64):
    ks = jax.random.split(key, 16)
    return {
        # conv weights in PyTorch OIHW layout
        'w1': 0.1 * jax.random.normal(ks[0], (hidden, input_dims, 3, 3), jnp.float32),
        'b1': 0.1 * jax.random.normal(ks[1], (hidden,), jnp.float32),
        'w2': 0.1 * jax.random.normal(ks[2], (hidden, hidden, 3, 3), jnp.float32),
        'b2': 0.1 * jax.random.normal(ks[3], (hidden,), jnp.float32),
        'w3': 0.1 * jax.random.normal(ks[4], (input_dims, hidden, 3, 3), jnp.float32),
        'b3': 0.1 * jax.random.normal(ks[5], (input_dims,), jnp.float32),
        # BatchNorm (eval-mode running stats + affine), nontrivial but deterministic
        'g1': 1.0 + 0.1 * jax.random.normal(ks[6], (hidden,), jnp.float32),
        'be1': 0.1 * jax.random.normal(ks[7], (hidden,), jnp.float32),
        'm1': 0.1 * jax.random.normal(ks[8], (hidden,), jnp.float32),
        'v1': 0.5 + jax.random.uniform(ks[9], (hidden,), jnp.float32),
        'g2': 1.0 + 0.1 * jax.random.normal(ks[10], (hidden,), jnp.float32),
        'be2': 0.1 * jax.random.normal(ks[11], (hidden,), jnp.float32),
        'm2': 0.1 * jax.random.normal(ks[12], (hidden,), jnp.float32),
        'v2': 0.5 + jax.random.uniform(ks[13], (hidden,), jnp.float32),
    }


if __name__ == "__main__":
    key = jax.random.PRNGKey(0)
    k_x, k_p = jax.random.split(key)

    # dni_Conv2d(input_dims=4, input_size=(16,16), num_classes=10,
    #            dni_hidden_size=64, conditioned=False)
    N, C, H, W = 2, 4, 16, 16
    hidden = 64

    x = jax.random.normal(k_x, (N, C, H, W), jnp.float32)
    params = make_params(k_p, input_dims=C, hidden=hidden)

    out = jax.block_until_ready(dni_conv2d_forward(x, params))
    ref = jax.block_until_ready(reference_forward(x, params))

    assert out.shape == (N, C, H, W), out.shape
    # bf16 matmul operands (f32 accumulation) give ~0.3% relative error through
    # the 3-layer / K=576 stack vs the f32 HIGHEST-precision reference; the bars
    # below sit ~5-10x above the expected error.
    diff = out - ref
    max_err = float(jnp.max(jnp.abs(diff)))
    rel_l2 = float(jnp.linalg.norm(diff) / jnp.linalg.norm(ref))
    assert rel_l2 < 1.5e-2, f"relative L2 error too high: {rel_l2}"
    assert max_err < 7.5e-2, f"max abs error too high: {max_err}"

    print("KERNEL_OK")
</pallas_src>

<mosaic_0001>
module attributes {stable_mosaic.version = 11 : i64} {
  func.func @_dni_conv2d_kernel(%arg0: i32, %arg1: memref<1x16x16x4xf32, #tpu.memory_space<vmem>>, %arg2: memref<640x64xbf16, #tpu.memory_space<vmem>>, %arg3: memref<1x64xf32, #tpu.memory_space<vmem>>, %arg4: memref<640x64xbf16, #tpu.memory_space<vmem>>, %arg5: memref<1x64xf32, #tpu.memory_space<vmem>>, %arg6: memref<640x128xbf16, #tpu.memory_space<vmem>>, %arg7: memref<1x128xf32, #tpu.memory_space<vmem>>, %arg8: memref<1x256x128xf32, #tpu.memory_space<vmem>>, %arg9: memref<1x18x18x64xf32, #tpu.memory_space<vmem>>, %arg10: memref<256x640xbf16, #tpu.memory_space<vmem>>) attributes {dimension_semantics = [#tpu.dimension_semantics<parallel>], iteration_bounds = array<i64: 2>, scalar_prefetch = 0 : i64, scratch_operands = 2 : i64, tpu.core_type = #tpu.core_type<tc>, window_params = [{transform_indices = @transform_0, window_bounds = array<i64: 1, 16, 16, 4>}, {pipeline_mode = #tpu.pipeline_mode<synchronous>, transform_indices = @transform_1, window_bounds = array<i64: 640, 64>}, {pipeline_mode = #tpu.pipeline_mode<synchronous>, transform_indices = @transform_2, window_bounds = array<i64: 1, 64>}, {pipeline_mode = #tpu.pipeline_mode<synchronous>, transform_indices = @transform_3, window_bounds = array<i64: 640, 64>}, {pipeline_mode = #tpu.pipeline_mode<synchronous>, transform_indices = @transform_4, window_bounds = array<i64: 1, 64>}, {pipeline_mode = #tpu.pipeline_mode<synchronous>, transform_indices = @transform_5, window_bounds = array<i64: 640, 128>}, {pipeline_mode = #tpu.pipeline_mode<synchronous>, transform_indices = @transform_6, window_bounds = array<i64: 1, 128>}, {transform_indices = @transform_7, window_bounds = array<i64: 1, 256, 128>}]} {
    %cst = arith.constant 0.000000e+00 : f32
    %0 = vector.broadcast %cst : f32 to vector<1x18x18x64xf32>
    %c0 = arith.constant 0 : index
    %c0_0 = arith.constant 0 : index
    %c0_1 = arith.constant 0 : index
    %c0_2 = arith.constant 0 : index
    %1 = vector.load %arg9[%c0, %c0_0, %c0_1, %c0_2] : memref<1x18x18x64xf32, #tpu.memory_space<vmem>>, vector<1x18x18x64xf32>
    tpu.vector_store %arg9[%c0, %c0_0, %c0_1, %c0_2], %0 {strides = array<i32>} : memref<1x18x18x64xf32, #tpu.memory_space<vmem>>, vector<1x18x18x64xf32>,
    %c0_3 = arith.constant 0 : index
    %c0_4 = arith.constant 0 : index
    %c0_5 = arith.constant 0 : index
    %c0_6 = arith.constant 0 : index
    %2 = vector.load %arg1[%c0_3, %c0_4, %c0_5, %c0_6] : memref<1x16x16x4xf32, #tpu.memory_space<vmem>>, vector<1x16x16x4xf32>
    %c0_7 = arith.constant 0 : index
    %c1 = arith.constant 1 : index
    %c1_8 = arith.constant 1 : index
    %c0_9 = arith.constant 0 : index
    %3 = vector.load %arg9[%c0_7, %c1, %c1_8, %c0_9] : memref<1x18x18x64xf32, #tpu.memory_space<vmem>>, vector<1x16x16x4xf32>
    tpu.vector_store %arg9[%c0_7, %c1, %c1_8, %c0_9], %2 {strides = array<i32>} : memref<1x18x18x64xf32, #tpu.memory_space<vmem>>, vector<1x16x16x4xf32>,
    %c0_10 = arith.constant 0 : index
    %c0_11 = arith.constant 0 : index
    %c0_12 = arith.constant 0 : index
    %c0_13 = arith.constant 0 : index
    %4 = vector.load %arg9[%c0_10, %c0_11, %c0_12, %c0_13] : memref<1x18x18x64xf32, #tpu.memory_space<vmem>>, vector<1x16x16x64xf32>
    %5 = vector.shape_cast %4 : vector<1x16x16x64xf32> to vector<256x64xf32>
    %6 = arith.truncf %5 : vector<256x64xf32> to vector<256x64xbf16>
    %c0_14 = arith.constant 0 : index
    %c0_15 = arith.constant 0 : index
    %c1_16 = arith.constant 1 : index
    %c0_17 = arith.constant 0 : index
    %7 = vector.load %arg9[%c0_14, %c0_15, %c1_16, %c0_17] : memref<1x18x18x64xf32, #tpu.memory_space<vmem>>, vector<1x16x16x64xf32>
    %8 = vector.shape_cast %7 : vector<1x16x16x64xf32> to vector<256x64xf32>
    %9 = arith.truncf %8 : vector<256x64xf32> to vector<256x64xbf16>
    %c0_18 = arith.constant 0 : index
    %c0_19 = arith.constant 0 : index
    %c2 = arith.constant 2 : index
    %c0_20 = arith.constant 0 : index
    %10 = vector.load %arg9[%c0_18, %c0_19, %c2, %c0_20] : memref<1x18x18x64xf32, #tpu.memory_space<vmem>>, vector<1x16x16x64xf32>
    %11 = vector.shape_cast %10 : vector<1x16x16x64xf32> to vector<256x64xf32>
    %12 = arith.truncf %11 : vector<256x64xf32> to vector<256x64xbf16>
    %c0_21 = arith.constant 0 : index
    %c1_22 = arith.constant 1 : index
    %c0_23 = arith.constant 0 : index
    %c0_24 = arith.constant 0 : index
    %13 = vector.load %arg9[%c0_21, %c1_22, %c0_23, %c0_24] : memref<1x18x18x64xf32, #tpu.memory_space<vmem>>, vector<1x16x16x64xf32>
    %14 = vector.shape_cast %13 : vector<1x16x16x64xf32> to vector<256x64xf32>
    %15 = arith.truncf %14 : vector<256x64xf32> to vector<256x64xbf16>
    %c0_25 = arith.constant 0 : index
    %c1_26 = arith.constant 1 : index
    %c1_27 = arith.constant 1 : index
    %c0_28 = arith.constant 0 : index
    %16 = vector.load %arg9[%c0_25, %c1_26, %c1_27, %c0_28] : memref<1x18x18x64xf32, #tpu.memory_space<vmem>>, vector<1x16x16x64xf32>
    %17 = vector.shape_cast %16 : vector<1x16x16x64xf32> to vector<256x64xf32>
    %18 = arith.truncf %17 : vector<256x64xf32> to vector<256x64xbf16>
    %c0_29 = arith.constant 0 : index
    %c1_30 = arith.constant 1 : index
    %c2_31 = arith.constant 2 : index
    %c0_32 = arith.constant 0 : index
    %19 = vector.load %arg9[%c0_29, %c1_30, %c2_31, %c0_32] : memref<1x18x18x64xf32, #tpu.memory_space<vmem>>, vector<1x16x16x64xf32>
    %20 = vector.shape_cast %19 : vector<1x16x16x64xf32> to vector<256x64xf32>
    %21 = arith.truncf %20 : vector<256x64xf32> to vector<256x64xbf16>
    %c0_33 = arith.constant 0 : index
    %c2_34 = arith.constant 2 : index
    %c0_35 = arith.constant 0 : index
    %c0_36 = arith.constant 0 : index
    %22 = vector.load %arg9[%c0_33, %c2_34, %c0_35, %c0_36] : memref<1x18x18x64xf32, #tpu.memory_space<vmem>>, vector<1x16x16x64xf32>
    %23 = vector.shape_cast %22 : vector<1x16x16x64xf32> to vector<256x64xf32>
    %24 = arith.truncf %23 : vector<256x64xf32> to vector<256x64xbf16>
    %c0_37 = arith.constant 0 : index
    %c2_38 = arith.constant 2 : index
    %c1_39 = arith.constant 1 : index
    %c0_40 = arith.constant 0 : index
    %25 = vector.load %arg9[%c0_37, %c2_38, %c1_39, %c0_40] : memref<1x18x18x64xf32, #tpu.memory_space<vmem>>, vector<1x16x16x64xf32>
    %26 = vector.shape_cast %25 : vector<1x16x16x64xf32> to vector<256x64xf32>
    %27 = arith.truncf %26 : vector<256x64xf32> to vector<256x64xbf16>
    %c0_41 = arith.constant 0 : index
    %c2_42 = arith.constant 2 : index
    %c2_43 = arith.constant 2 : index
    %c0_44 = arith.constant 0 : index
    %28 = vector.load %arg9[%c0_41, %c2_42, %c2_43, %c0_44] : memref<1x18x18x64xf32, #tpu.memory_space<vmem>>, vector<1x16x16x64xf32>
    %29 = vector.shape_cast %28 : vector<1x16x16x64xf32> to vector<256x64xf32>
    %30 = arith.truncf %29 : vector<256x64xf32> to vector<256x64xbf16>
    %cst_45 = arith.constant 0.000000e+00 : bf16
    %31 = vector.broadcast %cst_45 : bf16 to vector<256x64xbf16>
    %32 = tpu.concatenate %6, %9 in 1 : vector<256x64xbf16>, vector<256x64xbf16> -> vector<256x128xbf16>
    %c0_46 = arith.constant 0 : index
    %c0_47 = arith.constant 0 : index
    %33 = vector.load %arg10[%c0_46, %c0_47] : memref<256x640xbf16, #tpu.memory_space<vmem>>, vector<256x128xbf16>
    tpu.vector_store %arg10[%c0_46, %c0_47], %32 {strides = array<i32>} : memref<256x640xbf16, #tpu.memory_space<vmem>>, vector<256x128xbf16>,
    %34 = tpu.concatenate %12, %15 in 1 : vector<256x64xbf16>, vector<256x64xbf16> -> vector<256x128xbf16>
    %c0_48 = arith.constant 0 : index
    %c128 = arith.constant 128 : index
    %35 = vector.load %arg10[%c0_48, %c128] : memref<256x640xbf16, #tpu.memory_space<vmem>>, vector<256x128xbf16>
    tpu.vector_store %arg10[%c0_48, %c128], %34 {strides = array<i32>} : memref<256x640xbf16, #tpu.memory_space<vmem>>, vector<256x128xbf16>,
    %36 = tpu.concatenate %18, %21 in 1 : vector<256x64xbf16>, vector<256x64xbf16> -> vector<256x128xbf16>
    %c0_49 = arith.constant 0 : index
    %c256 = arith.constant 256 : index
    %37 = vector.load %arg10[%c0_49, %c256] : memref<256x640xbf16, #tpu.memory_space<vmem>>, vector<256x128xbf16>
    tpu.vector_store %arg10[%c0_49, %c256], %36 {strides = array<i32>} : memref<256x640xbf16, #tpu.memory_space<vmem>>, vector<256x128xbf16>,
    %38 = tpu.concatenate %24, %27 in 1 : vector<256x64xbf16>, vector<256x64xbf16> -> vector<256x128xbf16>
    %c0_50 = arith.constant 0 : index
    %c384 = arith.constant 384 : index
    %39 = vector.load %arg10[%c0_50, %c384] : memref<256x640xbf16, #tpu.memory_space<vmem>>, vector<256x128xbf16>
    tpu.vector_store %arg10[%c0_50, %c384], %38 {strides = array<i32>} : memref<256x640xbf16, #tpu.memory_space<vmem>>, vector<256x128xbf16>,
    %40 = tpu.concatenate %30, %31 in 1 : vector<256x64xbf16>, vector<256x64xbf16> -> vector<256x128xbf16>
    %c0_51 = arith.constant 0 : index
    %c512 = arith.constant 512 : index
    %41 = vector.load %arg10[%c0_51, %c512] : memref<256x640xbf16, #tpu.memory_space<vmem>>, vector<256x128xbf16>
    tpu.vector_store %arg10[%c0_51, %c512], %40 {strides = array<i32>} : memref<256x640xbf16, #tpu.memory_space<vmem>>, vector<256x128xbf16>,
    %c0_52 = arith.constant 0 : index
    %c0_53 = arith.constant 0 : index
    %42 = vector.load %arg10[%c0_52, %c0_53] : memref<256x640xbf16, #tpu.memory_space<vmem>>, vector<256x640xbf16>
    %c0_54 = arith.constant 0 : index
    %c0_55 = arith.constant 0 : index
    %43 = vector.load %arg2[%c0_54, %c0_55] : memref<640x64xbf16, #tpu.memory_space<vmem>>, vector<640x64xbf16>
    %cst_56 = arith.constant dense<0.000000e+00> : vector<256x64xf32>
    %44 = tpu.matmul %42, %43, %cst_56 {dimension_numbers = #tpu.dot_dimension_numbers<[1], [0], [0], [1], [0, 0, 1, 1], [], []>} : vector<256x640xbf16>, vector<640x64xbf16>, vector<256x64xf32> -> vector<256x64xf32>
    %c0_57 = arith.constant 0 : index
    %c0_58 = arith.constant 0 : index
    %45 = vector.load %arg3[%c0_57, %c0_58] : memref<1x64xf32, #tpu.memory_space<vmem>>, vector<1x64xf32>
    %46 = vector.broadcast %45 : vector<1x64xf32> to vector<256x64xf32>
    %47 = arith.addf %44, %46 : vector<256x64xf32>
    %cst_59 = arith.constant 0.000000e+00 : f32
    %48 = vector.broadcast %cst_59 : f32 to vector<256x64xf32>
    %49 = arith.maximumf %47, %48 : vector<256x64xf32>
    %50 = vector.shape_cast %49 : vector<256x64xf32> to vector<1x16x16x64xf32>
    %c0_60 = arith.constant 0 : index
    %c1_61 = arith.constant 1 : index
    %c1_62 = arith.constant 1 : index
    %c0_63 = arith.constant 0 : index
    %51 = vector.load %arg9[%c0_60, %c1_61, %c1_62, %c0_63] : memref<1x18x18x64xf32, #tpu.memory_space<vmem>>, vector<1x16x16x64xf32>
    tpu.vector_store %arg9[%c0_60, %c1_61, %c1_62, %c0_63], %50 {strides = array<i32>} : memref<1x18x18x64xf32, #tpu.memory_space<vmem>>, vector<1x16x16x64xf32>,
    %c0_64 = arith.constant 0 : index
    %c0_65 = arith.constant 0 : index
    %c0_66 = arith.constant 0 : index
    %c0_67 = arith.constant 0 : index
    %52 = vector.load %arg9[%c0_64, %c0_65, %c0_66, %c0_67] : memref<1x18x18x64xf32, #tpu.memory_space<vmem>>, vector<1x16x16x64xf32>
    %53 = vector.shape_cast %52 : vector<1x16x16x64xf32> to vector<256x64xf32>
    %54 = arith.truncf %53 : vector<256x64xf32> to vector<256x64xbf16>
    %c0_68 = arith.constant 0 : index
    %c0_69 = arith.constant 0 : index
    %c1_70 = arith.constant 1 : index
    %c0_71 = arith.constant 0 : index
    %55 = vector.load %arg9[%c0_68, %c0_69, %c1_70, %c0_71] : memref<1x18x18x64xf32, #tpu.memory_space<vmem>>, vector<1x16x16x64xf32>
    %56 = vector.shape_cast %55 : vector<1x16x16x64xf32> to vector<256x64xf32>
    %57 = arith.truncf %56 : vector<256x64xf32> to vector<256x64xbf16>
    %c0_72 = arith.constant 0 : index
    %c0_73 = arith.constant 0 : index
    %c2_74 = arith.constant 2 : index
    %c0_75 = arith.constant 0 : index
    %58 = vector.load %arg9[%c0_72, %c0_73, %c2_74, %c0_75] : memref<1x18x18x64xf32, #tpu.memory_space<vmem>>, vector<1x16x16x64xf32>
    %59 = vector.shape_cast %58 : vector<1x16x16x64xf32> to vector<256x64xf32>
    %60 = arith.truncf %59 : vector<256x64xf32> to vector<256x64xbf16>
    %c0_76 = arith.constant 0 : index
    %c1_77 = arith.constant 1 : index
    %c0_78 = arith.constant 0 : index
    %c0_79 = arith.constant 0 : index
    %61 = vector.load %arg9[%c0_76, %c1_77, %c0_78, %c0_79] : memref<1x18x18x64xf32, #tpu.memory_space<vmem>>, vector<1x16x16x64xf32>
    %62 = vector.shape_cast %61 : vector<1x16x16x64xf32> to vector<256x64xf32>
    %63 = arith.truncf %62 : vector<256x64xf32> to vector<256x64xbf16>
    %c0_80 = arith.constant 0 : index
    %c1_81 = arith.constant 1 : index
    %c1_82 = arith.constant 1 : index
    %c0_83 = arith.constant 0 : index
    %64 = vector.load %arg9[%c0_80, %c1_81, %c1_82, %c0_83] : memref<1x18x18x64xf32, #tpu.memory_space<vmem>>, vector<1x16x16x64xf32>
    %65 = vector.shape_cast %64 : vector<1x16x16x64xf32> to vector<256x64xf32>
    %66 = arith.truncf %65 : vector<256x64xf32> to vector<256x64xbf16>
    %c0_84 = arith.constant 0 : index
    %c1_85 = arith.constant 1 : index
    %c2_86 = arith.constant 2 : index
    %c0_87 = arith.constant 0 : index
    %67 = vector.load %arg9[%c0_84, %c1_85, %c2_86, %c0_87] : memref<1x18x18x64xf32, #tpu.memory_space<vmem>>, vector<1x16x16x64xf32>
    %68 = vector.shape_cast %67 : vector<1x16x16x64xf32> to vector<256x64xf32>
    %69 = arith.truncf %68 : vector<256x64xf32> to vector<256x64xbf16>
    %c0_88 = arith.constant 0 : index
    %c2_89 = arith.constant 2 : index
    %c0_90 = arith.constant 0 : index
    %c0_91 = arith.constant 0 : index
    %70 = vector.load %arg9[%c0_88, %c2_89, %c0_90, %c0_91] : memref<1x18x18x64xf32, #tpu.memory_space<vmem>>, vector<1x16x16x64xf32>
    %71 = vector.shape_cast %70 : vector<1x16x16x64xf32> to vector<256x64xf32>
    %72 = arith.truncf %71 : vector<256x64xf32> to vector<256x64xbf16>
    %c0_92 = arith.constant 0 : index
    %c2_93 = arith.constant 2 : index
    %c1_94 = arith.constant 1 : index
    %c0_95 = arith.constant 0 : index
    %73 = vector.load %arg9[%c0_92, %c2_93, %c1_94, %c0_95] : memref<1x18x18x64xf32, #tpu.memory_space<vmem>>, vector<1x16x16x64xf32>
    %74 = vector.shape_cast %73 : vector<1x16x16x64xf32> to vector<256x64xf32>
    %75 = arith.truncf %74 : vector<256x64xf32> to vector<256x64xbf16>
    %c0_96 = arith.constant 0 : index
    %c2_97 = arith.constant 2 : index
    %c2_98 = arith.constant 2 : index
    %c0_99 = arith.constant 0 : index
    %76 = vector.load %arg9[%c0_96, %c2_97, %c2_98, %c0_99] : memref<1x18x18x64xf32, #tpu.memory_space<vmem>>, vector<1x16x16x64xf32>
    %77 = vector.shape_cast %76 : vector<1x16x16x64xf32> to vector<256x64xf32>
    %78 = arith.truncf %77 : vector<256x64xf32> to vector<256x64xbf16>
    %cst_100 = arith.constant 0.000000e+00 : bf16
    %79 = vector.broadcast %cst_100 : bf16 to vector<256x64xbf16>
    %80 = tpu.concatenate %54, %57 in 1 : vector<256x64xbf16>, vector<256x64xbf16> -> vector<256x128xbf16>
    %c0_101 = arith.constant 0 : index
    %c0_102 = arith.constant 0 : index
    %81 = vector.load %arg10[%c0_101, %c0_102] : memref<256x640xbf16, #tpu.memory_space<vmem>>, vector<256x128xbf16>
    tpu.vector_store %arg10[%c0_101, %c0_102], %80 {strides = array<i32>} : memref<256x640xbf16, #tpu.memory_space<vmem>>, vector<256x128xbf16>,
    %82 = tpu.concatenate %60, %63 in 1 : vector<256x64xbf16>, vector<256x64xbf16> -> vector<256x128xbf16>
    %c0_103 = arith.constant 0 : index
    %c128_104 = arith.constant 128 : index
    %83 = vector.load %arg10[%c0_103, %c128_104] : memref<256x640xbf16, #tpu.memory_space<vmem>>, vector<256x128xbf16>
    tpu.vector_store %arg10[%c0_103, %c128_104], %82 {strides = array<i32>} : memref<256x640xbf16, #tpu.memory_space<vmem>>, vector<256x128xbf16>,
    %84 = tpu.concatenate %66, %69 in 1 : vector<256x64xbf16>, vector<256x64xbf16> -> vector<256x128xbf16>
    %c0_105 = arith.constant 0 : index
    %c256_106 = arith.constant 256 : index
    %85 = vector.load %arg10[%c0_105, %c256_106] : memref<256x640xbf16, #tpu.memory_space<vmem>>, vector<256x128xbf16>
    tpu.vector_store %arg10[%c0_105, %c256_106], %84 {strides = array<i32>} : memref<256x640xbf16, #tpu.memory_space<vmem>>, vector<256x128xbf16>,
    %86 = tpu.concatenate %72, %75 in 1 : vector<256x64xbf16>, vector<256x64xbf16> -> vector<256x128xbf16>
    %c0_107 = arith.constant 0 : index
    %c384_108 = arith.constant 384 : index
    %87 = vector.load %arg10[%c0_107, %c384_108] : memref<256x640xbf16, #tpu.memory_space<vmem>>, vector<256x128xbf16>
    tpu.vector_store %arg10[%c0_107, %c384_108], %86 {strides = array<i32>} : memref<256x640xbf16, #tpu.memory_space<vmem>>, vector<256x128xbf16>,
    %88 = tpu.concatenate %78, %79 in 1 : vector<256x64xbf16>, vector<256x64xbf16> -> vector<256x128xbf16>
    %c0_109 = arith.constant 0 : index
    %c512_110 = arith.constant 512 : index
    %89 = vector.load %arg10[%c0_109, %c512_110] : memref<256x640xbf16, #tpu.memory_space<vmem>>, vector<256x128xbf16>
    tpu.vector_store %arg10[%c0_109, %c512_110], %88 {strides = array<i32>} : memref<256x640xbf16, #tpu.memory_space<vmem>>, vector<256x128xbf16>,
    %c0_111 = arith.constant 0 : index
    %c0_112 = arith.constant 0 : index
    %90 = vector.load %arg10[%c0_111, %c0_112] : memref<256x640xbf16, #tpu.memory_space<vmem>>, vector<256x640xbf16>
    %c0_113 = arith.constant 0 : index
    %c0_114 = arith.constant 0 : index
    %91 = vector.load %arg4[%c0_113, %c0_114] : memref<640x64xbf16, #tpu.memory_space<vmem>>, vector<640x64xbf16>
    %cst_115 = arith.constant dense<0.000000e+00> : vector<256x64xf32>
    %92 = tpu.matmul %90, %91, %cst_115 {dimension_numbers = #tpu.dot_dimension_numbers<[1], [0], [0], [1], [0, 0, 1, 1], [], []>} : vector<256x640xbf16>, vector<640x64xbf16>, vector<256x64xf32> -> vector<256x64xf32>
    %c0_116 = arith.constant 0 : index
    %c0_117 = arith.constant 0 : index
    %93 = vector.load %arg5[%c0_116, %c0_117] : memref<1x64xf32, #tpu.memory_space<vmem>>, vector<1x64xf32>
    %94 = vector.broadcast %93 : vector<1x64xf32> to vector<256x64xf32>
    %95 = arith.addf %92, %94 : vector<256x64xf32>
    %cst_118 = arith.constant 0.000000e+00 : f32
    %96 = vector.broadcast %cst_118 : f32 to vector<256x64xf32>
    %97 = arith.maximumf %95, %96 : vector<256x64xf32>
    %98 = vector.shape_cast %97 : vector<256x64xf32> to vector<1x16x16x64xf32>
    %c0_119 = arith.constant 0 : index
    %c1_120 = arith.constant 1 : index
    %c1_121 = arith.constant 1 : index
    %c0_122 = arith.constant 0 : index
    %99 = vector.load %arg9[%c0_119, %c1_120, %c1_121, %c0_122] : memref<1x18x18x64xf32, #tpu.memory_space<vmem>>, vector<1x16x16x64xf32>
    tpu.vector_store %arg9[%c0_119, %c1_120, %c1_121, %c0_122], %98 {strides = array<i32>} : memref<1x18x18x64xf32, #tpu.memory_space<vmem>>, vector<1x16x16x64xf32>,
    %c0_123 = arith.constant 0 : index
    %c0_124 = arith.constant 0 : index
    %c0_125 = arith.constant 0 : index
    %c0_126 = arith.constant 0 : index
    %100 = vector.load %arg9[%c0_123, %c0_124, %c0_125, %c0_126] : memref<1x18x18x64xf32, #tpu.memory_space<vmem>>, vector<1x16x16x64xf32>
    %101 = vector.shape_cast %100 : vector<1x16x16x64xf32> to vector<256x64xf32>
    %102 = arith.truncf %101 : vector<256x64xf32> to vector<256x64xbf16>
    %c0_127 = arith.constant 0 : index
    %c0_128 = arith.constant 0 : index
    %c1_129 = arith.constant 1 : index
    %c0_130 = arith.constant 0 : index
    %103 = vector.load %arg9[%c0_127, %c0_128, %c1_129, %c0_130] : memref<1x18x18x64xf32, #tpu.memory_space<vmem>>, vector<1x16x16x64xf32>
    %104 = vector.shape_cast %103 : vector<1x16x16x64xf32> to vector<256x64xf32>
    %105 = arith.truncf %104 : vector<256x64xf32> to vector<256x64xbf16>
    %c0_131 = arith.constant 0 : index
    %c0_132 = arith.constant 0 : index
    %c2_133 = arith.constant 2 : index
    %c0_134 = arith.constant 0 : index
    %106 = vector.load %arg9[%c0_131, %c0_132, %c2_133, %c0_134] : memref<1x18x18x64xf32, #tpu.memory_space<vmem>>, vector<1x16x16x64xf32>
    %107 = vector.shape_cast %106 : vector<1x16x16x64xf32> to vector<256x64xf32>
    %108 = arith.truncf %107 : vector<256x64xf32> to vector<256x64xbf16>
    %c0_135 = arith.constant 0 : index
    %c1_136 = arith.constant 1 : index
    %c0_137 = arith.constant 0 : index
    %c0_138 = arith.constant 0 : index
    %109 = vector.load %arg9[%c0_135, %c1_136, %c0_137, %c0_138] : memref<1x18x18x64xf32, #tpu.memory_space<vmem>>, vector<1x16x16x64xf32>
    %110 = vector.shape_cast %109 : vector<1x16x16x64xf32> to vector<256x64xf32>
    %111 = arith.truncf %110 : vector<256x64xf32> to vector<256x64xbf16>
    %c0_139 = arith.constant 0 : index
    %c1_140 = arith.constant 1 : index
    %c1_141 = arith.constant 1 : index
    %c0_142 = arith.constant 0 : index
    %112 = vector.load %arg9[%c0_139, %c1_140, %c1_141, %c0_142] : memref<1x18x18x64xf32, #tpu.memory_space<vmem>>, vector<1x16x16x64xf32>
    %113 = vector.shape_cast %112 : vector<1x16x16x64xf32> to vector<256x64xf32>
    %114 = arith.truncf %113 : vector<256x64xf32> to vector<256x64xbf16>
    %c0_143 = arith.constant 0 : index
    %c1_144 = arith.constant 1 : index
    %c2_145 = arith.constant 2 : index
    %c0_146 = arith.constant 0 : index
    %115 = vector.load %arg9[%c0_143, %c1_144, %c2_145, %c0_146] : memref<1x18x18x64xf32, #tpu.memory_space<vmem>>, vector<1x16x16x64xf32>
    %116 = vector.shape_cast %115 : vector<1x16x16x64xf32> to vector<256x64xf32>
    %117 = arith.truncf %116 : vector<256x64xf32> to vector<256x64xbf16>
    %c0_147 = arith.constant 0 : index
    %c2_148 = arith.constant 2 : index
    %c0_149 = arith.constant 0 : index
    %c0_150 = arith.constant 0 : index
    %118 = vector.load %arg9[%c0_147, %c2_148, %c0_149, %c0_150] : memref<1x18x18x64xf32, #tpu.memory_space<vmem>>, vector<1x16x16x64xf32>
    %119 = vector.shape_cast %118 : vector<1x16x16x64xf32> to vector<256x64xf32>
    %120 = arith.truncf %119 : vector<256x64xf32> to vector<256x64xbf16>
    %c0_151 = arith.constant 0 : index
    %c2_152 = arith.constant 2 : index
    %c1_153 = arith.constant 1 : index
    %c0_154 = arith.constant 0 : index
    %121 = vector.load %arg9[%c0_151, %c2_152, %c1_153, %c0_154] : memref<1x18x18x64xf32, #tpu.memory_space<vmem>>, vector<1x16x16x64xf32>
    %122 = vector.shape_cast %121 : vector<1x16x16x64xf32> to vector<256x64xf32>
    %123 = arith.truncf %122 : vector<256x64xf32> to vector<256x64xbf16>
    %c0_155 = arith.constant 0 : index
    %c2_156 = arith.constant 2 : index
    %c2_157 = arith.constant 2 : index
    %c0_158 = arith.constant 0 : index
    %124 = vector.load %arg9[%c0_155, %c2_156, %c2_157, %c0_158] : memref<1x18x18x64xf32, #tpu.memory_space<vmem>>, vector<1x16x16x64xf32>
    %125 = vector.shape_cast %124 : vector<1x16x16x64xf32> to vector<256x64xf32>
    %126 = arith.truncf %125 : vector<256x64xf32> to vector<256x64xbf16>
    %cst_159 = arith.constant 0.000000e+00 : bf16
    %127 = vector.broadcast %cst_159 : bf16 to vector<256x64xbf16>
    %128 = tpu.concatenate %102, %105 in 1 : vector<256x64xbf16>, vector<256x64xbf16> -> vector<256x128xbf16>
    %c0_160 = arith.constant 0 : index
    %c0_161 = arith.constant 0 : index
    %129 = vector.load %arg10[%c0_160, %c0_161] : memref<256x640xbf16, #tpu.memory_space<vmem>>, vector<256x128xbf16>
    tpu.vector_store %arg10[%c0_160, %c0_161], %128 {strides = array<i32>} : memref<256x640xbf16, #tpu.memory_space<vmem>>, vector<256x128xbf16>,
    %130 = tpu.concatenate %108, %111 in 1 : vector<256x64xbf16>, vector<256x64xbf16> -> vector<256x128xbf16>
    %c0_162 = arith.constant 0 : index
    %c128_163 = arith.constant 128 : index
    %131 = vector.load %arg10[%c0_162, %c128_163] : memref<256x640xbf16, #tpu.memory_space<vmem>>, vector<256x128xbf16>
    tpu.vector_store %arg10[%c0_162, %c128_163], %130 {strides = array<i32>} : memref<256x640xbf16, #tpu.memory_space<vmem>>, vector<256x128xbf16>,
    %132 = tpu.concatenate %114, %117 in 1 : vector<256x64xbf16>, vector<256x64xbf16> -> vector<256x128xbf16>
    %c0_164 = arith.constant 0 : index
    %c256_165 = arith.constant 256 : index
    %133 = vector.load %arg10[%c0_164, %c256_165] : memref<256x640xbf16, #tpu.memory_space<vmem>>, vector<256x128xbf16>
    tpu.vector_store %arg10[%c0_164, %c256_165], %132 {strides = array<i32>} : memref<256x640xbf16, #tpu.memory_space<vmem>>, vector<256x128xbf16>,
    %134 = tpu.concatenate %120, %123 in 1 : vector<256x64xbf16>, vector<256x64xbf16> -> vector<256x128xbf16>
    %c0_166 = arith.constant 0 : index
    %c384_167 = arith.constant 384 : index
    %135 = vector.load %arg10[%c0_166, %c384_167] : memref<256x640xbf16, #tpu.memory_space<vmem>>, vector<256x128xbf16>
    tpu.vector_store %arg10[%c0_166, %c384_167], %134 {strides = array<i32>} : memref<256x640xbf16, #tpu.memory_space<vmem>>, vector<256x128xbf16>,
    %136 = tpu.concatenate %126, %127 in 1 : vector<256x64xbf16>, vector<256x64xbf16> -> vector<256x128xbf16>
    %c0_168 = arith.constant 0 : index
    %c512_169 = arith.constant 512 : index
    %137 = vector.load %arg10[%c0_168, %c512_169] : memref<256x640xbf16, #tpu.memory_space<vmem>>, vector<256x128xbf16>
    tpu.vector_store %arg10[%c0_168, %c512_169], %136 {strides = array<i32>} : memref<256x640xbf16, #tpu.memory_space<vmem>>, vector<256x128xbf16>,
    %c0_170 = arith.constant 0 : index
    %c0_171 = arith.constant 0 : index
    %138 = vector.load %arg10[%c0_170, %c0_171] : memref<256x640xbf16, #tpu.memory_space<vmem>>, vector<256x640xbf16>
    %c0_172 = arith.constant 0 : index
    %c0_173 = arith.constant 0 : index
    %139 = vector.load %arg6[%c0_172, %c0_173] : memref<640x128xbf16, #tpu.memory_space<vmem>>, vector<640x128xbf16>
    %cst_174 = arith.constant dense<0.000000e+00> : vector<256x128xf32>
    %140 = tpu.matmul %138, %139, %cst_174 {dimension_numbers = #tpu.dot_dimension_numbers<[1], [0], [0], [1], [0, 0, 1, 1], [], []>} : vector<256x640xbf16>, vector<640x128xbf16>, vector<256x128xf32> -> vector<256x128xf32>
    %c0_175 = arith.constant 0 : index
    %c0_176 = arith.constant 0 : index
    %141 = vector.load %arg7[%c0_175, %c0_176] : memref<1x128xf32, #tpu.memory_space<vmem>>, vector<1x128xf32>
    %142 = vector.broadcast %141 : vector<1x128xf32> to vector<256x128xf32>
    %143 = arith.addf %140, %142 : vector<256x128xf32>
    %144 = vector.shape_cast %143 : vector<256x128xf32> to vector<1x256x128xf32>
    %c0_177 = arith.constant 0 : index
    %c0_178 = arith.constant 0 : index
    %c0_179 = arith.constant 0 : index
    %145 = vector.load %arg8[%c0_177, %c0_178, %c0_179] : memref<1x256x128xf32, #tpu.memory_space<vmem>>, vector<1x256x128xf32>
    tpu.vector_store %arg8[%c0_177, %c0_178, %c0_179], %144 {strides = array<i32>} : memref<1x256x128xf32, #tpu.memory_space<vmem>>, vector<1x256x128xf32>,
    return
  }
  func.func @transform_0(%arg0: i32) -> (i32, i32, i32, i32) {
    %c0_i32 = arith.constant 0 : i32
    %c0_i32_0 = arith.constant 0 : i32
    %c0_i32_1 = arith.constant 0 : i32
    %c0_i32_2 = arith.constant 0 : i32
    return %arg0, %c0_i32, %c0_i32_0, %c0_i32_1 : i32, i32, i32, i32
  }
  func.func @transform_1(%arg0: i32) -> (i32, i32) {
    %c0_i32 = arith.constant 0 : i32
    %c0_i32_0 = arith.constant 0 : i32
    %c0_i32_1 = arith.constant 0 : i32
    return %c0_i32, %c0_i32_0 : i32, i32
  }
  func.func @transform_2(%arg0: i32) -> (i32, i32) {
    %c0_i32 = arith.constant 0 : i32
    %c0_i32_0 = arith.constant 0 : i32
    %c0_i32_1 = arith.constant 0 : i32
    return %c0_i32, %c0_i32_0 : i32, i32
  }
  func.func @transform_3(%arg0: i32) -> (i32, i32) {
    %c0_i32 = arith.constant 0 : i32
    %c0_i32_0 = arith.constant 0 : i32
    %c0_i32_1 = arith.constant 0 : i32
    return %c0_i32, %c0_i32_0 : i32, i32
  }
  func.func @transform_4(%arg0: i32) -> (i32, i32) {
    %c0_i32 = arith.constant 0 : i32
    %c0_i32_0 = arith.constant 0 : i32
    %c0_i32_1 = arith.constant 0 : i32
    return %c0_i32, %c0_i32_0 : i32, i32
  }
  func.func @transform_5(%arg0: i32) -> (i32, i32) {
    %c0_i32 = arith.constant 0 : i32
    %c0_i32_0 = arith.constant 0 : i32
    %c0_i32_1 = arith.constant 0 : i32
    return %c0_i32, %c0_i32_0 : i32, i32
  }
  func.func @transform_6(%arg0: i32) -> (i32, i32) {
    %c0_i32 = arith.constant 0 : i32
    %c0_i32_0 = arith.constant 0 : i32
    %c0_i32_1 = arith.constant 0 : i32
    return %c0_i32, %c0_i32_0 : i32, i32
  }
  func.func @transform_7(%arg0: i32) -> (i32, i32, i32) {
    %c0_i32 = arith.constant 0 : i32
    %c0_i32_0 = arith.constant 0 : i32
    %c0_i32_1 = arith.constant 0 : i32
    return %arg0, %c0_i32, %c0_i32_0 : i32, i32, i32
  }
}

</mosaic_0001>

<llo_original>
// kernel: tpu_custom_call.1
$region0: #{tpu_custom_call.1}
  #allocation0 [shape = 'u32[]', space=smem, size = 0x4, offset = 0x4, fixed_abs, tag = 'smem constant byte address 0x4 - core index']
  #allocation1 [shape = 'u32[144,128]{1,0:T(1,128)}', space=vmem, size = 0x12000, scoped, tag = 'internal scratch']
  #allocation2 [shape = 'f32[1,18,18,64]{3,2,1,0:T(8,128)}', space=vmem, size = 0x36000, scoped, tag = 'scratch operand']
  #allocation3 [shape = 'bf16[256,640]{1,0:T(8,128)(2,1)}', space=vmem, size = 0x50000, scoped, tag = 'scratch operand']
  %s0 = inlined_call_operand.vmem [shape: f32[2,16,16,4], index: 0, kind: input, shape index: {}]
  %s1 = inlined_call_operand.vmem [shape: bf16[640,64], index: 1, kind: input, shape index: {}]
  %s2 = inlined_call_operand.vmem [shape: f32[1,64], index: 2, kind: input, shape index: {}]
  %s3 = inlined_call_operand.vmem [shape: bf16[640,64], index: 3, kind: input, shape index: {}]
  %s4 = inlined_call_operand.vmem [shape: f32[1,64], index: 4, kind: input, shape index: {}]
  %s5 = inlined_call_operand.vmem [shape: bf16[640,128], index: 5, kind: input, shape index: {}]
  %s6 = inlined_call_operand.vmem [shape: f32[1,128], index: 6, kind: input, shape index: {}]
  %s7 = inlined_call_operand.hbm [shape: f32[2,256,128], index: 7, kind: output, shape index: {}]
  %s8 = sld [smem:[#allocation0]]
  $region61: #{tpu_custom_call.1} parent=0
    _
  %s10 = ssub.s32 1, %s8
  %s11 = scalar_select 0, %s10, %s8
  $region1: #{tpu_custom_call.1} parent=0
    #allocation4 [shape = 'u8[262144]{0}', space=vmem, size = 0x40000, scoped, tag = 'output window, operand 0']
    #allocation5 [shape = 's32[2]{0}', space=sflag, size = 0x8, scoped, tag = 'scoped memory for tpu_custom_call.1']
    %12 = vsyncpa [#allocation5], 0
    %s13 = scalar_lea.sflag [#allocation5], 1
    %14 = vsyncpa %s13, 0
    loop: start=0, step=1, limit=4
    $region2: #{tpu_custom_call.1} parent=1 // loop_pre_header
      _
    $region3: #{tpu_custom_call.1} parent=1 // loop_header
      %s16 = sphi 0, %s20
      %p17 = scmp.ge.s32.totalorder %s16, 4
      %s26 = sphi 0, %s28
      %s29 = sphi 0, %s26
      %s30 = sphi 0, %s29
      %s46 = sphi 0, %s30
      %s50 = sphi 0, %s50
      %s52 = sphi 0, %s50
      %s53 = sphi 0, %s52
      %s67 = sphi 0, %s53
      %s71 = sphi 0, %s71
      %s73 = sphi 0, %s71
      %s74 = sphi 0, %s73
      %s88 = sphi 0, %s74
      %s92 = sphi 0, %s92
      %s94 = sphi 0, %s92
      %s95 = sphi 0, %s94
      %s109 = sphi 0, %s95
      %s113 = sphi 0, %s113
      %s115 = sphi 0, %s113
      %s116 = sphi 0, %s115
      %s130 = sphi 0, %s116
      %s134 = sphi 0, %s134
      %s136 = sphi 0, %s134
      %s137 = sphi 0, %s136
      %s151 = sphi 0, %s137
      %s155 = sphi 0, %s155
      %s157 = sphi 0, %s155
      %s158 = sphi 0, %s157
      %s172 = sphi 0, %s158
      %s178 = sphi 0, %s180
      %s181 = sphi 0, %s178
      %s182 = sphi 0, %s181
      %s198 = sphi 0, %s182
    $region4: #{tpu_custom_call.1} parent=1 // loop_header_branch
      %19 = sbr.rel (%p17) target = $region8
    $region5: #{tpu_custom_call.1} parent=1 // loop_body
      %s21 = ssub.s32 %s16, 1
      %s22 = ssub.s32 %s16, 2
      %s23 = sadd.s32 %s16, 1
      %s24 = ssub.s32 %s16, %s23
      %p25 = scmp.eq.s32.totalorder %s24, 0
      %s27 = sadd.s32 %s26, 1
      %s28 = scalar_select %p25, %s26, %s27
      %p31 = pneg %p25
      %p32 = scmp.eq.s32.totalorder %s16, 1
      %p33 = por %p31, %p32
      %p34 = scmp.ne.s32.totalorder %s26, %s29
      %p35 = scmp.eq.s32.totalorder %s16, 0
      %p36 = por %p34, %p35
      %p37 = scmp.ne.s32.totalorder %s26, %s29
      %p38 = scmp.eq.s32.totalorder %s21, 1
      %p39 = por %p37, %p38
      %p40 = scmp.ne.s32.totalorder %s29, %s30
      %p41 = scmp.eq.s32.totalorder %s21, 0
      %p42 = por %p40, %p41
      %p43 = scmp.ne.s32.totalorder %s29, %s30
      %p44 = scmp.eq.s32.totalorder %s22, 1
      %p45 = por %p43, %p44
      %p47 = scmp.ne.s32.totalorder %s30, %s46
      %p48 = scmp.eq.s32.totalorder %s22, 0
      %p49 = por %p47, %p48
      %s51 = sadd.s32 %s50, 1
      %p54 = scmp.eq.s32.totalorder %s16, 1
      %p55 = scmp.ne.s32.totalorder %s50, %s52
      %p56 = scmp.eq.s32.totalorder %s16, 0
      %p57 = por %p55, %p56
      %p58 = scmp.ne.s32.totalorder %s50, %s52
      %p59 = scmp.eq.s32.totalorder %s21, 1
      %p60 = por %p58, %p59
      %p61 = scmp.ne.s32.totalorder %s52, %s53
      %p62 = scmp.eq.s32.totalorder %s21, 0
      %p63 = por %p61, %p62
      %p64 = scmp.ne.s32.totalorder %s52, %s53
      %p65 = scmp.eq.s32.totalorder %s22, 1
      %p66 = por %p64, %p65
      %p68 = scmp.ne.s32.totalorder %s53, %s67
      %p69 = scmp.eq.s32.totalorder %s22, 0
      %p70 = por %p68, %p69
      %s72 = sadd.s32 %s71, 1
      %p75 = scmp.eq.s32.totalorder %s16, 1
      %p76 = scmp.ne.s32.totalorder %s71, %s73
      %p77 = scmp.eq.s32.totalorder %s16, 0
      %p78 = por %p76, %p77
      %p79 = scmp.ne.s32.totalorder %s71, %s73
      %p80 = scmp.eq.s32.totalorder %s21, 1
      %p81 = por %p79, %p80
      %p82 = scmp.ne.s32.totalorder %s73, %s74
      %p83 = scmp.eq.s32.totalorder %s21, 0
      %p84 = por %p82, %p83
      %p85 = scmp.ne.s32.totalorder %s73, %s74
      %p86 = scmp.eq.s32.totalorder %s22, 1
      %p87 = por %p85, %p86
      %p89 = scmp.ne.s32.totalorder %s74, %s88
      %p90 = scmp.eq.s32.totalorder %s22, 0
      %p91 = por %p89, %p90
      %s93 = sadd.s32 %s92, 1
      %p96 = scmp.eq.s32.totalorder %s16, 1
      %p97 = scmp.ne.s32.totalorder %s92, %s94
      %p98 = scmp.eq.s32.totalorder %s16, 0
      %p99 = por %p97, %p98
      %p100 = scmp.ne.s32.totalorder %s92, %s94
      %p101 = scmp.eq.s32.totalorder %s21, 1
      %p102 = por %p100, %p101
      %p103 = scmp.ne.s32.totalorder %s94, %s95
      %p104 = scmp.eq.s32.totalorder %s21, 0
      %p105 = por %p103, %p104
      %p106 = scmp.ne.s32.totalorder %s94, %s95
      %p107 = scmp.eq.s32.totalorder %s22, 1
      %p108 = por %p106, %p107
      %p110 = scmp.ne.s32.totalorder %s95, %s109
      %p111 = scmp.eq.s32.totalorder %s22, 0
      %p112 = por %p110, %p111
      %s114 = sadd.s32 %s113, 1
      %p117 = scmp.eq.s32.totalorder %s16, 1
      %p118 = scmp.ne.s32.totalorder %s113, %s115
      %p119 = scmp.eq.s32.totalorder %s16, 0
      %p120 = por %p118, %p119
      %p121 = scmp.ne.s32.totalorder %s113, %s115
      %p122 = scmp.eq.s32.totalorder %s21, 1
      %p123 = por %p121, %p122
      %p124 = scmp.ne.s32.totalorder %s115, %s116
      %p125 = scmp.eq.s32.totalorder %s21, 0
      %p126 = por %p124, %p125
      %p127 = scmp.ne.s32.totalorder %s115, %s116
      %p128 = scmp.eq.s32.totalorder %s22, 1
      %p129 = por %p127, %p128
      %p131 = scmp.ne.s32.totalorder %s116, %s130
      %p132 = scmp.eq.s32.totalorder %s22, 0
      %p133 = por %p131, %p132
      %s135 = sadd.s32 %s134, 1
      %p138 = scmp.eq.s32.totalorder %s16, 1
      %p139 = scmp.ne.s32.totalorder %s134, %s136
      %p140 = scmp.eq.s32.totalorder %s16, 0
      %p141 = por %p139, %p140
      %p142 = scmp.ne.s32.totalorder %s134, %s136
      %p143 = scmp.eq.s32.totalorder %s21, 1
      %p144 = por %p142, %p143
      %p145 = scmp.ne.s32.totalorder %s136, %s137
      %p146 = scmp.eq.s32.totalorder %s21, 0
      %p147 = por %p145, %p146
      %p148 = scmp.ne.s32.totalorder %s136, %s137
      %p149 = scmp.eq.s32.totalorder %s22, 1
      %p150 = por %p148, %p149
      %p152 = scmp.ne.s32.totalorder %s137, %s151
      %p153 = scmp.eq.s32.totalorder %s22, 0
      %p154 = por %p152, %p153
      %s156 = sadd.s32 %s155, 1
      %p159 = scmp.eq.s32.totalorder %s16, 1
      %p160 = scmp.ne.s32.totalorder %s155, %s157
      %p161 = scmp.eq.s32.totalorder %s16, 0
      %p162 = por %p160, %p161
      %p163 = scmp.ne.s32.totalorder %s155, %s157
      %p164 = scmp.eq.s32.totalorder %s21, 1
      %p165 = por %p163, %p164
      %p166 = scmp.ne.s32.totalorder %s157, %s158
      %p167 = scmp.eq.s32.totalorder %s21, 0
      %p168 = por %p166, %p167
      %p169 = scmp.ne.s32.totalorder %s157, %s158
      %p170 = scmp.eq.s32.totalorder %s22, 1
      %p171 = por %p169, %p170
      %p173 = scmp.ne.s32.totalorder %s158, %s172
      %p174 = scmp.eq.s32.totalorder %s22, 0
      %p175 = por %p173, %p174
      %s176 = ssub.s32 %s16, %s23
      %p177 = scmp.eq.s32.totalorder %s176, 0
      %s179 = sadd.s32 %s178, 1
      %s180 = scalar_select %p177, %s178, %s179
      %p183 = pneg %p177
      %p184 = scmp.eq.s32.totalorder %s16, 1
      %p185 = por %p183, %p184
      %p186 = scmp.ne.s32.totalorder %s178, %s181
      %p187 = scmp.eq.s32.totalorder %s16, 0
      %p188 = por %p186, %p187
      %p189 = scmp.ne.s32.totalorder %s178, %s181
      %p190 = scmp.eq.s32.totalorder %s21, 1
      %p191 = por %p189, %p190
      %p192 = scmp.ne.s32.totalorder %s181, %s182
      %p193 = scmp.eq.s32.totalorder %s21, 0
      %p194 = por %p192, %p193
      %p195 = scmp.ne.s32.totalorder %s181, %s182
      %p196 = scmp.eq.s32.totalorder %s22, 1
      %p197 = por %p195, %p196
      %p199 = scmp.ne.s32.totalorder %s182, %s198
      %p200 = scmp.eq.s32.totalorder %s22, 0
      %p201 = por %p199, %p200
      %p202 = scmp.le.s32.totalorder 1, %s16
      %p203 = scmp.lt.s32.totalorder %s16, 3
      %p204 = pnand %p202, %p203
      %p205 = pneg %p204
      // Predicated region
      $region9: #{tpu_custom_call.1} parent=5 // pred_check
        _
      $region10: #{tpu_custom_call.1} parent=5 // pred_check_branch
        %207 = sbr.rel (%p204) target = $region12
      $region11: #{tpu_custom_call.1} parent=5 // pred_region
        %s208 = ssub.s32 %s16, 1
        // Predicated region
        $region13: #{tpu_custom_call.1} parent=11 // pred_check
          %p209 = pneg %p63
        $region14: #{tpu_custom_call.1} parent=11 // pred_check_branch
          %211 = sbr.rel (%p209) target = $region16
        $region15: #{tpu_custom_call.1} parent=11 // pred_region
          _
        $region16: #{tpu_custom_call.1} parent=11 // pred_fallthru
          _
        // Predicated region
        $region17: #{tpu_custom_call.1} parent=11 // pred_check
          %p212 = pneg %p84
        $region18: #{tpu_custom_call.1} parent=11 // pred_check_branch
          %214 = sbr.rel (%p212) target = $region20
        $region19: #{tpu_custom_call.1} parent=11 // pred_region
          _
        $region20: #{tpu_custom_call.1} parent=11 // pred_fallthru
          _
        // Predicated region
        $region21: #{tpu_custom_call.1} parent=11 // pred_check
          %p215 = pneg %p105
        $region22: #{tpu_custom_call.1} parent=11 // pred_check_branch
          %217 = sbr.rel (%p215) target = $region24
        $region23: #{tpu_custom_call.1} parent=11 // pred_region
          _
        $region24: #{tpu_custom_call.1} parent=11 // pred_fallthru
          _
        // Predicated region
        $region25: #{tpu_custom_call.1} parent=11 // pred_check
          %p218 = pneg %p126
        $region26: #{tpu_custom_call.1} parent=11 // pred_check_branch
          %220 = sbr.rel (%p218) target = $region28
        $region27: #{tpu_custom_call.1} parent=11 // pred_region
          _
        $region28: #{tpu_custom_call.1} parent=11 // pred_fallthru
          _
        // Predicated region
        $region29: #{tpu_custom_call.1} parent=11 // pred_check
          %p221 = pneg %p147
        $region30: #{tpu_custom_call.1} parent=11 // pred_check_branch
          %223 = sbr.rel (%p221) target = $region32
        $region31: #{tpu_custom_call.1} parent=11 // pred_region
          _
        $region32: #{tpu_custom_call.1} parent=11 // pred_fallthru
          _
        // Predicated region
        $region33: #{tpu_custom_call.1} parent=11 // pred_check
          %p224 = pneg %p168
        $region34: #{tpu_custom_call.1} parent=11 // pred_check_branch
          %226 = sbr.rel (%p224) target = $region36
        $region35: #{tpu_custom_call.1} parent=11 // pred_region
          _
        $region36: #{tpu_custom_call.1} parent=11 // pred_fallthru
          _
      $region12: #{tpu_custom_call.1} parent=5 // pred_fallthru
        _
      %p227 = scmp.lt.s32.totalorder %s16, 2
      // Predicated region
      $region37: #{tpu_custom_call.1} parent=5 // pred_check
        %p228 = pneg %p227
      $region38: #{tpu_custom_call.1} parent=5 // pred_check_branch
        %230 = sbr.rel (%p228) target = $region40
      $region39: #{tpu_custom_call.1} parent=5 // pred_region
        // Predicated region
        $region41: #{tpu_custom_call.1} parent=39 // pred_check
          %p231 = pneg %p36
        $region42: #{tpu_custom_call.1} parent=39 // pred_check_branch
          %233 = sbr.rel (%p231) target = $region44
        $region43: #{tpu_custom_call.1} parent=39 // pred_region
          %p234 = scmp.lt.s32.totalorder %s16, 1
          %s235 = scalar_select %p234, %s16, 1
          %s236 = smul.addr %s235, 32
          %s237 = smul.addr %s236, 8
          %s238 = scalar_lea.vmem %s0, %s237
        $region44: #{tpu_custom_call.1} parent=39 // pred_fallthru
          _
      $region40: #{tpu_custom_call.1} parent=5 // pred_fallthru
        _
      %p239 = scmp.le.s32.totalorder 1, %s16
      %p240 = scmp.lt.s32.totalorder %s16, 3
      %p241 = pnand %p239, %p240
      %p242 = pneg %p241
      // Predicated region
      $region45: #{tpu_custom_call.1} parent=5 // pred_check
        _
      $region46: #{tpu_custom_call.1} parent=5 // pred_check_branch
        %244 = sbr.rel (%p241) target = $region48
      $region47: #{tpu_custom_call.1} parent=5 // pred_region
        %s245 = ssub.s32 %s16, 1
        %p246 = scmp.lt.s32.totalorder %s21, 1
        %s247 = scalar_select %p246, %s21, 1
        %s248 = smul.addr %s247, 32
        %s249 = smul.addr %s248, 8
        %s250 = scalar_lea.vmem %s0, %s249
        %p251 = pneg %p42
        %p252 = pneg %p39
        %p253 = pneg %p63
        %p254 = pneg %p60
        %p255 = pneg %p84
        %p256 = pneg %p81
        %p257 = pneg %p105
        %p258 = pneg %p102
        %p259 = pneg %p126
        %p260 = pneg %p123
        %p261 = pneg %p147
        %p262 = pneg %p144
        %p263 = pneg %p168
        %p264 = pneg %p165
        %p265 = pneg %p194
        %p266 = pneg %p191
        %s267 = sand.u32 %s181, 1
        %s268 = scalar_lea.sflag [#allocation5], %s267
        %s269 = sand.u32 %s181, 1
        %s270 = smul.addr %s269, 256
        %s271 = scalar_lea.vmem [#allocation4], %s270
        %p272 = scmp.lt.s32.totalorder %s21, 1
        %s273 = scalar_select %p272, %s21, 1
        %s274 = smul.addr %s273, 32
        %s275 = smul.addr %s274, 8
        %s276 = scalar_lea.vmem %s0, %s275
        %vm278 = vcmask 523264
        %279 = vst.msk [vmem:[#allocation2] sm:$0xff] %vm278, 0.0
        %280 = vst.msk [vmem:[#allocation2 + $0x8] sm:$0xff] %vm278, 0.0
        %vm281 = vcmask 517120
        %282 = vst.msk [vmem:[#allocation2 + $0x10] sm:$0x3] %vm281, 0.0
        %283 = vst.msk [vmem:[#allocation2 + $0x18] sm:$0xff] %vm278, 0.0
        %284 = vst.msk [vmem:[#allocation2 + $0x20] sm:$0xff] %vm278, 0.0
        %285 = vst.msk [vmem:[#allocation2 + $0x28] sm:$0x3] %vm281, 0.0
        %286 = vst.msk [vmem:[#allocation2 + $0x30] sm:$0xff] %vm278, 0.0
        %287 = vst.msk [vmem:[#allocation2 + $0x38] sm:$0xff] %vm278, 0.0
        %288 = vst.msk [vmem:[#allocation2 + $0x40] sm:$0x3] %vm281, 0.0
        %289 = vst.msk [vmem:[#allocation2 + $0x48] sm:$0xff] %vm278, 0.0
        %290 = vst.msk [vmem:[#allocation2 + $0x50] sm:$0xff] %vm278, 0.0
        %291 = vst.msk [vmem:[#allocation2 + $0x58] sm:$0x3] %vm281, 0.0
        %292 = vst.msk [vmem:[#allocation2 + $0x60] sm:$0xff] %vm278, 0.0
        %293 = vst.msk [vmem:[#allocation2 + $0x68] sm:$0xff] %vm278, 0.0
        %294 = vst.msk [vmem:[#allocation2 + $0x70] sm:$0x3] %vm281, 0.0
        %295 = vst.msk [vmem:[#allocation2 + $0x78] sm:$0xff] %vm278, 0.0
        %296 = vst.msk [vmem:[#allocation2 + $0x80] sm:$0xff] %vm278, 0.0
        %297 = vst.msk [vmem:[#allocation2 + $0x88] sm:$0x3] %vm281, 0.0
        %298 = vst.msk [vmem:[#allocation2 + $0x90] sm:$0xff] %vm278, 0.0
        %299 = vst.msk [vmem:[#allocation2 + $0x98] sm:$0xff] %vm278, 0.0
        %300 = vst.msk [vmem:[#allocation2 + $0xa0] sm:$0x3] %vm281, 0.0
        %301 = vst.msk [vmem:[#allocation2 + $0xa8] sm:$0xff] %vm278, 0.0
        %302 = vst.msk [vmem:[#allocation2 + $0xb0] sm:$0xff] %vm278, 0.0
        %303 = vst.msk [vmem:[#allocation2 + $0xb8] sm:$0x3] %vm281, 0.0
        %304 = vst.msk [vmem:[#allocation2 + $0xc0] sm:$0xff] %vm278, 0.0
        %305 = vst.msk [vmem:[#allocation2 + $0xc8] sm:$0xff] %vm278, 0.0
        %306 = vst.msk [vmem:[#allocation2 + $0xd0] sm:$0x3] %vm281, 0.0
        %307 = vst.msk [vmem:[#allocation2 + $0xd8] sm:$0xff] %vm278, 0.0
        %308 = vst.msk [vmem:[#allocation2 + $0xe0] sm:$0xff] %vm278, 0.0
        %309 = vst.msk [vmem:[#allocation2 + $0xe8] sm:$0x3] %vm281, 0.0
        %310 = vst.msk [vmem:[#allocation2 + $0xf0] sm:$0xff] %vm278, 0.0
        %311 = vst.msk [vmem:[#allocation2 + $0xf8] sm:$0xff] %vm278, 0.0
        %312 = vst.msk [vmem:[#allocation2 + $0x100] sm:$0x3] %vm281, 0.0
        %313 = vst.msk [vmem:[#allocation2 + $0x108] sm:$0xff] %vm278, 0.0
        %314 = vst.msk [vmem:[#allocation2 + $0x110] sm:$0xff] %vm278, 0.0
        %315 = vst.msk [vmem:[#allocation2 + $0x118] sm:$0x3] %vm281, 0.0
        %316 = vst.msk [vmem:[#allocation2 + $0x120] sm:$0xff] %vm278, 0.0
        %317 = vst.msk [vmem:[#allocation2 + $0x128] sm:$0xff] %vm278, 0.0
        %318 = vst.msk [vmem:[#allocation2 + $0x130] sm:$0x3] %vm281, 0.0
        %319 = vst.msk [vmem:[#allocation2 + $0x138] sm:$0xff] %vm278, 0.0
        %320 = vst.msk [vmem:[#allocation2 + $0x140] sm:$0xff] %vm278, 0.0
        %321 = vst.msk [vmem:[#allocation2 + $0x148] sm:$0x3] %vm281, 0.0
        %322 = vst.msk [vmem:[#allocation2 + $0x150] sm:$0xff] %vm278, 0.0
        %323 = vst.msk [vmem:[#allocation2 + $0x158] sm:$0xff] %vm278, 0.0
        %324 = vst.msk [vmem:[#allocation2 + $0x160] sm:$0x3] %vm281, 0.0
        %325 = vst.msk [vmem:[#allocation2 + $0x168] sm:$0xff] %vm278, 0.0
        %326 = vst.msk [vmem:[#allocation2 + $0x170] sm:$0xff] %vm278, 0.0
        %327 = vst.msk [vmem:[#allocation2 + $0x178] sm:$0x3] %vm281, 0.0
        %328 = vst.msk [vmem:[#allocation2 + $0x180] sm:$0xff] %vm278, 0.0
        %329 = vst.msk [vmem:[#allocation2 + $0x188] sm:$0xff] %vm278, 0.0
        %330 = vst.msk [vmem:[#allocation2 + $0x190] sm:$0x3] %vm281, 0.0
        %331 = vst.msk [vmem:[#allocation2 + $0x198] sm:$0xff] %vm278, 0.0
        %332 = vst.msk [vmem:[#allocation2 + $0x1a0] sm:$0xff] %vm278, 0.0
        %333 = vst.msk [vmem:[#allocation2 + $0x1a8] sm:$0x3] %vm281, 0.0
        %v334 = vld [vmem:[%s276] sm:$0xff]
        %v335 = vld [vmem:[%s276 + $0x8] sm:$0xff]
        %v336 = vld [vmem:[%s276 + $0x10] sm:$0xff]
        %v337 = vld [vmem:[%s276 + $0x18] sm:$0xff]
        %v338 = vld [vmem:[%s276 + $0x20] sm:$0xff]
        %v339 = vld [vmem:[%s276 + $0x28] sm:$0xff]
        %v340 = vld [vmem:[%s276 + $0x30] sm:$0xff]
        %v341 = vld [vmem:[%s276 + $0x38] sm:$0xff]
        %v342 = vld [vmem:[%s276 + $0x40] sm:$0xff]
        %v343 = vld [vmem:[%s276 + $0x48] sm:$0xff]
        %v344 = vld [vmem:[%s276 + $0x50] sm:$0xff]
        %v345 = vld [vmem:[%s276 + $0x58] sm:$0xff]
        %v346 = vld [vmem:[%s276 + $0x60] sm:$0xff]
        %v347 = vld [vmem:[%s276 + $0x68] sm:$0xff]
        %v348 = vld [vmem:[%s276 + $0x70] sm:$0xff]
        %v349 = vld [vmem:[%s276 + $0x78] sm:$0xff]
        %v350 = vld [vmem:[%s276 + $0x80] sm:$0xff]
        %v351 = vld [vmem:[%s276 + $0x88] sm:$0xff]
        %v352 = vld [vmem:[%s276 + $0x90] sm:$0xff]
        %v353 = vld [vmem:[%s276 + $0x98] sm:$0xff]
        %v354 = vld [vmem:[%s276 + $0xa0] sm:$0xff]
        %v355 = vld [vmem:[%s276 + $0xa8] sm:$0xff]
        %v356 = vld [vmem:[%s276 + $0xb0] sm:$0xff]
        %v357 = vld [vmem:[%s276 + $0xb8] sm:$0xff]
        %v358 = vld [vmem:[%s276 + $0xc0] sm:$0xff]
        %v359 = vld [vmem:[%s276 + $0xc8] sm:$0xff]
        %v360 = vld [vmem:[%s276 + $0xd0] sm:$0xff]
        %v361 = vld [vmem:[%s276 + $0xd8] sm:$0xff]
        %v362 = vld [vmem:[%s276 + $0xe0] sm:$0xff]
        %v363 = vld [vmem:[%s276 + $0xe8] sm:$0xff]
        %v364 = vld [vmem:[%s276 + $0xf0] sm:$0xff]
        %v365 = vld [vmem:[%s276 + $0xf8] sm:$0xff]
        %s366 = scalar_lea.vmem [#allocation2], 24
        %vm367 = vcmask 31744
        %368 = vst.msk [vmem:[%s366 + $0x1] sm:$0xff] %vm367, %v334
        %369 = vst.msk [vmem:[%s366 + $0x9] sm:$0xff] %vm367, %v335
        %370 = vst.msk [vmem:[%s366 + $0x19] sm:$0xff] %vm367, %v336
        %371 = vst.msk [vmem:[%s366 + $0x21] sm:$0xff] %vm367, %v337
        %372 = vst.msk [vmem:[%s366 + $0x31] sm:$0xff] %vm367, %v338
        %373 = vst.msk [vmem:[%s366 + $0x39] sm:$0xff] %vm367, %v339
        %374 = vst.msk [vmem:[%s366 + $0x49] sm:$0xff] %vm367, %v340
        %375 = vst.msk [vmem:[%s366 + $0x51] sm:$0xff] %vm367, %v341
        %376 = vst.msk [vmem:[%s366 + $0x61] sm:$0xff] %vm367, %v342
        %377 = vst.msk [vmem:[%s366 + $0x69] sm:$0xff] %vm367, %v343
        %378 = vst.msk [vmem:[%s366 + $0x79] sm:$0xff] %vm367, %v344
        %379 = vst.msk [vmem:[%s366 + $0x81] sm:$0xff] %vm367, %v345
        %380 = vst.msk [vmem:[%s366 + $0x91] sm:$0xff] %vm367, %v346
        %381 = vst.msk [vmem:[%s366 + $0x99] sm:$0xff] %vm367, %v347
        %382 = vst.msk [vmem:[%s366 + $0xa9] sm:$0xff] %vm367, %v348
        %383 = vst.msk [vmem:[%s366 + $0xb1] sm:$0xff] %vm367, %v349
        %384 = vst.msk [vmem:[%s366 + $0xc1] sm:$0xff] %vm367, %v350
        %385 = vst.msk [vmem:[%s366 + $0xc9] sm:$0xff] %vm367, %v351
        %386 = vst.msk [vmem:[%s366 + $0xd9] sm:$0xff] %vm367, %v352
        %387 = vst.msk [vmem:[%s366 + $0xe1] sm:$0xff] %vm367, %v353
        %388 = vst.msk [vmem:[%s366 + $0xf1] sm:$0xff] %vm367, %v354
        %389 = vst.msk [vmem:[%s366 + $0xf9] sm:$0xff] %vm367, %v355
        %390 = vst.msk [vmem:[%s366 + $0x109] sm:$0xff] %vm367, %v356
        %391 = vst.msk [vmem:[%s366 + $0x111] sm:$0xff] %vm367, %v357
        %392 = vst.msk [vmem:[%s366 + $0x121] sm:$0xff] %vm367, %v358
        %393 = vst.msk [vmem:[%s366 + $0x129] sm:$0xff] %vm367, %v359
        %394 = vst.msk [vmem:[%s366 + $0x139] sm:$0xff] %vm367, %v360
        %395 = vst.msk [vmem:[%s366 + $0x141] sm:$0xff] %vm367, %v361
        %396 = vst.msk [vmem:[%s366 + $0x151] sm:$0xff] %vm367, %v362
        %397 = vst.msk [vmem:[%s366 + $0x159] sm:$0xff] %vm367, %v363
        %398 = vst.msk [vmem:[%s366 + $0x169] sm:$0xff] %vm367, %v364
        %399 = vst.msk [vmem:[%s366 + $0x171] sm:$0xff] %vm367, %v365
        %v400 = vld [vmem:[#allocation2] sm:$0xff]
        %v401 = vld [vmem:[#allocation2 + $0x8] sm:$0xff]
        %v402 = vld [vmem:[#allocation2 + $0x18] sm:$0xff]
        %v403 = vld [vmem:[#allocation2 + $0x20] sm:$0xff]
        %v404 = vld [vmem:[#allocation2 + $0x30] sm:$0xff]
        %v405 = vld [vmem:[#allocation2 + $0x38] sm:$0xff]
        %v406 = vld [vmem:[#allocation2 + $0x48] sm:$0xff]
        %v407 = vld [vmem:[#allocation2 + $0x50] sm:$0xff]
        %v408 = vld [vmem:[#allocation2 + $0x60] sm:$0xff]
        %v409 = vld [vmem:[#allocation2 + $0x68] sm:$0xff]
        %v410 = vld [vmem:[#allocation2 + $0x78] sm:$0xff]
        %v411 = vld [vmem:[#allocation2 + $0x80] sm:$0xff]
        %v412 = vld [vmem:[#allocation2 + $0x90] sm:$0xff]
        %v413 = vld [vmem:[#allocation2 + $0x98] sm:$0xff]
        %v414 = vld [vmem:[#allocation2 + $0xa8] sm:$0xff]
        %v415 = vld [vmem:[#allocation2 + $0xb0] sm:$0xff]
        %v416 = vld [vmem:[#allocation2 + $0xc0] sm:$0xff]
        %v417 = vld [vmem:[#allocation2 + $0xc8] sm:$0xff]
        %v418 = vld [vmem:[#allocation2 + $0xd8] sm:$0xff]
        %v419 = vld [vmem:[#allocation2 + $0xe0] sm:$0xff]
        %v420 = vld [vmem:[#allocation2 + $0xf0] sm:$0xff]
        %v421 = vld [vmem:[#allocation2 + $0xf8] sm:$0xff]
        %v422 = vld [vmem:[#allocation2 + $0x108] sm:$0xff]
        %v423 = vld [vmem:[#allocation2 + $0x110] sm:$0xff]
        %v424 = vld [vmem:[#allocation2 + $0x120] sm:$0xff]
        %v425 = vld [vmem:[#allocation2 + $0x128] sm:$0xff]
        %v426 = vld [vmem:[#allocation2 + $0x138] sm:$0xff]
        %v427 = vld [vmem:[#allocation2 + $0x140] sm:$0xff]
        %v428 = vld [vmem:[#allocation2 + $0x150] sm:$0xff]
        %v429 = vld [vmem:[#allocation2 + $0x158] sm:$0xff]
        %v430 = vld [vmem:[#allocation2 + $0x168] sm:$0xff]
        %v431 = vld [vmem:[#allocation2 + $0x170] sm:$0xff]
        %v432 = vpack.c.bf16 %v401, %v400
        %v433 = vpack.c.bf16 %v403, %v402
        %v434 = vpack.c.bf16 %v405, %v404
        %v435 = vpack.c.bf16 %v407, %v406
        %v436 = vpack.c.bf16 %v409, %v408
        %v437 = vpack.c.bf16 %v411, %v410
        %v438 = vpack.c.bf16 %v413, %v412
        %v439 = vpack.c.bf16 %v415, %v414
        %v440 = vpack.c.bf16 %v417, %v416
        %v441 = vpack.c.bf16 %v419, %v418
        %v442 = vpack.c.bf16 %v421, %v420
        %v443 = vpack.c.bf16 %v423, %v422
        %v444 = vpack.c.bf16 %v425, %v424
        %v445 = vpack.c.bf16 %v427, %v426
        %v446 = vpack.c.bf16 %v429, %v428
        %v447 = vpack.c.bf16 %v431, %v430
        %v448 = vld [vmem:[#allocation2 + $0x1] sm:$0xff]
        %v449 = vld [vmem:[#allocation2 + $0x9] sm:$0xff]
        %v450 = vld [vmem:[#allocation2 + $0x19] sm:$0xff]
        %v451 = vld [vmem:[#allocation2 + $0x21] sm:$0xff]
        %v452 = vld [vmem:[#allocation2 + $0x31] sm:$0xff]
        %v453 = vld [vmem:[#allocation2 + $0x39] sm:$0xff]
        %v454 = vld [vmem:[#allocation2 + $0x49] sm:$0xff]
        %v455 = vld [vmem:[#allocation2 + $0x51] sm:$0xff]
        %v456 = vld [vmem:[#allocation2 + $0x61] sm:$0xff]
        %v457 = vld [vmem:[#allocation2 + $0x69] sm:$0xff]
        %v458 = vld [vmem:[#allocation2 + $0x79] sm:$0xff]
        %v459 = vld [vmem:[#allocation2 + $0x81] sm:$0xff]
        %v460 = vld [vmem:[#allocation2 + $0x91] sm:$0xff]
        %v461 = vld [vmem:[#allocation2 + $0x99] sm:$0xff]
        %v462 = vld [vmem:[#allocation2 + $0xa9] sm:$0xff]
        %v463 = vld [vmem:[#allocation2 + $0xb1] sm:$0xff]
        %v464 = vld [vmem:[#allocation2 + $0xc1] sm:$0xff]
        %v465 = vld [vmem:[#allocation2 + $0xc9] sm:$0xff]
        %v466 = vld [vmem:[#allocation2 + $0xd9] sm:$0xff]
        %v467 = vld [vmem:[#allocation2 + $0xe1] sm:$0xff]
        %v468 = vld [vmem:[#allocation2 + $0xf1] sm:$0xff]
        %v469 = vld [vmem:[#allocation2 + $0xf9] sm:$0xff]
        %v470 = vld [vmem:[#allocation2 + $0x109] sm:$0xff]
        %v471 = vld [vmem:[#allocation2 + $0x111] sm:$0xff]
        %v472 = vld [vmem:[#allocation2 + $0x121] sm:$0xff]
        %v473 = vld [vmem:[#allocation2 + $0x129] sm:$0xff]
        %v474 = vld [vmem:[#allocation2 + $0x139] sm:$0xff]
        %v475 = vld [vmem:[#allocation2 + $0x141] sm:$0xff]
        %v476 = vld [vmem:[#allocation2 + $0x151] sm:$0xff]
        %v477 = vld [vmem:[#allocation2 + $0x159] sm:$0xff]
        %v478 = vld [vmem:[#allocation2 + $0x169] sm:$0xff]
        %v479 = vld [vmem:[#allocation2 + $0x171] sm:$0xff]
        %v480 = vpack.c.bf16 %v449, %v448
        %v481 = vpack.c.bf16 %v451, %v450
        %v482 = vpack.c.bf16 %v453, %v452
        %v483 = vpack.c.bf16 %v455, %v454
        %v484 = vpack.c.bf16 %v457, %v456
        %v485 = vpack.c.bf16 %v459, %v458
        %v486 = vpack.c.bf16 %v461, %v460
        %v487 = vpack.c.bf16 %v463, %v462
        %v488 = vpack.c.bf16 %v465, %v464
        %v489 = vpack.c.bf16 %v467, %v466
        %v490 = vpack.c.bf16 %v469, %v468
        %v491 = vpack.c.bf16 %v471, %v470
        %v492 = vpack.c.bf16 %v473, %v472
        %v493 = vpack.c.bf16 %v475, %v474
        %v494 = vpack.c.bf16 %v477, %v476
        %v495 = vpack.c.bf16 %v479, %v478
        %v496 = vld [vmem:[#allocation2 + $0x2] sm:$0xff]
        %v497 = vld [vmem:[#allocation2 + $0xa] sm:$0xff]
        %v498 = vld [vmem:[#allocation2 + $0x1a] sm:$0xff]
        %v499 = vld [vmem:[#allocation2 + $0x22] sm:$0xff]
        %v500 = vld [vmem:[#allocation2 + $0x32] sm:$0xff]
        %v501 = vld [vmem:[#allocation2 + $0x3a] sm:$0xff]
        %v502 = vld [vmem:[#allocation2 + $0x4a] sm:$0xff]
        %v503 = vld [vmem:[#allocation2 + $0x52] sm:$0xff]
        %v504 = vld [vmem:[#allocation2 + $0x62] sm:$0xff]
        %v505 = vld [vmem:[#allocation2 + $0x6a] sm:$0xff]
        %v506 = vld [vmem:[#allocation2 + $0x7a] sm:$0xff]
        %v507 = vld [vmem:[#allocation2 + $0x82] sm:$0xff]
        %v508 = vld [vmem:[#allocation2 + $0x92] sm:$0xff]
        %v509 = vld [vmem:[#allocation2 + $0x9a] sm:$0xff]
        %v510 = vld [vmem:[#allocation2 + $0xaa] sm:$0xff]
        %v511 = vld [vmem:[#allocation2 + $0xb2] sm:$0xff]
        %v512 = vld [vmem:[#allocation2 + $0xc2] sm:$0xff]
        %v513 = vld [vmem:[#allocation2 + $0xca] sm:$0xff]
        %v514 = vld [vmem:[#allocation2 + $0xda] sm:$0xff]
        %v515 = vld [vmem:[#allocation2 + $0xe2] sm:$0xff]
        %v516 = vld [vmem:[#allocation2 + $0xf2] sm:$0xff]
        %v517 = vld [vmem:[#allocation2 + $0xfa] sm:$0xff]
        %v518 = vld [vmem:[#allocation2 + $0x10a] sm:$0xff]
        %v519 = vld [vmem:[#allocation2 + $0x112] sm:$0xff]
        %v520 = vld [vmem:[#allocation2 + $0x122] sm:$0xff]
        %v521 = vld [vmem:[#allocation2 + $0x12a] sm:$0xff]
        %v522 = vld [vmem:[#allocation2 + $0x13a] sm:$0xff]
        %v523 = vld [vmem:[#allocation2 + $0x142] sm:$0xff]
        %v524 = vld [vmem:[#allocation2 + $0x152] sm:$0xff]
        %v525 = vld [vmem:[#allocation2 + $0x15a] sm:$0xff]
        %v526 = vld [vmem:[#allocation2 + $0x16a] sm:$0xff]
        %v527 = vld [vmem:[#allocation2 + $0x172] sm:$0xff]
        %v528 = vpack.c.bf16 %v497, %v496
        %v529 = vpack.c.bf16 %v499, %v498
        %v530 = vpack.c.bf16 %v501, %v500
        %v531 = vpack.c.bf16 %v503, %v502
        %v532 = vpack.c.bf16 %v505, %v504
        %v533 = vpack.c.bf16 %v507, %v506
        %v534 = vpack.c.bf16 %v509, %v508
        %v535 = vpack.c.bf16 %v511, %v510
        %v536 = vpack.c.bf16 %v513, %v512
        %v537 = vpack.c.bf16 %v515, %v514
        %v538 = vpack.c.bf16 %v517, %v516
        %v539 = vpack.c.bf16 %v519, %v518
        %v540 = vpack.c.bf16 %v521, %v520
        %v541 = vpack.c.bf16 %v523, %v522
        %v542 = vpack.c.bf16 %v525, %v524
        %v543 = vpack.c.bf16 %v527, %v526
        %v544 = vld [vmem:[%s366] sm:$0xff]
        %v545 = vld [vmem:[%s366 + $0x8] sm:$0xff]
        %v546 = vld [vmem:[%s366 + $0x18] sm:$0xff]
        %v547 = vld [vmem:[%s366 + $0x20] sm:$0xff]
        %v548 = vld [vmem:[%s366 + $0x30] sm:$0xff]
        %v549 = vld [vmem:[%s366 + $0x38] sm:$0xff]
        %v550 = vld [vmem:[%s366 + $0x48] sm:$0xff]
        %v551 = vld [vmem:[%s366 + $0x50] sm:$0xff]
        %v552 = vld [vmem:[%s366 + $0x60] sm:$0xff]
        %v553 = vld [vmem:[%s366 + $0x68] sm:$0xff]
        %v554 = vld [vmem:[%s366 + $0x78] sm:$0xff]
        %v555 = vld [vmem:[%s366 + $0x80] sm:$0xff]
        %v556 = vld [vmem:[%s366 + $0x90] sm:$0xff]
        %v557 = vld [vmem:[%s366 + $0x98] sm:$0xff]
        %v558 = vld [vmem:[%s366 + $0xa8] sm:$0xff]
        %v559 = vld [vmem:[%s366 + $0xb0] sm:$0xff]
        %v560 = vld [vmem:[%s366 + $0xc0] sm:$0xff]
        %v561 = vld [vmem:[%s366 + $0xc8] sm:$0xff]
        %v562 = vld [vmem:[%s366 + $0xd8] sm:$0xff]
        %v563 = vld [vmem:[%s366 + $0xe0] sm:$0xff]
        %v564 = vld [vmem:[%s366 + $0xf0] sm:$0xff]
        %v565 = vld [vmem:[%s366 + $0xf8] sm:$0xff]
        %v566 = vld [vmem:[%s366 + $0x108] sm:$0xff]
        %v567 = vld [vmem:[%s366 + $0x110] sm:$0xff]
        %v568 = vld [vmem:[%s366 + $0x120] sm:$0xff]
        %v569 = vld [vmem:[%s366 + $0x128] sm:$0xff]
        %v570 = vld [vmem:[%s366 + $0x138] sm:$0xff]
        %v571 = vld [vmem:[%s366 + $0x140] sm:$0xff]
        %v572 = vld [vmem:[%s366 + $0x150] sm:$0xff]
        %v573 = vld [vmem:[%s366 + $0x158] sm:$0xff]
        %v574 = vld [vmem:[%s366 + $0x168] sm:$0xff]
        %v575 = vld [vmem:[%s366 + $0x170] sm:$0xff]
        %v576 = vpack.c.bf16 %v545, %v544
        %v577 = vpack.c.bf16 %v547, %v546
        %v578 = vpack.c.bf16 %v549, %v548
        %v579 = vpack.c.bf16 %v551, %v550
        %v580 = vpack.c.bf16 %v553, %v552
        %v581 = vpack.c.bf16 %v555, %v554
        %v582 = vpack.c.bf16 %v557, %v556
        %v583 = vpack.c.bf16 %v559, %v558
        %v584 = vpack.c.bf16 %v561, %v560
        %v585 = vpack.c.bf16 %v563, %v562
        %v586 = vpack.c.bf16 %v565, %v564
        %v587 = vpack.c.bf16 %v567, %v566
        %v588 = vpack.c.bf16 %v569, %v568
        %v589 = vpack.c.bf16 %v571, %v570
        %v590 = vpack.c.bf16 %v573, %v572
        %v591 = vpack.c.bf16 %v575, %v574
        %v592 = vld [vmem:[%s366 + $0x1] sm:$0xff]
        %v593 = vld [vmem:[%s366 + $0x9] sm:$0xff]
        %v594 = vld [vmem:[%s366 + $0x19] sm:$0xff]
        %v595 = vld [vmem:[%s366 + $0x21] sm:$0xff]
        %v596 = vld [vmem:[%s366 + $0x31] sm:$0xff]
        %v597 = vld [vmem:[%s366 + $0x39] sm:$0xff]
        %v598 = vld [vmem:[%s366 + $0x49] sm:$0xff]
        %v599 = vld [vmem:[%s366 + $0x51] sm:$0xff]
        %v600 = vld [vmem:[%s366 + $0x61] sm:$0xff]
        %v601 = vld [vmem:[%s366 + $0x69] sm:$0xff]
        %v602 = vld [vmem:[%s366 + $0x79] sm:$0xff]
        %v603 = vld [vmem:[%s366 + $0x81] sm:$0xff]
        %v604 = vld [vmem:[%s366 + $0x91] sm:$0xff]
        %v605 = vld [vmem:[%s366 + $0x99] sm:$0xff]
        %v606 = vld [vmem:[%s366 + $0xa9] sm:$0xff]
        %v607 = vld [vmem:[%s366 + $0xb1] sm:$0xff]
        %v608 = vld [vmem:[%s366 + $0xc1] sm:$0xff]
        %v609 = vld [vmem:[%s366 + $0xc9] sm:$0xff]
        %v610 = vld [vmem:[%s366 + $0xd9] sm:$0xff]
        %v611 = vld [vmem:[%s366 + $0xe1] sm:$0xff]
        %v612 = vld [vmem:[%s366 + $0xf1] sm:$0xff]
        %v613 = vld [vmem:[%s366 + $0xf9] sm:$0xff]
        %v614 = vld [vmem:[%s366 + $0x109] sm:$0xff]
        %v615 = vld [vmem:[%s366 + $0x111] sm:$0xff]
        %v616 = vld [vmem:[%s366 + $0x121] sm:$0xff]
        %v617 = vld [vmem:[%s366 + $0x129] sm:$0xff]
        %v618 = vld [vmem:[%s366 + $0x139] sm:$0xff]
        %v619 = vld [vmem:[%s366 + $0x141] sm:$0xff]
        %v620 = vld [vmem:[%s366 + $0x151] sm:$0xff]
        %v621 = vld [vmem:[%s366 + $0x159] sm:$0xff]
        %v622 = vld [vmem:[%s366 + $0x169] sm:$0xff]
        %v623 = vld [vmem:[%s366 + $0x171] sm:$0xff]
        %v624 = vpack.c.bf16 %v593, %v592
        %v625 = vpack.c.bf16 %v595, %v594
        %v626 = vpack.c.bf16 %v597, %v596
        %v627 = vpack.c.bf16 %v599, %v598
        %v628 = vpack.c.bf16 %v601, %v600
        %v629 = vpack.c.bf16 %v603, %v602
        %v630 = vpack.c.bf16 %v605, %v604
        %v631 = vpack.c.bf16 %v607, %v606
        %v632 = vpack.c.bf16 %v609, %v608
        %v633 = vpack.c.bf16 %v611, %v610
        %v634 = vpack.c.bf16 %v613, %v612
        %v635 = vpack.c.bf16 %v615, %v614
        %v636 = vpack.c.bf16 %v617, %v616
        %v637 = vpack.c.bf16 %v619, %v618
        %v638 = vpack.c.bf16 %v621, %v620
        %v639 = vpack.c.bf16 %v623, %v622
        %v640 = vld [vmem:[%s366 + $0x2] sm:$0xff]
        %v641 = vld [vmem:[%s366 + $0xa] sm:$0xff]
        %v642 = vld [vmem:[%s366 + $0x1a] sm:$0xff]
        %v643 = vld [vmem:[%s366 + $0x22] sm:$0xff]
        %v644 = vld [vmem:[%s366 + $0x32] sm:$0xff]
        %v645 = vld [vmem:[%s366 + $0x3a] sm:$0xff]
        %v646 = vld [vmem:[%s366 + $0x4a] sm:$0xff]
        %v647 = vld [vmem:[%s366 + $0x52] sm:$0xff]
        %v648 = vld [vmem:[%s366 + $0x62] sm:$0xff]
        %v649 = vld [vmem:[%s366 + $0x6a] sm:$0xff]
        %v650 = vld [vmem:[%s366 + $0x7a] sm:$0xff]
        %v651 = vld [vmem:[%s366 + $0x82] sm:$0xff]
        %v652 = vld [vmem:[%s366 + $0x92] sm:$0xff]
        %v653 = vld [vmem:[%s366 + $0x9a] sm:$0xff]
        %v654 = vld [vmem:[%s366 + $0xaa] sm:$0xff]
        %v655 = vld [vmem:[%s366 + $0xb2] sm:$0xff]
        %v656 = vld [vmem:[%s366 + $0xc2] sm:$0xff]
        %v657 = vld [vmem:[%s366 + $0xca] sm:$0xff]
        %v658 = vld [vmem:[%s366 + $0xda] sm:$0xff]
        %v659 = vld [vmem:[%s366 + $0xe2] sm:$0xff]
        %v660 = vld [vmem:[%s366 + $0xf2] sm:$0xff]
        %v661 = vld [vmem:[%s366 + $0xfa] sm:$0xff]
        %v662 = vld [vmem:[%s366 + $0x10a] sm:$0xff]
        %v663 = vld [vmem:[%s366 + $0x112] sm:$0xff]
        %v664 = vld [vmem:[%s366 + $0x122] sm:$0xff]
        %v665 = vld [vmem:[%s366 + $0x12a] sm:$0xff]
        %v666 = vld [vmem:[%s366 + $0x13a] sm:$0xff]
        %v667 = vld [vmem:[%s366 + $0x142] sm:$0xff]
        %v668 = vld [vmem:[%s366 + $0x152] sm:$0xff]
        %v669 = vld [vmem:[%s366 + $0x15a] sm:$0xff]
        %v670 = vld [vmem:[%s366 + $0x16a] sm:$0xff]
        %v671 = vld [vmem:[%s366 + $0x172] sm:$0xff]
        %v672 = vpack.c.bf16 %v641, %v640
        %v673 = vpack.c.bf16 %v643, %v642
        %v674 = vpack.c.bf16 %v645, %v644
        %v675 = vpack.c.bf16 %v647, %v646
        %v676 = vpack.c.bf16 %v649, %v648
        %v677 = vpack.c.bf16 %v651, %v650
        %v678 = vpack.c.bf16 %v653, %v652
        %v679 = vpack.c.bf16 %v655, %v654
        %v680 = vpack.c.bf16 %v657, %v656
        %v681 = vpack.c.bf16 %v659, %v658
        %v682 = vpack.c.bf16 %v661, %v660
        %v683 = vpack.c.bf16 %v663, %v662
        %v684 = vpack.c.bf16 %v665, %v664
        %v685 = vpack.c.bf16 %v667, %v666
        %v686 = vpack.c.bf16 %v669, %v668
        %v687 = vpack.c.bf16 %v671, %v670
        %s688 = scalar_lea.vmem [#allocation2], 48
        %v689 = vld [vmem:[%s688] sm:$0xff]
        %v690 = vld [vmem:[%s688 + $0x8] sm:$0xff]
        %v691 = vld [vmem:[%s688 + $0x18] sm:$0xff]
        %v692 = vld [vmem:[%s688 + $0x20] sm:$0xff]
        %v693 = vld [vmem:[%s688 + $0x30] sm:$0xff]
        %v694 = vld [vmem:[%s688 + $0x38] sm:$0xff]
        %v695 = vld [vmem:[%s688 + $0x48] sm:$0xff]
        %v696 = vld [vmem:[%s688 + $0x50] sm:$0xff]
        %v697 = vld [vmem:[%s688 + $0x60] sm:$0xff]
        %v698 = vld [vmem:[%s688 + $0x68] sm:$0xff]
        %v699 = vld [vmem:[%s688 + $0x78] sm:$0xff]
        %v700 = vld [vmem:[%s688 + $0x80] sm:$0xff]
        %v701 = vld [vmem:[%s688 + $0x90] sm:$0xff]
        %v702 = vld [vmem:[%s688 + $0x98] sm:$0xff]
        %v703 = vld [vmem:[%s688 + $0xa8] sm:$0xff]
        %v704 = vld [vmem:[%s688 + $0xb0] sm:$0xff]
        %v705 = vld [vmem:[%s688 + $0xc0] sm:$0xff]
        %v706 = vld [vmem:[%s688 + $0xc8] sm:$0xff]
        %v707 = vld [vmem:[%s688 + $0xd8] sm:$0xff]
        %v708 = vld [vmem:[%s688 + $0xe0] sm:$0xff]
        %v709 = vld [vmem:[%s688 + $0xf0] sm:$0xff]
        %v710 = vld [vmem:[%s688 + $0xf8] sm:$0xff]
        %v711 = vld [vmem:[%s688 + $0x108] sm:$0xff]
        %v712 = vld [vmem:[%s688 + $0x110] sm:$0xff]
        %v713 = vld [vmem:[%s688 + $0x120] sm:$0xff]
        %v714 = vld [vmem:[%s688 + $0x128] sm:$0xff]
        %v715 = vld [vmem:[%s688 + $0x138] sm:$0xff]
        %v716 = vld [vmem:[%s688 + $0x140] sm:$0xff]
        %v717 = vld [vmem:[%s688 + $0x150] sm:$0xff]
        %v718 = vld [vmem:[%s688 + $0x158] sm:$0xff]
        %v719 = vld [vmem:[%s688 + $0x168] sm:$0xff]
        %v720 = vld [vmem:[%s688 + $0x170] sm:$0xff]
        %v721 = vpack.c.bf16 %v690, %v689
        %v722 = vpack.c.bf16 %v692, %v691
        %v723 = vpack.c.bf16 %v694, %v693
        %v724 = vpack.c.bf16 %v696, %v695
        %v725 = vpack.c.bf16 %v698, %v697
        %v726 = vpack.c.bf16 %v700, %v699
        %v727 = vpack.c.bf16 %v702, %v701
        %v728 = vpack.c.bf16 %v704, %v703
        %v729 = vpack.c.bf16 %v706, %v705
        %v730 = vpack.c.bf16 %v708, %v707
        %v731 = vpack.c.bf16 %v710, %v709
        %v732 = vpack.c.bf16 %v712, %v711
        %v733 = vpack.c.bf16 %v714, %v713
        %v734 = vpack.c.bf16 %v716, %v715
        %v735 = vpack.c.bf16 %v718, %v717
        %v736 = vpack.c.bf16 %v720, %v719
        %v737 = vld [vmem:[%s688 + $0x1] sm:$0xff]
        %v738 = vld [vmem:[%s688 + $0x9] sm:$0xff]
        %v739 = vld [vmem:[%s688 + $0x19] sm:$0xff]
        %v740 = vld [vmem:[%s688 + $0x21] sm:$0xff]
        %v741 = vld [vmem:[%s688 + $0x31] sm:$0xff]
        %v742 = vld [vmem:[%s688 + $0x39] sm:$0xff]
        %v743 = vld [vmem:[%s688 + $0x49] sm:$0xff]
        %v744 = vld [vmem:[%s688 + $0x51] sm:$0xff]
        %v745 = vld [vmem:[%s688 + $0x61] sm:$0xff]
        %v746 = vld [vmem:[%s688 + $0x69] sm:$0xff]
        %v747 = vld [vmem:[%s688 + $0x79] sm:$0xff]
        %v748 = vld [vmem:[%s688 + $0x81] sm:$0xff]
        %v749 = vld [vmem:[%s688 + $0x91] sm:$0xff]
        %v750 = vld [vmem:[%s688 + $0x99] sm:$0xff]
        %v751 = vld [vmem:[%s688 + $0xa9] sm:$0xff]
        %v752 = vld [vmem:[%s688 + $0xb1] sm:$0xff]
        %v753 = vld [vmem:[%s688 + $0xc1] sm:$0xff]
        %v754 = vld [vmem:[%s688 + $0xc9] sm:$0xff]
        %v755 = vld [vmem:[%s688 + $0xd9] sm:$0xff]
        %v756 = vld [vmem:[%s688 + $0xe1] sm:$0xff]
        %v757 = vld [vmem:[%s688 + $0xf1] sm:$0xff]
        %v758 = vld [vmem:[%s688 + $0xf9] sm:$0xff]
        %v759 = vld [vmem:[%s688 + $0x109] sm:$0xff]
        %v760 = vld [vmem:[%s688 + $0x111] sm:$0xff]
        %v761 = vld [vmem:[%s688 + $0x121] sm:$0xff]
        %v762 = vld [vmem:[%s688 + $0x129] sm:$0xff]
        %v763 = vld [vmem:[%s688 + $0x139] sm:$0xff]
        %v764 = vld [vmem:[%s688 + $0x141] sm:$0xff]
        %v765 = vld [vmem:[%s688 + $0x151] sm:$0xff]
        %v766 = vld [vmem:[%s688 + $0x159] sm:$0xff]
        %v767 = vld [vmem:[%s688 + $0x169] sm:$0xff]
        %v768 = vld [vmem:[%s688 + $0x171] sm:$0xff]
        %v769 = vpack.c.bf16 %v738, %v737
        %v770 = vpack.c.bf16 %v740, %v739
        %v771 = vpack.c.bf16 %v742, %v741
        %v772 = vpack.c.bf16 %v744, %v743
        %v773 = vpack.c.bf16 %v746, %v745
        %v774 = vpack.c.bf16 %v748, %v747
        %v775 = vpack.c.bf16 %v750, %v749
        %v776 = vpack.c.bf16 %v752, %v751
        %v777 = vpack.c.bf16 %v754, %v753
        %v778 = vpack.c.bf16 %v756, %v755
        %v779 = vpack.c.bf16 %v758, %v757
        %v780 = vpack.c.bf16 %v760, %v759
        %v781 = vpack.c.bf16 %v762, %v761
        %v782 = vpack.c.bf16 %v764, %v763
        %v783 = vpack.c.bf16 %v766, %v765
        %v784 = vpack.c.bf16 %v768, %v767
        %v785 = vld [vmem:[%s688 + $0x2] sm:$0xff]
        %v786 = vld [vmem:[%s688 + $0xa] sm:$0xff]
        %v787 = vld [vmem:[%s688 + $0x1a] sm:$0xff]
        %v788 = vld [vmem:[%s688 + $0x22] sm:$0xff]
        %v789 = vld [vmem:[%s688 + $0x32] sm:$0xff]
        %v790 = vld [vmem:[%s688 + $0x3a] sm:$0xff]
        %v791 = vld [vmem:[%s688 + $0x4a] sm:$0xff]
        %v792 = vld [vmem:[%s688 + $0x52] sm:$0xff]
        %v793 = vld [vmem:[%s688 + $0x62] sm:$0xff]
        %v794 = vld [vmem:[%s688 + $0x6a] sm:$0xff]
        %v795 = vld [vmem:[%s688 + $0x7a] sm:$0xff]
        %v796 = vld [vmem:[%s688 + $0x82] sm:$0xff]
        %v797 = vld [vmem:[%s688 + $0x92] sm:$0xff]
        %v798 = vld [vmem:[%s688 + $0x9a] sm:$0xff]
        %v799 = vld [vmem:[%s688 + $0xaa] sm:$0xff]
        %v800 = vld [vmem:[%s688 + $0xb2] sm:$0xff]
        %v801 = vld [vmem:[%s688 + $0xc2] sm:$0xff]
        %v802 = vld [vmem:[%s688 + $0xca] sm:$0xff]
        %v803 = vld [vmem:[%s688 + $0xda] sm:$0xff]
        %v804 = vld [vmem:[%s688 + $0xe2] sm:$0xff]
        %v805 = vld [vmem:[%s688 + $0xf2] sm:$0xff]
        %v806 = vld [vmem:[%s688 + $0xfa] sm:$0xff]
        %v807 = vld [vmem:[%s688 + $0x10a] sm:$0xff]
        %v808 = vld [vmem:[%s688 + $0x112] sm:$0xff]
        %v809 = vld [vmem:[%s688 + $0x122] sm:$0xff]
        %v810 = vld [vmem:[%s688 + $0x12a] sm:$0xff]
        %v811 = vld [vmem:[%s688 + $0x13a] sm:$0xff]
        %v812 = vld [vmem:[%s688 + $0x142] sm:$0xff]
        %v813 = vld [vmem:[%s688 + $0x152] sm:$0xff]
        %v814 = vld [vmem:[%s688 + $0x15a] sm:$0xff]
        %v815 = vld [vmem:[%s688 + $0x16a] sm:$0xff]
        %v816 = vld [vmem:[%s688 + $0x172] sm:$0xff]
        %v817 = vpack.c.bf16 %v786, %v785
        %v818 = vpack.c.bf16 %v788, %v787
        %v819 = vpack.c.bf16 %v790, %v789
        %v820 = vpack.c.bf16 %v792, %v791
        %v821 = vpack.c.bf16 %v794, %v793
        %v822 = vpack.c.bf16 %v796, %v795
        %v823 = vpack.c.bf16 %v798, %v797
        %v824 = vpack.c.bf16 %v800, %v799
        %v825 = vpack.c.bf16 %v802, %v801
        %v826 = vpack.c.bf16 %v804, %v803
        %v827 = vpack.c.bf16 %v806, %v805
        %v828 = vpack.c.bf16 %v808, %v807
        %v829 = vpack.c.bf16 %v810, %v809
        %v830 = vpack.c.bf16 %v812, %v811
        %v831 = vpack.c.bf16 %v814, %v813
        %v832 = vpack.c.bf16 %v816, %v815
        %849 = vrot.lane.b32.xlu0 %v480, 64
        %v850 = vpop.permute.xlu0 %849
        %851 = vrot.lane.b32.xlu0 %v481, 64
        %v852 = vpop.permute.xlu0 %851
        %853 = vrot.lane.b32.xlu0 %v482, 64
        %v854 = vpop.permute.xlu0 %853
        %855 = vrot.lane.b32.xlu0 %v483, 64
        %v856 = vpop.permute.xlu0 %855
        %857 = vrot.lane.b32.xlu0 %v484, 64
        %v858 = vpop.permute.xlu0 %857
        %859 = vrot.lane.b32.xlu0 %v485, 64
        %v860 = vpop.permute.xlu0 %859
        %861 = vrot.lane.b32.xlu0 %v486, 64
        %v862 = vpop.permute.xlu0 %861
        %863 = vrot.lane.b32.xlu0 %v487, 64
        %v864 = vpop.permute.xlu0 %863
        %865 = vrot.lane.b32.xlu0 %v488, 64
        %v866 = vpop.permute.xlu0 %865
        %867 = vrot.lane.b32.xlu0 %v489, 64
        %v868 = vpop.permute.xlu0 %867
        %869 = vrot.lane.b32.xlu0 %v490, 64
        %v870 = vpop.permute.xlu0 %869
        %871 = vrot.lane.b32.xlu0 %v491, 64
        %v872 = vpop.permute.xlu0 %871
        %873 = vrot.lane.b32.xlu0 %v492, 64
        %v874 = vpop.permute.xlu0 %873
        %875 = vrot.lane.b32.xlu0 %v493, 64
        %v876 = vpop.permute.xlu0 %875
        %877 = vrot.lane.b32.xlu0 %v494, 64
        %v878 = vpop.permute.xlu0 %877
        %879 = vrot.lane.b32.xlu0 %v495, 64
        %v880 = vpop.permute.xlu0 %879
        %v883 = vsel %vm278, %v432, %v850
        %v886 = vsel %vm278, %v433, %v852
        %v889 = vsel %vm278, %v434, %v854
        %v892 = vsel %vm278, %v435, %v856
        %v895 = vsel %vm278, %v436, %v858
        %v898 = vsel %vm278, %v437, %v860
        %v901 = vsel %vm278, %v438, %v862
        %v904 = vsel %vm278, %v439, %v864
        %v907 = vsel %vm278, %v440, %v866
        %v910 = vsel %vm278, %v441, %v868
        %v913 = vsel %vm278, %v442, %v870
        %v916 = vsel %vm278, %v443, %v872
        %v919 = vsel %vm278, %v444, %v874
        %v922 = vsel %vm278, %v445, %v876
        %v925 = vsel %vm278, %v446, %v878
        %v928 = vsel %vm278, %v447, %v880
        %v945 = vunpack.c.l.b16 %v883
        %v946 = vunpack.c.h.b16 %v883
        %v947 = vunpack.c.l.b16 %v886
        %v948 = vunpack.c.h.b16 %v886
        %v949 = vunpack.c.l.b16 %v889
        %v950 = vunpack.c.h.b16 %v889
        %v951 = vunpack.c.l.b16 %v892
        %v952 = vunpack.c.h.b16 %v892
        %v953 = vunpack.c.l.b16 %v895
        %v954 = vunpack.c.h.b16 %v895
        %v955 = vunpack.c.l.b16 %v898
        %v956 = vunpack.c.h.b16 %v898
        %v957 = vunpack.c.l.b16 %v901
        %v958 = vunpack.c.h.b16 %v901
        %v959 = vunpack.c.l.b16 %v904
        %v960 = vunpack.c.h.b16 %v904
        %v961 = vunpack.c.l.b16 %v907
        %v962 = vunpack.c.h.b16 %v907
        %v963 = vunpack.c.l.b16 %v910
        %v964 = vunpack.c.h.b16 %v910
        %v965 = vunpack.c.l.b16 %v913
        %v966 = vunpack.c.h.b16 %v913
        %v967 = vunpack.c.l.b16 %v916
        %v968 = vunpack.c.h.b16 %v916
        %v969 = vunpack.c.l.b16 %v919
        %v970 = vunpack.c.h.b16 %v919
        %v971 = vunpack.c.l.b16 %v922
        %v972 = vunpack.c.h.b16 %v922
        %v973 = vunpack.c.l.b16 %v925
        %v974 = vunpack.c.h.b16 %v925
        %v975 = vunpack.c.l.b16 %v928
        %v976 = vunpack.c.h.b16 %v928
        %v977 = vpack.c.b16 %v945, %v945
        %v978 = vpack.c.b16 %v946, %v946
        %v979 = vpack.c.b16 %v947, %v947
        %v980 = vpack.c.b16 %v948, %v948
        %v981 = vpack.c.b16 %v949, %v949
        %v982 = vpack.c.b16 %v950, %v950
        %v983 = vpack.c.b16 %v951, %v951
        %v984 = vpack.c.b16 %v952, %v952
        %v985 = vpack.c.b16 %v953, %v953
        %v986 = vpack.c.b16 %v954, %v954
        %v987 = vpack.c.b16 %v955, %v955
        %v988 = vpack.c.b16 %v956, %v956
        %v989 = vpack.c.b16 %v957, %v957
        %v990 = vpack.c.b16 %v958, %v958
        %v991 = vpack.c.b16 %v959, %v959
        %v992 = vpack.c.b16 %v960, %v960
        %v993 = vpack.c.b16 %v961, %v961
        %v994 = vpack.c.b16 %v962, %v962
        %v995 = vpack.c.b16 %v963, %v963
        %v996 = vpack.c.b16 %v964, %v964
        %v997 = vpack.c.b16 %v965, %v965
        %v998 = vpack.c.b16 %v966, %v966
        %v999 = vpack.c.b16 %v967, %v967
        %v1000 = vpack.c.b16 %v968, %v968
        %v1001 = vpack.c.b16 %v969, %v969
        %v1002 = vpack.c.b16 %v970, %v970
        %v1003 = vpack.c.b16 %v971, %v971
        %v1004 = vpack.c.b16 %v972, %v972
        %v1005 = vpack.c.b16 %v973, %v973
        %v1006 = vpack.c.b16 %v974, %v974
        %v1007 = vpack.c.b16 %v975, %v975
        %v1008 = vpack.c.b16 %v976, %v976
        %1041 = vst [vmem:[#allocation3] sm:$0xf] %v977
        %1042 = vst [vmem:[#allocation3 + $0x14] sm:$0xf] %v978
        %1043 = vst [vmem:[#allocation3 + $0x28] sm:$0xf] %v979
        %1044 = vst [vmem:[#allocation3 + $0x3c] sm:$0xf] %v980
        %1045 = vst [vmem:[#allocation3 + $0x50] sm:$0xf] %v981
        %1046 = vst [vmem:[#allocation3 + $0x64] sm:$0xf] %v982
        %1047 = vst [vmem:[#allocation3 + $0x78] sm:$0xf] %v983
        %1048 = vst [vmem:[#allocation3 + $0x8c] sm:$0xf] %v984
        %1049 = vst [vmem:[#allocation3 + $0xa0] sm:$0xf] %v985
        %1050 = vst [vmem:[#allocation3 + $0xb4] sm:$0xf] %v986
        %1051 = vst [vmem:[#allocation3 + $0xc8] sm:$0xf] %v987
        %1052 = vst [vmem:[#allocation3 + $0xdc] sm:$0xf] %v988
        %1053 = vst [vmem:[#allocation3 + $0xf0] sm:$0xf] %v989
        %1054 = vst [vmem:[#allocation3 + $0x104] sm:$0xf] %v990
        %1055 = vst [vmem:[#allocation3 + $0x118] sm:$0xf] %v991
        %1056 = vst [vmem:[#allocation3 + $0x12c] sm:$0xf] %v992
        %1057 = vst [vmem:[#allocation3 + $0x140] sm:$0xf] %v993
        %1058 = vst [vmem:[#allocation3 + $0x154] sm:$0xf] %v994
        %1059 = vst [vmem:[#allocation3 + $0x168] sm:$0xf] %v995
        %1060 = vst [vmem:[#allocation3 + $0x17c] sm:$0xf] %v996
        %1061 = vst [vmem:[#allocation3 + $0x190] sm:$0xf] %v997
        %1062 = vst [vmem:[#allocation3 + $0x1a4] sm:$0xf] %v998
        %1063 = vst [vmem:[#allocation3 + $0x1b8] sm:$0xf] %v999
        %1064 = vst [vmem:[#allocation3 + $0x1cc] sm:$0xf] %v1000
        %1065 = vst [vmem:[#allocation3 + $0x1e0] sm:$0xf] %v1001
        %1066 = vst [vmem:[#allocation3 + $0x1f4] sm:$0xf] %v1002
        %1067 = vst [vmem:[#allocation3 + $0x208] sm:$0xf] %v1003
        %1068 = vst [vmem:[#allocation3 + $0x21c] sm:$0xf] %v1004
        %1069 = vst [vmem:[#allocation3 + $0x230] sm:$0xf] %v1005
        %1070 = vst [vmem:[#allocation3 + $0x244] sm:$0xf] %v1006
        %1071 = vst [vmem:[#allocation3 + $0x258] sm:$0xf] %v1007
        %1072 = vst [vmem:[#allocation3 + $0x26c] sm:$0xf] %v1008
        %1089 = vrot.lane.b32.xlu0 %v576, 64
        %v1090 = vpop.permute.xlu0 %1089
        %1091 = vrot.lane.b32.xlu0 %v577, 64
        %v1092 = vpop.permute.xlu0 %1091
        %1093 = vrot.lane.b32.xlu0 %v578, 64
        %v1094 = vpop.permute.xlu0 %1093
        %1095 = vrot.lane.b32.xlu0 %v579, 64
        %v1096 = vpop.permute.xlu0 %1095
        %1097 = vrot.lane.b32.xlu0 %v580, 64
        %v1098 = vpop.permute.xlu0 %1097
        %1099 = vrot.lane.b32.xlu0 %v581, 64
        %v1100 = vpop.permute.xlu0 %1099
        %1101 = vrot.lane.b32.xlu0 %v582, 64
        %v1102 = vpop.permute.xlu0 %1101
        %1103 = vrot.lane.b32.xlu0 %v583, 64
        %v1104 = vpop.permute.xlu0 %1103
        %1105 = vrot.lane.b32.xlu0 %v584, 64
        %v1106 = vpop.permute.xlu0 %1105
        %1107 = vrot.lane.b32.xlu0 %v585, 64
        %v1108 = vpop.permute.xlu0 %1107
        %1109 = vrot.lane.b32.xlu0 %v586, 64
        %v1110 = vpop.permute.xlu0 %1109
        %1111 = vrot.lane.b32.xlu0 %v587, 64
        %v1112 = vpop.permute.xlu0 %1111
        %1113 = vrot.lane.b32.xlu0 %v588, 64
        %v1114 = vpop.permute.xlu0 %1113
        %1115 = vrot.lane.b32.xlu0 %v589, 64
        %v1116 = vpop.permute.xlu0 %1115
        %1117 = vrot.lane.b32.xlu0 %v590, 64
        %v1118 = vpop.permute.xlu0 %1117
        %1119 = vrot.lane.b32.xlu0 %v591, 64
        %v1120 = vpop.permute.xlu0 %1119
        %v1123 = vsel %vm278, %v528, %v1090
        %v1126 = vsel %vm278, %v529, %v1092
        %v1129 = vsel %vm278, %v530, %v1094
        %v1132 = vsel %vm278, %v531, %v1096
        %v1135 = vsel %vm278, %v532, %v1098
        %v1138 = vsel %vm278, %v533, %v1100
        %v1141 = vsel %vm278, %v534, %v1102
        %v1144 = vsel %vm278, %v535, %v1104
        %v1147 = vsel %vm278, %v536, %v1106
        %v1150 = vsel %vm278, %v537, %v1108
        %v1153 = vsel %vm278, %v538, %v1110
        %v1156 = vsel %vm278, %v539, %v1112
        %v1159 = vsel %vm278, %v540, %v1114
        %v1162 = vsel %vm278, %v541, %v1116
        %v1165 = vsel %vm278, %v542, %v1118
        %v1168 = vsel %vm278, %v543, %v1120
        %v1185 = vunpack.c.l.b16 %v1123
        %v1186 = vunpack.c.h.b16 %v1123
        %v1187 = vunpack.c.l.b16 %v1126
        %v1188 = vunpack.c.h.b16 %v1126
        %v1189 = vunpack.c.l.b16 %v1129
        %v1190 = vunpack.c.h.b16 %v1129
        %v1191 = vunpack.c.l.b16 %v1132
        %v1192 = vunpack.c.h.b16 %v1132
        %v1193 = vunpack.c.l.b16 %v1135
        %v1194 = vunpack.c.h.b16 %v1135
        %v1195 = vunpack.c.l.b16 %v1138
        %v1196 = vunpack.c.h.b16 %v1138
        %v1197 = vunpack.c.l.b16 %v1141
        %v1198 = vunpack.c.h.b16 %v1141
        %v1199 = vunpack.c.l.b16 %v1144
        %v1200 = vunpack.c.h.b16 %v1144
        %v1201 = vunpack.c.l.b16 %v1147
        %v1202 = vunpack.c.h.b16 %v1147
        %v1203 = vunpack.c.l.b16 %v1150
        %v1204 = vunpack.c.h.b16 %v1150
        %v1205 = vunpack.c.l.b16 %v1153
        %v1206 = vunpack.c.h.b16 %v1153
        %v1207 = vunpack.c.l.b16 %v1156
        %v1208 = vunpack.c.h.b16 %v1156
        %v1209 = vunpack.c.l.b16 %v1159
        %v1210 = vunpack.c.h.b16 %v1159
        %v1211 = vunpack.c.l.b16 %v1162
        %v1212 = vunpack.c.h.b16 %v1162
        %v1213 = vunpack.c.l.b16 %v1165
        %v1214 = vunpack.c.h.b16 %v1165
        %v1215 = vunpack.c.l.b16 %v1168
        %v1216 = vunpack.c.h.b16 %v1168
        %v1217 = vpack.c.b16 %v1185, %v1185
        %v1218 = vpack.c.b16 %v1186, %v1186
        %v1219 = vpack.c.b16 %v1187, %v1187
        %v1220 = vpack.c.b16 %v1188, %v1188
        %v1221 = vpack.c.b16 %v1189, %v1189
        %v1222 = vpack.c.b16 %v1190, %v1190
        %v1223 = vpack.c.b16 %v1191, %v1191
        %v1224 = vpack.c.b16 %v1192, %v1192
        %v1225 = vpack.c.b16 %v1193, %v1193
        %v1226 = vpack.c.b16 %v1194, %v1194
        %v1227 = vpack.c.b16 %v1195, %v1195
        %v1228 = vpack.c.b16 %v1196, %v1196
        %v1229 = vpack.c.b16 %v1197, %v1197
        %v1230 = vpack.c.b16 %v1198, %v1198
        %v1231 = vpack.c.b16 %v1199, %v1199
        %v1232 = vpack.c.b16 %v1200, %v1200
        %v1233 = vpack.c.b16 %v1201, %v1201
        %v1234 = vpack.c.b16 %v1202, %v1202
        %v1235 = vpack.c.b16 %v1203, %v1203
        %v1236 = vpack.c.b16 %v1204, %v1204
        %v1237 = vpack.c.b16 %v1205, %v1205
        %v1238 = vpack.c.b16 %v1206, %v1206
        %v1239 = vpack.c.b16 %v1207, %v1207
        %v1240 = vpack.c.b16 %v1208, %v1208
        %v1241 = vpack.c.b16 %v1209, %v1209
        %v1242 = vpack.c.b16 %v1210, %v1210
        %v1243 = vpack.c.b16 %v1211, %v1211
        %v1244 = vpack.c.b16 %v1212, %v1212
        %v1245 = vpack.c.b16 %v1213, %v1213
        %v1246 = vpack.c.b16 %v1214, %v1214
        %v1247 = vpack.c.b16 %v1215, %v1215
        %v1248 = vpack.c.b16 %v1216, %v1216
        %1281 = vst [vmem:[#allocation3 + $0x4] sm:$0xf] %v1217
        %1282 = vst [vmem:[#allocation3 + $0x18] sm:$0xf] %v1218
        %1283 = vst [vmem:[#allocation3 + $0x2c] sm:$0xf] %v1219
        %1284 = vst [vmem:[#allocation3 + $0x40] sm:$0xf] %v1220
        %1285 = vst [vmem:[#allocation3 + $0x54] sm:$0xf] %v1221
        %1286 = vst [vmem:[#allocation3 + $0x68] sm:$0xf] %v1222
        %1287 = vst [vmem:[#allocation3 + $0x7c] sm:$0xf] %v1223
        %1288 = vst [vmem:[#allocation3 + $0x90] sm:$0xf] %v1224
        %1289 = vst [vmem:[#allocation3 + $0xa4] sm:$0xf] %v1225
        %1290 = vst [vmem:[#allocation3 + $0xb8] sm:$0xf] %v1226
        %1291 = vst [vmem:[#allocation3 + $0xcc] sm:$0xf] %v1227
        %1292 = vst [vmem:[#allocation3 + $0xe0] sm:$0xf] %v1228
        %1293 = vst [vmem:[#allocation3 + $0xf4] sm:$0xf] %v1229
        %1294 = vst [vmem:[#allocation3 + $0x108] sm:$0xf] %v1230
        %1295 = vst [vmem:[#allocation3 + $0x11c] sm:$0xf] %v1231
        %1296 = vst [vmem:[#allocation3 + $0x130] sm:$0xf] %v1232
        %1297 = vst [vmem:[#allocation3 + $0x144] sm:$0xf] %v1233
        %1298 = vst [vmem:[#allocation3 + $0x158] sm:$0xf] %v1234
        %1299 = vst [vmem:[#allocation3 + $0x16c] sm:$0xf] %v1235
        %1300 = vst [vmem:[#allocation3 + $0x180] sm:$0xf] %v1236
        %1301 = vst [vmem:[#allocation3 + $0x194] sm:$0xf] %v1237
        %1302 = vst [vmem:[#allocation3 + $0x1a8] sm:$0xf] %v1238
        %1303 = vst [vmem:[#allocation3 + $0x1bc] sm:$0xf] %v1239
        %1304 = vst [vmem:[#allocation3 + $0x1d0] sm:$0xf] %v1240
        %1305 = vst [vmem:[#allocation3 + $0x1e4] sm:$0xf] %v1241
        %1306 = vst [vmem:[#allocation3 + $0x1f8] sm:$0xf] %v1242
        %1307 = vst [vmem:[#allocation3 + $0x20c] sm:$0xf] %v1243
        %1308 = vst [vmem:[#allocation3 + $0x220] sm:$0xf] %v1244
        %1309 = vst [vmem:[#allocation3 + $0x234] sm:$0xf] %v1245
        %1310 = vst [vmem:[#allocation3 + $0x248] sm:$0xf] %v1246
        %1311 = vst [vmem:[#allocation3 + $0x25c] sm:$0xf] %v1247
        %1312 = vst [vmem:[#allocation3 + $0x270] sm:$0xf] %v1248
        %1329 = vrot.lane.b32.xlu0 %v672, 64
        %v1330 = vpop.permute.xlu0 %1329
        %1331 = vrot.lane.b32.xlu0 %v673, 64
        %v1332 = vpop.permute.xlu0 %1331
        %1333 = vrot.lane.b32.xlu0 %v674, 64
        %v1334 = vpop.permute.xlu0 %1333
        %1335 = vrot.lane.b32.xlu0 %v675, 64
        %v1336 = vpop.permute.xlu0 %1335
        %1337 = vrot.lane.b32.xlu0 %v676, 64
        %v1338 = vpop.permute.xlu0 %1337
        %1339 = vrot.lane.b32.xlu0 %v677, 64
        %v1340 = vpop.permute.xlu0 %1339
        %1341 = vrot.lane.b32.xlu0 %v678, 64
        %v1342 = vpop.permute.xlu0 %1341
        %1343 = vrot.lane.b32.xlu0 %v679, 64
        %v1344 = vpop.permute.xlu0 %1343
        %1345 = vrot.lane.b32.xlu0 %v680, 64
        %v1346 = vpop.permute.xlu0 %1345
        %1347 = vrot.lane.b32.xlu0 %v681, 64
        %v1348 = vpop.permute.xlu0 %1347
        %1349 = vrot.lane.b32.xlu0 %v682, 64
        %v1350 = vpop.permute.xlu0 %1349
        %1351 = vrot.lane.b32.xlu0 %v683, 64
        %v1352 = vpop.permute.xlu0 %1351
        %1353 = vrot.lane.b32.xlu0 %v684, 64
        %v1354 = vpop.permute.xlu0 %1353
        %1355 = vrot.lane.b32.xlu0 %v685, 64
        %v1356 = vpop.permute.xlu0 %1355
        %1357 = vrot.lane.b32.xlu0 %v686, 64
        %v1358 = vpop.permute.xlu0 %1357
        %1359 = vrot.lane.b32.xlu0 %v687, 64
        %v1360 = vpop.permute.xlu0 %1359
        %v1363 = vsel %vm278, %v624, %v1330
        %v1366 = vsel %vm278, %v625, %v1332
        %v1369 = vsel %vm278, %v626, %v1334
        %v1372 = vsel %vm278, %v627, %v1336
        %v1375 = vsel %vm278, %v628, %v1338
        %v1378 = vsel %vm278, %v629, %v1340
        %v1381 = vsel %vm278, %v630, %v1342
        %v1384 = vsel %vm278, %v631, %v1344
        %v1387 = vsel %vm278, %v632, %v1346
        %v1390 = vsel %vm278, %v633, %v1348
        %v1393 = vsel %vm278, %v634, %v1350
        %v1396 = vsel %vm278, %v635, %v1352
        %v1399 = vsel %vm278, %v636, %v1354
        %v1402 = vsel %vm278, %v637, %v1356
        %v1405 = vsel %vm278, %v638, %v1358
        %v1408 = vsel %vm278, %v639, %v1360
        %v1425 = vunpack.c.l.b16 %v1363
        %v1426 = vunpack.c.h.b16 %v1363
        %v1427 = vunpack.c.l.b16 %v1366
        %v1428 = vunpack.c.h.b16 %v1366
        %v1429 = vunpack.c.l.b16 %v1369
        %v1430 = vunpack.c.h.b16 %v1369
        %v1431 = vunpack.c.l.b16 %v1372
        %v1432 = vunpack.c.h.b16 %v1372
        %v1433 = vunpack.c.l.b16 %v1375
        %v1434 = vunpack.c.h.b16 %v1375
        %v1435 = vunpack.c.l.b16 %v1378
        %v1436 = vunpack.c.h.b16 %v1378
        %v1437 = vunpack.c.l.b16 %v1381
        %v1438 = vunpack.c.h.b16 %v1381
        %v1439 = vunpack.c.l.b16 %v1384
        %v1440 = vunpack.c.h.b16 %v1384
        %v1441 = vunpack.c.l.b16 %v1387
        %v1442 = vunpack.c.h.b16 %v1387
        %v1443 = vunpack.c.l.b16 %v1390
        %v1444 = vunpack.c.h.b16 %v1390
        %v1445 = vunpack.c.l.b16 %v1393
        %v1446 = vunpack.c.h.b16 %v1393
        %v1447 = vunpack.c.l.b16 %v1396
        %v1448 = vunpack.c.h.b16 %v1396
        %v1449 = vunpack.c.l.b16 %v1399
        %v1450 = vunpack.c.h.b16 %v1399
        %v1451 = vunpack.c.l.b16 %v1402
        %v1452 = vunpack.c.h.b16 %v1402
        %v1453 = vunpack.c.l.b16 %v1405
        %v1454 = vunpack.c.h.b16 %v1405
        %v1455 = vunpack.c.l.b16 %v1408
        %v1456 = vunpack.c.h.b16 %v1408
        %v1457 = vpack.c.b16 %v1425, %v1425
        %v1458 = vpack.c.b16 %v1426, %v1426
        %v1459 = vpack.c.b16 %v1427, %v1427
        %v1460 = vpack.c.b16 %v1428, %v1428
        %v1461 = vpack.c.b16 %v1429, %v1429
        %v1462 = vpack.c.b16 %v1430, %v1430
        %v1463 = vpack.c.b16 %v1431, %v1431
        %v1464 = vpack.c.b16 %v1432, %v1432
        %v1465 = vpack.c.b16 %v1433, %v1433
        %v1466 = vpack.c.b16 %v1434, %v1434
        %v1467 = vpack.c.b16 %v1435, %v1435
        %v1468 = vpack.c.b16 %v1436, %v1436
        %v1469 = vpack.c.b16 %v1437, %v1437
        %v1470 = vpack.c.b16 %v1438, %v1438
        %v1471 = vpack.c.b16 %v1439, %v1439
        %v1472 = vpack.c.b16 %v1440, %v1440
        %v1473 = vpack.c.b16 %v1441, %v1441
        %v1474 = vpack.c.b16 %v1442, %v1442
        %v1475 = vpack.c.b16 %v1443, %v1443
        %v1476 = vpack.c.b16 %v1444, %v1444
        %v1477 = vpack.c.b16 %v1445, %v1445
        %v1478 = vpack.c.b16 %v1446, %v1446
        %v1479 = vpack.c.b16 %v1447, %v1447
        %v1480 = vpack.c.b16 %v1448, %v1448
        %v1481 = vpack.c.b16 %v1449, %v1449
        %v1482 = vpack.c.b16 %v1450, %v1450
        %v1483 = vpack.c.b16 %v1451, %v1451
        %v1484 = vpack.c.b16 %v1452, %v1452
        %v1485 = vpack.c.b16 %v1453, %v1453
        %v1486 = vpack.c.b16 %v1454, %v1454
        %v1487 = vpack.c.b16 %v1455, %v1455
        %v1488 = vpack.c.b16 %v1456, %v1456
        %1521 = vst [vmem:[#allocation3 + $0x8] sm:$0xf] %v1457
        %1522 = vst [vmem:[#allocation3 + $0x1c] sm:$0xf] %v1458
        %1523 = vst [vmem:[#allocation3 + $0x30] sm:$0xf] %v1459
        %1524 = vst [vmem:[#allocation3 + $0x44] sm:$0xf] %v1460
        %1525 = vst [vmem:[#allocation3 + $0x58] sm:$0xf] %v1461
        %1526 = vst [vmem:[#allocation3 + $0x6c] sm:$0xf] %v1462
        %1527 = vst [vmem:[#allocation3 + $0x80] sm:$0xf] %v1463
        %1528 = vst [vmem:[#allocation3 + $0x94] sm:$0xf] %v1464
        %1529 = vst [vmem:[#allocation3 + $0xa8] sm:$0xf] %v1465
        %1530 = vst [vmem:[#allocation3 + $0xbc] sm:$0xf] %v1466
        %1531 = vst [vmem:[#allocation3 + $0xd0] sm:$0xf] %v1467
        %1532 = vst [vmem:[#allocation3 + $0xe4] sm:$0xf] %v1468
        %1533 = vst [vmem:[#allocation3 + $0xf8] sm:$0xf] %v1469
        %1534 = vst [vmem:[#allocation3 + $0x10c] sm:$0xf] %v1470
        %1535 = vst [vmem:[#allocation3 + $0x120] sm:$0xf] %v1471
        %1536 = vst [vmem:[#allocation3 + $0x134] sm:$0xf] %v1472
        %1537 = vst [vmem:[#allocation3 + $0x148] sm:$0xf] %v1473
        %1538 = vst [vmem:[#allocation3 + $0x15c] sm:$0xf] %v1474
        %1539 = vst [vmem:[#allocation3 + $0x170] sm:$0xf] %v1475
        %1540 = vst [vmem:[#allocation3 + $0x184] sm:$0xf] %v1476
        %1541 = vst [vmem:[#allocation3 + $0x198] sm:$0xf] %v1477
        %1542 = vst [vmem:[#allocation3 + $0x1ac] sm:$0xf] %v1478
        %1543 = vst [vmem:[#allocation3 + $0x1c0] sm:$0xf] %v1479
        %1544 = vst [vmem:[#allocation3 + $0x1d4] sm:$0xf] %v1480
        %1545 = vst [vmem:[#allocation3 + $0x1e8] sm:$0xf] %v1481
        %1546 = vst [vmem:[#allocation3 + $0x1fc] sm:$0xf] %v1482
        %1547 = vst [vmem:[#allocation3 + $0x210] sm:$0xf] %v1483
        %1548 = vst [vmem:[#allocation3 + $0x224] sm:$0xf] %v1484
        %1549 = vst [vmem:[#allocation3 + $0x238] sm:$0xf] %v1485
        %1550 = vst [vmem:[#allocation3 + $0x24c] sm:$0xf] %v1486
        %1551 = vst [vmem:[#allocation3 + $0x260] sm:$0xf] %v1487
        %1552 = vst [vmem:[#allocation3 + $0x274] sm:$0xf] %v1488
        %1569 = vrot.lane.b32.xlu0 %v769, 64
        %v1570 = vpop.permute.xlu0 %1569
        %1571 = vrot.lane.b32.xlu0 %v770, 64
        %v1572 = vpop.permute.xlu0 %1571
        %1573 = vrot.lane.b32.xlu0 %v771, 64
        %v1574 = vpop.permute.xlu0 %1573
        %1575 = vrot.lane.b32.xlu0 %v772, 64
        %v1576 = vpop.permute.xlu0 %1575
        %1577 = vrot.lane.b32.xlu0 %v773, 64
        %v1578 = vpop.permute.xlu0 %1577
        %1579 = vrot.lane.b32.xlu0 %v774, 64
        %v1580 = vpop.permute.xlu0 %1579
        %1581 = vrot.lane.b32.xlu0 %v775, 64
        %v1582 = vpop.permute.xlu0 %1581
        %1583 = vrot.lane.b32.xlu0 %v776, 64
        %v1584 = vpop.permute.xlu0 %1583
        %1585 = vrot.lane.b32.xlu0 %v777, 64
        %v1586 = vpop.permute.xlu0 %1585
        %1587 = vrot.lane.b32.xlu0 %v778, 64
        %v1588 = vpop.permute.xlu0 %1587
        %1589 = vrot.lane.b32.xlu0 %v779, 64
        %v1590 = vpop.permute.xlu0 %1589
        %1591 = vrot.lane.b32.xlu0 %v780, 64
        %v1592 = vpop.permute.xlu0 %1591
        %1593 = vrot.lane.b32.xlu0 %v781, 64
        %v1594 = vpop.permute.xlu0 %1593
        %1595 = vrot.lane.b32.xlu0 %v782, 64
        %v1596 = vpop.permute.xlu0 %1595
        %1597 = vrot.lane.b32.xlu0 %v783, 64
        %v1598 = vpop.permute.xlu0 %1597
        %1599 = vrot.lane.b32.xlu0 %v784, 64
        %v1600 = vpop.permute.xlu0 %1599
        %v1603 = vsel %vm278, %v721, %v1570
        %v1606 = vsel %vm278, %v722, %v1572
        %v1609 = vsel %vm278, %v723, %v1574
        %v1612 = vsel %vm278, %v724, %v1576
        %v1615 = vsel %vm278, %v725, %v1578
        %v1618 = vsel %vm278, %v726, %v1580
        %v1621 = vsel %vm278, %v727, %v1582
        %v1624 = vsel %vm278, %v728, %v1584
        %v1627 = vsel %vm278, %v729, %v1586
        %v1630 = vsel %vm278, %v730, %v1588
        %v1633 = vsel %vm278, %v731, %v1590
        %v1636 = vsel %vm278, %v732, %v1592
        %v1639 = vsel %vm278, %v733, %v1594
        %v1642 = vsel %vm278, %v734, %v1596
        %v1645 = vsel %vm278, %v735, %v1598
        %v1648 = vsel %vm278, %v736, %v1600
        %v1665 = vunpack.c.l.b16 %v1603
        %v1666 = vunpack.c.h.b16 %v1603
        %v1667 = vunpack.c.l.b16 %v1606
        %v1668 = vunpack.c.h.b16 %v1606
        %v1669 = vunpack.c.l.b16 %v1609
        %v1670 = vunpack.c.h.b16 %v1609
        %v1671 = vunpack.c.l.b16 %v1612
        %v1672 = vunpack.c.h.b16 %v1612
        %v1673 = vunpack.c.l.b16 %v1615
        %v1674 = vunpack.c.h.b16 %v1615
        %v1675 = vunpack.c.l.b16 %v1618
        %v1676 = vunpack.c.h.b16 %v1618
        %v1677 = vunpack.c.l.b16 %v1621
        %v1678 = vunpack.c.h.b16 %v1621
        %v1679 = vunpack.c.l.b16 %v1624
        %v1680 = vunpack.c.h.b16 %v1624
        %v1681 = vunpack.c.l.b16 %v1627
        %v1682 = vunpack.c.h.b16 %v1627
        %v1683 = vunpack.c.l.b16 %v1630
        %v1684 = vunpack.c.h.b16 %v1630
        %v1685 = vunpack.c.l.b16 %v1633
        %v1686 = vunpack.c.h.b16 %v1633
        %v1687 = vunpack.c.l.b16 %v1636
        %v1688 = vunpack.c.h.b16 %v1636
        %v1689 = vunpack.c.l.b16 %v1639
        %v1690 = vunpack.c.h.b16 %v1639
        %v1691 = vunpack.c.l.b16 %v1642
        %v1692 = vunpack.c.h.b16 %v1642
        %v1693 = vunpack.c.l.b16 %v1645
        %v1694 = vunpack.c.h.b16 %v1645
        %v1695 = vunpack.c.l.b16 %v1648
        %v1696 = vunpack.c.h.b16 %v1648
        %v1697 = vpack.c.b16 %v1665, %v1665
        %v1698 = vpack.c.b16 %v1666, %v1666
        %v1699 = vpack.c.b16 %v1667, %v1667
        %v1700 = vpack.c.b16 %v1668, %v1668
        %v1701 = vpack.c.b16 %v1669, %v1669
        %v1702 = vpack.c.b16 %v1670, %v1670
        %v1703 = vpack.c.b16 %v1671, %v1671
        %v1704 = vpack.c.b16 %v1672, %v1672
        %v1705 = vpack.c.b16 %v1673, %v1673
        %v1706 = vpack.c.b16 %v1674, %v1674
        %v1707 = vpack.c.b16 %v1675, %v1675
        %v1708 = vpack.c.b16 %v1676, %v1676
        %v1709 = vpack.c.b16 %v1677, %v1677
        %v1710 = vpack.c.b16 %v1678, %v1678
        %v1711 = vpack.c.b16 %v1679, %v1679
        %v1712 = vpack.c.b16 %v1680, %v1680
        %v1713 = vpack.c.b16 %v1681, %v1681
        %v1714 = vpack.c.b16 %v1682, %v1682
        %v1715 = vpack.c.b16 %v1683, %v1683
        %v1716 = vpack.c.b16 %v1684, %v1684
        %v1717 = vpack.c.b16 %v1685, %v1685
        %v1718 = vpack.c.b16 %v1686, %v1686
        %v1719 = vpack.c.b16 %v1687, %v1687
        %v1720 = vpack.c.b16 %v1688, %v1688
        %v1721 = vpack.c.b16 %v1689, %v1689
        %v1722 = vpack.c.b16 %v1690, %v1690
        %v1723 = vpack.c.b16 %v1691, %v1691
        %v1724 = vpack.c.b16 %v1692, %v1692
        %v1725 = vpack.c.b16 %v1693, %v1693
        %v1726 = vpack.c.b16 %v1694, %v1694
        %v1727 = vpack.c.b16 %v1695, %v1695
        %v1728 = vpack.c.b16 %v1696, %v1696
        %1761 = vst [vmem:[#allocation3 + $0xc] sm:$0xf] %v1697
        %1762 = vst [vmem:[#allocation3 + $0x20] sm:$0xf] %v1698
        %1763 = vst [vmem:[#allocation3 + $0x34] sm:$0xf] %v1699
        %1764 = vst [vmem:[#allocation3 + $0x48] sm:$0xf] %v1700
        %1765 = vst [vmem:[#allocation3 + $0x5c] sm:$0xf] %v1701
        %1766 = vst [vmem:[#allocation3 + $0x70] sm:$0xf] %v1702
        %1767 = vst [vmem:[#allocation3 + $0x84] sm:$0xf] %v1703
        %1768 = vst [vmem:[#allocation3 + $0x98] sm:$0xf] %v1704
        %1769 = vst [vmem:[#allocation3 + $0xac] sm:$0xf] %v1705
        %1770 = vst [vmem:[#allocation3 + $0xc0] sm:$0xf] %v1706
        %1771 = vst [vmem:[#allocation3 + $0xd4] sm:$0xf] %v1707
        %1772 = vst [vmem:[#allocation3 + $0xe8] sm:$0xf] %v1708
        %1773 = vst [vmem:[#allocation3 + $0xfc] sm:$0xf] %v1709
        %1774 = vst [vmem:[#allocation3 + $0x110] sm:$0xf] %v1710
        %1775 = vst [vmem:[#allocation3 + $0x124] sm:$0xf] %v1711
        %1776 = vst [vmem:[#allocation3 + $0x138] sm:$0xf] %v1712
        %1777 = vst [vmem:[#allocation3 + $0x14c] sm:$0xf] %v1713
        %1778 = vst [vmem:[#allocation3 + $0x160] sm:$0xf] %v1714
        %1779 = vst [vmem:[#allocation3 + $0x174] sm:$0xf] %v1715
        %1780 = vst [vmem:[#allocation3 + $0x188] sm:$0xf] %v1716
        %1781 = vst [vmem:[#allocation3 + $0x19c] sm:$0xf] %v1717
        %1782 = vst [vmem:[#allocation3 + $0x1b0] sm:$0xf] %v1718
        %1783 = vst [vmem:[#allocation3 + $0x1c4] sm:$0xf] %v1719
        %1784 = vst [vmem:[#allocation3 + $0x1d8] sm:$0xf] %v1720
        %1785 = vst [vmem:[#allocation3 + $0x1ec] sm:$0xf] %v1721
        %1786 = vst [vmem:[#allocation3 + $0x200] sm:$0xf] %v1722
        %1787 = vst [vmem:[#allocation3 + $0x214] sm:$0xf] %v1723
        %1788 = vst [vmem:[#allocation3 + $0x228] sm:$0xf] %v1724
        %1789 = vst [vmem:[#allocation3 + $0x23c] sm:$0xf] %v1725
        %1790 = vst [vmem:[#allocation3 + $0x250] sm:$0xf] %v1726
        %1791 = vst [vmem:[#allocation3 + $0x264] sm:$0xf] %v1727
        %1792 = vst [vmem:[#allocation3 + $0x278] sm:$0xf] %v1728
        %v1795 = vsel %vm278, %v817, 0
        %v1797 = vsel %vm278, %v818, 0
        %v1799 = vsel %vm278, %v819, 0
        %v1801 = vsel %vm278, %v820, 0
        %v1803 = vsel %vm278, %v821, 0
        %v1805 = vsel %vm278, %v822, 0
        %v1807 = vsel %vm278, %v823, 0
        %v1809 = vsel %vm278, %v824, 0
        %v1811 = vsel %vm278, %v825, 0
        %v1813 = vsel %vm278, %v826, 0
        %v1815 = vsel %vm278, %v827, 0
        %v1817 = vsel %vm278, %v828, 0
        %v1819 = vsel %vm278, %v829, 0
        %v1821 = vsel %vm278, %v830, 0
        %v1823 = vsel %vm278, %v831, 0
        %v1825 = vsel %vm278, %v832, 0
        %v1842 = vunpack.c.l.b16 %v1795
        %v1843 = vunpack.c.h.b16 %v1795
        %v1844 = vunpack.c.l.b16 %v1797
        %v1845 = vunpack.c.h.b16 %v1797
        %v1846 = vunpack.c.l.b16 %v1799
        %v1847 = vunpack.c.h.b16 %v1799
        %v1848 = vunpack.c.l.b16 %v1801
        %v1849 = vunpack.c.h.b16 %v1801
        %v1850 = vunpack.c.l.b16 %v1803
        %v1851 = vunpack.c.h.b16 %v1803
        %v1852 = vunpack.c.l.b16 %v1805
        %v1853 = vunpack.c.h.b16 %v1805
        %v1854 = vunpack.c.l.b16 %v1807
        %v1855 = vunpack.c.h.b16 %v1807
        %v1856 = vunpack.c.l.b16 %v1809
        %v1857 = vunpack.c.h.b16 %v1809
        %v1858 = vunpack.c.l.b16 %v1811
        %v1859 = vunpack.c.h.b16 %v1811
        %v1860 = vunpack.c.l.b16 %v1813
        %v1861 = vunpack.c.h.b16 %v1813
        %v1862 = vunpack.c.l.b16 %v1815
        %v1863 = vunpack.c.h.b16 %v1815
        %v1864 = vunpack.c.l.b16 %v1817
        %v1865 = vunpack.c.h.b16 %v1817
        %v1866 = vunpack.c.l.b16 %v1819
        %v1867 = vunpack.c.h.b16 %v1819
        %v1868 = vunpack.c.l.b16 %v1821
        %v1869 = vunpack.c.h.b16 %v1821
        %v1870 = vunpack.c.l.b16 %v1823
        %v1871 = vunpack.c.h.b16 %v1823
        %v1872 = vunpack.c.l.b16 %v1825
        %v1873 = vunpack.c.h.b16 %v1825
        %v1874 = vpack.c.b16 %v1842, %v1842
        %v1875 = vpack.c.b16 %v1843, %v1843
        %v1876 = vpack.c.b16 %v1844, %v1844
        %v1877 = vpack.c.b16 %v1845, %v1845
        %v1878 = vpack.c.b16 %v1846, %v1846
        %v1879 = vpack.c.b16 %v1847, %v1847
        %v1880 = vpack.c.b16 %v1848, %v1848
        %v1881 = vpack.c.b16 %v1849, %v1849
        %v1882 = vpack.c.b16 %v1850, %v1850
        %v1883 = vpack.c.b16 %v1851, %v1851
        %v1884 = vpack.c.b16 %v1852, %v1852
        %v1885 = vpack.c.b16 %v1853, %v1853
        %v1886 = vpack.c.b16 %v1854, %v1854
        %v1887 = vpack.c.b16 %v1855, %v1855
        %v1888 = vpack.c.b16 %v1856, %v1856
        %v1889 = vpack.c.b16 %v1857, %v1857
        %v1890 = vpack.c.b16 %v1858, %v1858
        %v1891 = vpack.c.b16 %v1859, %v1859
        %v1892 = vpack.c.b16 %v1860, %v1860
        %v1893 = vpack.c.b16 %v1861, %v1861
        %v1894 = vpack.c.b16 %v1862, %v1862
        %v1895 = vpack.c.b16 %v1863, %v1863
        %v1896 = vpack.c.b16 %v1864, %v1864
        %v1897 = vpack.c.b16 %v1865, %v1865
        %v1898 = vpack.c.b16 %v1866, %v1866
        %v1899 = vpack.c.b16 %v1867, %v1867
        %v1900 = vpack.c.b16 %v1868, %v1868
        %v1901 = vpack.c.b16 %v1869, %v1869
        %v1902 = vpack.c.b16 %v1870, %v1870
        %v1903 = vpack.c.b16 %v1871, %v1871
        %v1904 = vpack.c.b16 %v1872, %v1872
        %v1905 = vpack.c.b16 %v1873, %v1873
        %1938 = vst [vmem:[#allocation3 + $0x10] sm:$0xf] %v1874
        %1939 = vst [vmem:[#allocation3 + $0x24] sm:$0xf] %v1875
        %1940 = vst [vmem:[#allocation3 + $0x38] sm:$0xf] %v1876
        %1941 = vst [vmem:[#allocation3 + $0x4c] sm:$0xf] %v1877
        %1942 = vst [vmem:[#allocation3 + $0x60] sm:$0xf] %v1878
        %1943 = vst [vmem:[#allocation3 + $0x74] sm:$0xf] %v1879
        %1944 = vst [vmem:[#allocation3 + $0x88] sm:$0xf] %v1880
        %1945 = vst [vmem:[#allocation3 + $0x9c] sm:$0xf] %v1881
        %1946 = vst [vmem:[#allocation3 + $0xb0] sm:$0xf] %v1882
        %1947 = vst [vmem:[#allocation3 + $0xc4] sm:$0xf] %v1883
        %1948 = vst [vmem:[#allocation3 + $0xd8] sm:$0xf] %v1884
        %1949 = vst [vmem:[#allocation3 + $0xec] sm:$0xf] %v1885
        %1950 = vst [vmem:[#allocation3 + $0x100] sm:$0xf] %v1886
        %1951 = vst [vmem:[#allocation3 + $0x114] sm:$0xf] %v1887
        %1952 = vst [vmem:[#allocation3 + $0x128] sm:$0xf] %v1888
        %1953 = vst [vmem:[#allocation3 + $0x13c] sm:$0xf] %v1889
        %1954 = vst [vmem:[#allocation3 + $0x150] sm:$0xf] %v1890
        %1955 = vst [vmem:[#allocation3 + $0x164] sm:$0xf] %v1891
        %1956 = vst [vmem:[#allocation3 + $0x178] sm:$0xf] %v1892
        %1957 = vst [vmem:[#allocation3 + $0x18c] sm:$0xf] %v1893
        %1958 = vst [vmem:[#allocation3 + $0x1a0] sm:$0xf] %v1894
        %1959 = vst [vmem:[#allocation3 + $0x1b4] sm:$0xf] %v1895
        %1960 = vst [vmem:[#allocation3 + $0x1c8] sm:$0xf] %v1896
        %1961 = vst [vmem:[#allocation3 + $0x1dc] sm:$0xf] %v1897
        %1962 = vst [vmem:[#allocation3 + $0x1f0] sm:$0xf] %v1898
        %1963 = vst [vmem:[#allocation3 + $0x204] sm:$0xf] %v1899
        %1964 = vst [vmem:[#allocation3 + $0x218] sm:$0xf] %v1900
        %1965 = vst [vmem:[#allocation3 + $0x22c] sm:$0xf] %v1901
        %1966 = vst [vmem:[#allocation3 + $0x240] sm:$0xf] %v1902
        %1967 = vst [vmem:[#allocation3 + $0x254] sm:$0xf] %v1903
        %1968 = vst [vmem:[#allocation3 + $0x268] sm:$0xf] %v1904
        %1969 = vst [vmem:[#allocation3 + $0x27c] sm:$0xf] %v1905
        %v1970 = vld [vmem:[#allocation3] sm:$0xff]
        %v1971 = vld [vmem:[#allocation3 + $0x8] sm:$0xff]
        %v1972 = vld [vmem:[#allocation3 + $0x10] sm:$0xf]
        %v1973 = vld [vmem:[#allocation3 + $0x14] sm:$0xff]
        %v1974 = vld [vmem:[#allocation3 + $0x1c] sm:$0xff]
        %v1975 = vld [vmem:[#allocation3 + $0x24] sm:$0xf]
        %v1976 = vld [vmem:[#allocation3 + $0x28] sm:$0xff]
        %v1977 = vld [vmem:[#allocation3 + $0x30] sm:$0xff]
        %v1978 = vld [vmem:[#allocation3 + $0x38] sm:$0xf]
        %v1979 = vld [vmem:[#allocation3 + $0x3c] sm:$0xff]
        %v1980 = vld [vmem:[#allocation3 + $0x44] sm:$0xff]
        %v1981 = vld [vmem:[#allocation3 + $0x4c] sm:$0xf]
        %v1982 = vld [vmem:[#allocation3 + $0x50] sm:$0xff]
        %v1983 = vld [vmem:[#allocation3 + $0x58] sm:$0xff]
        %v1984 = vld [vmem:[#allocation3 + $0x60] sm:$0xf]
        %v1985 = vld [vmem:[#allocation3 + $0x64] sm:$0xff]
        %v1986 = vld [vmem:[#allocation3 + $0x6c] sm:$0xff]
        %v1987 = vld [vmem:[#allocation3 + $0x74] sm:$0xf]
        %v1988 = vld [vmem:[#allocation3 + $0x78] sm:$0xff]
        %v1989 = vld [vmem:[#allocation3 + $0x80] sm:$0xff]
        %v1990 = vld [vmem:[#allocation3 + $0x88] sm:$0xf]
        %v1991 = vld [vmem:[#allocation3 + $0x8c] sm:$0xff]
        %v1992 = vld [vmem:[#allocation3 + $0x94] sm:$0xff]
        %v1993 = vld [vmem:[#allocation3 + $0x9c] sm:$0xf]
        %v1994 = vld [vmem:[#allocation3 + $0xa0] sm:$0xff]
        %v1995 = vld [vmem:[#allocation3 + $0xa8] sm:$0xff]
        %v1996 = vld [vmem:[#allocation3 + $0xb0] sm:$0xf]
        %v1997 = vld [vmem:[#allocation3 + $0xb4] sm:$0xff]
        %v1998 = vld [vmem:[#allocation3 + $0xbc] sm:$0xff]
        %v1999 = vld [vmem:[#allocation3 + $0xc4] sm:$0xf]
        %v2000 = vld [vmem:[#allocation3 + $0xc8] sm:$0xff]
        %v2001 = vld [vmem:[#allocation3 + $0xd0] sm:$0xff]
        %v2002 = vld [vmem:[#allocation3 + $0xd8] sm:$0xf]
        %v2003 = vld [vmem:[#allocation3 + $0xdc] sm:$0xff]
        %v2004 = vld [vmem:[#allocation3 + $0xe4] sm:$0xff]
        %v2005 = vld [vmem:[#allocation3 + $0xec] sm:$0xf]
        %v2006 = vld [vmem:[#allocation3 + $0xf0] sm:$0xff]
        %v2007 = vld [vmem:[#allocation3 + $0xf8] sm:$0xff]
        %v2008 = vld [vmem:[#allocation3 + $0x100] sm:$0xf]
        %v2009 = vld [vmem:[#allocation3 + $0x104] sm:$0xff]
        %v2010 = vld [vmem:[#allocation3 + $0x10c] sm:$0xff]
        %v2011 = vld [vmem:[#allocation3 + $0x114] sm:$0xf]
        %v2012 = vld [vmem:[#allocation3 + $0x118] sm:$0xff]
        %v2013 = vld [vmem:[#allocation3 + $0x120] sm:$0xff]
        %v2014 = vld [vmem:[#allocation3 + $0x128] sm:$0xf]
        %v2015 = vld [vmem:[#allocation3 + $0x12c] sm:$0xff]
        %v2016 = vld [vmem:[#allocation3 + $0x134] sm:$0xff]
        %v2017 = vld [vmem:[#allocation3 + $0x13c] sm:$0xf]
        %v2018 = vld [vmem:[#allocation3 + $0x140] sm:$0xff]
        %v2019 = vld [vmem:[#allocation3 + $0x148] sm:$0xff]
        %v2020 = vld [vmem:[#allocation3 + $0x150] sm:$0xf]
        %v2021 = vld [vmem:[#allocation3 + $0x154] sm:$0xff]
        %v2022 = vld [vmem:[#allocation3 + $0x15c] sm:$0xff]
        %v2023 = vld [vmem:[#allocation3 + $0x164] sm:$0xf]
        %v2024 = vld [vmem:[#allocation3 + $0x168] sm:$0xff]
        %v2025 = vld [vmem:[#allocation3 + $0x170] sm:$0xff]
        %v2026 = vld [vmem:[#allocation3 + $0x178] sm:$0xf]
        %v2027 = vld [vmem:[#allocation3 + $0x17c] sm:$0xff]
        %v2028 = vld [vmem:[#allocation3 + $0x184] sm:$0xff]
        %v2029 = vld [vmem:[#allocation3 + $0x18c] sm:$0xf]
        %v2030 = vld [vmem:[#allocation3 + $0x190] sm:$0xff]
        %v2031 = vld [vmem:[#allocation3 + $0x198] sm:$0xff]
        %v2032 = vld [vmem:[#allocation3 + $0x1a0] sm:$0xf]
        %v2033 = vld [vmem:[#allocation3 + $0x1a4] sm:$0xff]
        %v2034 = vld [vmem:[#allocation3 + $0x1ac] sm:$0xff]
        %v2035 = vld [vmem:[#allocation3 + $0x1b4] sm:$0xf]
        %v2036 = vld [vmem:[#allocation3 + $0x1b8] sm:$0xff]
        %v2037 = vld [vmem:[#allocation3 + $0x1c0] sm:$0xff]
        %v2038 = vld [vmem:[#allocation3 + $0x1c8] sm:$0xf]
        %v2039 = vld [vmem:[#allocation3 + $0x1cc] sm:$0xff]
        %v2040 = vld [vmem:[#allocation3 + $0x1d4] sm:$0xff]
        %v2041 = vld [vmem:[#allocation3 + $0x1dc] sm:$0xf]
        %v2042 = vld [vmem:[#allocation3 + $0x1e0] sm:$0xff]
        %v2043 = vld [vmem:[#allocation3 + $0x1e8] sm:$0xff]
        %v2044 = vld [vmem:[#allocation3 + $0x1f0] sm:$0xf]
        %v2045 = vld [vmem:[#allocation3 + $0x1f4] sm:$0xff]
        %v2046 = vld [vmem:[#allocation3 + $0x1fc] sm:$0xff]
        %v2047 = vld [vmem:[#allocation3 + $0x204] sm:$0xf]
        %v2048 = vld [vmem:[#allocation3 + $0x208] sm:$0xff]
        %v2049 = vld [vmem:[#allocation3 + $0x210] sm:$0xff]
        %v2050 = vld [vmem:[#allocation3 + $0x218] sm:$0xf]
        %v2051 = vld [vmem:[#allocation3 + $0x21c] sm:$0xff]
        %v2052 = vld [vmem:[#allocation3 + $0x224] sm:$0xff]
        %v2053 = vld [vmem:[#allocation3 + $0x22c] sm:$0xf]
        %v2054 = vld [vmem:[#allocation3 + $0x230] sm:$0xff]
        %v2055 = vld [vmem:[#allocation3 + $0x238] sm:$0xff]
        %v2056 = vld [vmem:[#allocation3 + $0x240] sm:$0xf]
        %v2057 = vld [vmem:[#allocation3 + $0x244] sm:$0xff]
        %v2058 = vld [vmem:[#allocation3 + $0x24c] sm:$0xff]
        %v2059 = vld [vmem:[#allocation3 + $0x254] sm:$0xf]
        %v2060 = vld [vmem:[#allocation3 + $0x258] sm:$0xff]
        %v2061 = vld [vmem:[#allocation3 + $0x260] sm:$0xff]
        %v2062 = vld [vmem:[#allocation3 + $0x268] sm:$0xf]
        %v2063 = vld [vmem:[#allocation3 + $0x26c] sm:$0xff]
        %v2064 = vld [vmem:[#allocation3 + $0x274] sm:$0xff]
        %v2065 = vld [vmem:[#allocation3 + $0x27c] sm:$0xf]
        %v2066 = vld [vmem:[%s1] sm:$0xf]
        %v2067 = vld [vmem:[%s1 + $0x4] sm:$0xf]
        %v2068 = vld [vmem:[%s1 + $0x8] sm:$0xf]
        %v2069 = vld [vmem:[%s1 + $0xc] sm:$0xf]
        %v2070 = vld [vmem:[%s1 + $0x10] sm:$0xf]
        %v2071 = vld [vmem:[%s1 + $0x14] sm:$0xf]
        %v2072 = vld [vmem:[%s1 + $0x18] sm:$0xf]
        %v2073 = vld [vmem:[%s1 + $0x1c] sm:$0xf]
        %v2074 = vld [vmem:[%s1 + $0x20] sm:$0xf]
        %v2075 = vld [vmem:[%s1 + $0x24] sm:$0xf]
        %v2076 = vld [vmem:[%s1 + $0x28] sm:$0xf]
        %v2077 = vld [vmem:[%s1 + $0x2c] sm:$0xf]
        %v2078 = vld [vmem:[%s1 + $0x30] sm:$0xf]
        %v2079 = vld [vmem:[%s1 + $0x34] sm:$0xf]
        %v2080 = vld [vmem:[%s1 + $0x38] sm:$0xf]
        %v2081 = vld [vmem:[%s1 + $0x3c] sm:$0xf]
        %v2082 = vld [vmem:[%s1 + $0x40] sm:$0xf]
        %v2083 = vld [vmem:[%s1 + $0x44] sm:$0xf]
        %v2084 = vld [vmem:[%s1 + $0x48] sm:$0xf]
        %v2085 = vld [vmem:[%s1 + $0x4c] sm:$0xf]
        %v2086 = vld [vmem:[%s1 + $0x50] sm:$0xf]
        %v2087 = vld [vmem:[%s1 + $0x54] sm:$0xf]
        %v2088 = vld [vmem:[%s1 + $0x58] sm:$0xf]
        %v2089 = vld [vmem:[%s1 + $0x5c] sm:$0xf]
        %v2090 = vld [vmem:[%s1 + $0x60] sm:$0xf]
        %v2091 = vld [vmem:[%s1 + $0x64] sm:$0xf]
        %v2092 = vld [vmem:[%s1 + $0x68] sm:$0xf]
        %v2093 = vld [vmem:[%s1 + $0x6c] sm:$0xf]
        %v2094 = vld [vmem:[%s1 + $0x70] sm:$0xf]
        %v2095 = vld [vmem:[%s1 + $0x74] sm:$0xf]
        %v2096 = vld [vmem:[%s1 + $0x78] sm:$0xf]
        %v2097 = vld [vmem:[%s1 + $0x7c] sm:$0xf]
        %v2098 = vld [vmem:[%s1 + $0x80] sm:$0xf]
        %v2099 = vld [vmem:[%s1 + $0x84] sm:$0xf]
        %v2100 = vld [vmem:[%s1 + $0x88] sm:$0xf]
        %v2101 = vld [vmem:[%s1 + $0x8c] sm:$0xf]
        %v2102 = vld [vmem:[%s1 + $0x90] sm:$0xf]
        %v2103 = vld [vmem:[%s1 + $0x94] sm:$0xf]
        %v2104 = vld [vmem:[%s1 + $0x98] sm:$0xf]
        %v2105 = vld [vmem:[%s1 + $0x9c] sm:$0xf]
        %v2106 = vld [vmem:[%s1 + $0xa0] sm:$0xf]
        %v2107 = vld [vmem:[%s1 + $0xa4] sm:$0xf]
        %v2108 = vld [vmem:[%s1 + $0xa8] sm:$0xf]
        %v2109 = vld [vmem:[%s1 + $0xac] sm:$0xf]
        %v2110 = vld [vmem:[%s1 + $0xb0] sm:$0xf]
        %v2111 = vld [vmem:[%s1 + $0xb4] sm:$0xf]
        %v2112 = vld [vmem:[%s1 + $0xb8] sm:$0xf]
        %v2113 = vld [vmem:[%s1 + $0xbc] sm:$0xf]
        %v2114 = vld [vmem:[%s1 + $0xc0] sm:$0xf]
        %v2115 = vld [vmem:[%s1 + $0xc4] sm:$0xf]
        %v2116 = vld [vmem:[%s1 + $0xc8] sm:$0xf]
        %v2117 = vld [vmem:[%s1 + $0xcc] sm:$0xf]
        %v2118 = vld [vmem:[%s1 + $0xd0] sm:$0xf]
        %v2119 = vld [vmem:[%s1 + $0xd4] sm:$0xf]
        %v2120 = vld [vmem:[%s1 + $0xd8] sm:$0xf]
        %v2121 = vld [vmem:[%s1 + $0xdc] sm:$0xf]
        %v2122 = vld [vmem:[%s1 + $0xe0] sm:$0xf]
        %v2123 = vld [vmem:[%s1 + $0xe4] sm:$0xf]
        %v2124 = vld [vmem:[%s1 + $0xe8] sm:$0xf]
        %v2125 = vld [vmem:[%s1 + $0xec] sm:$0xf]
        %v2126 = vld [vmem:[%s1 + $0xf0] sm:$0xf]
        %v2127 = vld [vmem:[%s1 + $0xf4] sm:$0xf]
        %v2128 = vld [vmem:[%s1 + $0xf8] sm:$0xf]
        %v2129 = vld [vmem:[%s1 + $0xfc] sm:$0xf]
        %v2130 = vld [vmem:[%s1 + $0x100] sm:$0xf]
        %v2131 = vld [vmem:[%s1 + $0x104] sm:$0xf]
        %v2132 = vld [vmem:[%s1 + $0x108] sm:$0xf]
        %v2133 = vld [vmem:[%s1 + $0x10c] sm:$0xf]
        %v2134 = vld [vmem:[%s1 + $0x110] sm:$0xf]
        %v2135 = vld [vmem:[%s1 + $0x114] sm:$0xf]
        %v2136 = vld [vmem:[%s1 + $0x118] sm:$0xf]
        %v2137 = vld [vmem:[%s1 + $0x11c] sm:$0xf]
        %v2138 = vld [vmem:[%s1 + $0x120] sm:$0xf]
        %v2139 = vld [vmem:[%s1 + $0x124] sm:$0xf]
        %v2140 = vld [vmem:[%s1 + $0x128] sm:$0xf]
        %v2141 = vld [vmem:[%s1 + $0x12c] sm:$0xf]
        %v2142 = vld [vmem:[%s1 + $0x130] sm:$0xf]
        %v2143 = vld [vmem:[%s1 + $0x134] sm:$0xf]
        %v2144 = vld [vmem:[%s1 + $0x138] sm:$0xf]
        %v2145 = vld [vmem:[%s1 + $0x13c] sm:$0xf]
        %v2146 = vld [vmem:[%s2] sm:$0x1]
        %v2148 = vlaneseq
        %v2149 = vshrl.u32 %v2148, 7
        %v2150 = vsub.s32 0, %v2149
        %v2151 = vrot.slane %v2146, %v2150
        %v2249 = vunpack.c.l.b16 %v1970
        %v2250 = vunpack.c.h.b16 %v1970
        %v2251 = vunpack.c.l.b16 %v1971
        %v2252 = vunpack.c.h.b16 %v1971
        %v2253 = vunpack.c.l.b16 %v1972
        %v2254 = vunpack.c.l.b16 %v1973
        %v2255 = vunpack.c.h.b16 %v1973
        %v2256 = vunpack.c.l.b16 %v1974
        %v2257 = vunpack.c.h.b16 %v1974
        %v2258 = vunpack.c.l.b16 %v1975
        %v2259 = vunpack.c.l.b16 %v1976
        %v2260 = vunpack.c.h.b16 %v1976
        %v2261 = vunpack.c.l.b16 %v1977
        %v2262 = vunpack.c.h.b16 %v1977
        %v2263 = vunpack.c.l.b16 %v1978
        %v2264 = vunpack.c.l.b16 %v1979
        %v2265 = vunpack.c.h.b16 %v1979
        %v2266 = vunpack.c.l.b16 %v1980
        %v2267 = vunpack.c.h.b16 %v1980
        %v2268 = vunpack.c.l.b16 %v1981
        %v2269 = vunpack.c.l.b16 %v1982
        %v2270 = vunpack.c.h.b16 %v1982
        %v2271 = vunpack.c.l.b16 %v1983
        %v2272 = vunpack.c.h.b16 %v1983
        %v2273 = vunpack.c.l.b16 %v1984
        %v2274 = vunpack.c.l.b16 %v1985
        %v2275 = vunpack.c.h.b16 %v1985
        %v2276 = vunpack.c.l.b16 %v1986
        %v2277 = vunpack.c.h.b16 %v1986
        %v2278 = vunpack.c.l.b16 %v1987
        %v2279 = vunpack.c.l.b16 %v1988
        %v2280 = vunpack.c.h.b16 %v1988
        %v2281 = vunpack.c.l.b16 %v1989
        %v2282 = vunpack.c.h.b16 %v1989
        %v2283 = vunpack.c.l.b16 %v1990
        %v2284 = vunpack.c.l.b16 %v1991
        %v2285 = vunpack.c.h.b16 %v1991
        %v2286 = vunpack.c.l.b16 %v1992
        %v2287 = vunpack.c.h.b16 %v1992
        %v2288 = vunpack.c.l.b16 %v1993
        %v2289 = vunpack.c.l.b16 %v1994
        %v2290 = vunpack.c.h.b16 %v1994
        %v2291 = vunpack.c.l.b16 %v1995
        %v2292 = vunpack.c.h.b16 %v1995
        %v2293 = vunpack.c.l.b16 %v1996
        %v2294 = vunpack.c.l.b16 %v1997
        %v2295 = vunpack.c.h.b16 %v1997
        %v2296 = vunpack.c.l.b16 %v1998
        %v2297 = vunpack.c.h.b16 %v1998
        %v2298 = vunpack.c.l.b16 %v1999
        %v2299 = vunpack.c.l.b16 %v2000
        %v2300 = vunpack.c.h.b16 %v2000
        %v2301 = vunpack.c.l.b16 %v2001
        %v2302 = vunpack.c.h.b16 %v2001
        %v2303 = vunpack.c.l.b16 %v2002
        %v2304 = vunpack.c.l.b16 %v2003
        %v2305 = vunpack.c.h.b16 %v2003
        %v2306 = vunpack.c.l.b16 %v2004
        %v2307 = vunpack.c.h.b16 %v2004
        %v2308 = vunpack.c.l.b16 %v2005
        %v2309 = vunpack.c.l.b16 %v2006
        %v2310 = vunpack.c.h.b16 %v2006
        %v2311 = vunpack.c.l.b16 %v2007
        %v2312 = vunpack.c.h.b16 %v2007
        %v2313 = vunpack.c.l.b16 %v2008
        %v2314 = vunpack.c.l.b16 %v2009
        %v2315 = vunpack.c.h.b16 %v2009
        %v2316 = vunpack.c.l.b16 %v2010
        %v2317 = vunpack.c.h.b16 %v2010
        %v2318 = vunpack.c.l.b16 %v2011
        %v2319 = vunpack.c.l.b16 %v2012
        %v2320 = vunpack.c.h.b16 %v2012
        %v2321 = vunpack.c.l.b16 %v2013
        %v2322 = vunpack.c.h.b16 %v2013
        %v2323 = vunpack.c.l.b16 %v2014
        %v2324 = vunpack.c.l.b16 %v2015
        %v2325 = vunpack.c.h.b16 %v2015
        %v2326 = vunpack.c.l.b16 %v2016
        %v2327 = vunpack.c.h.b16 %v2016
        %v2328 = vunpack.c.l.b16 %v2017
        %v2329 = vunpack.c.l.b16 %v2018
        %v2330 = vunpack.c.h.b16 %v2018
        %v2331 = vunpack.c.l.b16 %v2019
        %v2332 = vunpack.c.h.b16 %v2019
        %v2333 = vunpack.c.l.b16 %v2020
        %v2334 = vunpack.c.l.b16 %v2021
        %v2335 = vunpack.c.h.b16 %v2021
        %v2336 = vunpack.c.l.b16 %v2022
        %v2337 = vunpack.c.h.b16 %v2022
        %v2338 = vunpack.c.l.b16 %v2023
        %v2339 = vunpack.c.l.b16 %v2024
        %v2340 = vunpack.c.h.b16 %v2024
        %v2341 = vunpack.c.l.b16 %v2025
        %v2342 = vunpack.c.h.b16 %v2025
        %v2343 = vunpack.c.l.b16 %v2026
        %v2344 = vunpack.c.l.b16 %v2027
        %v2345 = vunpack.c.h.b16 %v2027
        %v2346 = vunpack.c.l.b16 %v2028
        %v2347 = vunpack.c.h.b16 %v2028
        %v2348 = vunpack.c.l.b16 %v2029
        %v2349 = vunpack.c.l.b16 %v2030
        %v2350 = vunpack.c.h.b16 %v2030
        %v2351 = vunpack.c.l.b16 %v2031
        %v2352 = vunpack.c.h.b16 %v2031
        %v2353 = vunpack.c.l.b16 %v2032
        %v2354 = vunpack.c.l.b16 %v2033
        %v2355 = vunpack.c.h.b16 %v2033
        %v2356 = vunpack.c.l.b16 %v2034
        %v2357 = vunpack.c.h.b16 %v2034
        %v2358 = vunpack.c.l.b16 %v2035
        %v2359 = vunpack.c.l.b16 %v2036
        %v2360 = vunpack.c.h.b16 %v2036
        %v2361 = vunpack.c.l.b16 %v2037
        %v2362 = vunpack.c.h.b16 %v2037
        %v2363 = vunpack.c.l.b16 %v2038
        %v2364 = vunpack.c.l.b16 %v2039
        %v2365 = vunpack.c.h.b16 %v2039
        %v2366 = vunpack.c.l.b16 %v2040
        %v2367 = vunpack.c.h.b16 %v2040
        %v2368 = vunpack.c.l.b16 %v2041
        %v2369 = vunpack.c.l.b16 %v2042
        %v2370 = vunpack.c.h.b16 %v2042
        %v2371 = vunpack.c.l.b16 %v2043
        %v2372 = vunpack.c.h.b16 %v2043
        %v2373 = vunpack.c.l.b16 %v2044
        %v2374 = vunpack.c.l.b16 %v2045
        %v2375 = vunpack.c.h.b16 %v2045
        %v2376 = vunpack.c.l.b16 %v2046
        %v2377 = vunpack.c.h.b16 %v2046
        %v2378 = vunpack.c.l.b16 %v2047
        %v2379 = vunpack.c.l.b16 %v2048
        %v2380 = vunpack.c.h.b16 %v2048
        %v2381 = vunpack.c.l.b16 %v2049
        %v2382 = vunpack.c.h.b16 %v2049
        %v2383 = vunpack.c.l.b16 %v2050
        %v2384 = vunpack.c.l.b16 %v2051
        %v2385 = vunpack.c.h.b16 %v2051
        %v2386 = vunpack.c.l.b16 %v2052
        %v2387 = vunpack.c.h.b16 %v2052
        %v2388 = vunpack.c.l.b16 %v2053
        %v2389 = vunpack.c.l.b16 %v2054
        %v2390 = vunpack.c.h.b16 %v2054
        %v2391 = vunpack.c.l.b16 %v2055
        %v2392 = vunpack.c.h.b16 %v2055
        %v2393 = vunpack.c.l.b16 %v2056
        %v2394 = vunpack.c.l.b16 %v2057
        %v2395 = vunpack.c.h.b16 %v2057
        %v2396 = vunpack.c.l.b16 %v2058
        %v2397 = vunpack.c.h.b16 %v2058
        %v2398 = vunpack.c.l.b16 %v2059
        %v2399 = vunpack.c.l.b16 %v2060
        %v2400 = vunpack.c.h.b16 %v2060
        %v2401 = vunpack.c.l.b16 %v2061
        %v2402 = vunpack.c.h.b16 %v2061
        %v2403 = vunpack.c.l.b16 %v2062
        %v2404 = vunpack.c.l.b16 %v2063
        %v2405 = vunpack.c.h.b16 %v2063
        %v2406 = vunpack.c.l.b16 %v2064
        %v2407 = vunpack.c.h.b16 %v2064
        %v2408 = vunpack.c.l.b16 %v2065
        %v2409 = vpack.c.b16 %v2254, %v2249
        %v2410 = vpack.c.b16 %v2255, %v2250
        %v2411 = vpack.c.b16 %v2256, %v2251
        %v2412 = vpack.c.b16 %v2257, %v2252
        %v2413 = vpack.c.b16 %v2258, %v2253
        %v2414 = vpack.c.b16 %v2264, %v2259
        %v2415 = vpack.c.b16 %v2265, %v2260
        %v2416 = vpack.c.b16 %v2266, %v2261
        %v2417 = vpack.c.b16 %v2267, %v2262
        %v2418 = vpack.c.b16 %v2268, %v2263
        %v2419 = vpack.c.b16 %v2274, %v2269
        %v2420 = vpack.c.b16 %v2275, %v2270
        %v2421 = vpack.c.b16 %v2276, %v2271
        %v2422 = vpack.c.b16 %v2277, %v2272
        %v2423 = vpack.c.b16 %v2278, %v2273
        %v2424 = vpack.c.b16 %v2284, %v2279
        %v2425 = vpack.c.b16 %v2285, %v2280
        %v2426 = vpack.c.b16 %v2286, %v2281
        %v2427 = vpack.c.b16 %v2287, %v2282
        %v2428 = vpack.c.b16 %v2288, %v2283
        %v2429 = vpack.c.b16 %v2294, %v2289
        %v2430 = vpack.c.b16 %v2295, %v2290
        %v2431 = vpack.c.b16 %v2296, %v2291
        %v2432 = vpack.c.b16 %v2297, %v2292
        %v2433 = vpack.c.b16 %v2298, %v2293
        %v2434 = vpack.c.b16 %v2304, %v2299
        %v2435 = vpack.c.b16 %v2305, %v2300
        %v2436 = vpack.c.b16 %v2306, %v2301
        %v2437 = vpack.c.b16 %v2307, %v2302
        %v2438 = vpack.c.b16 %v2308, %v2303
        %v2439 = vpack.c.b16 %v2314, %v2309
        %v2440 = vpack.c.b16 %v2315, %v2310
        %v2441 = vpack.c.b16 %v2316, %v2311
        %v2442 = vpack.c.b16 %v2317, %v2312
        %v2443 = vpack.c.b16 %v2318, %v2313
        %v2444 = vpack.c.b16 %v2324, %v2319
        %v2445 = vpack.c.b16 %v2325, %v2320
        %v2446 = vpack.c.b16 %v2326, %v2321
        %v2447 = vpack.c.b16 %v2327, %v2322
        %v2448 = vpack.c.b16 %v2328, %v2323
        %v2449 = vpack.c.b16 %v2334, %v2329
        %v2450 = vpack.c.b16 %v2335, %v2330
        %v2451 = vpack.c.b16 %v2336, %v2331
        %v2452 = vpack.c.b16 %v2337, %v2332
        %v2453 = vpack.c.b16 %v2338, %v2333
        %v2454 = vpack.c.b16 %v2344, %v2339
        %v2455 = vpack.c.b16 %v2345, %v2340
        %v2456 = vpack.c.b16 %v2346, %v2341
        %v2457 = vpack.c.b16 %v2347, %v2342
        %v2458 = vpack.c.b16 %v2348, %v2343
        %v2459 = vpack.c.b16 %v2354, %v2349
        %v2460 = vpack.c.b16 %v2355, %v2350
        %v2461 = vpack.c.b16 %v2356, %v2351
        %v2462 = vpack.c.b16 %v2357, %v2352
        %v2463 = vpack.c.b16 %v2358, %v2353
        %v2464 = vpack.c.b16 %v2364, %v2359
        %v2465 = vpack.c.b16 %v2365, %v2360
        %v2466 = vpack.c.b16 %v2366, %v2361
        %v2467 = vpack.c.b16 %v2367, %v2362
        %v2468 = vpack.c.b16 %v2368, %v2363
        %v2469 = vpack.c.b16 %v2374, %v2369
        %v2470 = vpack.c.b16 %v2375, %v2370
        %v2471 = vpack.c.b16 %v2376, %v2371
        %v2472 = vpack.c.b16 %v2377, %v2372
        %v2473 = vpack.c.b16 %v2378, %v2373
        %v2474 = vpack.c.b16 %v2384, %v2379
        %v2475 = vpack.c.b16 %v2385, %v2380
        %v2476 = vpack.c.b16 %v2386, %v2381
        %v2477 = vpack.c.b16 %v2387, %v2382
        %v2478 = vpack.c.b16 %v2388, %v2383
        %v2479 = vpack.c.b16 %v2394, %v2389
        %v2480 = vpack.c.b16 %v2395, %v2390
        %v2481 = vpack.c.b16 %v2396, %v2391
        %v2482 = vpack.c.b16 %v2397, %v2392
        %v2483 = vpack.c.b16 %v2398, %v2393
        %v2484 = vpack.c.b16 %v2404, %v2399
        %v2485 = vpack.c.b16 %v2405, %v2400
        %v2486 = vpack.c.b16 %v2406, %v2401
        %v2487 = vpack.c.b16 %v2407, %v2402
        %v2488 = vpack.c.b16 %v2408, %v2403
        %v2649 = vunpack.c.l.b16 %v2066
        %v2650 = vunpack.c.l.b16 %v2067
        %v2651 = vunpack.c.l.b16 %v2068
        %v2652 = vunpack.c.l.b16 %v2069
        %v2653 = vunpack.c.l.b16 %v2070
        %v2654 = vunpack.c.l.b16 %v2071
        %v2655 = vunpack.c.l.b16 %v2072
        %v2656 = vunpack.c.l.b16 %v2073
        %v2657 = vunpack.c.l.b16 %v2074
        %v2658 = vunpack.c.l.b16 %v2075
        %v2659 = vunpack.c.l.b16 %v2076
        %v2660 = vunpack.c.l.b16 %v2077
        %v2661 = vunpack.c.l.b16 %v2078
        %v2662 = vunpack.c.l.b16 %v2079
        %v2663 = vunpack.c.l.b16 %v2080
        %v2664 = vunpack.c.l.b16 %v2081
        %v2665 = vunpack.c.l.b16 %v2082
        %v2666 = vunpack.c.l.b16 %v2083
        %v2667 = vunpack.c.l.b16 %v2084
        %v2668 = vunpack.c.l.b16 %v2085
        %v2669 = vunpack.c.l.b16 %v2086
        %v2670 = vunpack.c.l.b16 %v2087
        %v2671 = vunpack.c.l.b16 %v2088
        %v2672 = vunpack.c.l.b16 %v2089
        %v2673 = vunpack.c.l.b16 %v2090
        %v2674 = vunpack.c.l.b16 %v2091
        %v2675 = vunpack.c.l.b16 %v2092
        %v2676 = vunpack.c.l.b16 %v2093
        %v2677 = vunpack.c.l.b16 %v2094
        %v2678 = vunpack.c.l.b16 %v2095
        %v2679 = vunpack.c.l.b16 %v2096
        %v2680 = vunpack.c.l.b16 %v2097
        %v2681 = vunpack.c.l.b16 %v2098
        %v2682 = vunpack.c.l.b16 %v2099
        %v2683 = vunpack.c.l.b16 %v2100
        %v2684 = vunpack.c.l.b16 %v2101
        %v2685 = vunpack.c.l.b16 %v2102
        %v2686 = vunpack.c.l.b16 %v2103
        %v2687 = vunpack.c.l.b16 %v2104
        %v2688 = vunpack.c.l.b16 %v2105
        %v2689 = vunpack.c.l.b16 %v2106
        %v2690 = vunpack.c.l.b16 %v2107
        %v2691 = vunpack.c.l.b16 %v2108
        %v2692 = vunpack.c.l.b16 %v2109
        %v2693 = vunpack.c.l.b16 %v2110
        %v2694 = vunpack.c.l.b16 %v2111
        %v2695 = vunpack.c.l.b16 %v2112
        %v2696 = vunpack.c.l.b16 %v2113
        %v2697 = vunpack.c.l.b16 %v2114
        %v2698 = vunpack.c.l.b16 %v2115
        %v2699 = vunpack.c.l.b16 %v2116
        %v2700 = vunpack.c.l.b16 %v2117
        %v2701 = vunpack.c.l.b16 %v2118
        %v2702 = vunpack.c.l.b16 %v2119
        %v2703 = vunpack.c.l.b16 %v2120
        %v2704 = vunpack.c.l.b16 %v2121
        %v2705 = vunpack.c.l.b16 %v2122
        %v2706 = vunpack.c.l.b16 %v2123
        %v2707 = vunpack.c.l.b16 %v2124
        %v2708 = vunpack.c.l.b16 %v2125
        %v2709 = vunpack.c.l.b16 %v2126
        %v2710 = vunpack.c.l.b16 %v2127
        %v2711 = vunpack.c.l.b16 %v2128
        %v2712 = vunpack.c.l.b16 %v2129
        %v2713 = vunpack.c.l.b16 %v2130
        %v2714 = vunpack.c.l.b16 %v2131
        %v2715 = vunpack.c.l.b16 %v2132
        %v2716 = vunpack.c.l.b16 %v2133
        %v2717 = vunpack.c.l.b16 %v2134
        %v2718 = vunpack.c.l.b16 %v2135
        %v2719 = vunpack.c.l.b16 %v2136
        %v2720 = vunpack.c.l.b16 %v2137
        %v2721 = vunpack.c.l.b16 %v2138
        %v2722 = vunpack.c.l.b16 %v2139
        %v2723 = vunpack.c.l.b16 %v2140
        %v2724 = vunpack.c.l.b16 %v2141
        %v2725 = vunpack.c.l.b16 %v2142
        %v2726 = vunpack.c.l.b16 %v2143
        %v2727 = vunpack.c.l.b16 %v2144
        %v2728 = vunpack.c.l.b16 %v2145
        %v2729 = vpack.c.b16 %v2650, %v2649
        %v2730 = vpack.c.b16 %v2652, %v2651
        %v2731 = vpack.c.b16 %v2654, %v2653
        %v2732 = vpack.c.b16 %v2656, %v2655
        %v2733 = vpack.c.b16 %v2658, %v2657
        %v2734 = vpack.c.b16 %v2660, %v2659
        %v2735 = vpack.c.b16 %v2662, %v2661
        %v2736 = vpack.c.b16 %v2664, %v2663
        %v2737 = vpack.c.b16 %v2666, %v2665
        %v2738 = vpack.c.b16 %v2668, %v2667
        %v2739 = vpack.c.b16 %v2670, %v2669
        %v2740 = vpack.c.b16 %v2672, %v2671
        %v2741 = vpack.c.b16 %v2674, %v2673
        %v2742 = vpack.c.b16 %v2676, %v2675
        %v2743 = vpack.c.b16 %v2678, %v2677
        %v2744 = vpack.c.b16 %v2680, %v2679
        %v2745 = vpack.c.b16 %v2682, %v2681
        %v2746 = vpack.c.b16 %v2684, %v2683
        %v2747 = vpack.c.b16 %v2686, %v2685
        %v2748 = vpack.c.b16 %v2688, %v2687
        %v2749 = vpack.c.b16 %v2690, %v2689
        %v2750 = vpack.c.b16 %v2692, %v2691
        %v2751 = vpack.c.b16 %v2694, %v2693
        %v2752 = vpack.c.b16 %v2696, %v2695
        %v2753 = vpack.c.b16 %v2698, %v2697
        %v2754 = vpack.c.b16 %v2700, %v2699
        %v2755 = vpack.c.b16 %v2702, %v2701
        %v2756 = vpack.c.b16 %v2704, %v2703
        %v2757 = vpack.c.b16 %v2706, %v2705
        %v2758 = vpack.c.b16 %v2708, %v2707
        %v2759 = vpack.c.b16 %v2710, %v2709
        %v2760 = vpack.c.b16 %v2712, %v2711
        %v2761 = vpack.c.b16 %v2714, %v2713
        %v2762 = vpack.c.b16 %v2716, %v2715
        %v2763 = vpack.c.b16 %v2718, %v2717
        %v2764 = vpack.c.b16 %v2720, %v2719
        %v2765 = vpack.c.b16 %v2722, %v2721
        %v2766 = vpack.c.b16 %v2724, %v2723
        %v2767 = vpack.c.b16 %v2726, %v2725
        %v2768 = vpack.c.b16 %v2728, %v2727
        %2809 = vmatprep.subr.bf16.mxu0 0
        %2810 = vmatpush1.bf16.msra.mxu0 %v2736
        %2811 = vmatprep.subr.bf16.mxu0 0
        %2812 = vmatpush1.bf16.msra.mxu0 %v2735
        %2813 = vmatprep.subr.bf16.mxu0 0
        %2814 = vmatpush1.bf16.msra.mxu0 %v2734
        %2815 = vmatprep.subr.bf16.mxu0 0
        %2816 = vmatpush1.bf16.msra.mxu0 %v2733
        %2817 = vmatprep.subr.bf16.mxu0 0
        %2818 = vmatpush1.bf16.msra.mxu0 %v2732
        %2819 = vmatprep.subr.bf16.mxu0 0
        %2820 = vmatpush1.bf16.msra.mxu0 %v2731
        %2821 = vmatprep.subr.bf16.mxu0 0
        %2822 = vmatpush1.bf16.msra.mxu0 %v2730
        %2823 = vmatprep.subr.bf16.mxu0 0
        %2824 = vmatpush1.bf16.msra.mxu0 %v2729
        %2825 = vmatprep.subr.bf16.mxu0 0
        %2826 = vmatpush2.bf16.msra.mxu0 %v2744
        %2827 = vmatprep.subr.bf16.mxu0 0
        %2828 = vmatpush2.bf16.msra.mxu0 %v2743
        %2829 = vmatprep.subr.bf16.mxu0 0
        %2830 = vmatpush2.bf16.msra.mxu0 %v2742
        %2831 = vmatprep.subr.bf16.mxu0 0
        %2832 = vmatpush2.bf16.msra.mxu0 %v2741
        %2833 = vmatprep.subr.bf16.mxu0 0
        %2834 = vmatpush2.bf16.msra.mxu0 %v2740
        %2835 = vmatprep.subr.bf16.mxu0 0
        %2836 = vmatpush2.bf16.msra.mxu0 %v2739
        %2837 = vmatprep.subr.bf16.mxu0 0
        %2838 = vmatpush2.bf16.msra.mxu0 %v2738
        %2839 = vmatprep.subr.bf16.mxu0 0
        %2840 = vmatpush2.bf16.msra.mxu0 %v2737
        %2841 = vmatprep.mubr.bf16.mxu0 %v2410
        %2842 = vmatmul.mubr.bf16.gmra.mxu0 %v2409
        %v2843 = vpop.f32.mrf.mxu0
        %v2844 = vadd.f32 %v2151, %v2843
        %v2845 = vpop.f32.mrf.mxu0
        %v2846 = vpop.f32.mrf.mxu0
        %v2847 = vadd.f32 %v2151, %v2846
        %v2848 = vpop.f32.mrf.mxu0
        %2849 = vmatprep.mubr.bf16.mxu0 %v2415
        %2850 = vmatmul.mubr.bf16.gmra.mxu0 %v2414
        %v2851 = vpop.f32.mrf.mxu0
        %v2852 = vadd.f32 %v2151, %v2851
        %v2853 = vpop.f32.mrf.mxu0
        %v2854 = vpop.f32.mrf.mxu0
        %v2855 = vadd.f32 %v2151, %v2854
        %v2856 = vpop.f32.mrf.mxu0
        %2857 = vmatprep.mubr.bf16.mxu0 %v2420
        %2858 = vmatmul.mubr.bf16.gmra.mxu0 %v2419
        %v2859 = vpop.f32.mrf.mxu0
        %v2860 = vadd.f32 %v2151, %v2859
        %v2861 = vpop.f32.mrf.mxu0
        %v2862 = vpop.f32.mrf.mxu0
        %v2863 = vadd.f32 %v2151, %v2862
        %v2864 = vpop.f32.mrf.mxu0
        %2865 = vmatprep.mubr.bf16.mxu0 %v2425
        %2866 = vmatmul.mubr.bf16.gmra.mxu0 %v2424
        %v2867 = vpop.f32.mrf.mxu0
        %v2868 = vadd.f32 %v2151, %v2867
        %v2869 = vpop.f32.mrf.mxu0
        %v2870 = vpop.f32.mrf.mxu0
        %v2871 = vadd.f32 %v2151, %v2870
        %v2872 = vpop.f32.mrf.mxu0
        %2873 = vmatprep.mubr.bf16.mxu0 %v2430
        %2874 = vmatmul.mubr.bf16.gmra.mxu0 %v2429
        %v2875 = vpop.f32.mrf.mxu0
        %v2876 = vadd.f32 %v2151, %v2875
        %v2877 = vpop.f32.mrf.mxu0
        %v2878 = vpop.f32.mrf.mxu0
        %v2879 = vadd.f32 %v2151, %v2878
        %v2880 = vpop.f32.mrf.mxu0
        %2881 = vmatprep.mubr.bf16.mxu0 %v2435
        %2882 = vmatmul.mubr.bf16.gmra.mxu0 %v2434
        %v2883 = vpop.f32.mrf.mxu0
        %v2884 = vadd.f32 %v2151, %v2883
        %v2885 = vpop.f32.mrf.mxu0
        %v2886 = vpop.f32.mrf.mxu0
        %v2887 = vadd.f32 %v2151, %v2886
        %v2888 = vpop.f32.mrf.mxu0
        %2889 = vmatprep.mubr.bf16.mxu0 %v2440
        %2890 = vmatmul.mubr.bf16.gmra.mxu0 %v2439
        %v2891 = vpop.f32.mrf.mxu0
        %v2892 = vadd.f32 %v2151, %v2891
        %v2893 = vpop.f32.mrf.mxu0
        %v2894 = vpop.f32.mrf.mxu0
        %v2895 = vadd.f32 %v2151, %v2894
        %v2896 = vpop.f32.mrf.mxu0
        %2897 = vmatprep.mubr.bf16.mxu0 %v2445
        %2898 = vmatmul.mubr.bf16.gmra.mxu0 %v2444
        %v2899 = vpop.f32.mrf.mxu0
        %v2900 = vadd.f32 %v2151, %v2899
        %v2901 = vpop.f32.mrf.mxu0
        %v2902 = vpop.f32.mrf.mxu0
        %v2903 = vadd.f32 %v2151, %v2902
        %v2904 = vpop.f32.mrf.mxu0
        %2905 = vmatprep.mubr.bf16.mxu0 %v2450
        %2906 = vmatmul.mubr.bf16.gmra.mxu0 %v2449
        %v2907 = vpop.f32.mrf.mxu0
        %v2908 = vadd.f32 %v2151, %v2907
        %v2909 = vpop.f32.mrf.mxu0
        %v2910 = vpop.f32.mrf.mxu0
        %v2911 = vadd.f32 %v2151, %v2910
        %v2912 = vpop.f32.mrf.mxu0
        %2913 = vmatprep.mubr.bf16.mxu0 %v2455
        %2914 = vmatmul.mubr.bf16.gmra.mxu0 %v2454
        %v2915 = vpop.f32.mrf.mxu0
        %v2916 = vadd.f32 %v2151, %v2915
        %v2917 = vpop.f32.mrf.mxu0
        %v2918 = vpop.f32.mrf.mxu0
        %v2919 = vadd.f32 %v2151, %v2918
        %v2920 = vpop.f32.mrf.mxu0
        %2921 = vmatprep.mubr.bf16.mxu0 %v2460
        %2922 = vmatmul.mubr.bf16.gmra.mxu0 %v2459
        %v2923 = vpop.f32.mrf.mxu0
        %v2924 = vadd.f32 %v2151, %v2923
        %v2925 = vpop.f32.mrf.mxu0
        %v2926 = vpop.f32.mrf.mxu0
        %v2927 = vadd.f32 %v2151, %v2926
        %v2928 = vpop.f32.mrf.mxu0
        %2929 = vmatprep.mubr.bf16.mxu0 %v2465
        %2930 = vmatmul.mubr.bf16.gmra.mxu0 %v2464
        %v2931 = vpop.f32.mrf.mxu0
        %v2932 = vadd.f32 %v2151, %v2931
        %v2933 = vpop.f32.mrf.mxu0
        %v2934 = vpop.f32.mrf.mxu0
        %v2935 = vadd.f32 %v2151, %v2934
        %v2936 = vpop.f32.mrf.mxu0
        %2937 = vmatprep.mubr.bf16.mxu0 %v2470
        %2938 = vmatmul.mubr.bf16.gmra.mxu0 %v2469
        %v2939 = vpop.f32.mrf.mxu0
        %v2940 = vadd.f32 %v2151, %v2939
        %v2941 = vpop.f32.mrf.mxu0
        %v2942 = vpop.f32.mrf.mxu0
        %v2943 = vadd.f32 %v2151, %v2942
        %v2944 = vpop.f32.mrf.mxu0
        %2945 = vmatprep.mubr.bf16.mxu0 %v2475
        %2946 = vmatmul.mubr.bf16.gmra.mxu0 %v2474
        %v2947 = vpop.f32.mrf.mxu0
        %v2948 = vadd.f32 %v2151, %v2947
        %v2949 = vpop.f32.mrf.mxu0
        %v2950 = vpop.f32.mrf.mxu0
        %v2951 = vadd.f32 %v2151, %v2950
        %v2952 = vpop.f32.mrf.mxu0
        %2953 = vmatprep.mubr.bf16.mxu0 %v2480
        %2954 = vmatmul.mubr.bf16.gmra.mxu0 %v2479
        %v2955 = vpop.f32.mrf.mxu0
        %v2956 = vadd.f32 %v2151, %v2955
        %v2957 = vpop.f32.mrf.mxu0
        %v2958 = vpop.f32.mrf.mxu0
        %v2959 = vadd.f32 %v2151, %v2958
        %v2960 = vpop.f32.mrf.mxu0
        %2961 = vmatprep.mubr.bf16.mxu0 %v2485
        %2962 = vmatmul.mubr.bf16.gmra.mxu0 %v2484
        %v2963 = vpop.f32.mrf.mxu0
        %v2964 = vadd.f32 %v2151, %v2963
        %v2965 = vpop.f32.mrf.mxu0
        %v2966 = vpop.f32.mrf.mxu0
        %v2967 = vadd.f32 %v2151, %v2966
        %v2968 = vpop.f32.mrf.mxu0
        %2969 = vdwg.mxu0
        %2970 = vmatprep.subr.bf16.mxu0 0
        %2971 = vmatpush1.bf16.msra.mxu0 %v2752
        %2972 = vmatprep.subr.bf16.mxu0 0
        %2973 = vmatpush1.bf16.msra.mxu0 %v2751
        %2974 = vmatprep.subr.bf16.mxu0 0
        %2975 = vmatpush1.bf16.msra.mxu0 %v2750
        %2976 = vmatprep.subr.bf16.mxu0 0
        %2977 = vmatpush1.bf16.msra.mxu0 %v2749
        %2978 = vmatprep.subr.bf16.mxu0 0
        %2979 = vmatpush1.bf16.msra.mxu0 %v2748
        %2980 = vmatprep.subr.bf16.mxu0 0
        %2981 = vmatpush1.bf16.msra.mxu0 %v2747
        %2982 = vmatprep.subr.bf16.mxu0 0
        %2983 = vmatpush1.bf16.msra.mxu0 %v2746
        %2984 = vmatprep.subr.bf16.mxu0 0
        %2985 = vmatpush1.bf16.msra.mxu0 %v2745
        %2986 = vmatprep.subr.bf16.mxu0 0
        %2987 = vmatpush2.bf16.msra.mxu0 %v2760
        %2988 = vmatprep.subr.bf16.mxu0 0
        %2989 = vmatpush2.bf16.msra.mxu0 %v2759
        %2990 = vmatprep.subr.bf16.mxu0 0
        %2991 = vmatpush2.bf16.msra.mxu0 %v2758
        %2992 = vmatprep.subr.bf16.mxu0 0
        %2993 = vmatpush2.bf16.msra.mxu0 %v2757
        %2994 = vmatprep.subr.bf16.mxu0 0
        %2995 = vmatpush2.bf16.msra.mxu0 %v2756
        %2996 = vmatprep.subr.bf16.mxu0 0
        %2997 = vmatpush2.bf16.msra.mxu0 %v2755
        %2998 = vmatprep.subr.bf16.mxu0 0
        %2999 = vmatpush2.bf16.msra.mxu0 %v2754
        %3000 = vmatprep.subr.bf16.mxu0 0
        %3001 = vmatpush2.bf16.msra.mxu0 %v2753
        %3002 = vmatprep.mubr.bf16.mxu0 %v2412
        %3003 = vmatmul.mubr.bf16.gmra.mxu0 %v2411
        %v3004 = vpop.f32.mrf.mxu0
        %v3005 = vadd.f32 %v2844, %v3004
        %v3006 = vpop.f32.mrf.mxu0
        %v3007 = vpop.f32.mrf.mxu0
        %v3008 = vadd.f32 %v2847, %v3007
        %v3009 = vpop.f32.mrf.mxu0
        %3010 = vmatprep.mubr.bf16.mxu0 %v2417
        %3011 = vmatmul.mubr.bf16.gmra.mxu0 %v2416
        %v3012 = vpop.f32.mrf.mxu0
        %v3013 = vadd.f32 %v2852, %v3012
        %v3014 = vpop.f32.mrf.mxu0
        %v3015 = vpop.f32.mrf.mxu0
        %v3016 = vadd.f32 %v2855, %v3015
        %v3017 = vpop.f32.mrf.mxu0
        %3018 = vmatprep.mubr.bf16.mxu0 %v2422
        %3019 = vmatmul.mubr.bf16.gmra.mxu0 %v2421
        %v3020 = vpop.f32.mrf.mxu0
        %v3021 = vadd.f32 %v2860, %v3020
        %v3022 = vpop.f32.mrf.mxu0
        %v3023 = vpop.f32.mrf.mxu0
        %v3024 = vadd.f32 %v2863, %v3023
        %v3025 = vpop.f32.mrf.mxu0
        %3026 = vmatprep.mubr.bf16.mxu0 %v2427
        %3027 = vmatmul.mubr.bf16.gmra.mxu0 %v2426
        %v3028 = vpop.f32.mrf.mxu0
        %v3029 = vadd.f32 %v2868, %v3028
        %v3030 = vpop.f32.mrf.mxu0
        %v3031 = vpop.f32.mrf.mxu0
        %v3032 = vadd.f32 %v2871, %v3031
        %v3033 = vpop.f32.mrf.mxu0
        %3034 = vmatprep.mubr.bf16.mxu0 %v2432
        %3035 = vmatmul.mubr.bf16.gmra.mxu0 %v2431
        %v3036 = vpop.f32.mrf.mxu0
        %v3037 = vadd.f32 %v2876, %v3036
        %v3038 = vpop.f32.mrf.mxu0
        %v3039 = vpop.f32.mrf.mxu0
        %v3040 = vadd.f32 %v2879, %v3039
        %v3041 = vpop.f32.mrf.mxu0
        %3042 = vmatprep.mubr.bf16.mxu0 %v2437
        %3043 = vmatmul.mubr.bf16.gmra.mxu0 %v2436
        %v3044 = vpop.f32.mrf.mxu0
        %v3045 = vadd.f32 %v2884, %v3044
        %v3046 = vpop.f32.mrf.mxu0
        %v3047 = vpop.f32.mrf.mxu0
        %v3048 = vadd.f32 %v2887, %v3047
        %v3049 = vpop.f32.mrf.mxu0
        %3050 = vmatprep.mubr.bf16.mxu0 %v2442
        %3051 = vmatmul.mubr.bf16.gmra.mxu0 %v2441
        %v3052 = vpop.f32.mrf.mxu0
        %v3053 = vadd.f32 %v2892, %v3052
        %v3054 = vpop.f32.mrf.mxu0
        %v3055 = vpop.f32.mrf.mxu0
        %v3056 = vadd.f32 %v2895, %v3055
        %v3057 = vpop.f32.mrf.mxu0
        %3058 = vmatprep.mubr.bf16.mxu0 %v2447
        %3059 = vmatmul.mubr.bf16.gmra.mxu0 %v2446
        %v3060 = vpop.f32.mrf.mxu0
        %v3061 = vadd.f32 %v2900, %v3060
        %v3062 = vpop.f32.mrf.mxu0
        %v3063 = vpop.f32.mrf.mxu0
        %v3064 = vadd.f32 %v2903, %v3063
        %v3065 = vpop.f32.mrf.mxu0
        %3066 = vmatprep.mubr.bf16.mxu0 %v2452
        %3067 = vmatmul.mubr.bf16.gmra.mxu0 %v2451
        %v3068 = vpop.f32.mrf.mxu0
        %v3069 = vadd.f32 %v2908, %v3068
        %v3070 = vpop.f32.mrf.mxu0
        %v3071 = vpop.f32.mrf.mxu0
        %v3072 = vadd.f32 %v2911, %v3071
        %v3073 = vpop.f32.mrf.mxu0
        %3074 = vmatprep.mubr.bf16.mxu0 %v2457
        %3075 = vmatmul.mubr.bf16.gmra.mxu0 %v2456
        %v3076 = vpop.f32.mrf.mxu0
        %v3077 = vadd.f32 %v2916, %v3076
        %v3078 = vpop.f32.mrf.mxu0
        %v3079 = vpop.f32.mrf.mxu0
        %v3080 = vadd.f32 %v2919, %v3079
        %v3081 = vpop.f32.mrf.mxu0
        %3082 = vmatprep.mubr.bf16.mxu0 %v2462
        %3083 = vmatmul.mubr.bf16.gmra.mxu0 %v2461
        %v3084 = vpop.f32.mrf.mxu0
        %v3085 = vadd.f32 %v2924, %v3084
        %v3086 = vpop.f32.mrf.mxu0
        %v3087 = vpop.f32.mrf.mxu0
        %v3088 = vadd.f32 %v2927, %v3087
        %v3089 = vpop.f32.mrf.mxu0
        %3090 = vmatprep.mubr.bf16.mxu0 %v2467
        %3091 = vmatmul.mubr.bf16.gmra.mxu0 %v2466
        %v3092 = vpop.f32.mrf.mxu0
        %v3093 = vadd.f32 %v2932, %v3092
        %v3094 = vpop.f32.mrf.mxu0
        %v3095 = vpop.f32.mrf.mxu0
        %v3096 = vadd.f32 %v2935, %v3095
        %v3097 = vpop.f32.mrf.mxu0
        %3098 = vmatprep.mubr.bf16.mxu0 %v2472
        %3099 = vmatmul.mubr.bf16.gmra.mxu0 %v2471
        %v3100 = vpop.f32.mrf.mxu0
        %v3101 = vadd.f32 %v2940, %v3100
        %v3102 = vpop.f32.mrf.mxu0
        %v3103 = vpop.f32.mrf.mxu0
        %v3104 = vadd.f32 %v2943, %v3103
        %v3105 = vpop.f32.mrf.mxu0
        %3106 = vmatprep.mubr.bf16.mxu0 %v2477
        %3107 = vmatmul.mubr.bf16.gmra.mxu0 %v2476
        %v3108 = vpop.f32.mrf.mxu0
        %v3109 = vadd.f32 %v2948, %v3108
        %v3110 = vpop.f32.mrf.mxu0
        %v3111 = vpop.f32.mrf.mxu0
        %v3112 = vadd.f32 %v2951, %v3111
        %v3113 = vpop.f32.mrf.mxu0
        %3114 = vmatprep.mubr.bf16.mxu0 %v2482
        %3115 = vmatmul.mubr.bf16.gmra.mxu0 %v2481
        %v3116 = vpop.f32.mrf.mxu0
        %v3117 = vadd.f32 %v2956, %v3116
        %v3118 = vpop.f32.mrf.mxu0
        %v3119 = vpop.f32.mrf.mxu0
        %v3120 = vadd.f32 %v2959, %v3119
        %v3121 = vpop.f32.mrf.mxu0
        %3122 = vmatprep.mubr.bf16.mxu0 %v2487
        %3123 = vmatmul.mubr.bf16.gmra.mxu0 %v2486
        %v3124 = vpop.f32.mrf.mxu0
        %v3125 = vadd.f32 %v2964, %v3124
        %v3126 = vpop.f32.mrf.mxu0
        %v3127 = vpop.f32.mrf.mxu0
        %v3128 = vadd.f32 %v2967, %v3127
        %v3129 = vpop.f32.mrf.mxu0
        %3130 = vdwg.mxu0
        %3131 = vmatprep.subr.bf16.mxu0 0
        %3132 = vmatpush1.bf16.msra.mxu0 %v2768
        %3133 = vmatprep.subr.bf16.mxu0 0
        %3134 = vmatpush1.bf16.msra.mxu0 %v2767
        %3135 = vmatprep.subr.bf16.mxu0 0
        %3136 = vmatpush1.bf16.msra.mxu0 %v2766
        %3137 = vmatprep.subr.bf16.mxu0 0
        %3138 = vmatpush1.bf16.msra.mxu0 %v2765
        %3139 = vmatprep.subr.bf16.mxu0 0
        %3140 = vmatpush1.bf16.msra.mxu0 %v2764
        %3141 = vmatprep.subr.bf16.mxu0 0
        %3142 = vmatpush1.bf16.msra.mxu0 %v2763
        %3143 = vmatprep.subr.bf16.mxu0 0
        %3144 = vmatpush1.bf16.msra.mxu0 %v2762
        %3145 = vmatprep.subr.bf16.mxu0 0
        %3146 = vmatpush1.bf16.msra.mxu0 %v2761
        %3147 = vmatprep.subr.bf16.mxu0 0
        %3148 = vmatpush2.bf16.msra.mxu0 0
        %3149 = vmatprep.subr.bf16.mxu0 0
        %3150 = vmatpush2.bf16.msra.mxu0 0
        %3151 = vmatprep.subr.bf16.mxu0 0
        %3152 = vmatpush2.bf16.msra.mxu0 0
        %3153 = vmatprep.subr.bf16.mxu0 0
        %3154 = vmatpush2.bf16.msra.mxu0 0
        %3155 = vmatprep.subr.bf16.mxu0 0
        %3156 = vmatpush2.bf16.msra.mxu0 0
        %3157 = vmatprep.subr.bf16.mxu0 0
        %3158 = vmatpush2.bf16.msra.mxu0 0
        %3159 = vmatprep.subr.bf16.mxu0 0
        %3160 = vmatpush2.bf16.msra.mxu0 0
        %3161 = vmatprep.subr.bf16.mxu0 0
        %3162 = vmatpush2.bf16.msra.mxu0 0
        %3163 = vmatprep.mubr.bf16.mxu0 0
        %3164 = vmatmul.mubr.bf16.gmra.mxu0 %v2413
        %v3165 = vpop.f32.mrf.mxu0
        %v3166 = vadd.f32 %v3005, %v3165
        %v3167 = vpop.f32.mrf.mxu0
        %v3168 = vpop.f32.mrf.mxu0
        %v3169 = vadd.f32 %v3008, %v3168
        %v3170 = vpop.f32.mrf.mxu0
        %3171 = vmatprep.mubr.bf16.mxu0 0
        %3172 = vmatmul.mubr.bf16.gmra.mxu0 %v2418
        %v3173 = vpop.f32.mrf.mxu0
        %v3174 = vadd.f32 %v3013, %v3173
        %v3175 = vpop.f32.mrf.mxu0
        %v3176 = vpop.f32.mrf.mxu0
        %v3177 = vadd.f32 %v3016, %v3176
        %v3178 = vpop.f32.mrf.mxu0
        %3179 = vmatprep.mubr.bf16.mxu0 0
        %3180 = vmatmul.mubr.bf16.gmra.mxu0 %v2423
        %v3181 = vpop.f32.mrf.mxu0
        %v3182 = vadd.f32 %v3021, %v3181
        %v3183 = vpop.f32.mrf.mxu0
        %v3184 = vpop.f32.mrf.mxu0
        %v3185 = vadd.f32 %v3024, %v3184
        %v3186 = vpop.f32.mrf.mxu0
        %3187 = vmatprep.mubr.bf16.mxu0 0
        %3188 = vmatmul.mubr.bf16.gmra.mxu0 %v2428
        %v3189 = vpop.f32.mrf.mxu0
        %v3190 = vadd.f32 %v3029, %v3189
        %v3191 = vpop.f32.mrf.mxu0
        %v3192 = vpop.f32.mrf.mxu0
        %v3193 = vadd.f32 %v3032, %v3192
        %v3194 = vpop.f32.mrf.mxu0
        %3195 = vmatprep.mubr.bf16.mxu0 0
        %3196 = vmatmul.mubr.bf16.gmra.mxu0 %v2433
        %v3197 = vpop.f32.mrf.mxu0
        %v3198 = vadd.f32 %v3037, %v3197
        %v3199 = vpop.f32.mrf.mxu0
        %v3200 = vpop.f32.mrf.mxu0
        %v3201 = vadd.f32 %v3040, %v3200
        %v3202 = vpop.f32.mrf.mxu0
        %3203 = vmatprep.mubr.bf16.mxu0 0
        %3204 = vmatmul.mubr.bf16.gmra.mxu0 %v2438
        %v3205 = vpop.f32.mrf.mxu0
        %v3206 = vadd.f32 %v3045, %v3205
        %v3207 = vpop.f32.mrf.mxu0
        %v3208 = vpop.f32.mrf.mxu0
        %v3209 = vadd.f32 %v3048, %v3208
        %v3210 = vpop.f32.mrf.mxu0
        %3211 = vmatprep.mubr.bf16.mxu0 0
        %3212 = vmatmul.mubr.bf16.gmra.mxu0 %v2443
        %v3213 = vpop.f32.mrf.mxu0
        %v3214 = vadd.f32 %v3053, %v3213
        %v3215 = vpop.f32.mrf.mxu0
        %v3216 = vpop.f32.mrf.mxu0
        %v3217 = vadd.f32 %v3056, %v3216
        %v3218 = vpop.f32.mrf.mxu0
        %3219 = vmatprep.mubr.bf16.mxu0 0
        %3220 = vmatmul.mubr.bf16.gmra.mxu0 %v2448
        %v3221 = vpop.f32.mrf.mxu0
        %v3222 = vadd.f32 %v3061, %v3221
        %v3223 = vpop.f32.mrf.mxu0
        %v3224 = vpop.f32.mrf.mxu0
        %v3225 = vadd.f32 %v3064, %v3224
        %v3226 = vpop.f32.mrf.mxu0
        %3227 = vmatprep.mubr.bf16.mxu0 0
        %3228 = vmatmul.mubr.bf16.gmra.mxu0 %v2453
        %v3229 = vpop.f32.mrf.mxu0
        %v3230 = vadd.f32 %v3069, %v3229
        %v3231 = vpop.f32.mrf.mxu0
        %v3232 = vpop.f32.mrf.mxu0
        %v3233 = vadd.f32 %v3072, %v3232
        %v3234 = vpop.f32.mrf.mxu0
        %3235 = vmatprep.mubr.bf16.mxu0 0
        %3236 = vmatmul.mubr.bf16.gmra.mxu0 %v2458
        %v3237 = vpop.f32.mrf.mxu0
        %v3238 = vadd.f32 %v3077, %v3237
        %v3239 = vpop.f32.mrf.mxu0
        %v3240 = vpop.f32.mrf.mxu0
        %v3241 = vadd.f32 %v3080, %v3240
        %v3242 = vpop.f32.mrf.mxu0
        %3243 = vmatprep.mubr.bf16.mxu0 0
        %3244 = vmatmul.mubr.bf16.gmra.mxu0 %v2463
        %v3245 = vpop.f32.mrf.mxu0
        %v3246 = vadd.f32 %v3085, %v3245
        %v3247 = vpop.f32.mrf.mxu0
        %v3248 = vpop.f32.mrf.mxu0
        %v3249 = vadd.f32 %v3088, %v3248
        %v3250 = vpop.f32.mrf.mxu0
        %3251 = vmatprep.mubr.bf16.mxu0 0
        %3252 = vmatmul.mubr.bf16.gmra.mxu0 %v2468
        %v3253 = vpop.f32.mrf.mxu0
        %v3254 = vadd.f32 %v3093, %v3253
        %v3255 = vpop.f32.mrf.mxu0
        %v3256 = vpop.f32.mrf.mxu0
        %v3257 = vadd.f32 %v3096, %v3256
        %v3258 = vpop.f32.mrf.mxu0
        %3259 = vmatprep.mubr.bf16.mxu0 0
        %3260 = vmatmul.mubr.bf16.gmra.mxu0 %v2473
        %v3261 = vpop.f32.mrf.mxu0
        %v3262 = vadd.f32 %v3101, %v3261
        %v3263 = vpop.f32.mrf.mxu0
        %v3264 = vpop.f32.mrf.mxu0
        %v3265 = vadd.f32 %v3104, %v3264
        %v3266 = vpop.f32.mrf.mxu0
        %3267 = vmatprep.mubr.bf16.mxu0 0
        %3268 = vmatmul.mubr.bf16.gmra.mxu0 %v2478
        %v3269 = vpop.f32.mrf.mxu0
        %v3270 = vadd.f32 %v3109, %v3269
        %v3271 = vpop.f32.mrf.mxu0
        %v3272 = vpop.f32.mrf.mxu0
        %v3273 = vadd.f32 %v3112, %v3272
        %v3274 = vpop.f32.mrf.mxu0
        %3275 = vmatprep.mubr.bf16.mxu0 0
        %3276 = vmatmul.mubr.bf16.gmra.mxu0 %v2483
        %v3277 = vpop.f32.mrf.mxu0
        %v3278 = vadd.f32 %v3117, %v3277
        %v3279 = vpop.f32.mrf.mxu0
        %v3280 = vpop.f32.mrf.mxu0
        %v3281 = vadd.f32 %v3120, %v3280
        %v3282 = vpop.f32.mrf.mxu0
        %3283 = vmatprep.mubr.bf16.mxu0 0
        %3284 = vmatmul.mubr.bf16.gmra.mxu0 %v2488
        %v3285 = vpop.f32.mrf.mxu0
        %v3286 = vadd.f32 %v3125, %v3285
        %v3287 = vpop.f32.mrf.mxu0
        %v3288 = vpop.f32.mrf.mxu0
        %v3289 = vadd.f32 %v3128, %v3288
        %v3290 = vpop.f32.mrf.mxu0
        %3291 = vdwg.mxu0
        %v3292 = vmax.f32 %v3166, 0.0
        %v3293 = vmax.f32 %v3169, 0.0
        %v3294 = vmax.f32 %v3174, 0.0
        %v3295 = vmax.f32 %v3177, 0.0
        %v3296 = vmax.f32 %v3182, 0.0
        %v3297 = vmax.f32 %v3185, 0.0
        %v3298 = vmax.f32 %v3190, 0.0
        %v3299 = vmax.f32 %v3193, 0.0
        %v3300 = vmax.f32 %v3198, 0.0
        %v3301 = vmax.f32 %v3201, 0.0
        %v3302 = vmax.f32 %v3206, 0.0
        %v3303 = vmax.f32 %v3209, 0.0
        %v3304 = vmax.f32 %v3214, 0.0
        %v3305 = vmax.f32 %v3217, 0.0
        %v3306 = vmax.f32 %v3222, 0.0
        %v3307 = vmax.f32 %v3225, 0.0
        %v3308 = vmax.f32 %v3230, 0.0
        %v3309 = vmax.f32 %v3233, 0.0
        %v3310 = vmax.f32 %v3238, 0.0
        %v3311 = vmax.f32 %v3241, 0.0
        %v3312 = vmax.f32 %v3246, 0.0
        %v3313 = vmax.f32 %v3249, 0.0
        %v3314 = vmax.f32 %v3254, 0.0
        %v3315 = vmax.f32 %v3257, 0.0
        %v3316 = vmax.f32 %v3262, 0.0
        %v3317 = vmax.f32 %v3265, 0.0
        %v3318 = vmax.f32 %v3270, 0.0
        %v3319 = vmax.f32 %v3273, 0.0
        %v3320 = vmax.f32 %v3278, 0.0
        %v3321 = vmax.f32 %v3281, 0.0
        %v3322 = vmax.f32 %v3286, 0.0
        %v3323 = vmax.f32 %v3289, 0.0
        %3324 = vst.msk [vmem:[%s366 + $0x1] sm:$0xff] %vm278, %v3292
        %3325 = vst.msk [vmem:[%s366 + $0x9] sm:$0xff] %vm278, %v3293
        %3326 = vst.msk [vmem:[%s366 + $0x19] sm:$0xff] %vm278, %v3294
        %3327 = vst.msk [vmem:[%s366 + $0x21] sm:$0xff] %vm278, %v3295
        %3328 = vst.msk [vmem:[%s366 + $0x31] sm:$0xff] %vm278, %v3296
        %3329 = vst.msk [vmem:[%s366 + $0x39] sm:$0xff] %vm278, %v3297
        %3330 = vst.msk [vmem:[%s366 + $0x49] sm:$0xff] %vm278, %v3298
        %3331 = vst.msk [vmem:[%s366 + $0x51] sm:$0xff] %vm278, %v3299
        %3332 = vst.msk [vmem:[%s366 + $0x61] sm:$0xff] %vm278, %v3300
        %3333 = vst.msk [vmem:[%s366 + $0x69] sm:$0xff] %vm278, %v3301
        %3334 = vst.msk [vmem:[%s366 + $0x79] sm:$0xff] %vm278, %v3302
        %3335 = vst.msk [vmem:[%s366 + $0x81] sm:$0xff] %vm278, %v3303
        %3336 = vst.msk [vmem:[%s366 + $0x91] sm:$0xff] %vm278, %v3304
        %3337 = vst.msk [vmem:[%s366 + $0x99] sm:$0xff] %vm278, %v3305
        %3338 = vst.msk [vmem:[%s366 + $0xa9] sm:$0xff] %vm278, %v3306
        %3339 = vst.msk [vmem:[%s366 + $0xb1] sm:$0xff] %vm278, %v3307
        %3340 = vst.msk [vmem:[%s366 + $0xc1] sm:$0xff] %vm278, %v3308
        %3341 = vst.msk [vmem:[%s366 + $0xc9] sm:$0xff] %vm278, %v3309
        %3342 = vst.msk [vmem:[%s366 + $0xd9] sm:$0xff] %vm278, %v3310
        %3343 = vst.msk [vmem:[%s366 + $0xe1] sm:$0xff] %vm278, %v3311
        %3344 = vst.msk [vmem:[%s366 + $0xf1] sm:$0xff] %vm278, %v3312
        %3345 = vst.msk [vmem:[%s366 + $0xf9] sm:$0xff] %vm278, %v3313
        %3346 = vst.msk [vmem:[%s366 + $0x109] sm:$0xff] %vm278, %v3314
        %3347 = vst.msk [vmem:[%s366 + $0x111] sm:$0xff] %vm278, %v3315
        %3348 = vst.msk [vmem:[%s366 + $0x121] sm:$0xff] %vm278, %v3316
        %3349 = vst.msk [vmem:[%s366 + $0x129] sm:$0xff] %vm278, %v3317
        %3350 = vst.msk [vmem:[%s366 + $0x139] sm:$0xff] %vm278, %v3318
        %3351 = vst.msk [vmem:[%s366 + $0x141] sm:$0xff] %vm278, %v3319
        %3352 = vst.msk [vmem:[%s366 + $0x151] sm:$0xff] %vm278, %v3320
        %3353 = vst.msk [vmem:[%s366 + $0x159] sm:$0xff] %vm278, %v3321
        %3354 = vst.msk [vmem:[%s366 + $0x169] sm:$0xff] %vm278, %v3322
        %3355 = vst.msk [vmem:[%s366 + $0x171] sm:$0xff] %vm278, %v3323
        %v3356 = vld [vmem:[#allocation2] sm:$0xff]
        %v3357 = vld [vmem:[#allocation2 + $0x8] sm:$0xff]
        %v3358 = vld [vmem:[#allocation2 + $0x18] sm:$0xff]
        %v3359 = vld [vmem:[#allocation2 + $0x20] sm:$0xff]
        %v3360 = vld [vmem:[#allocation2 + $0x30] sm:$0xff]
        %v3361 = vld [vmem:[#allocation2 + $0x38] sm:$0xff]
        %v3362 = vld [vmem:[#allocation2 + $0x48] sm:$0xff]
        %v3363 = vld [vmem:[#allocation2 + $0x50] sm:$0xff]
        %v3364 = vld [vmem:[#allocation2 + $0x60] sm:$0xff]
        %v3365 = vld [vmem:[#allocation2 + $0x68] sm:$0xff]
        %v3366 = vld [vmem:[#allocation2 + $0x78] sm:$0xff]
        %v3367 = vld [vmem:[#allocation2 + $0x80] sm:$0xff]
        %v3368 = vld [vmem:[#allocation2 + $0x90] sm:$0xff]
        %v3369 = vld [vmem:[#allocation2 + $0x98] sm:$0xff]
        %v3370 = vld [vmem:[#allocation2 + $0xa8] sm:$0xff]
        %v3371 = vld [vmem:[#allocation2 + $0xb0] sm:$0xff]
        %v3372 = vld [vmem:[#allocation2 + $0xc0] sm:$0xff]
        %v3373 = vld [vmem:[#allocation2 + $0xc8] sm:$0xff]
        %v3374 = vld [vmem:[#allocation2 + $0xd8] sm:$0xff]
        %v3375 = vld [vmem:[#allocation2 + $0xe0] sm:$0xff]
        %v3376 = vld [vmem:[#allocation2 + $0xf0] sm:$0xff]
        %v3377 = vld [vmem:[#allocation2 + $0xf8] sm:$0xff]
        %v3378 = vld [vmem:[#allocation2 + $0x108] sm:$0xff]
        %v3379 = vld [vmem:[#allocation2 + $0x110] sm:$0xff]
        %v3380 = vld [vmem:[#allocation2 + $0x120] sm:$0xff]
        %v3381 = vld [vmem:[#allocation2 + $0x128] sm:$0xff]
        %v3382 = vld [vmem:[#allocation2 + $0x138] sm:$0xff]
        %v3383 = vld [vmem:[#allocation2 + $0x140] sm:$0xff]
        %v3384 = vld [vmem:[#allocation2 + $0x150] sm:$0xff]
        %v3385 = vld [vmem:[#allocation2 + $0x158] sm:$0xff]
        %v3386 = vld [vmem:[#allocation2 + $0x168] sm:$0xff]
        %v3387 = vld [vmem:[#allocation2 + $0x170] sm:$0xff]
        %v3388 = vpack.c.bf16 %v3357, %v3356
        %v3389 = vpack.c.bf16 %v3359, %v3358
        %v3390 = vpack.c.bf16 %v3361, %v3360
        %v3391 = vpack.c.bf16 %v3363, %v3362
        %v3392 = vpack.c.bf16 %v3365, %v3364
        %v3393 = vpack.c.bf16 %v3367, %v3366
        %v3394 = vpack.c.bf16 %v3369, %v3368
        %v3395 = vpack.c.bf16 %v3371, %v3370
        %v3396 = vpack.c.bf16 %v3373, %v3372
        %v3397 = vpack.c.bf16 %v3375, %v3374
        %v3398 = vpack.c.bf16 %v3377, %v3376
        %v3399 = vpack.c.bf16 %v3379, %v3378
        %v3400 = vpack.c.bf16 %v3381, %v3380
        %v3401 = vpack.c.bf16 %v3383, %v3382
        %v3402 = vpack.c.bf16 %v3385, %v3384
        %v3403 = vpack.c.bf16 %v3387, %v3386
        %v3404 = vld [vmem:[#allocation2 + $0x1] sm:$0xff]
        %v3405 = vld [vmem:[#allocation2 + $0x9] sm:$0xff]
        %v3406 = vld [vmem:[#allocation2 + $0x19] sm:$0xff]
        %v3407 = vld [vmem:[#allocation2 + $0x21] sm:$0xff]
        %v3408 = vld [vmem:[#allocation2 + $0x31] sm:$0xff]
        %v3409 = vld [vmem:[#allocation2 + $0x39] sm:$0xff]
        %v3410 = vld [vmem:[#allocation2 + $0x49] sm:$0xff]
        %v3411 = vld [vmem:[#allocation2 + $0x51] sm:$0xff]
        %v3412 = vld [vmem:[#allocation2 + $0x61] sm:$0xff]
        %v3413 = vld [vmem:[#allocation2 + $0x69] sm:$0xff]
        %v3414 = vld [vmem:[#allocation2 + $0x79] sm:$0xff]
        %v3415 = vld [vmem:[#allocation2 + $0x81] sm:$0xff]
        %v3416 = vld [vmem:[#allocation2 + $0x91] sm:$0xff]
        %v3417 = vld [vmem:[#allocation2 + $0x99] sm:$0xff]
        %v3418 = vld [vmem:[#allocation2 + $0xa9] sm:$0xff]
        %v3419 = vld [vmem:[#allocation2 + $0xb1] sm:$0xff]
        %v3420 = vld [vmem:[#allocation2 + $0xc1] sm:$0xff]
        %v3421 = vld [vmem:[#allocation2 + $0xc9] sm:$0xff]
        %v3422 = vld [vmem:[#allocation2 + $0xd9] sm:$0xff]
        %v3423 = vld [vmem:[#allocation2 + $0xe1] sm:$0xff]
        %v3424 = vld [vmem:[#allocation2 + $0xf1] sm:$0xff]
        %v3425 = vld [vmem:[#allocation2 + $0xf9] sm:$0xff]
        %v3426 = vld [vmem:[#allocation2 + $0x109] sm:$0xff]
        %v3427 = vld [vmem:[#allocation2 + $0x111] sm:$0xff]
        %v3428 = vld [vmem:[#allocation2 + $0x121] sm:$0xff]
        %v3429 = vld [vmem:[#allocation2 + $0x129] sm:$0xff]
        %v3430 = vld [vmem:[#allocation2 + $0x139] sm:$0xff]
        %v3431 = vld [vmem:[#allocation2 + $0x141] sm:$0xff]
        %v3432 = vld [vmem:[#allocation2 + $0x151] sm:$0xff]
        %v3433 = vld [vmem:[#allocation2 + $0x159] sm:$0xff]
        %v3434 = vld [vmem:[#allocation2 + $0x169] sm:$0xff]
        %v3435 = vld [vmem:[#allocation2 + $0x171] sm:$0xff]
        %v3436 = vpack.c.bf16 %v3405, %v3404
        %v3437 = vpack.c.bf16 %v3407, %v3406
        %v3438 = vpack.c.bf16 %v3409, %v3408
        %v3439 = vpack.c.bf16 %v3411, %v3410
        %v3440 = vpack.c.bf16 %v3413, %v3412
        %v3441 = vpack.c.bf16 %v3415, %v3414
        %v3442 = vpack.c.bf16 %v3417, %v3416
        %v3443 = vpack.c.bf16 %v3419, %v3418
        %v3444 = vpack.c.bf16 %v3421, %v3420
        %v3445 = vpack.c.bf16 %v3423, %v3422
        %v3446 = vpack.c.bf16 %v3425, %v3424
        %v3447 = vpack.c.bf16 %v3427, %v3426
        %v3448 = vpack.c.bf16 %v3429, %v3428
        %v3449 = vpack.c.bf16 %v3431, %v3430
        %v3450 = vpack.c.bf16 %v3433, %v3432
        %v3451 = vpack.c.bf16 %v3435, %v3434
        %v3452 = vld [vmem:[#allocation2 + $0x2] sm:$0xff]
        %v3453 = vld [vmem:[#allocation2 + $0xa] sm:$0xff]
        %v3454 = vld [vmem:[#allocation2 + $0x1a] sm:$0xff]
        %v3455 = vld [vmem:[#allocation2 + $0x22] sm:$0xff]
        %v3456 = vld [vmem:[#allocation2 + $0x32] sm:$0xff]
        %v3457 = vld [vmem:[#allocation2 + $0x3a] sm:$0xff]
        %v3458 = vld [vmem:[#allocation2 + $0x4a] sm:$0xff]
        %v3459 = vld [vmem:[#allocation2 + $0x52] sm:$0xff]
        %v3460 = vld [vmem:[#allocation2 + $0x62] sm:$0xff]
        %v3461 = vld [vmem:[#allocation2 + $0x6a] sm:$0xff]
        %v3462 = vld [vmem:[#allocation2 + $0x7a] sm:$0xff]
        %v3463 = vld [vmem:[#allocation2 + $0x82] sm:$0xff]
        %v3464 = vld [vmem:[#allocation2 + $0x92] sm:$0xff]
        %v3465 = vld [vmem:[#allocation2 + $0x9a] sm:$0xff]
        %v3466 = vld [vmem:[#allocation2 + $0xaa] sm:$0xff]
        %v3467 = vld [vmem:[#allocation2 + $0xb2] sm:$0xff]
        %v3468 = vld [vmem:[#allocation2 + $0xc2] sm:$0xff]
        %v3469 = vld [vmem:[#allocation2 + $0xca] sm:$0xff]
        %v3470 = vld [vmem:[#allocation2 + $0xda] sm:$0xff]
        %v3471 = vld [vmem:[#allocation2 + $0xe2] sm:$0xff]
        %v3472 = vld [vmem:[#allocation2 + $0xf2] sm:$0xff]
        %v3473 = vld [vmem:[#allocation2 + $0xfa] sm:$0xff]
        %v3474 = vld [vmem:[#allocation2 + $0x10a] sm:$0xff]
        %v3475 = vld [vmem:[#allocation2 + $0x112] sm:$0xff]
        %v3476 = vld [vmem:[#allocation2 + $0x122] sm:$0xff]
        %v3477 = vld [vmem:[#allocation2 + $0x12a] sm:$0xff]
        %v3478 = vld [vmem:[#allocation2 + $0x13a] sm:$0xff]
        %v3479 = vld [vmem:[#allocation2 + $0x142] sm:$0xff]
        %v3480 = vld [vmem:[#allocation2 + $0x152] sm:$0xff]
        %v3481 = vld [vmem:[#allocation2 + $0x15a] sm:$0xff]
        %v3482 = vld [vmem:[#allocation2 + $0x16a] sm:$0xff]
        %v3483 = vld [vmem:[#allocation2 + $0x172] sm:$0xff]
        %v3484 = vpack.c.bf16 %v3453, %v3452
        %v3485 = vpack.c.bf16 %v3455, %v3454
        %v3486 = vpack.c.bf16 %v3457, %v3456
        %v3487 = vpack.c.bf16 %v3459, %v3458
        %v3488 = vpack.c.bf16 %v3461, %v3460
        %v3489 = vpack.c.bf16 %v3463, %v3462
        %v3490 = vpack.c.bf16 %v3465, %v3464
        %v3491 = vpack.c.bf16 %v3467, %v3466
        %v3492 = vpack.c.bf16 %v3469, %v3468
        %v3493 = vpack.c.bf16 %v3471, %v3470
        %v3494 = vpack.c.bf16 %v3473, %v3472
        %v3495 = vpack.c.bf16 %v3475, %v3474
        %v3496 = vpack.c.bf16 %v3477, %v3476
        %v3497 = vpack.c.bf16 %v3479, %v3478
        %v3498 = vpack.c.bf16 %v3481, %v3480
        %v3499 = vpack.c.bf16 %v3483, %v3482
        %v3500 = vld [vmem:[%s366] sm:$0xff]
        %v3501 = vld [vmem:[%s366 + $0x8] sm:$0xff]
        %v3502 = vld [vmem:[%s366 + $0x18] sm:$0xff]
        %v3503 = vld [vmem:[%s366 + $0x20] sm:$0xff]
        %v3504 = vld [vmem:[%s366 + $0x30] sm:$0xff]
        %v3505 = vld [vmem:[%s366 + $0x38] sm:$0xff]
        %v3506 = vld [vmem:[%s366 + $0x48] sm:$0xff]
        %v3507 = vld [vmem:[%s366 + $0x50] sm:$0xff]
        %v3508 = vld [vmem:[%s366 + $0x60] sm:$0xff]
        %v3509 = vld [vmem:[%s366 + $0x68] sm:$0xff]
        %v3510 = vld [vmem:[%s366 + $0x78] sm:$0xff]
        %v3511 = vld [vmem:[%s366 + $0x80] sm:$0xff]
        %v3512 = vld [vmem:[%s366 + $0x90] sm:$0xff]
        %v3513 = vld [vmem:[%s366 + $0x98] sm:$0xff]
        %v3514 = vld [vmem:[%s366 + $0xa8] sm:$0xff]
        %v3515 = vld [vmem:[%s366 + $0xb0] sm:$0xff]
        %v3516 = vld [vmem:[%s366 + $0xc0] sm:$0xff]
        %v3517 = vld [vmem:[%s366 + $0xc8] sm:$0xff]
        %v3518 = vld [vmem:[%s366 + $0xd8] sm:$0xff]
        %v3519 = vld [vmem:[%s366 + $0xe0] sm:$0xff]
        %v3520 = vld [vmem:[%s366 + $0xf0] sm:$0xff]
        %v3521 = vld [vmem:[%s366 + $0xf8] sm:$0xff]
        %v3522 = vld [vmem:[%s366 + $0x108] sm:$0xff]
        %v3523 = vld [vmem:[%s366 + $0x110] sm:$0xff]
        %v3524 = vld [vmem:[%s366 + $0x120] sm:$0xff]
        %v3525 = vld [vmem:[%s366 + $0x128] sm:$0xff]
        %v3526 = vld [vmem:[%s366 + $0x138] sm:$0xff]
        %v3527 = vld [vmem:[%s366 + $0x140] sm:$0xff]
        %v3528 = vld [vmem:[%s366 + $0x150] sm:$0xff]
        %v3529 = vld [vmem:[%s366 + $0x158] sm:$0xff]
        %v3530 = vld [vmem:[%s366 + $0x168] sm:$0xff]
        %v3531 = vld [vmem:[%s366 + $0x170] sm:$0xff]
        %v3532 = vpack.c.bf16 %v3501, %v3500
        %v3533 = vpack.c.bf16 %v3503, %v3502
        %v3534 = vpack.c.bf16 %v3505, %v3504
        %v3535 = vpack.c.bf16 %v3507, %v3506
        %v3536 = vpack.c.bf16 %v3509, %v3508
        %v3537 = vpack.c.bf16 %v3511, %v3510
        %v3538 = vpack.c.bf16 %v3513, %v3512
        %v3539 = vpack.c.bf16 %v3515, %v3514
        %v3540 = vpack.c.bf16 %v3517, %v3516
        %v3541 = vpack.c.bf16 %v3519, %v3518
        %v3542 = vpack.c.bf16 %v3521, %v3520
        %v3543 = vpack.c.bf16 %v3523, %v3522
        %v3544 = vpack.c.bf16 %v3525, %v3524
        %v3545 = vpack.c.bf16 %v3527, %v3526
        %v3546 = vpack.c.bf16 %v3529, %v3528
        %v3547 = vpack.c.bf16 %v3531, %v3530
        %v3548 = vld [vmem:[%s366 + $0x1] sm:$0xff]
        %v3549 = vld [vmem:[%s366 + $0x9] sm:$0xff]
        %v3550 = vld [vmem:[%s366 + $0x19] sm:$0xff]
        %v3551 = vld [vmem:[%s366 + $0x21] sm:$0xff]
        %v3552 = vld [vmem:[%s366 + $0x31] sm:$0xff]
        %v3553 = vld [vmem:[%s366 + $0x39] sm:$0xff]
        %v3554 = vld [vmem:[%s366 + $0x49] sm:$0xff]
        %v3555 = vld [vmem:[%s366 + $0x51] sm:$0xff]
        %v3556 = vld [vmem:[%s366 + $0x61] sm:$0xff]
        %v3557 = vld [vmem:[%s366 + $0x69] sm:$0xff]
        %v3558 = vld [vmem:[%s366 + $0x79] sm:$0xff]
        %v3559 = vld [vmem:[%s366 + $0x81] sm:$0xff]
        %v3560 = vld [vmem:[%s366 + $0x91] sm:$0xff]
        %v3561 = vld [vmem:[%s366 + $0x99] sm:$0xff]
        %v3562 = vld [vmem:[%s366 + $0xa9] sm:$0xff]
        %v3563 = vld [vmem:[%s366 + $0xb1] sm:$0xff]
        %v3564 = vld [vmem:[%s366 + $0xc1] sm:$0xff]
        %v3565 = vld [vmem:[%s366 + $0xc9] sm:$0xff]
        %v3566 = vld [vmem:[%s366 + $0xd9] sm:$0xff]
        %v3567 = vld [vmem:[%s366 + $0xe1] sm:$0xff]
        %v3568 = vld [vmem:[%s366 + $0xf1] sm:$0xff]
        %v3569 = vld [vmem:[%s366 + $0xf9] sm:$0xff]
        %v3570 = vld [vmem:[%s366 + $0x109] sm:$0xff]
        %v3571 = vld [vmem:[%s366 + $0x111] sm:$0xff]
        %v3572 = vld [vmem:[%s366 + $0x121] sm:$0xff]
        %v3573 = vld [vmem:[%s366 + $0x129] sm:$0xff]
        %v3574 = vld [vmem:[%s366 + $0x139] sm:$0xff]
        %v3575 = vld [vmem:[%s366 + $0x141] sm:$0xff]
        %v3576 = vld [vmem:[%s366 + $0x151] sm:$0xff]
        %v3577 = vld [vmem:[%s366 + $0x159] sm:$0xff]
        %v3578 = vld [vmem:[%s366 + $0x169] sm:$0xff]
        %v3579 = vld [vmem:[%s366 + $0x171] sm:$0xff]
        %v3580 = vpack.c.bf16 %v3549, %v3548
        %v3581 = vpack.c.bf16 %v3551, %v3550
        %v3582 = vpack.c.bf16 %v3553, %v3552
        %v3583 = vpack.c.bf16 %v3555, %v3554
        %v3584 = vpack.c.bf16 %v3557, %v3556
        %v3585 = vpack.c.bf16 %v3559, %v3558
        %v3586 = vpack.c.bf16 %v3561, %v3560
        %v3587 = vpack.c.bf16 %v3563, %v3562
        %v3588 = vpack.c.bf16 %v3565, %v3564
        %v3589 = vpack.c.bf16 %v3567, %v3566
        %v3590 = vpack.c.bf16 %v3569, %v3568
        %v3591 = vpack.c.bf16 %v3571, %v3570
        %v3592 = vpack.c.bf16 %v3573, %v3572
        %v3593 = vpack.c.bf16 %v3575, %v3574
        %v3594 = vpack.c.bf16 %v3577, %v3576
        %v3595 = vpack.c.bf16 %v3579, %v3578
        %v3596 = vld [vmem:[%s366 + $0x2] sm:$0xff]
        %v3597 = vld [vmem:[%s366 + $0xa] sm:$0xff]
        %v3598 = vld [vmem:[%s366 + $0x1a] sm:$0xff]
        %v3599 = vld [vmem:[%s366 + $0x22] sm:$0xff]
        %v3600 = vld [vmem:[%s366 + $0x32] sm:$0xff]
        %v3601 = vld [vmem:[%s366 + $0x3a] sm:$0xff]
        %v3602 = vld [vmem:[%s366 + $0x4a] sm:$0xff]
        %v3603 = vld [vmem:[%s366 + $0x52] sm:$0xff]
        %v3604 = vld [vmem:[%s366 + $0x62] sm:$0xff]
        %v3605 = vld [vmem:[%s366 + $0x6a] sm:$0xff]
        %v3606 = vld [vmem:[%s366 + $0x7a] sm:$0xff]
        %v3607 = vld [vmem:[%s366 + $0x82] sm:$0xff]
        %v3608 = vld [vmem:[%s366 + $0x92] sm:$0xff]
        %v3609 = vld [vmem:[%s366 + $0x9a] sm:$0xff]
        %v3610 = vld [vmem:[%s366 + $0xaa] sm:$0xff]
        %v3611 = vld [vmem:[%s366 + $0xb2] sm:$0xff]
        %v3612 = vld [vmem:[%s366 + $0xc2] sm:$0xff]
        %v3613 = vld [vmem:[%s366 + $0xca] sm:$0xff]
        %v3614 = vld [vmem:[%s366 + $0xda] sm:$0xff]
        %v3615 = vld [vmem:[%s366 + $0xe2] sm:$0xff]
        %v3616 = vld [vmem:[%s366 + $0xf2] sm:$0xff]
        %v3617 = vld [vmem:[%s366 + $0xfa] sm:$0xff]
        %v3618 = vld [vmem:[%s366 + $0x10a] sm:$0xff]
        %v3619 = vld [vmem:[%s366 + $0x112] sm:$0xff]
        %v3620 = vld [vmem:[%s366 + $0x122] sm:$0xff]
        %v3621 = vld [vmem:[%s366 + $0x12a] sm:$0xff]
        %v3622 = vld [vmem:[%s366 + $0x13a] sm:$0xff]
        %v3623 = vld [vmem:[%s366 + $0x142] sm:$0xff]
        %v3624 = vld [vmem:[%s366 + $0x152] sm:$0xff]
        %v3625 = vld [vmem:[%s366 + $0x15a] sm:$0xff]
        %v3626 = vld [vmem:[%s366 + $0x16a] sm:$0xff]
        %v3627 = vld [vmem:[%s366 + $0x172] sm:$0xff]
        %v3628 = vpack.c.bf16 %v3597, %v3596
        %v3629 = vpack.c.bf16 %v3599, %v3598
        %v3630 = vpack.c.bf16 %v3601, %v3600
        %v3631 = vpack.c.bf16 %v3603, %v3602
        %v3632 = vpack.c.bf16 %v3605, %v3604
        %v3633 = vpack.c.bf16 %v3607, %v3606
        %v3634 = vpack.c.bf16 %v3609, %v3608
        %v3635 = vpack.c.bf16 %v3611, %v3610
        %v3636 = vpack.c.bf16 %v3613, %v3612
        %v3637 = vpack.c.bf16 %v3615, %v3614
        %v3638 = vpack.c.bf16 %v3617, %v3616
        %v3639 = vpack.c.bf16 %v3619, %v3618
        %v3640 = vpack.c.bf16 %v3621, %v3620
        %v3641 = vpack.c.bf16 %v3623, %v3622
        %v3642 = vpack.c.bf16 %v3625, %v3624
        %v3643 = vpack.c.bf16 %v3627, %v3626
        %v3644 = vld [vmem:[%s688] sm:$0xff]
        %v3645 = vld [vmem:[%s688 + $0x8] sm:$0xff]
        %v3646 = vld [vmem:[%s688 + $0x18] sm:$0xff]
        %v3647 = vld [vmem:[%s688 + $0x20] sm:$0xff]
        %v3648 = vld [vmem:[%s688 + $0x30] sm:$0xff]
        %v3649 = vld [vmem:[%s688 + $0x38] sm:$0xff]
        %v3650 = vld [vmem:[%s688 + $0x48] sm:$0xff]
        %v3651 = vld [vmem:[%s688 + $0x50] sm:$0xff]
        %v3652 = vld [vmem:[%s688 + $0x60] sm:$0xff]
        %v3653 = vld [vmem:[%s688 + $0x68] sm:$0xff]
        %v3654 = vld [vmem:[%s688 + $0x78] sm:$0xff]
        %v3655 = vld [vmem:[%s688 + $0x80] sm:$0xff]
        %v3656 = vld [vmem:[%s688 + $0x90] sm:$0xff]
        %v3657 = vld [vmem:[%s688 + $0x98] sm:$0xff]
        %v3658 = vld [vmem:[%s688 + $0xa8] sm:$0xff]
        %v3659 = vld [vmem:[%s688 + $0xb0] sm:$0xff]
        %v3660 = vld [vmem:[%s688 + $0xc0] sm:$0xff]
        %v3661 = vld [vmem:[%s688 + $0xc8] sm:$0xff]
        %v3662 = vld [vmem:[%s688 + $0xd8] sm:$0xff]
        %v3663 = vld [vmem:[%s688 + $0xe0] sm:$0xff]
        %v3664 = vld [vmem:[%s688 + $0xf0] sm:$0xff]
        %v3665 = vld [vmem:[%s688 + $0xf8] sm:$0xff]
        %v3666 = vld [vmem:[%s688 + $0x108] sm:$0xff]
        %v3667 = vld [vmem:[%s688 + $0x110] sm:$0xff]
        %v3668 = vld [vmem:[%s688 + $0x120] sm:$0xff]
        %v3669 = vld [vmem:[%s688 + $0x128] sm:$0xff]
        %v3670 = vld [vmem:[%s688 + $0x138] sm:$0xff]
        %v3671 = vld [vmem:[%s688 + $0x140] sm:$0xff]
        %v3672 = vld [vmem:[%s688 + $0x150] sm:$0xff]
        %v3673 = vld [vmem:[%s688 + $0x158] sm:$0xff]
        %v3674 = vld [vmem:[%s688 + $0x168] sm:$0xff]
        %v3675 = vld [vmem:[%s688 + $0x170] sm:$0xff]
        %v3676 = vpack.c.bf16 %v3645, %v3644
        %v3677 = vpack.c.bf16 %v3647, %v3646
        %v3678 = vpack.c.bf16 %v3649, %v3648
        %v3679 = vpack.c.bf16 %v3651, %v3650
        %v3680 = vpack.c.bf16 %v3653, %v3652
        %v3681 = vpack.c.bf16 %v3655, %v3654
        %v3682 = vpack.c.bf16 %v3657, %v3656
        %v3683 = vpack.c.bf16 %v3659, %v3658
        %v3684 = vpack.c.bf16 %v3661, %v3660
        %v3685 = vpack.c.bf16 %v3663, %v3662
        %v3686 = vpack.c.bf16 %v3665, %v3664
        %v3687 = vpack.c.bf16 %v3667, %v3666
        %v3688 = vpack.c.bf16 %v3669, %v3668
        %v3689 = vpack.c.bf16 %v3671, %v3670
        %v3690 = vpack.c.bf16 %v3673, %v3672
        %v3691 = vpack.c.bf16 %v3675, %v3674
        %v3692 = vld [vmem:[%s688 + $0x1] sm:$0xff]
        %v3693 = vld [vmem:[%s688 + $0x9] sm:$0xff]
        %v3694 = vld [vmem:[%s688 + $0x19] sm:$0xff]
        %v3695 = vld [vmem:[%s688 + $0x21] sm:$0xff]
        %v3696 = vld [vmem:[%s688 + $0x31] sm:$0xff]
        %v3697 = vld [vmem:[%s688 + $0x39] sm:$0xff]
        %v3698 = vld [vmem:[%s688 + $0x49] sm:$0xff]
        %v3699 = vld [vmem:[%s688 + $0x51] sm:$0xff]
        %v3700 = vld [vmem:[%s688 + $0x61] sm:$0xff]
        %v3701 = vld [vmem:[%s688 + $0x69] sm:$0xff]
        %v3702 = vld [vmem:[%s688 + $0x79] sm:$0xff]
        %v3703 = vld [vmem:[%s688 + $0x81] sm:$0xff]
        %v3704 = vld [vmem:[%s688 + $0x91] sm:$0xff]
        %v3705 = vld [vmem:[%s688 + $0x99] sm:$0xff]
        %v3706 = vld [vmem:[%s688 + $0xa9] sm:$0xff]
        %v3707 = vld [vmem:[%s688 + $0xb1] sm:$0xff]
        %v3708 = vld [vmem:[%s688 + $0xc1] sm:$0xff]
        %v3709 = vld [vmem:[%s688 + $0xc9] sm:$0xff]
        %v3710 = vld [vmem:[%s688 + $0xd9] sm:$0xff]
        %v3711 = vld [vmem:[%s688 + $0xe1] sm:$0xff]
        %v3712 = vld [vmem:[%s688 + $0xf1] sm:$0xff]
        %v3713 = vld [vmem:[%s688 + $0xf9] sm:$0xff]
        %v3714 = vld [vmem:[%s688 + $0x109] sm:$0xff]
        %v3715 = vld [vmem:[%s688 + $0x111] sm:$0xff]
        %v3716 = vld [vmem:[%s688 + $0x121] sm:$0xff]
        %v3717 = vld [vmem:[%s688 + $0x129] sm:$0xff]
        %v3718 = vld [vmem:[%s688 + $0x139] sm:$0xff]
        %v3719 = vld [vmem:[%s688 + $0x141] sm:$0xff]
        %v3720 = vld [vmem:[%s688 + $0x151] sm:$0xff]
        %v3721 = vld [vmem:[%s688 + $0x159] sm:$0xff]
        %v3722 = vld [vmem:[%s688 + $0x169] sm:$0xff]
        %v3723 = vld [vmem:[%s688 + $0x171] sm:$0xff]
        %v3724 = vpack.c.bf16 %v3693, %v3692
        %v3725 = vpack.c.bf16 %v3695, %v3694
        %v3726 = vpack.c.bf16 %v3697, %v3696
        %v3727 = vpack.c.bf16 %v3699, %v3698
        %v3728 = vpack.c.bf16 %v3701, %v3700
        %v3729 = vpack.c.bf16 %v3703, %v3702
        %v3730 = vpack.c.bf16 %v3705, %v3704
        %v3731 = vpack.c.bf16 %v3707, %v3706
        %v3732 = vpack.c.bf16 %v3709, %v3708
        %v3733 = vpack.c.bf16 %v3711, %v3710
        %v3734 = vpack.c.bf16 %v3713, %v3712
        %v3735 = vpack.c.bf16 %v3715, %v3714
        %v3736 = vpack.c.bf16 %v3717, %v3716
        %v3737 = vpack.c.bf16 %v3719, %v3718
        %v3738 = vpack.c.bf16 %v3721, %v3720
        %v3739 = vpack.c.bf16 %v3723, %v3722
        %v3740 = vld [vmem:[%s688 + $0x2] sm:$0xff]
        %v3741 = vld [vmem:[%s688 + $0xa] sm:$0xff]
        %v3742 = vld [vmem:[%s688 + $0x1a] sm:$0xff]
        %v3743 = vld [vmem:[%s688 + $0x22] sm:$0xff]
        %v3744 = vld [vmem:[%s688 + $0x32] sm:$0xff]
        %v3745 = vld [vmem:[%s688 + $0x3a] sm:$0xff]
        %v3746 = vld [vmem:[%s688 + $0x4a] sm:$0xff]
        %v3747 = vld [vmem:[%s688 + $0x52] sm:$0xff]
        %v3748 = vld [vmem:[%s688 + $0x62] sm:$0xff]
        %v3749 = vld [vmem:[%s688 + $0x6a] sm:$0xff]
        %v3750 = vld [vmem:[%s688 + $0x7a] sm:$0xff]
        %v3751 = vld [vmem:[%s688 + $0x82] sm:$0xff]
        %v3752 = vld [vmem:[%s688 + $0x92] sm:$0xff]
        %v3753 = vld [vmem:[%s688 + $0x9a] sm:$0xff]
        %v3754 = vld [vmem:[%s688 + $0xaa] sm:$0xff]
        %v3755 = vld [vmem:[%s688 + $0xb2] sm:$0xff]
        %v3756 = vld [vmem:[%s688 + $0xc2] sm:$0xff]
        %v3757 = vld [vmem:[%s688 + $0xca] sm:$0xff]
        %v3758 = vld [vmem:[%s688 + $0xda] sm:$0xff]
        %v3759 = vld [vmem:[%s688 + $0xe2] sm:$0xff]
        %v3760 = vld [vmem:[%s688 + $0xf2] sm:$0xff]
        %v3761 = vld [vmem:[%s688 + $0xfa] sm:$0xff]
        %v3762 = vld [vmem:[%s688 + $0x10a] sm:$0xff]
        %v3763 = vld [vmem:[%s688 + $0x112] sm:$0xff]
        %v3764 = vld [vmem:[%s688 + $0x122] sm:$0xff]
        %v3765 = vld [vmem:[%s688 + $0x12a] sm:$0xff]
        %v3766 = vld [vmem:[%s688 + $0x13a] sm:$0xff]
        %v3767 = vld [vmem:[%s688 + $0x142] sm:$0xff]
        %v3768 = vld [vmem:[%s688 + $0x152] sm:$0xff]
        %v3769 = vld [vmem:[%s688 + $0x15a] sm:$0xff]
        %v3770 = vld [vmem:[%s688 + $0x16a] sm:$0xff]
        %v3771 = vld [vmem:[%s688 + $0x172] sm:$0xff]
        %v3772 = vpack.c.bf16 %v3741, %v3740
        %v3773 = vpack.c.bf16 %v3743, %v3742
        %v3774 = vpack.c.bf16 %v3745, %v3744
        %v3775 = vpack.c.bf16 %v3747, %v3746
        %v3776 = vpack.c.bf16 %v3749, %v3748
        %v3777 = vpack.c.bf16 %v3751, %v3750
        %v3778 = vpack.c.bf16 %v3753, %v3752
        %v3779 = vpack.c.bf16 %v3755, %v3754
        %v3780 = vpack.c.bf16 %v3757, %v3756
        %v3781 = vpack.c.bf16 %v3759, %v3758
        %v3782 = vpack.c.bf16 %v3761, %v3760
        %v3783 = vpack.c.bf16 %v3763, %v3762
        %v3784 = vpack.c.bf16 %v3765, %v3764
        %v3785 = vpack.c.bf16 %v3767, %v3766
        %v3786 = vpack.c.bf16 %v3769, %v3768
        %v3787 = vpack.c.bf16 %v3771, %v3770
        %3804 = vrot.lane.b32.xlu0 %v3436, 64
        %v3805 = vpop.permute.xlu0 %3804
        %3806 = vrot.lane.b32.xlu0 %v3437, 64
        %v3807 = vpop.permute.xlu0 %3806
        %3808 = vrot.lane.b32.xlu0 %v3438, 64
        %v3809 = vpop.permute.xlu0 %3808
        %3810 = vrot.lane.b32.xlu0 %v3439, 64
        %v3811 = vpop.permute.xlu0 %3810
        %3812 = vrot.lane.b32.xlu0 %v3440, 64
        %v3813 = vpop.permute.xlu0 %3812
        %3814 = vrot.lane.b32.xlu0 %v3441, 64
        %v3815 = vpop.permute.xlu0 %3814
        %3816 = vrot.lane.b32.xlu0 %v3442, 64
        %v3817 = vpop.permute.xlu0 %3816
        %3818 = vrot.lane.b32.xlu0 %v3443, 64
        %v3819 = vpop.permute.xlu0 %3818
        %3820 = vrot.lane.b32.xlu0 %v3444, 64
        %v3821 = vpop.permute.xlu0 %3820
        %3822 = vrot.lane.b32.xlu0 %v3445, 64
        %v3823 = vpop.permute.xlu0 %3822
        %3824 = vrot.lane.b32.xlu0 %v3446, 64
        %v3825 = vpop.permute.xlu0 %3824
        %3826 = vrot.lane.b32.xlu0 %v3447, 64
        %v3827 = vpop.permute.xlu0 %3826
        %3828 = vrot.lane.b32.xlu0 %v3448, 64
        %v3829 = vpop.permute.xlu0 %3828
        %3830 = vrot.lane.b32.xlu0 %v3449, 64
        %v3831 = vpop.permute.xlu0 %3830
        %3832 = vrot.lane.b32.xlu0 %v3450, 64
        %v3833 = vpop.permute.xlu0 %3832
        %3834 = vrot.lane.b32.xlu0 %v3451, 64
        %v3835 = vpop.permute.xlu0 %3834
        %v3838 = vsel %vm278, %v3388, %v3805
        %v3841 = vsel %vm278, %v3389, %v3807
        %v3844 = vsel %vm278, %v3390, %v3809
        %v3847 = vsel %vm278, %v3391, %v3811
        %v3850 = vsel %vm278, %v3392, %v3813
        %v3853 = vsel %vm278, %v3393, %v3815
        %v3856 = vsel %vm278, %v3394, %v3817
        %v3859 = vsel %vm278, %v3395, %v3819
        %v3862 = vsel %vm278, %v3396, %v3821
        %v3865 = vsel %vm278, %v3397, %v3823
        %v3868 = vsel %vm278, %v3398, %v3825
        %v3871 = vsel %vm278, %v3399, %v3827
        %v3874 = vsel %vm278, %v3400, %v3829
        %v3877 = vsel %vm278, %v3401, %v3831
        %v3880 = vsel %vm278, %v3402, %v3833
        %v3883 = vsel %vm278, %v3403, %v3835
        %v3900 = vunpack.c.l.b16 %v3838
        %v3901 = vunpack.c.h.b16 %v3838
        %v3902 = vunpack.c.l.b16 %v3841
        %v3903 = vunpack.c.h.b16 %v3841
        %v3904 = vunpack.c.l.b16 %v3844
        %v3905 = vunpack.c.h.b16 %v3844
        %v3906 = vunpack.c.l.b16 %v3847
        %v3907 = vunpack.c.h.b16 %v3847
        %v3908 = vunpack.c.l.b16 %v3850
        %v3909 = vunpack.c.h.b16 %v3850
        %v3910 = vunpack.c.l.b16 %v3853
        %v3911 = vunpack.c.h.b16 %v3853
        %v3912 = vunpack.c.l.b16 %v3856
        %v3913 = vunpack.c.h.b16 %v3856
        %v3914 = vunpack.c.l.b16 %v3859
        %v3915 = vunpack.c.h.b16 %v3859
        %v3916 = vunpack.c.l.b16 %v3862
        %v3917 = vunpack.c.h.b16 %v3862
        %v3918 = vunpack.c.l.b16 %v3865
        %v3919 = vunpack.c.h.b16 %v3865
        %v3920 = vunpack.c.l.b16 %v3868
        %v3921 = vunpack.c.h.b16 %v3868
        %v3922 = vunpack.c.l.b16 %v3871
        %v3923 = vunpack.c.h.b16 %v3871
        %v3924 = vunpack.c.l.b16 %v3874
        %v3925 = vunpack.c.h.b16 %v3874
        %v3926 = vunpack.c.l.b16 %v3877
        %v3927 = vunpack.c.h.b16 %v3877
        %v3928 = vunpack.c.l.b16 %v3880
        %v3929 = vunpack.c.h.b16 %v3880
        %v3930 = vunpack.c.l.b16 %v3883
        %v3931 = vunpack.c.h.b16 %v3883
        %v3932 = vpack.c.b16 %v3900, %v3900
        %v3933 = vpack.c.b16 %v3901, %v3901
        %v3934 = vpack.c.b16 %v3902, %v3902
        %v3935 = vpack.c.b16 %v3903, %v3903
        %v3936 = vpack.c.b16 %v3904, %v3904
        %v3937 = vpack.c.b16 %v3905, %v3905
        %v3938 = vpack.c.b16 %v3906, %v3906
        %v3939 = vpack.c.b16 %v3907, %v3907
        %v3940 = vpack.c.b16 %v3908, %v3908
        %v3941 = vpack.c.b16 %v3909, %v3909
        %v3942 = vpack.c.b16 %v3910, %v3910
        %v3943 = vpack.c.b16 %v3911, %v3911
        %v3944 = vpack.c.b16 %v3912, %v3912
        %v3945 = vpack.c.b16 %v3913, %v3913
        %v3946 = vpack.c.b16 %v3914, %v3914
        %v3947 = vpack.c.b16 %v3915, %v3915
        %v3948 = vpack.c.b16 %v3916, %v3916
        %v3949 = vpack.c.b16 %v3917, %v3917
        %v3950 = vpack.c.b16 %v3918, %v3918
        %v3951 = vpack.c.b16 %v3919, %v3919
        %v3952 = vpack.c.b16 %v3920, %v3920
        %v3953 = vpack.c.b16 %v3921, %v3921
        %v3954 = vpack.c.b16 %v3922, %v3922
        %v3955 = vpack.c.b16 %v3923, %v3923
        %v3956 = vpack.c.b16 %v3924, %v3924
        %v3957 = vpack.c.b16 %v3925, %v3925
        %v3958 = vpack.c.b16 %v3926, %v3926
        %v3959 = vpack.c.b16 %v3927, %v3927
        %v3960 = vpack.c.b16 %v3928, %v3928
        %v3961 = vpack.c.b16 %v3929, %v3929
        %v3962 = vpack.c.b16 %v3930, %v3930
        %v3963 = vpack.c.b16 %v3931, %v3931
        %3996 = vst [vmem:[#allocation3] sm:$0xf] %v3932
        %3997 = vst [vmem:[#allocation3 + $0x14] sm:$0xf] %v3933
        %3998 = vst [vmem:[#allocation3 + $0x28] sm:$0xf] %v3934
        %3999 = vst [vmem:[#allocation3 + $0x3c] sm:$0xf] %v3935
        %4000 = vst [vmem:[#allocation3 + $0x50] sm:$0xf] %v3936
        %4001 = vst [vmem:[#allocation3 + $0x64] sm:$0xf] %v3937
        %4002 = vst [vmem:[#allocation3 + $0x78] sm:$0xf] %v3938
        %4003 = vst [vmem:[#allocation3 + $0x8c] sm:$0xf] %v3939
        %4004 = vst [vmem:[#allocation3 + $0xa0] sm:$0xf] %v3940
        %4005 = vst [vmem:[#allocation3 + $0xb4] sm:$0xf] %v3941
        %4006 = vst [vmem:[#allocation3 + $0xc8] sm:$0xf] %v3942
        %4007 = vst [vmem:[#allocation3 + $0xdc] sm:$0xf] %v3943
        %4008 = vst [vmem:[#allocation3 + $0xf0] sm:$0xf] %v3944
        %4009 = vst [vmem:[#allocation3 + $0x104] sm:$0xf] %v3945
        %4010 = vst [vmem:[#allocation3 + $0x118] sm:$0xf] %v3946
        %4011 = vst [vmem:[#allocation3 + $0x12c] sm:$0xf] %v3947
        %4012 = vst [vmem:[#allocation3 + $0x140] sm:$0xf] %v3948
        %4013 = vst [vmem:[#allocation3 + $0x154] sm:$0xf] %v3949
        %4014 = vst [vmem:[#allocation3 + $0x168] sm:$0xf] %v3950
        %4015 = vst [vmem:[#allocation3 + $0x17c] sm:$0xf] %v3951
        %4016 = vst [vmem:[#allocation3 + $0x190] sm:$0xf] %v3952
        %4017 = vst [vmem:[#allocation3 + $0x1a4] sm:$0xf] %v3953
        %4018 = vst [vmem:[#allocation3 + $0x1b8] sm:$0xf] %v3954
        %4019 = vst [vmem:[#allocation3 + $0x1cc] sm:$0xf] %v3955
        %4020 = vst [vmem:[#allocation3 + $0x1e0] sm:$0xf] %v3956
        %4021 = vst [vmem:[#allocation3 + $0x1f4] sm:$0xf] %v3957
        %4022 = vst [vmem:[#allocation3 + $0x208] sm:$0xf] %v3958
        %4023 = vst [vmem:[#allocation3 + $0x21c] sm:$0xf] %v3959
        %4024 = vst [vmem:[#allocation3 + $0x230] sm:$0xf] %v3960
        %4025 = vst [vmem:[#allocation3 + $0x244] sm:$0xf] %v3961
        %4026 = vst [vmem:[#allocation3 + $0x258] sm:$0xf] %v3962
        %4027 = vst [vmem:[#allocation3 + $0x26c] sm:$0xf] %v3963
        %4044 = vrot.lane.b32.xlu0 %v3532, 64
        %v4045 = vpop.permute.xlu0 %4044
        %4046 = vrot.lane.b32.xlu0 %v3533, 64
        %v4047 = vpop.permute.xlu0 %4046
        %4048 = vrot.lane.b32.xlu0 %v3534, 64
        %v4049 = vpop.permute.xlu0 %4048
        %4050 = vrot.lane.b32.xlu0 %v3535, 64
        %v4051 = vpop.permute.xlu0 %4050
        %4052 = vrot.lane.b32.xlu0 %v3536, 64
        %v4053 = vpop.permute.xlu0 %4052
        %4054 = vrot.lane.b32.xlu0 %v3537, 64
        %v4055 = vpop.permute.xlu0 %4054
        %4056 = vrot.lane.b32.xlu0 %v3538, 64
        %v4057 = vpop.permute.xlu0 %4056
        %4058 = vrot.lane.b32.xlu0 %v3539, 64
        %v4059 = vpop.permute.xlu0 %4058
        %4060 = vrot.lane.b32.xlu0 %v3540, 64
        %v4061 = vpop.permute.xlu0 %4060
        %4062 = vrot.lane.b32.xlu0 %v3541, 64
        %v4063 = vpop.permute.xlu0 %4062
        %4064 = vrot.lane.b32.xlu0 %v3542, 64
        %v4065 = vpop.permute.xlu0 %4064
        %4066 = vrot.lane.b32.xlu0 %v3543, 64
        %v4067 = vpop.permute.xlu0 %4066
        %4068 = vrot.lane.b32.xlu0 %v3544, 64
        %v4069 = vpop.permute.xlu0 %4068
        %4070 = vrot.lane.b32.xlu0 %v3545, 64
        %v4071 = vpop.permute.xlu0 %4070
        %4072 = vrot.lane.b32.xlu0 %v3546, 64
        %v4073 = vpop.permute.xlu0 %4072
        %4074 = vrot.lane.b32.xlu0 %v3547, 64
        %v4075 = vpop.permute.xlu0 %4074
        %v4078 = vsel %vm278, %v3484, %v4045
        %v4081 = vsel %vm278, %v3485, %v4047
        %v4084 = vsel %vm278, %v3486, %v4049
        %v4087 = vsel %vm278, %v3487, %v4051
        %v4090 = vsel %vm278, %v3488, %v4053
        %v4093 = vsel %vm278, %v3489, %v4055
        %v4096 = vsel %vm278, %v3490, %v4057
        %v4099 = vsel %vm278, %v3491, %v4059
        %v4102 = vsel %vm278, %v3492, %v4061
        %v4105 = vsel %vm278, %v3493, %v4063
        %v4108 = vsel %vm278, %v3494, %v4065
        %v4111 = vsel %vm278, %v3495, %v4067
        %v4114 = vsel %vm278, %v3496, %v4069
        %v4117 = vsel %vm278, %v3497, %v4071
        %v4120 = vsel %vm278, %v3498, %v4073
        %v4123 = vsel %vm278, %v3499, %v4075
        %v4140 = vunpack.c.l.b16 %v4078
        %v4141 = vunpack.c.h.b16 %v4078
        %v4142 = vunpack.c.l.b16 %v4081
        %v4143 = vunpack.c.h.b16 %v4081
        %v4144 = vunpack.c.l.b16 %v4084
        %v4145 = vunpack.c.h.b16 %v4084
        %v4146 = vunpack.c.l.b16 %v4087
        %v4147 = vunpack.c.h.b16 %v4087
        %v4148 = vunpack.c.l.b16 %v4090
        %v4149 = vunpack.c.h.b16 %v4090
        %v4150 = vunpack.c.l.b16 %v4093
        %v4151 = vunpack.c.h.b16 %v4093
        %v4152 = vunpack.c.l.b16 %v4096
        %v4153 = vunpack.c.h.b16 %v4096
        %v4154 = vunpack.c.l.b16 %v4099
        %v4155 = vunpack.c.h.b16 %v4099
        %v4156 = vunpack.c.l.b16 %v4102
        %v4157 = vunpack.c.h.b16 %v4102
        %v4158 = vunpack.c.l.b16 %v4105
        %v4159 = vunpack.c.h.b16 %v4105
        %v4160 = vunpack.c.l.b16 %v4108
        %v4161 = vunpack.c.h.b16 %v4108
        %v4162 = vunpack.c.l.b16 %v4111
        %v4163 = vunpack.c.h.b16 %v4111
        %v4164 = vunpack.c.l.b16 %v4114
        %v4165 = vunpack.c.h.b16 %v4114
        %v4166 = vunpack.c.l.b16 %v4117
        %v4167 = vunpack.c.h.b16 %v4117
        %v4168 = vunpack.c.l.b16 %v4120
        %v4169 = vunpack.c.h.b16 %v4120
        %v4170 = vunpack.c.l.b16 %v4123
        %v4171 = vunpack.c.h.b16 %v4123
        %v4172 = vpack.c.b16 %v4140, %v4140
        %v4173 = vpack.c.b16 %v4141, %v4141
        %v4174 = vpack.c.b16 %v4142, %v4142
        %v4175 = vpack.c.b16 %v4143, %v4143
        %v4176 = vpack.c.b16 %v4144, %v4144
        %v4177 = vpack.c.b16 %v4145, %v4145
        %v4178 = vpack.c.b16 %v4146, %v4146
        %v4179 = vpack.c.b16 %v4147, %v4147
        %v4180 = vpack.c.b16 %v4148, %v4148
        %v4181 = vpack.c.b16 %v4149, %v4149
        %v4182 = vpack.c.b16 %v4150, %v4150
        %v4183 = vpack.c.b16 %v4151, %v4151
        %v4184 = vpack.c.b16 %v4152, %v4152
        %v4185 = vpack.c.b16 %v4153, %v4153
        %v4186 = vpack.c.b16 %v4154, %v4154
        %v4187 = vpack.c.b16 %v4155, %v4155
        %v4188 = vpack.c.b16 %v4156, %v4156
        %v4189 = vpack.c.b16 %v4157, %v4157
        %v4190 = vpack.c.b16 %v4158, %v4158
        %v4191 = vpack.c.b16 %v4159, %v4159
        %v4192 = vpack.c.b16 %v4160, %v4160
        %v4193 = vpack.c.b16 %v4161, %v4161
        %v4194 = vpack.c.b16 %v4162, %v4162
        %v4195 = vpack.c.b16 %v4163, %v4163
        %v4196 = vpack.c.b16 %v4164, %v4164
        %v4197 = vpack.c.b16 %v4165, %v4165
        %v4198 = vpack.c.b16 %v4166, %v4166
        %v4199 = vpack.c.b16 %v4167, %v4167
        %v4200 = vpack.c.b16 %v4168, %v4168
        %v4201 = vpack.c.b16 %v4169, %v4169
        %v4202 = vpack.c.b16 %v4170, %v4170
        %v4203 = vpack.c.b16 %v4171, %v4171
        %4236 = vst [vmem:[#allocation3 + $0x4] sm:$0xf] %v4172
        %4237 = vst [vmem:[#allocation3 + $0x18] sm:$0xf] %v4173
        %4238 = vst [vmem:[#allocation3 + $0x2c] sm:$0xf] %v4174
        %4239 = vst [vmem:[#allocation3 + $0x40] sm:$0xf] %v4175
        %4240 = vst [vmem:[#allocation3 + $0x54] sm:$0xf] %v4176
        %4241 = vst [vmem:[#allocation3 + $0x68] sm:$0xf] %v4177
        %4242 = vst [vmem:[#allocation3 + $0x7c] sm:$0xf] %v4178
        %4243 = vst [vmem:[#allocation3 + $0x90] sm:$0xf] %v4179
        %4244 = vst [vmem:[#allocation3 + $0xa4] sm:$0xf] %v4180
        %4245 = vst [vmem:[#allocation3 + $0xb8] sm:$0xf] %v4181
        %4246 = vst [vmem:[#allocation3 + $0xcc] sm:$0xf] %v4182
        %4247 = vst [vmem:[#allocation3 + $0xe0] sm:$0xf] %v4183
        %4248 = vst [vmem:[#allocation3 + $0xf4] sm:$0xf] %v4184
        %4249 = vst [vmem:[#allocation3 + $0x108] sm:$0xf] %v4185
        %4250 = vst [vmem:[#allocation3 + $0x11c] sm:$0xf] %v4186
        %4251 = vst [vmem:[#allocation3 + $0x130] sm:$0xf] %v4187
        %4252 = vst [vmem:[#allocation3 + $0x144] sm:$0xf] %v4188
        %4253 = vst [vmem:[#allocation3 + $0x158] sm:$0xf] %v4189
        %4254 = vst [vmem:[#allocation3 + $0x16c] sm:$0xf] %v4190
        %4255 = vst [vmem:[#allocation3 + $0x180] sm:$0xf] %v4191
        %4256 = vst [vmem:[#allocation3 + $0x194] sm:$0xf] %v4192
        %4257 = vst [vmem:[#allocation3 + $0x1a8] sm:$0xf] %v4193
        %4258 = vst [vmem:[#allocation3 + $0x1bc] sm:$0xf] %v4194
        %4259 = vst [vmem:[#allocation3 + $0x1d0] sm:$0xf] %v4195
        %4260 = vst [vmem:[#allocation3 + $0x1e4] sm:$0xf] %v4196
        %4261 = vst [vmem:[#allocation3 + $0x1f8] sm:$0xf] %v4197
        %4262 = vst [vmem:[#allocation3 + $0x20c] sm:$0xf] %v4198
        %4263 = vst [vmem:[#allocation3 + $0x220] sm:$0xf] %v4199
        %4264 = vst [vmem:[#allocation3 + $0x234] sm:$0xf] %v4200
        %4265 = vst [vmem:[#allocation3 + $0x248] sm:$0xf] %v4201
        %4266 = vst [vmem:[#allocation3 + $0x25c] sm:$0xf] %v4202
        %4267 = vst [vmem:[#allocation3 + $0x270] sm:$0xf] %v4203
        %4284 = vrot.lane.b32.xlu0 %v3628, 64
        %v4285 = vpop.permute.xlu0 %4284
        %4286 = vrot.lane.b32.xlu0 %v3629, 64
        %v4287 = vpop.permute.xlu0 %4286
        %4288 = vrot.lane.b32.xlu0 %v3630, 64
        %v4289 = vpop.permute.xlu0 %4288
        %4290 = vrot.lane.b32.xlu0 %v3631, 64
        %v4291 = vpop.permute.xlu0 %4290
        %4292 = vrot.lane.b32.xlu0 %v3632, 64
        %v4293 = vpop.permute.xlu0 %4292
        %4294 = vrot.lane.b32.xlu0 %v3633, 64
        %v4295 = vpop.permute.xlu0 %4294
        %4296 = vrot.lane.b32.xlu0 %v3634, 64
        %v4297 = vpop.permute.xlu0 %4296
        %4298 = vrot.lane.b32.xlu0 %v3635, 64
        %v4299 = vpop.permute.xlu0 %4298
        %4300 = vrot.lane.b32.xlu0 %v3636, 64
        %v4301 = vpop.permute.xlu0 %4300
        %4302 = vrot.lane.b32.xlu0 %v3637, 64
        %v4303 = vpop.permute.xlu0 %4302
        %4304 = vrot.lane.b32.xlu0 %v3638, 64
        %v4305 = vpop.permute.xlu0 %4304
        %4306 = vrot.lane.b32.xlu0 %v3639, 64
        %v4307 = vpop.permute.xlu0 %4306
        %4308 = vrot.lane.b32.xlu0 %v3640, 64
        %v4309 = vpop.permute.xlu0 %4308
        %4310 = vrot.lane.b32.xlu0 %v3641, 64
        %v4311 = vpop.permute.xlu0 %4310
        %4312 = vrot.lane.b32.xlu0 %v3642, 64
        %v4313 = vpop.permute.xlu0 %4312
        %4314 = vrot.lane.b32.xlu0 %v3643, 64
        %v4315 = vpop.permute.xlu0 %4314
        %v4318 = vsel %vm278, %v3580, %v4285
        %v4321 = vsel %vm278, %v3581, %v4287
        %v4324 = vsel %vm278, %v3582, %v4289
        %v4327 = vsel %vm278, %v3583, %v4291
        %v4330 = vsel %vm278, %v3584, %v4293
        %v4333 = vsel %vm278, %v3585, %v4295
        %v4336 = vsel %vm278, %v3586, %v4297
        %v4339 = vsel %vm278, %v3587, %v4299
        %v4342 = vsel %vm278, %v3588, %v4301
        %v4345 = vsel %vm278, %v3589, %v4303
        %v4348 = vsel %vm278, %v3590, %v4305
        %v4351 = vsel %vm278, %v3591, %v4307
        %v4354 = vsel %vm278, %v3592, %v4309
        %v4357 = vsel %vm278, %v3593, %v4311
        %v4360 = vsel %vm278, %v3594, %v4313
        %v4363 = vsel %vm278, %v3595, %v4315
        %v4380 = vunpack.c.l.b16 %v4318
        %v4381 = vunpack.c.h.b16 %v4318
        %v4382 = vunpack.c.l.b16 %v4321
        %v4383 = vunpack.c.h.b16 %v4321
        %v4384 = vunpack.c.l.b16 %v4324
        %v4385 = vunpack.c.h.b16 %v4324
        %v4386 = vunpack.c.l.b16 %v4327
        %v4387 = vunpack.c.h.b16 %v4327
        %v4388 = vunpack.c.l.b16 %v4330
        %v4389 = vunpack.c.h.b16 %v4330
        %v4390 = vunpack.c.l.b16 %v4333
        %v4391 = vunpack.c.h.b16 %v4333
        %v4392 = vunpack.c.l.b16 %v4336
        %v4393 = vunpack.c.h.b16 %v4336
        %v4394 = vunpack.c.l.b16 %v4339
        %v4395 = vunpack.c.h.b16 %v4339
        %v4396 = vunpack.c.l.b16 %v4342
        %v4397 = vunpack.c.h.b16 %v4342
        %v4398 = vunpack.c.l.b16 %v4345
        %v4399 = vunpack.c.h.b16 %v4345
        %v4400 = vunpack.c.l.b16 %v4348
        %v4401 = vunpack.c.h.b16 %v4348
        %v4402 = vunpack.c.l.b16 %v4351
        %v4403 = vunpack.c.h.b16 %v4351
        %v4404 = vunpack.c.l.b16 %v4354
        %v4405 = vunpack.c.h.b16 %v4354
        %v4406 = vunpack.c.l.b16 %v4357
        %v4407 = vunpack.c.h.b16 %v4357
        %v4408 = vunpack.c.l.b16 %v4360
        %v4409 = vunpack.c.h.b16 %v4360
        %v4410 = vunpack.c.l.b16 %v4363
        %v4411 = vunpack.c.h.b16 %v4363
        %v4412 = vpack.c.b16 %v4380, %v4380
        %v4413 = vpack.c.b16 %v4381, %v4381
        %v4414 = vpack.c.b16 %v4382, %v4382
        %v4415 = vpack.c.b16 %v4383, %v4383
        %v4416 = vpack.c.b16 %v4384, %v4384
        %v4417 = vpack.c.b16 %v4385, %v4385
        %v4418 = vpack.c.b16 %v4386, %v4386
        %v4419 = vpack.c.b16 %v4387, %v4387
        %v4420 = vpack.c.b16 %v4388, %v4388
        %v4421 = vpack.c.b16 %v4389, %v4389
        %v4422 = vpack.c.b16 %v4390, %v4390
        %v4423 = vpack.c.b16 %v4391, %v4391
        %v4424 = vpack.c.b16 %v4392, %v4392
        %v4425 = vpack.c.b16 %v4393, %v4393
        %v4426 = vpack.c.b16 %v4394, %v4394
        %v4427 = vpack.c.b16 %v4395, %v4395
        %v4428 = vpack.c.b16 %v4396, %v4396
        %v4429 = vpack.c.b16 %v4397, %v4397
        %v4430 = vpack.c.b16 %v4398, %v4398
        %v4431 = vpack.c.b16 %v4399, %v4399
        %v4432 = vpack.c.b16 %v4400, %v4400
        %v4433 = vpack.c.b16 %v4401, %v4401
        %v4434 = vpack.c.b16 %v4402, %v4402
        %v4435 = vpack.c.b16 %v4403, %v4403
        %v4436 = vpack.c.b16 %v4404, %v4404
        %v4437 = vpack.c.b16 %v4405, %v4405
        %v4438 = vpack.c.b16 %v4406, %v4406
        %v4439 = vpack.c.b16 %v4407, %v4407
        %v4440 = vpack.c.b16 %v4408, %v4408
        %v4441 = vpack.c.b16 %v4409, %v4409
        %v4442 = vpack.c.b16 %v4410, %v4410
        %v4443 = vpack.c.b16 %v4411, %v4411
        %4476 = vst [vmem:[#allocation3 + $0x8] sm:$0xf] %v4412
        %4477 = vst [vmem:[#allocation3 + $0x1c] sm:$0xf] %v4413
        %4478 = vst [vmem:[#allocation3 + $0x30] sm:$0xf] %v4414
        %4479 = vst [vmem:[#allocation3 + $0x44] sm:$0xf] %v4415
        %4480 = vst [vmem:[#allocation3 + $0x58] sm:$0xf] %v4416
        %4481 = vst [vmem:[#allocation3 + $0x6c] sm:$0xf] %v4417
        %4482 = vst [vmem:[#allocation3 + $0x80] sm:$0xf] %v4418
        %4483 = vst [vmem:[#allocation3 + $0x94] sm:$0xf] %v4419
        %4484 = vst [vmem:[#allocation3 + $0xa8] sm:$0xf] %v4420
        %4485 = vst [vmem:[#allocation3 + $0xbc] sm:$0xf] %v4421
        %4486 = vst [vmem:[#allocation3 + $0xd0] sm:$0xf] %v4422
        %4487 = vst [vmem:[#allocation3 + $0xe4] sm:$0xf] %v4423
        %4488 = vst [vmem:[#allocation3 + $0xf8] sm:$0xf] %v4424
        %4489 = vst [vmem:[#allocation3 + $0x10c] sm:$0xf] %v4425
        %4490 = vst [vmem:[#allocation3 + $0x120] sm:$0xf] %v4426
        %4491 = vst [vmem:[#allocation3 + $0x134] sm:$0xf] %v4427
        %4492 = vst [vmem:[#allocation3 + $0x148] sm:$0xf] %v4428
        %4493 = vst [vmem:[#allocation3 + $0x15c] sm:$0xf] %v4429
        %4494 = vst [vmem:[#allocation3 + $0x170] sm:$0xf] %v4430
        %4495 = vst [vmem:[#allocation3 + $0x184] sm:$0xf] %v4431
        %4496 = vst [vmem:[#allocation3 + $0x198] sm:$0xf] %v4432
        %4497 = vst [vmem:[#allocation3 + $0x1ac] sm:$0xf] %v4433
        %4498 = vst [vmem:[#allocation3 + $0x1c0] sm:$0xf] %v4434
        %4499 = vst [vmem:[#allocation3 + $0x1d4] sm:$0xf] %v4435
        %4500 = vst [vmem:[#allocation3 + $0x1e8] sm:$0xf] %v4436
        %4501 = vst [vmem:[#allocation3 + $0x1fc] sm:$0xf] %v4437
        %4502 = vst [vmem:[#allocation3 + $0x210] sm:$0xf] %v4438
        %4503 = vst [vmem:[#allocation3 + $0x224] sm:$0xf] %v4439
        %4504 = vst [vmem:[#allocation3 + $0x238] sm:$0xf] %v4440
        %4505 = vst [vmem:[#allocation3 + $0x24c] sm:$0xf] %v4441
        %4506 = vst [vmem:[#allocation3 + $0x260] sm:$0xf] %v4442
        %4507 = vst [vmem:[#allocation3 + $0x274] sm:$0xf] %v4443
        %4524 = vrot.lane.b32.xlu0 %v3724, 64
        %v4525 = vpop.permute.xlu0 %4524
        %4526 = vrot.lane.b32.xlu0 %v3725, 64
        %v4527 = vpop.permute.xlu0 %4526
        %4528 = vrot.lane.b32.xlu0 %v3726, 64
        %v4529 = vpop.permute.xlu0 %4528
        %4530 = vrot.lane.b32.xlu0 %v3727, 64
        %v4531 = vpop.permute.xlu0 %4530
        %4532 = vrot.lane.b32.xlu0 %v3728, 64
        %v4533 = vpop.permute.xlu0 %4532
        %4534 = vrot.lane.b32.xlu0 %v3729, 64
        %v4535 = vpop.permute.xlu0 %4534
        %4536 = vrot.lane.b32.xlu0 %v3730, 64
        %v4537 = vpop.permute.xlu0 %4536
        %4538 = vrot.lane.b32.xlu0 %v3731, 64
        %v4539 = vpop.permute.xlu0 %4538
        %4540 = vrot.lane.b32.xlu0 %v3732, 64
        %v4541 = vpop.permute.xlu0 %4540
        %4542 = vrot.lane.b32.xlu0 %v3733, 64
        %v4543 = vpop.permute.xlu0 %4542
        %4544 = vrot.lane.b32.xlu0 %v3734, 64
        %v4545 = vpop.permute.xlu0 %4544
        %4546 = vrot.lane.b32.xlu0 %v3735, 64
        %v4547 = vpop.permute.xlu0 %4546
        %4548 = vrot.lane.b32.xlu0 %v3736, 64
        %v4549 = vpop.permute.xlu0 %4548
        %4550 = vrot.lane.b32.xlu0 %v3737, 64
        %v4551 = vpop.permute.xlu0 %4550
        %4552 = vrot.lane.b32.xlu0 %v3738, 64
        %v4553 = vpop.permute.xlu0 %4552
        %4554 = vrot.lane.b32.xlu0 %v3739, 64
        %v4555 = vpop.permute.xlu0 %4554
        %v4558 = vsel %vm278, %v3676, %v4525
        %v4561 = vsel %vm278, %v3677, %v4527
        %v4564 = vsel %vm278, %v3678, %v4529
        %v4567 = vsel %vm278, %v3679, %v4531
        %v4570 = vsel %vm278, %v3680, %v4533
        %v4573 = vsel %vm278, %v3681, %v4535
        %v4576 = vsel %vm278, %v3682, %v4537
        %v4579 = vsel %vm278, %v3683, %v4539
        %v4582 = vsel %vm278, %v3684, %v4541
        %v4585 = vsel %vm278, %v3685, %v4543
        %v4588 = vsel %vm278, %v3686, %v4545
        %v4591 = vsel %vm278, %v3687, %v4547
        %v4594 = vsel %vm278, %v3688, %v4549
        %v4597 = vsel %vm278, %v3689, %v4551
        %v4600 = vsel %vm278, %v3690, %v4553
        %v4603 = vsel %vm278, %v3691, %v4555
        %v4620 = vunpack.c.l.b16 %v4558
        %v4621 = vunpack.c.h.b16 %v4558
        %v4622 = vunpack.c.l.b16 %v4561
        %v4623 = vunpack.c.h.b16 %v4561
        %v4624 = vunpack.c.l.b16 %v4564
        %v4625 = vunpack.c.h.b16 %v4564
        %v4626 = vunpack.c.l.b16 %v4567
        %v4627 = vunpack.c.h.b16 %v4567
        %v4628 = vunpack.c.l.b16 %v4570
        %v4629 = vunpack.c.h.b16 %v4570
        %v4630 = vunpack.c.l.b16 %v4573
        %v4631 = vunpack.c.h.b16 %v4573
        %v4632 = vunpack.c.l.b16 %v4576
        %v4633 = vunpack.c.h.b16 %v4576
        %v4634 = vunpack.c.l.b16 %v4579
        %v4635 = vunpack.c.h.b16 %v4579
        %v4636 = vunpack.c.l.b16 %v4582
        %v4637 = vunpack.c.h.b16 %v4582
        %v4638 = vunpack.c.l.b16 %v4585
        %v4639 = vunpack.c.h.b16 %v4585
        %v4640 = vunpack.c.l.b16 %v4588
        %v4641 = vunpack.c.h.b16 %v4588
        %v4642 = vunpack.c.l.b16 %v4591
        %v4643 = vunpack.c.h.b16 %v4591
        %v4644 = vunpack.c.l.b16 %v4594
        %v4645 = vunpack.c.h.b16 %v4594
        %v4646 = vunpack.c.l.b16 %v4597
        %v4647 = vunpack.c.h.b16 %v4597
        %v4648 = vunpack.c.l.b16 %v4600
        %v4649 = vunpack.c.h.b16 %v4600
        %v4650 = vunpack.c.l.b16 %v4603
        %v4651 = vunpack.c.h.b16 %v4603
        %v4652 = vpack.c.b16 %v4620, %v4620
        %v4653 = vpack.c.b16 %v4621, %v4621
        %v4654 = vpack.c.b16 %v4622, %v4622
        %v4655 = vpack.c.b16 %v4623, %v4623
        %v4656 = vpack.c.b16 %v4624, %v4624
        %v4657 = vpack.c.b16 %v4625, %v4625
        %v4658 = vpack.c.b16 %v4626, %v4626
        %v4659 = vpack.c.b16 %v4627, %v4627
        %v4660 = vpack.c.b16 %v4628, %v4628
        %v4661 = vpack.c.b16 %v4629, %v4629
        %v4662 = vpack.c.b16 %v4630, %v4630
        %v4663 = vpack.c.b16 %v4631, %v4631
        %v4664 = vpack.c.b16 %v4632, %v4632
        %v4665 = vpack.c.b16 %v4633, %v4633
        %v4666 = vpack.c.b16 %v4634, %v4634
        %v4667 = vpack.c.b16 %v4635, %v4635
        %v4668 = vpack.c.b16 %v4636, %v4636
        %v4669 = vpack.c.b16 %v4637, %v4637
        %v4670 = vpack.c.b16 %v4638, %v4638
        %v4671 = vpack.c.b16 %v4639, %v4639
        %v4672 = vpack.c.b16 %v4640, %v4640
        %v4673 = vpack.c.b16 %v4641, %v4641
        %v4674 = vpack.c.b16 %v4642, %v4642
        %v4675 = vpack.c.b16 %v4643, %v4643
        %v4676 = vpack.c.b16 %v4644, %v4644
        %v4677 = vpack.c.b16 %v4645, %v4645
        %v4678 = vpack.c.b16 %v4646, %v4646
        %v4679 = vpack.c.b16 %v4647, %v4647
        %v4680 = vpack.c.b16 %v4648, %v4648
        %v4681 = vpack.c.b16 %v4649, %v4649
        %v4682 = vpack.c.b16 %v4650, %v4650
        %v4683 = vpack.c.b16 %v4651, %v4651
        %4716 = vst [vmem:[#allocation3 + $0xc] sm:$0xf] %v4652
        %4717 = vst [vmem:[#allocation3 + $0x20] sm:$0xf] %v4653
        %4718 = vst [vmem:[#allocation3 + $0x34] sm:$0xf] %v4654
        %4719 = vst [vmem:[#allocation3 + $0x48] sm:$0xf] %v4655
        %4720 = vst [vmem:[#allocation3 + $0x5c] sm:$0xf] %v4656
        %4721 = vst [vmem:[#allocation3 + $0x70] sm:$0xf] %v4657
        %4722 = vst [vmem:[#allocation3 + $0x84] sm:$0xf] %v4658
        %4723 = vst [vmem:[#allocation3 + $0x98] sm:$0xf] %v4659
        %4724 = vst [vmem:[#allocation3 + $0xac] sm:$0xf] %v4660
        %4725 = vst [vmem:[#allocation3 + $0xc0] sm:$0xf] %v4661
        %4726 = vst [vmem:[#allocation3 + $0xd4] sm:$0xf] %v4662
        %4727 = vst [vmem:[#allocation3 + $0xe8] sm:$0xf] %v4663
        %4728 = vst [vmem:[#allocation3 + $0xfc] sm:$0xf] %v4664
        %4729 = vst [vmem:[#allocation3 + $0x110] sm:$0xf] %v4665
        %4730 = vst [vmem:[#allocation3 + $0x124] sm:$0xf] %v4666
        %4731 = vst [vmem:[#allocation3 + $0x138] sm:$0xf] %v4667
        %4732 = vst [vmem:[#allocation3 + $0x14c] sm:$0xf] %v4668
        %4733 = vst [vmem:[#allocation3 + $0x160] sm:$0xf] %v4669
        %4734 = vst [vmem:[#allocation3 + $0x174] sm:$0xf] %v4670
        %4735 = vst [vmem:[#allocation3 + $0x188] sm:$0xf] %v4671
        %4736 = vst [vmem:[#allocation3 + $0x19c] sm:$0xf] %v4672
        %4737 = vst [vmem:[#allocation3 + $0x1b0] sm:$0xf] %v4673
        %4738 = vst [vmem:[#allocation3 + $0x1c4] sm:$0xf] %v4674
        %4739 = vst [vmem:[#allocation3 + $0x1d8] sm:$0xf] %v4675
        %4740 = vst [vmem:[#allocation3 + $0x1ec] sm:$0xf] %v4676
        %4741 = vst [vmem:[#allocation3 + $0x200] sm:$0xf] %v4677
        %4742 = vst [vmem:[#allocation3 + $0x214] sm:$0xf] %v4678
        %4743 = vst [vmem:[#allocation3 + $0x228] sm:$0xf] %v4679
        %4744 = vst [vmem:[#allocation3 + $0x23c] sm:$0xf] %v4680
        %4745 = vst [vmem:[#allocation3 + $0x250] sm:$0xf] %v4681
        %4746 = vst [vmem:[#allocation3 + $0x264] sm:$0xf] %v4682
        %4747 = vst [vmem:[#allocation3 + $0x278] sm:$0xf] %v4683
        %v4749 = vsel %vm278, %v3772, 0
        %v4751 = vsel %vm278, %v3773, 0
        %v4753 = vsel %vm278, %v3774, 0
        %v4755 = vsel %vm278, %v3775, 0
        %v4757 = vsel %vm278, %v3776, 0
        %v4759 = vsel %vm278, %v3777, 0
        %v4761 = vsel %vm278, %v3778, 0
        %v4763 = vsel %vm278, %v3779, 0
        %v4765 = vsel %vm278, %v3780, 0
        %v4767 = vsel %vm278, %v3781, 0
        %v4769 = vsel %vm278, %v3782, 0
        %v4771 = vsel %vm278, %v3783, 0
        %v4773 = vsel %vm278, %v3784, 0
        %v4775 = vsel %vm278, %v3785, 0
        %v4777 = vsel %vm278, %v3786, 0
        %v4779 = vsel %vm278, %v3787, 0
        %v4796 = vunpack.c.l.b16 %v4749
        %v4797 = vunpack.c.h.b16 %v4749
        %v4798 = vunpack.c.l.b16 %v4751
        %v4799 = vunpack.c.h.b16 %v4751
        %v4800 = vunpack.c.l.b16 %v4753
        %v4801 = vunpack.c.h.b16 %v4753
        %v4802 = vunpack.c.l.b16 %v4755
        %v4803 = vunpack.c.h.b16 %v4755
        %v4804 = vunpack.c.l.b16 %v4757
        %v4805 = vunpack.c.h.b16 %v4757
        %v4806 = vunpack.c.l.b16 %v4759
        %v4807 = vunpack.c.h.b16 %v4759
        %v4808 = vunpack.c.l.b16 %v4761
        %v4809 = vunpack.c.h.b16 %v4761
        %v4810 = vunpack.c.l.b16 %v4763
        %v4811 = vunpack.c.h.b16 %v4763
        %v4812 = vunpack.c.l.b16 %v4765
        %v4813 = vunpack.c.h.b16 %v4765
        %v4814 = vunpack.c.l.b16 %v4767
        %v4815 = vunpack.c.h.b16 %v4767
        %v4816 = vunpack.c.l.b16 %v4769
        %v4817 = vunpack.c.h.b16 %v4769
        %v4818 = vunpack.c.l.b16 %v4771
        %v4819 = vunpack.c.h.b16 %v4771
        %v4820 = vunpack.c.l.b16 %v4773
        %v4821 = vunpack.c.h.b16 %v4773
        %v4822 = vunpack.c.l.b16 %v4775
        %v4823 = vunpack.c.h.b16 %v4775
        %v4824 = vunpack.c.l.b16 %v4777
        %v4825 = vunpack.c.h.b16 %v4777
        %v4826 = vunpack.c.l.b16 %v4779
        %v4827 = vunpack.c.h.b16 %v4779
        %v4828 = vpack.c.b16 %v4796, %v4796
        %v4829 = vpack.c.b16 %v4797, %v4797
        %v4830 = vpack.c.b16 %v4798, %v4798
        %v4831 = vpack.c.b16 %v4799, %v4799
        %v4832 = vpack.c.b16 %v4800, %v4800
        %v4833 = vpack.c.b16 %v4801, %v4801
        %v4834 = vpack.c.b16 %v4802, %v4802
        %v4835 = vpack.c.b16 %v4803, %v4803
        %v4836 = vpack.c.b16 %v4804, %v4804
        %v4837 = vpack.c.b16 %v4805, %v4805
        %v4838 = vpack.c.b16 %v4806, %v4806
        %v4839 = vpack.c.b16 %v4807, %v4807
        %v4840 = vpack.c.b16 %v4808, %v4808
        %v4841 = vpack.c.b16 %v4809, %v4809
        %v4842 = vpack.c.b16 %v4810, %v4810
        %v4843 = vpack.c.b16 %v4811, %v4811
        %v4844 = vpack.c.b16 %v4812, %v4812
        %v4845 = vpack.c.b16 %v4813, %v4813
        %v4846 = vpack.c.b16 %v4814, %v4814
        %v4847 = vpack.c.b16 %v4815, %v4815
        %v4848 = vpack.c.b16 %v4816, %v4816
        %v4849 = vpack.c.b16 %v4817, %v4817
        %v4850 = vpack.c.b16 %v4818, %v4818
        %v4851 = vpack.c.b16 %v4819, %v4819
        %v4852 = vpack.c.b16 %v4820, %v4820
        %v4853 = vpack.c.b16 %v4821, %v4821
        %v4854 = vpack.c.b16 %v4822, %v4822
        %v4855 = vpack.c.b16 %v4823, %v4823
        %v4856 = vpack.c.b16 %v4824, %v4824
        %v4857 = vpack.c.b16 %v4825, %v4825
        %v4858 = vpack.c.b16 %v4826, %v4826
        %v4859 = vpack.c.b16 %v4827, %v4827
        %4892 = vst [vmem:[#allocation3 + $0x10] sm:$0xf] %v4828
        %4893 = vst [vmem:[#allocation3 + $0x24] sm:$0xf] %v4829
        %4894 = vst [vmem:[#allocation3 + $0x38] sm:$0xf] %v4830
        %4895 = vst [vmem:[#allocation3 + $0x4c] sm:$0xf] %v4831
        %4896 = vst [vmem:[#allocation3 + $0x60] sm:$0xf] %v4832
        %4897 = vst [vmem:[#allocation3 + $0x74] sm:$0xf] %v4833
        %4898 = vst [vmem:[#allocation3 + $0x88] sm:$0xf] %v4834
        %4899 = vst [vmem:[#allocation3 + $0x9c] sm:$0xf] %v4835
        %4900 = vst [vmem:[#allocation3 + $0xb0] sm:$0xf] %v4836
        %4901 = vst [vmem:[#allocation3 + $0xc4] sm:$0xf] %v4837
        %4902 = vst [vmem:[#allocation3 + $0xd8] sm:$0xf] %v4838
        %4903 = vst [vmem:[#allocation3 + $0xec] sm:$0xf] %v4839
        %4904 = vst [vmem:[#allocation3 + $0x100] sm:$0xf] %v4840
        %4905 = vst [vmem:[#allocation3 + $0x114] sm:$0xf] %v4841
        %4906 = vst [vmem:[#allocation3 + $0x128] sm:$0xf] %v4842
        %4907 = vst [vmem:[#allocation3 + $0x13c] sm:$0xf] %v4843
        %4908 = vst [vmem:[#allocation3 + $0x150] sm:$0xf] %v4844
        %4909 = vst [vmem:[#allocation3 + $0x164] sm:$0xf] %v4845
        %4910 = vst [vmem:[#allocation3 + $0x178] sm:$0xf] %v4846
        %4911 = vst [vmem:[#allocation3 + $0x18c] sm:$0xf] %v4847
        %4912 = vst [vmem:[#allocation3 + $0x1a0] sm:$0xf] %v4848
        %4913 = vst [vmem:[#allocation3 + $0x1b4] sm:$0xf] %v4849
        %4914 = vst [vmem:[#allocation3 + $0x1c8] sm:$0xf] %v4850
        %4915 = vst [vmem:[#allocation3 + $0x1dc] sm:$0xf] %v4851
        %4916 = vst [vmem:[#allocation3 + $0x1f0] sm:$0xf] %v4852
        %4917 = vst [vmem:[#allocation3 + $0x204] sm:$0xf] %v4853
        %4918 = vst [vmem:[#allocation3 + $0x218] sm:$0xf] %v4854
        %4919 = vst [vmem:[#allocation3 + $0x22c] sm:$0xf] %v4855
        %4920 = vst [vmem:[#allocation3 + $0x240] sm:$0xf] %v4856
        %4921 = vst [vmem:[#allocation3 + $0x254] sm:$0xf] %v4857
        %4922 = vst [vmem:[#allocation3 + $0x268] sm:$0xf] %v4858
        %4923 = vst [vmem:[#allocation3 + $0x27c] sm:$0xf] %v4859
        %v4924 = vld [vmem:[#allocation3] sm:$0xff]
        %v4925 = vld [vmem:[#allocation3 + $0x8] sm:$0xff]
        %v4926 = vld [vmem:[#allocation3 + $0x10] sm:$0xf]
        %v4927 = vld [vmem:[#allocation3 + $0x14] sm:$0xff]
        %v4928 = vld [vmem:[#allocation3 + $0x1c] sm:$0xff]
        %v4929 = vld [vmem:[#allocation3 + $0x24] sm:$0xf]
        %v4930 = vld [vmem:[#allocation3 + $0x28] sm:$0xff]
        %v4931 = vld [vmem:[#allocation3 + $0x30] sm:$0xff]
        %v4932 = vld [vmem:[#allocation3 + $0x38] sm:$0xf]
        %v4933 = vld [vmem:[#allocation3 + $0x3c] sm:$0xff]
        %v4934 = vld [vmem:[#allocation3 + $0x44] sm:$0xff]
        %v4935 = vld [vmem:[#allocation3 + $0x4c] sm:$0xf]
        %v4936 = vld [vmem:[#allocation3 + $0x50] sm:$0xff]
        %v4937 = vld [vmem:[#allocation3 + $0x58] sm:$0xff]
        %v4938 = vld [vmem:[#allocation3 + $0x60] sm:$0xf]
        %v4939 = vld [vmem:[#allocation3 + $0x64] sm:$0xff]
        %v4940 = vld [vmem:[#allocation3 + $0x6c] sm:$0xff]
        %v4941 = vld [vmem:[#allocation3 + $0x74] sm:$0xf]
        %v4942 = vld [vmem:[#allocation3 + $0x78] sm:$0xff]
        %v4943 = vld [vmem:[#allocation3 + $0x80] sm:$0xff]
        %v4944 = vld [vmem:[#allocation3 + $0x88] sm:$0xf]
        %v4945 = vld [vmem:[#allocation3 + $0x8c] sm:$0xff]
        %v4946 = vld [vmem:[#allocation3 + $0x94] sm:$0xff]
        %v4947 = vld [vmem:[#allocation3 + $0x9c] sm:$0xf]
        %v4948 = vld [vmem:[#allocation3 + $0xa0] sm:$0xff]
        %v4949 = vld [vmem:[#allocation3 + $0xa8] sm:$0xff]
        %v4950 = vld [vmem:[#allocation3 + $0xb0] sm:$0xf]
        %v4951 = vld [vmem:[#allocation3 + $0xb4] sm:$0xff]
        %v4952 = vld [vmem:[#allocation3 + $0xbc] sm:$0xff]
        %v4953 = vld [vmem:[#allocation3 + $0xc4] sm:$0xf]
        %v4954 = vld [vmem:[#allocation3 + $0xc8] sm:$0xff]
        %v4955 = vld [vmem:[#allocation3 + $0xd0] sm:$0xff]
        %v4956 = vld [vmem:[#allocation3 + $0xd8] sm:$0xf]
        %v4957 = vld [vmem:[#allocation3 + $0xdc] sm:$0xff]
        %v4958 = vld [vmem:[#allocation3 + $0xe4] sm:$0xff]
        %v4959 = vld [vmem:[#allocation3 + $0xec] sm:$0xf]
        %v4960 = vld [vmem:[#allocation3 + $0xf0] sm:$0xff]
        %v4961 = vld [vmem:[#allocation3 + $0xf8] sm:$0xff]
        %v4962 = vld [vmem:[#allocation3 + $0x100] sm:$0xf]
        %v4963 = vld [vmem:[#allocation3 + $0x104] sm:$0xff]
        %v4964 = vld [vmem:[#allocation3 + $0x10c] sm:$0xff]
        %v4965 = vld [vmem:[#allocation3 + $0x114] sm:$0xf]
        %v4966 = vld [vmem:[#allocation3 + $0x118] sm:$0xff]
        %v4967 = vld [vmem:[#allocation3 + $0x120] sm:$0xff]
        %v4968 = vld [vmem:[#allocation3 + $0x128] sm:$0xf]
        %v4969 = vld [vmem:[#allocation3 + $0x12c] sm:$0xff]
        %v4970 = vld [vmem:[#allocation3 + $0x134] sm:$0xff]
        %v4971 = vld [vmem:[#allocation3 + $0x13c] sm:$0xf]
        %v4972 = vld [vmem:[#allocation3 + $0x140] sm:$0xff]
        %v4973 = vld [vmem:[#allocation3 + $0x148] sm:$0xff]
        %v4974 = vld [vmem:[#allocation3 + $0x150] sm:$0xf]
        %v4975 = vld [vmem:[#allocation3 + $0x154] sm:$0xff]
        %v4976 = vld [vmem:[#allocation3 + $0x15c] sm:$0xff]
        %v4977 = vld [vmem:[#allocation3 + $0x164] sm:$0xf]
        %v4978 = vld [vmem:[#allocation3 + $0x168] sm:$0xff]
        %v4979 = vld [vmem:[#allocation3 + $0x170] sm:$0xff]
        %v4980 = vld [vmem:[#allocation3 + $0x178] sm:$0xf]
        %v4981 = vld [vmem:[#allocation3 + $0x17c] sm:$0xff]
        %v4982 = vld [vmem:[#allocation3 + $0x184] sm:$0xff]
        %v4983 = vld [vmem:[#allocation3 + $0x18c] sm:$0xf]
        %v4984 = vld [vmem:[#allocation3 + $0x190] sm:$0xff]
        %v4985 = vld [vmem:[#allocation3 + $0x198] sm:$0xff]
        %v4986 = vld [vmem:[#allocation3 + $0x1a0] sm:$0xf]
        %v4987 = vld [vmem:[#allocation3 + $0x1a4] sm:$0xff]
        %v4988 = vld [vmem:[#allocation3 + $0x1ac] sm:$0xff]
        %v4989 = vld [vmem:[#allocation3 + $0x1b4] sm:$0xf]
        %v4990 = vld [vmem:[#allocation3 + $0x1b8] sm:$0xff]
        %v4991 = vld [vmem:[#allocation3 + $0x1c0] sm:$0xff]
        %v4992 = vld [vmem:[#allocation3 + $0x1c8] sm:$0xf]
        %v4993 = vld [vmem:[#allocation3 + $0x1cc] sm:$0xff]
        %v4994 = vld [vmem:[#allocation3 + $0x1d4] sm:$0xff]
        %v4995 = vld [vmem:[#allocation3 + $0x1dc] sm:$0xf]
        %v4996 = vld [vmem:[#allocation3 + $0x1e0] sm:$0xff]
        %v4997 = vld [vmem:[#allocation3 + $0x1e8] sm:$0xff]
        %v4998 = vld [vmem:[#allocation3 + $0x1f0] sm:$0xf]
        %v4999 = vld [vmem:[#allocation3 + $0x1f4] sm:$0xff]
        %v5000 = vld [vmem:[#allocation3 + $0x1fc] sm:$0xff]
        %v5001 = vld [vmem:[#allocation3 + $0x204] sm:$0xf]
        %v5002 = vld [vmem:[#allocation3 + $0x208] sm:$0xff]
        %v5003 = vld [vmem:[#allocation3 + $0x210] sm:$0xff]
        %v5004 = vld [vmem:[#allocation3 + $0x218] sm:$0xf]
        %v5005 = vld [vmem:[#allocation3 + $0x21c] sm:$0xff]
        %v5006 = vld [vmem:[#allocation3 + $0x224] sm:$0xff]
        %v5007 = vld [vmem:[#allocation3 + $0x22c] sm:$0xf]
        %v5008 = vld [vmem:[#allocation3 + $0x230] sm:$0xff]
        %v5009 = vld [vmem:[#allocation3 + $0x238] sm:$0xff]
        %v5010 = vld [vmem:[#allocation3 + $0x240] sm:$0xf]
        %v5011 = vld [vmem:[#allocation3 + $0x244] sm:$0xff]
        %v5012 = vld [vmem:[#allocation3 + $0x24c] sm:$0xff]
        %v5013 = vld [vmem:[#allocation3 + $0x254] sm:$0xf]
        %v5014 = vld [vmem:[#allocation3 + $0x258] sm:$0xff]
        %v5015 = vld [vmem:[#allocation3 + $0x260] sm:$0xff]
        %v5016 = vld [vmem:[#allocation3 + $0x268] sm:$0xf]
        %v5017 = vld [vmem:[#allocation3 + $0x26c] sm:$0xff]
        %v5018 = vld [vmem:[#allocation3 + $0x274] sm:$0xff]
        %v5019 = vld [vmem:[#allocation3 + $0x27c] sm:$0xf]
        %v5020 = vld [vmem:[%s3] sm:$0xf]
        %v5021 = vld [vmem:[%s3 + $0x4] sm:$0xf]
        %v5022 = vld [vmem:[%s3 + $0x8] sm:$0xf]
        %v5023 = vld [vmem:[%s3 + $0xc] sm:$0xf]
        %v5024 = vld [vmem:[%s3 + $0x10] sm:$0xf]
        %v5025 = vld [vmem:[%s3 + $0x14] sm:$0xf]
        %v5026 = vld [vmem:[%s3 + $0x18] sm:$0xf]
        %v5027 = vld [vmem:[%s3 + $0x1c] sm:$0xf]
        %v5028 = vld [vmem:[%s3 + $0x20] sm:$0xf]
        %v5029 = vld [vmem:[%s3 + $0x24] sm:$0xf]
        %v5030 = vld [vmem:[%s3 + $0x28] sm:$0xf]
        %v5031 = vld [vmem:[%s3 + $0x2c] sm:$0xf]
        %v5032 = vld [vmem:[%s3 + $0x30] sm:$0xf]
        %v5033 = vld [vmem:[%s3 + $0x34] sm:$0xf]
        %v5034 = vld [vmem:[%s3 + $0x38] sm:$0xf]
        %v5035 = vld [vmem:[%s3 + $0x3c] sm:$0xf]
        %v5036 = vld [vmem:[%s3 + $0x40] sm:$0xf]
        %v5037 = vld [vmem:[%s3 + $0x44] sm:$0xf]
        %v5038 = vld [vmem:[%s3 + $0x48] sm:$0xf]
        %v5039 = vld [vmem:[%s3 + $0x4c] sm:$0xf]
        %v5040 = vld [vmem:[%s3 + $0x50] sm:$0xf]
        %v5041 = vld [vmem:[%s3 + $0x54] sm:$0xf]
        %v5042 = vld [vmem:[%s3 + $0x58] sm:$0xf]
        %v5043 = vld [vmem:[%s3 + $0x5c] sm:$0xf]
        %v5044 = vld [vmem:[%s3 + $0x60] sm:$0xf]
        %v5045 = vld [vmem:[%s3 + $0x64] sm:$0xf]
        %v5046 = vld [vmem:[%s3 + $0x68] sm:$0xf]
        %v5047 = vld [vmem:[%s3 + $0x6c] sm:$0xf]
        %v5048 = vld [vmem:[%s3 + $0x70] sm:$0xf]
        %v5049 = vld [vmem:[%s3 + $0x74] sm:$0xf]
        %v5050 = vld [vmem:[%s3 + $0x78] sm:$0xf]
        %v5051 = vld [vmem:[%s3 + $0x7c] sm:$0xf]
        %v5052 = vld [vmem:[%s3 + $0x80] sm:$0xf]
        %v5053 = vld [vmem:[%s3 + $0x84] sm:$0xf]
        %v5054 = vld [vmem:[%s3 + $0x88] sm:$0xf]
        %v5055 = vld [vmem:[%s3 + $0x8c] sm:$0xf]
        %v5056 = vld [vmem:[%s3 + $0x90] sm:$0xf]
        %v5057 = vld [vmem:[%s3 + $0x94] sm:$0xf]
        %v5058 = vld [vmem:[%s3 + $0x98] sm:$0xf]
        %v5059 = vld [vmem:[%s3 + $0x9c] sm:$0xf]
        %v5060 = vld [vmem:[%s3 + $0xa0] sm:$0xf]
        %v5061 = vld [vmem:[%s3 + $0xa4] sm:$0xf]
        %v5062 = vld [vmem:[%s3 + $0xa8] sm:$0xf]
        %v5063 = vld [vmem:[%s3 + $0xac] sm:$0xf]
        %v5064 = vld [vmem:[%s3 + $0xb0] sm:$0xf]
        %v5065 = vld [vmem:[%s3 + $0xb4] sm:$0xf]
        %v5066 = vld [vmem:[%s3 + $0xb8] sm:$0xf]
        %v5067 = vld [vmem:[%s3 + $0xbc] sm:$0xf]
        %v5068 = vld [vmem:[%s3 + $0xc0] sm:$0xf]
        %v5069 = vld [vmem:[%s3 + $0xc4] sm:$0xf]
        %v5070 = vld [vmem:[%s3 + $0xc8] sm:$0xf]
        %v5071 = vld [vmem:[%s3 + $0xcc] sm:$0xf]
        %v5072 = vld [vmem:[%s3 + $0xd0] sm:$0xf]
        %v5073 = vld [vmem:[%s3 + $0xd4] sm:$0xf]
        %v5074 = vld [vmem:[%s3 + $0xd8] sm:$0xf]
        %v5075 = vld [vmem:[%s3 + $0xdc] sm:$0xf]
        %v5076 = vld [vmem:[%s3 + $0xe0] sm:$0xf]
        %v5077 = vld [vmem:[%s3 + $0xe4] sm:$0xf]
        %v5078 = vld [vmem:[%s3 + $0xe8] sm:$0xf]
        %v5079 = vld [vmem:[%s3 + $0xec] sm:$0xf]
        %v5080 = vld [vmem:[%s3 + $0xf0] sm:$0xf]
        %v5081 = vld [vmem:[%s3 + $0xf4] sm:$0xf]
        %v5082 = vld [vmem:[%s3 + $0xf8] sm:$0xf]
        %v5083 = vld [vmem:[%s3 + $0xfc] sm:$0xf]
        %v5084 = vld [vmem:[%s3 + $0x100] sm:$0xf]
        %v5085 = vld [vmem:[%s3 + $0x104] sm:$0xf]
        %v5086 = vld [vmem:[%s3 + $0x108] sm:$0xf]
        %v5087 = vld [vmem:[%s3 + $0x10c] sm:$0xf]
        %v5088 = vld [vmem:[%s3 + $0x110] sm:$0xf]
        %v5089 = vld [vmem:[%s3 + $0x114] sm:$0xf]
        %v5090 = vld [vmem:[%s3 + $0x118] sm:$0xf]
        %v5091 = vld [vmem:[%s3 + $0x11c] sm:$0xf]
        %v5092 = vld [vmem:[%s3 + $0x120] sm:$0xf]
        %v5093 = vld [vmem:[%s3 + $0x124] sm:$0xf]
        %v5094 = vld [vmem:[%s3 + $0x128] sm:$0xf]
        %v5095 = vld [vmem:[%s3 + $0x12c] sm:$0xf]
        %v5096 = vld [vmem:[%s3 + $0x130] sm:$0xf]
        %v5097 = vld [vmem:[%s3 + $0x134] sm:$0xf]
        %v5098 = vld [vmem:[%s3 + $0x138] sm:$0xf]
        %v5099 = vld [vmem:[%s3 + $0x13c] sm:$0xf]
        %v5100 = vld [vmem:[%s4] sm:$0x1]
        %v5102 = vlaneseq
        %v5103 = vshrl.u32 %v5102, 7
        %v5104 = vsub.s32 0, %v5103
        %v5105 = vrot.slane %v5100, %v5104
        %v5203 = vunpack.c.l.b16 %v4924
        %v5204 = vunpack.c.h.b16 %v4924
        %v5205 = vunpack.c.l.b16 %v4925
        %v5206 = vunpack.c.h.b16 %v4925
        %v5207 = vunpack.c.l.b16 %v4926
        %v5208 = vunpack.c.l.b16 %v4927
        %v5209 = vunpack.c.h.b16 %v4927
        %v5210 = vunpack.c.l.b16 %v4928
        %v5211 = vunpack.c.h.b16 %v4928
        %v5212 = vunpack.c.l.b16 %v4929
        %v5213 = vunpack.c.l.b16 %v4930
        %v5214 = vunpack.c.h.b16 %v4930
        %v5215 = vunpack.c.l.b16 %v4931
        %v5216 = vunpack.c.h.b16 %v4931
        %v5217 = vunpack.c.l.b16 %v4932
        %v5218 = vunpack.c.l.b16 %v4933
        %v5219 = vunpack.c.h.b16 %v4933
        %v5220 = vunpack.c.l.b16 %v4934
        %v5221 = vunpack.c.h.b16 %v4934
        %v5222 = vunpack.c.l.b16 %v4935
        %v5223 = vunpack.c.l.b16 %v4936
        %v5224 = vunpack.c.h.b16 %v4936
        %v5225 = vunpack.c.l.b16 %v4937
        %v5226 = vunpack.c.h.b16 %v4937
        %v5227 = vunpack.c.l.b16 %v4938
        %v5228 = vunpack.c.l.b16 %v4939
        %v5229 = vunpack.c.h.b16 %v4939
        %v5230 = vunpack.c.l.b16 %v4940
        %v5231 = vunpack.c.h.b16 %v4940
        %v5232 = vunpack.c.l.b16 %v4941
        %v5233 = vunpack.c.l.b16 %v4942
        %v5234 = vunpack.c.h.b16 %v4942
        %v5235 = vunpack.c.l.b16 %v4943
        %v5236 = vunpack.c.h.b16 %v4943
        %v5237 = vunpack.c.l.b16 %v4944
        %v5238 = vunpack.c.l.b16 %v4945
        %v5239 = vunpack.c.h.b16 %v4945
        %v5240 = vunpack.c.l.b16 %v4946
        %v5241 = vunpack.c.h.b16 %v4946
        %v5242 = vunpack.c.l.b16 %v4947
        %v5243 = vunpack.c.l.b16 %v4948
        %v5244 = vunpack.c.h.b16 %v4948
        %v5245 = vunpack.c.l.b16 %v4949
        %v5246 = vunpack.c.h.b16 %v4949
        %v5247 = vunpack.c.l.b16 %v4950
        %v5248 = vunpack.c.l.b16 %v4951
        %v5249 = vunpack.c.h.b16 %v4951
        %v5250 = vunpack.c.l.b16 %v4952
        %v5251 = vunpack.c.h.b16 %v4952
        %v5252 = vunpack.c.l.b16 %v4953
        %v5253 = vunpack.c.l.b16 %v4954
        %v5254 = vunpack.c.h.b16 %v4954
        %v5255 = vunpack.c.l.b16 %v4955
        %v5256 = vunpack.c.h.b16 %v4955
        %v5257 = vunpack.c.l.b16 %v4956
        %v5258 = vunpack.c.l.b16 %v4957
        %v5259 = vunpack.c.h.b16 %v4957
        %v5260 = vunpack.c.l.b16 %v4958
        %v5261 = vunpack.c.h.b16 %v4958
        %v5262 = vunpack.c.l.b16 %v4959
        %v5263 = vunpack.c.l.b16 %v4960
        %v5264 = vunpack.c.h.b16 %v4960
        %v5265 = vunpack.c.l.b16 %v4961
        %v5266 = vunpack.c.h.b16 %v4961
        %v5267 = vunpack.c.l.b16 %v4962
        %v5268 = vunpack.c.l.b16 %v4963
        %v5269 = vunpack.c.h.b16 %v4963
        %v5270 = vunpack.c.l.b16 %v4964
        %v5271 = vunpack.c.h.b16 %v4964
        %v5272 = vunpack.c.l.b16 %v4965
        %v5273 = vunpack.c.l.b16 %v4966
        %v5274 = vunpack.c.h.b16 %v4966
        %v5275 = vunpack.c.l.b16 %v4967
        %v5276 = vunpack.c.h.b16 %v4967
        %v5277 = vunpack.c.l.b16 %v4968
        %v5278 = vunpack.c.l.b16 %v4969
        %v5279 = vunpack.c.h.b16 %v4969
        %v5280 = vunpack.c.l.b16 %v4970
        %v5281 = vunpack.c.h.b16 %v4970
        %v5282 = vunpack.c.l.b16 %v4971
        %v5283 = vunpack.c.l.b16 %v4972
        %v5284 = vunpack.c.h.b16 %v4972
        %v5285 = vunpack.c.l.b16 %v4973
        %v5286 = vunpack.c.h.b16 %v4973
        %v5287 = vunpack.c.l.b16 %v4974
        %v5288 = vunpack.c.l.b16 %v4975
        %v5289 = vunpack.c.h.b16 %v4975
        %v5290 = vunpack.c.l.b16 %v4976
        %v5291 = vunpack.c.h.b16 %v4976
        %v5292 = vunpack.c.l.b16 %v4977
        %v5293 = vunpack.c.l.b16 %v4978
        %v5294 = vunpack.c.h.b16 %v4978
        %v5295 = vunpack.c.l.b16 %v4979
        %v5296 = vunpack.c.h.b16 %v4979
        %v5297 = vunpack.c.l.b16 %v4980
        %v5298 = vunpack.c.l.b16 %v4981
        %v5299 = vunpack.c.h.b16 %v4981
        %v5300 = vunpack.c.l.b16 %v4982
        %v5301 = vunpack.c.h.b16 %v4982
        %v5302 = vunpack.c.l.b16 %v4983
        %v5303 = vunpack.c.l.b16 %v4984
        %v5304 = vunpack.c.h.b16 %v4984
        %v5305 = vunpack.c.l.b16 %v4985
        %v5306 = vunpack.c.h.b16 %v4985
        %v5307 = vunpack.c.l.b16 %v4986
        %v5308 = vunpack.c.l.b16 %v4987
        %v5309 = vunpack.c.h.b16 %v4987
        %v5310 = vunpack.c.l.b16 %v4988
        %v5311 = vunpack.c.h.b16 %v4988
        %v5312 = vunpack.c.l.b16 %v4989
        %v5313 = vunpack.c.l.b16 %v4990
        %v5314 = vunpack.c.h.b16 %v4990
        %v5315 = vunpack.c.l.b16 %v4991
        %v5316 = vunpack.c.h.b16 %v4991
        %v5317 = vunpack.c.l.b16 %v4992
        %v5318 = vunpack.c.l.b16 %v4993
        %v5319 = vunpack.c.h.b16 %v4993
        %v5320 = vunpack.c.l.b16 %v4994
        %v5321 = vunpack.c.h.b16 %v4994
        %v5322 = vunpack.c.l.b16 %v4995
        %v5323 = vunpack.c.l.b16 %v4996
        %v5324 = vunpack.c.h.b16 %v4996
        %v5325 = vunpack.c.l.b16 %v4997
        %v5326 = vunpack.c.h.b16 %v4997
        %v5327 = vunpack.c.l.b16 %v4998
        %v5328 = vunpack.c.l.b16 %v4999
        %v5329 = vunpack.c.h.b16 %v4999
        %v5330 = vunpack.c.l.b16 %v5000
        %v5331 = vunpack.c.h.b16 %v5000
        %v5332 = vunpack.c.l.b16 %v5001
        %v5333 = vunpack.c.l.b16 %v5002
        %v5334 = vunpack.c.h.b16 %v5002
        %v5335 = vunpack.c.l.b16 %v5003
        %v5336 = vunpack.c.h.b16 %v5003
        %v5337 = vunpack.c.l.b16 %v5004
        %v5338 = vunpack.c.l.b16 %v5005
        %v5339 = vunpack.c.h.b16 %v5005
        %v5340 = vunpack.c.l.b16 %v5006
        %v5341 = vunpack.c.h.b16 %v5006
        %v5342 = vunpack.c.l.b16 %v5007
        %v5343 = vunpack.c.l.b16 %v5008
        %v5344 = vunpack.c.h.b16 %v5008
        %v5345 = vunpack.c.l.b16 %v5009
        %v5346 = vunpack.c.h.b16 %v5009
        %v5347 = vunpack.c.l.b16 %v5010
        %v5348 = vunpack.c.l.b16 %v5011
        %v5349 = vunpack.c.h.b16 %v5011
        %v5350 = vunpack.c.l.b16 %v5012
        %v5351 = vunpack.c.h.b16 %v5012
        %v5352 = vunpack.c.l.b16 %v5013
        %v5353 = vunpack.c.l.b16 %v5014
        %v5354 = vunpack.c.h.b16 %v5014
        %v5355 = vunpack.c.l.b16 %v5015
        %v5356 = vunpack.c.h.b16 %v5015
        %v5357 = vunpack.c.l.b16 %v5016
        %v5358 = vunpack.c.l.b16 %v5017
        %v5359 = vunpack.c.h.b16 %v5017
        %v5360 = vunpack.c.l.b16 %v5018
        %v5361 = vunpack.c.h.b16 %v5018
        %v5362 = vunpack.c.l.b16 %v5019
        %v5363 = vpack.c.b16 %v5208, %v5203
        %v5364 = vpack.c.b16 %v5209, %v5204
        %v5365 = vpack.c.b16 %v5210, %v5205
        %v5366 = vpack.c.b16 %v5211, %v5206
        %v5367 = vpack.c.b16 %v5212, %v5207
        %v5368 = vpack.c.b16 %v5218, %v5213
        %v5369 = vpack.c.b16 %v5219, %v5214
        %v5370 = vpack.c.b16 %v5220, %v5215
        %v5371 = vpack.c.b16 %v5221, %v5216
        %v5372 = vpack.c.b16 %v5222, %v5217
        %v5373 = vpack.c.b16 %v5228, %v5223
        %v5374 = vpack.c.b16 %v5229, %v5224
        %v5375 = vpack.c.b16 %v5230, %v5225
        %v5376 = vpack.c.b16 %v5231, %v5226
        %v5377 = vpack.c.b16 %v5232, %v5227
        %v5378 = vpack.c.b16 %v5238, %v5233
        %v5379 = vpack.c.b16 %v5239, %v5234
        %v5380 = vpack.c.b16 %v5240, %v5235
        %v5381 = vpack.c.b16 %v5241, %v5236
        %v5382 = vpack.c.b16 %v5242, %v5237
        %v5383 = vpack.c.b16 %v5248, %v5243
        %v5384 = vpack.c.b16 %v5249, %v5244
        %v5385 = vpack.c.b16 %v5250, %v5245
        %v5386 = vpack.c.b16 %v5251, %v5246
        %v5387 = vpack.c.b16 %v5252, %v5247
        %v5388 = vpack.c.b16 %v5258, %v5253
        %v5389 = vpack.c.b16 %v5259, %v5254
        %v5390 = vpack.c.b16 %v5260, %v5255
        %v5391 = vpack.c.b16 %v5261, %v5256
        %v5392 = vpack.c.b16 %v5262, %v5257
        %v5393 = vpack.c.b16 %v5268, %v5263
        %v5394 = vpack.c.b16 %v5269, %v5264
        %v5395 = vpack.c.b16 %v5270, %v5265
        %v5396 = vpack.c.b16 %v5271, %v5266
        %v5397 = vpack.c.b16 %v5272, %v5267
        %v5398 = vpack.c.b16 %v5278, %v5273
        %v5399 = vpack.c.b16 %v5279, %v5274
        %v5400 = vpack.c.b16 %v5280, %v5275
        %v5401 = vpack.c.b16 %v5281, %v5276
        %v5402 = vpack.c.b16 %v5282, %v5277
        %v5403 = vpack.c.b16 %v5288, %v5283
        %v5404 = vpack.c.b16 %v5289, %v5284
        %v5405 = vpack.c.b16 %v5290, %v5285
        %v5406 = vpack.c.b16 %v5291, %v5286
        %v5407 = vpack.c.b16 %v5292, %v5287
        %v5408 = vpack.c.b16 %v5298, %v5293
        %v5409 = vpack.c.b16 %v5299, %v5294
        %v5410 = vpack.c.b16 %v5300, %v5295
        %v5411 = vpack.c.b16 %v5301, %v5296
        %v5412 = vpack.c.b16 %v5302, %v5297
        %v5413 = vpack.c.b16 %v5308, %v5303
        %v5414 = vpack.c.b16 %v5309, %v5304
        %v5415 = vpack.c.b16 %v5310, %v5305
        %v5416 = vpack.c.b16 %v5311, %v5306
        %v5417 = vpack.c.b16 %v5312, %v5307
        %v5418 = vpack.c.b16 %v5318, %v5313
        %v5419 = vpack.c.b16 %v5319, %v5314
        %v5420 = vpack.c.b16 %v5320, %v5315
        %v5421 = vpack.c.b16 %v5321, %v5316
        %v5422 = vpack.c.b16 %v5322, %v5317
        %v5423 = vpack.c.b16 %v5328, %v5323
        %v5424 = vpack.c.b16 %v5329, %v5324
        %v5425 = vpack.c.b16 %v5330, %v5325
        %v5426 = vpack.c.b16 %v5331, %v5326
        %v5427 = vpack.c.b16 %v5332, %v5327
        %v5428 = vpack.c.b16 %v5338, %v5333
        %v5429 = vpack.c.b16 %v5339, %v5334
        %v5430 = vpack.c.b16 %v5340, %v5335
        %v5431 = vpack.c.b16 %v5341, %v5336
        %v5432 = vpack.c.b16 %v5342, %v5337
        %v5433 = vpack.c.b16 %v5348, %v5343
        %v5434 = vpack.c.b16 %v5349, %v5344
        %v5435 = vpack.c.b16 %v5350, %v5345
        %v5436 = vpack.c.b16 %v5351, %v5346
        %v5437 = vpack.c.b16 %v5352, %v5347
        %v5438 = vpack.c.b16 %v5358, %v5353
        %v5439 = vpack.c.b16 %v5359, %v5354
        %v5440 = vpack.c.b16 %v5360, %v5355
        %v5441 = vpack.c.b16 %v5361, %v5356
        %v5442 = vpack.c.b16 %v5362, %v5357
        %v5603 = vunpack.c.l.b16 %v5020
        %v5604 = vunpack.c.l.b16 %v5021
        %v5605 = vunpack.c.l.b16 %v5022
        %v5606 = vunpack.c.l.b16 %v5023
        %v5607 = vunpack.c.l.b16 %v5024
        %v5608 = vunpack.c.l.b16 %v5025
        %v5609 = vunpack.c.l.b16 %v5026
        %v5610 = vunpack.c.l.b16 %v5027
        %v5611 = vunpack.c.l.b16 %v5028
        %v5612 = vunpack.c.l.b16 %v5029
        %v5613 = vunpack.c.l.b16 %v5030
        %v5614 = vunpack.c.l.b16 %v5031
        %v5615 = vunpack.c.l.b16 %v5032
        %v5616 = vunpack.c.l.b16 %v5033
        %v5617 = vunpack.c.l.b16 %v5034
        %v5618 = vunpack.c.l.b16 %v5035
        %v5619 = vunpack.c.l.b16 %v5036
        %v5620 = vunpack.c.l.b16 %v5037
        %v5621 = vunpack.c.l.b16 %v5038
        %v5622 = vunpack.c.l.b16 %v5039
        %v5623 = vunpack.c.l.b16 %v5040
        %v5624 = vunpack.c.l.b16 %v5041
        %v5625 = vunpack.c.l.b16 %v5042
        %v5626 = vunpack.c.l.b16 %v5043
        %v5627 = vunpack.c.l.b16 %v5044
        %v5628 = vunpack.c.l.b16 %v5045
        %v5629 = vunpack.c.l.b16 %v5046
        %v5630 = vunpack.c.l.b16 %v5047
        %v5631 = vunpack.c.l.b16 %v5048
        %v5632 = vunpack.c.l.b16 %v5049
        %v5633 = vunpack.c.l.b16 %v5050
        %v5634 = vunpack.c.l.b16 %v5051
        %v5635 = vunpack.c.l.b16 %v5052
        %v5636 = vunpack.c.l.b16 %v5053
        %v5637 = vunpack.c.l.b16 %v5054
        %v5638 = vunpack.c.l.b16 %v5055
        %v5639 = vunpack.c.l.b16 %v5056
        %v5640 = vunpack.c.l.b16 %v5057
        %v5641 = vunpack.c.l.b16 %v5058
        %v5642 = vunpack.c.l.b16 %v5059
        %v5643 = vunpack.c.l.b16 %v5060
        %v5644 = vunpack.c.l.b16 %v5061
        %v5645 = vunpack.c.l.b16 %v5062
        %v5646 = vunpack.c.l.b16 %v5063
        %v5647 = vunpack.c.l.b16 %v5064
        %v5648 = vunpack.c.l.b16 %v5065
        %v5649 = vunpack.c.l.b16 %v5066
        %v5650 = vunpack.c.l.b16 %v5067
        %v5651 = vunpack.c.l.b16 %v5068
        %v5652 = vunpack.c.l.b16 %v5069
        %v5653 = vunpack.c.l.b16 %v5070
        %v5654 = vunpack.c.l.b16 %v5071
        %v5655 = vunpack.c.l.b16 %v5072
        %v5656 = vunpack.c.l.b16 %v5073
        %v5657 = vunpack.c.l.b16 %v5074
        %v5658 = vunpack.c.l.b16 %v5075
        %v5659 = vunpack.c.l.b16 %v5076
        %v5660 = vunpack.c.l.b16 %v5077
        %v5661 = vunpack.c.l.b16 %v5078
        %v5662 = vunpack.c.l.b16 %v5079
        %v5663 = vunpack.c.l.b16 %v5080
        %v5664 = vunpack.c.l.b16 %v5081
        %v5665 = vunpack.c.l.b16 %v5082
        %v5666 = vunpack.c.l.b16 %v5083
        %v5667 = vunpack.c.l.b16 %v5084
        %v5668 = vunpack.c.l.b16 %v5085
        %v5669 = vunpack.c.l.b16 %v5086
        %v5670 = vunpack.c.l.b16 %v5087
        %v5671 = vunpack.c.l.b16 %v5088
        %v5672 = vunpack.c.l.b16 %v5089
        %v5673 = vunpack.c.l.b16 %v5090
        %v5674 = vunpack.c.l.b16 %v5091
        %v5675 = vunpack.c.l.b16 %v5092
        %v5676 = vunpack.c.l.b16 %v5093
        %v5677 = vunpack.c.l.b16 %v5094
        %v5678 = vunpack.c.l.b16 %v5095
        %v5679 = vunpack.c.l.b16 %v5096
        %v5680 = vunpack.c.l.b16 %v5097
        %v5681 = vunpack.c.l.b16 %v5098
        %v5682 = vunpack.c.l.b16 %v5099
        %v5683 = vpack.c.b16 %v5604, %v5603
        %v5684 = vpack.c.b16 %v5606, %v5605
        %v5685 = vpack.c.b16 %v5608, %v5607
        %v5686 = vpack.c.b16 %v5610, %v5609
        %v5687 = vpack.c.b16 %v5612, %v5611
        %v5688 = vpack.c.b16 %v5614, %v5613
        %v5689 = vpack.c.b16 %v5616, %v5615
        %v5690 = vpack.c.b16 %v5618, %v5617
        %v5691 = vpack.c.b16 %v5620, %v5619
        %v5692 = vpack.c.b16 %v5622, %v5621
        %v5693 = vpack.c.b16 %v5624, %v5623
        %v5694 = vpack.c.b16 %v5626, %v5625
        %v5695 = vpack.c.b16 %v5628, %v5627
        %v5696 = vpack.c.b16 %v5630, %v5629
        %v5697 = vpack.c.b16 %v5632, %v5631
        %v5698 = vpack.c.b16 %v5634, %v5633
        %v5699 = vpack.c.b16 %v5636, %v5635
        %v5700 = vpack.c.b16 %v5638, %v5637
        %v5701 = vpack.c.b16 %v5640, %v5639
        %v5702 = vpack.c.b16 %v5642, %v5641
        %v5703 = vpack.c.b16 %v5644, %v5643
        %v5704 = vpack.c.b16 %v5646, %v5645
        %v5705 = vpack.c.b16 %v5648, %v5647
        %v5706 = vpack.c.b16 %v5650, %v5649
        %v5707 = vpack.c.b16 %v5652, %v5651
        %v5708 = vpack.c.b16 %v5654, %v5653
        %v5709 = vpack.c.b16 %v5656, %v5655
        %v5710 = vpack.c.b16 %v5658, %v5657
        %v5711 = vpack.c.b16 %v5660, %v5659
        %v5712 = vpack.c.b16 %v5662, %v5661
        %v5713 = vpack.c.b16 %v5664, %v5663
        %v5714 = vpack.c.b16 %v5666, %v5665
        %v5715 = vpack.c.b16 %v5668, %v5667
        %v5716 = vpack.c.b16 %v5670, %v5669
        %v5717 = vpack.c.b16 %v5672, %v5671
        %v5718 = vpack.c.b16 %v5674, %v5673
        %v5719 = vpack.c.b16 %v5676, %v5675
        %v5720 = vpack.c.b16 %v5678, %v5677
        %v5721 = vpack.c.b16 %v5680, %v5679
        %v5722 = vpack.c.b16 %v5682, %v5681
        %5763 = vmatprep.subr.bf16.mxu0 0
        %5764 = vmatpush1.bf16.msra.mxu0 %v5690
        %5765 = vmatprep.subr.bf16.mxu0 0
        %5766 = vmatpush1.bf16.msra.mxu0 %v5689
        %5767 = vmatprep.subr.bf16.mxu0 0
        %5768 = vmatpush1.bf16.msra.mxu0 %v5688
        %5769 = vmatprep.subr.bf16.mxu0 0
        %5770 = vmatpush1.bf16.msra.mxu0 %v5687
        %5771 = vmatprep.subr.bf16.mxu0 0
        %5772 = vmatpush1.bf16.msra.mxu0 %v5686
        %5773 = vmatprep.subr.bf16.mxu0 0
        %5774 = vmatpush1.bf16.msra.mxu0 %v5685
        %5775 = vmatprep.subr.bf16.mxu0 0
        %5776 = vmatpush1.bf16.msra.mxu0 %v5684
        %5777 = vmatprep.subr.bf16.mxu0 0
        %5778 = vmatpush1.bf16.msra.mxu0 %v5683
        %5779 = vmatprep.subr.bf16.mxu0 0
        %5780 = vmatpush2.bf16.msra.mxu0 %v5698
        %5781 = vmatprep.subr.bf16.mxu0 0
        %5782 = vmatpush2.bf16.msra.mxu0 %v5697
        %5783 = vmatprep.subr.bf16.mxu0 0
        %5784 = vmatpush2.bf16.msra.mxu0 %v5696
        %5785 = vmatprep.subr.bf16.mxu0 0
        %5786 = vmatpush2.bf16.msra.mxu0 %v5695
        %5787 = vmatprep.subr.bf16.mxu0 0
        %5788 = vmatpush2.bf16.msra.mxu0 %v5694
        %5789 = vmatprep.subr.bf16.mxu0 0
        %5790 = vmatpush2.bf16.msra.mxu0 %v5693
        %5791 = vmatprep.subr.bf16.mxu0 0
        %5792 = vmatpush2.bf16.msra.mxu0 %v5692
        %5793 = vmatprep.subr.bf16.mxu0 0
        %5794 = vmatpush2.bf16.msra.mxu0 %v5691
        %5795 = vmatprep.mubr.bf16.mxu0 %v5364
        %5796 = vmatmul.mubr.bf16.gmra.mxu0 %v5363
        %v5797 = vpop.f32.mrf.mxu0
        %v5798 = vadd.f32 %v5105, %v5797
        %v5799 = vpop.f32.mrf.mxu0
        %v5800 = vpop.f32.mrf.mxu0
        %v5801 = vadd.f32 %v5105, %v5800
        %v5802 = vpop.f32.mrf.mxu0
        %5803 = vmatprep.mubr.bf16.mxu0 %v5369
        %5804 = vmatmul.mubr.bf16.gmra.mxu0 %v5368
        %v5805 = vpop.f32.mrf.mxu0
        %v5806 = vadd.f32 %v5105, %v5805
        %v5807 = vpop.f32.mrf.mxu0
        %v5808 = vpop.f32.mrf.mxu0
        %v5809 = vadd.f32 %v5105, %v5808
        %v5810 = vpop.f32.mrf.mxu0
        %5811 = vmatprep.mubr.bf16.mxu0 %v5374
        %5812 = vmatmul.mubr.bf16.gmra.mxu0 %v5373
        %v5813 = vpop.f32.mrf.mxu0
        %v5814 = vadd.f32 %v5105, %v5813
        %v5815 = vpop.f32.mrf.mxu0
        %v5816 = vpop.f32.mrf.mxu0
        %v5817 = vadd.f32 %v5105, %v5816
        %v5818 = vpop.f32.mrf.mxu0
        %5819 = vmatprep.mubr.bf16.mxu0 %v5379
        %5820 = vmatmul.mubr.bf16.gmra.mxu0 %v5378
        %v5821 = vpop.f32.mrf.mxu0
        %v5822 = vadd.f32 %v5105, %v5821
        %v5823 = vpop.f32.mrf.mxu0
        %v5824 = vpop.f32.mrf.mxu0
        %v5825 = vadd.f32 %v5105, %v5824
        %v5826 = vpop.f32.mrf.mxu0
        %5827 = vmatprep.mubr.bf16.mxu0 %v5384
        %5828 = vmatmul.mubr.bf16.gmra.mxu0 %v5383
        %v5829 = vpop.f32.mrf.mxu0
        %v5830 = vadd.f32 %v5105, %v5829
        %v5831 = vpop.f32.mrf.mxu0
        %v5832 = vpop.f32.mrf.mxu0
        %v5833 = vadd.f32 %v5105, %v5832
        %v5834 = vpop.f32.mrf.mxu0
        %5835 = vmatprep.mubr.bf16.mxu0 %v5389
        %5836 = vmatmul.mubr.bf16.gmra.mxu0 %v5388
        %v5837 = vpop.f32.mrf.mxu0
        %v5838 = vadd.f32 %v5105, %v5837
        %v5839 = vpop.f32.mrf.mxu0
        %v5840 = vpop.f32.mrf.mxu0
        %v5841 = vadd.f32 %v5105, %v5840
        %v5842 = vpop.f32.mrf.mxu0
        %5843 = vmatprep.mubr.bf16.mxu0 %v5394
        %5844 = vmatmul.mubr.bf16.gmra.mxu0 %v5393
        %v5845 = vpop.f32.mrf.mxu0
        %v5846 = vadd.f32 %v5105, %v5845
        %v5847 = vpop.f32.mrf.mxu0
        %v5848 = vpop.f32.mrf.mxu0
        %v5849 = vadd.f32 %v5105, %v5848
        %v5850 = vpop.f32.mrf.mxu0
        %5851 = vmatprep.mubr.bf16.mxu0 %v5399
        %5852 = vmatmul.mubr.bf16.gmra.mxu0 %v5398
        %v5853 = vpop.f32.mrf.mxu0
        %v5854 = vadd.f32 %v5105, %v5853
        %v5855 = vpop.f32.mrf.mxu0
        %v5856 = vpop.f32.mrf.mxu0
        %v5857 = vadd.f32 %v5105, %v5856
        %v5858 = vpop.f32.mrf.mxu0
        %5859 = vmatprep.mubr.bf16.mxu0 %v5404
        %5860 = vmatmul.mubr.bf16.gmra.mxu0 %v5403
        %v5861 = vpop.f32.mrf.mxu0
        %v5862 = vadd.f32 %v5105, %v5861
        %v5863 = vpop.f32.mrf.mxu0
        %v5864 = vpop.f32.mrf.mxu0
        %v5865 = vadd.f32 %v5105, %v5864
        %v5866 = vpop.f32.mrf.mxu0
        %5867 = vmatprep.mubr.bf16.mxu0 %v5409
        %5868 = vmatmul.mubr.bf16.gmra.mxu0 %v5408
        %v5869 = vpop.f32.mrf.mxu0
        %v5870 = vadd.f32 %v5105, %v5869
        %v5871 = vpop.f32.mrf.mxu0
        %v5872 = vpop.f32.mrf.mxu0
        %v5873 = vadd.f32 %v5105, %v5872
        %v5874 = vpop.f32.mrf.mxu0
        %5875 = vmatprep.mubr.bf16.mxu0 %v5414
        %5876 = vmatmul.mubr.bf16.gmra.mxu0 %v5413
        %v5877 = vpop.f32.mrf.mxu0
        %v5878 = vadd.f32 %v5105, %v5877
        %v5879 = vpop.f32.mrf.mxu0
        %v5880 = vpop.f32.mrf.mxu0
        %v5881 = vadd.f32 %v5105, %v5880
        %v5882 = vpop.f32.mrf.mxu0
        %5883 = vmatprep.mubr.bf16.mxu0 %v5419
        %5884 = vmatmul.mubr.bf16.gmra.mxu0 %v5418
        %v5885 = vpop.f32.mrf.mxu0
        %v5886 = vadd.f32 %v5105, %v5885
        %v5887 = vpop.f32.mrf.mxu0
        %v5888 = vpop.f32.mrf.mxu0
        %v5889 = vadd.f32 %v5105, %v5888
        %v5890 = vpop.f32.mrf.mxu0
        %5891 = vmatprep.mubr.bf16.mxu0 %v5424
        %5892 = vmatmul.mubr.bf16.gmra.mxu0 %v5423
        %v5893 = vpop.f32.mrf.mxu0
        %v5894 = vadd.f32 %v5105, %v5893
        %v5895 = vpop.f32.mrf.mxu0
        %v5896 = vpop.f32.mrf.mxu0
        %v5897 = vadd.f32 %v5105, %v5896
        %v5898 = vpop.f32.mrf.mxu0
        %5899 = vmatprep.mubr.bf16.mxu0 %v5429
        %5900 = vmatmul.mubr.bf16.gmra.mxu0 %v5428
        %v5901 = vpop.f32.mrf.mxu0
        %v5902 = vadd.f32 %v5105, %v5901
        %v5903 = vpop.f32.mrf.mxu0
        %v5904 = vpop.f32.mrf.mxu0
        %v5905 = vadd.f32 %v5105, %v5904
        %v5906 = vpop.f32.mrf.mxu0
        %5907 = vmatprep.mubr.bf16.mxu0 %v5434
        %5908 = vmatmul.mubr.bf16.gmra.mxu0 %v5433
        %v5909 = vpop.f32.mrf.mxu0
        %v5910 = vadd.f32 %v5105, %v5909
        %v5911 = vpop.f32.mrf.mxu0
        %v5912 = vpop.f32.mrf.mxu0
        %v5913 = vadd.f32 %v5105, %v5912
        %v5914 = vpop.f32.mrf.mxu0
        %5915 = vmatprep.mubr.bf16.mxu0 %v5439
        %5916 = vmatmul.mubr.bf16.gmra.mxu0 %v5438
        %v5917 = vpop.f32.mrf.mxu0
        %v5918 = vadd.f32 %v5105, %v5917
        %v5919 = vpop.f32.mrf.mxu0
        %v5920 = vpop.f32.mrf.mxu0
        %v5921 = vadd.f32 %v5105, %v5920
        %v5922 = vpop.f32.mrf.mxu0
        %5923 = vdwg.mxu0
        %5924 = vmatprep.subr.bf16.mxu0 0
        %5925 = vmatpush1.bf16.msra.mxu0 %v5706
        %5926 = vmatprep.subr.bf16.mxu0 0
        %5927 = vmatpush1.bf16.msra.mxu0 %v5705
        %5928 = vmatprep.subr.bf16.mxu0 0
        %5929 = vmatpush1.bf16.msra.mxu0 %v5704
        %5930 = vmatprep.subr.bf16.mxu0 0
        %5931 = vmatpush1.bf16.msra.mxu0 %v5703
        %5932 = vmatprep.subr.bf16.mxu0 0
        %5933 = vmatpush1.bf16.msra.mxu0 %v5702
        %5934 = vmatprep.subr.bf16.mxu0 0
        %5935 = vmatpush1.bf16.msra.mxu0 %v5701
        %5936 = vmatprep.subr.bf16.mxu0 0
        %5937 = vmatpush1.bf16.msra.mxu0 %v5700
        %5938 = vmatprep.subr.bf16.mxu0 0
        %5939 = vmatpush1.bf16.msra.mxu0 %v5699
        %5940 = vmatprep.subr.bf16.mxu0 0
        %5941 = vmatpush2.bf16.msra.mxu0 %v5714
        %5942 = vmatprep.subr.bf16.mxu0 0
        %5943 = vmatpush2.bf16.msra.mxu0 %v5713
        %5944 = vmatprep.subr.bf16.mxu0 0
        %5945 = vmatpush2.bf16.msra.mxu0 %v5712
        %5946 = vmatprep.subr.bf16.mxu0 0
        %5947 = vmatpush2.bf16.msra.mxu0 %v5711
        %5948 = vmatprep.subr.bf16.mxu0 0
        %5949 = vmatpush2.bf16.msra.mxu0 %v5710
        %5950 = vmatprep.subr.bf16.mxu0 0
        %5951 = vmatpush2.bf16.msra.mxu0 %v5709
        %5952 = vmatprep.subr.bf16.mxu0 0
        %5953 = vmatpush2.bf16.msra.mxu0 %v5708
        %5954 = vmatprep.subr.bf16.mxu0 0
        %5955 = vmatpush2.bf16.msra.mxu0 %v5707
        %5956 = vmatprep.mubr.bf16.mxu0 %v5366
        %5957 = vmatmul.mubr.bf16.gmra.mxu0 %v5365
        %v5958 = vpop.f32.mrf.mxu0
        %v5959 = vadd.f32 %v5798, %v5958
        %v5960 = vpop.f32.mrf.mxu0
        %v5961 = vpop.f32.mrf.mxu0
        %v5962 = vadd.f32 %v5801, %v5961
        %v5963 = vpop.f32.mrf.mxu0
        %5964 = vmatprep.mubr.bf16.mxu0 %v5371
        %5965 = vmatmul.mubr.bf16.gmra.mxu0 %v5370
        %v5966 = vpop.f32.mrf.mxu0
        %v5967 = vadd.f32 %v5806, %v5966
        %v5968 = vpop.f32.mrf.mxu0
        %v5969 = vpop.f32.mrf.mxu0
        %v5970 = vadd.f32 %v5809, %v5969
        %v5971 = vpop.f32.mrf.mxu0
        %5972 = vmatprep.mubr.bf16.mxu0 %v5376
        %5973 = vmatmul.mubr.bf16.gmra.mxu0 %v5375
        %v5974 = vpop.f32.mrf.mxu0
        %v5975 = vadd.f32 %v5814, %v5974
        %v5976 = vpop.f32.mrf.mxu0
        %v5977 = vpop.f32.mrf.mxu0
        %v5978 = vadd.f32 %v5817, %v5977
        %v5979 = vpop.f32.mrf.mxu0
        %5980 = vmatprep.mubr.bf16.mxu0 %v5381
        %5981 = vmatmul.mubr.bf16.gmra.mxu0 %v5380
        %v5982 = vpop.f32.mrf.mxu0
        %v5983 = vadd.f32 %v5822, %v5982
        %v5984 = vpop.f32.mrf.mxu0
        %v5985 = vpop.f32.mrf.mxu0
        %v5986 = vadd.f32 %v5825, %v5985
        %v5987 = vpop.f32.mrf.mxu0
        %5988 = vmatprep.mubr.bf16.mxu0 %v5386
        %5989 = vmatmul.mubr.bf16.gmra.mxu0 %v5385
        %v5990 = vpop.f32.mrf.mxu0
        %v5991 = vadd.f32 %v5830, %v5990
        %v5992 = vpop.f32.mrf.mxu0
        %v5993 = vpop.f32.mrf.mxu0
        %v5994 = vadd.f32 %v5833, %v5993
        %v5995 = vpop.f32.mrf.mxu0
        %5996 = vmatprep.mubr.bf16.mxu0 %v5391
        %5997 = vmatmul.mubr.bf16.gmra.mxu0 %v5390
        %v5998 = vpop.f32.mrf.mxu0
        %v5999 = vadd.f32 %v5838, %v5998
        %v6000 = vpop.f32.mrf.mxu0
        %v6001 = vpop.f32.mrf.mxu0
        %v6002 = vadd.f32 %v5841, %v6001
        %v6003 = vpop.f32.mrf.mxu0
        %6004 = vmatprep.mubr.bf16.mxu0 %v5396
        %6005 = vmatmul.mubr.bf16.gmra.mxu0 %v5395
        %v6006 = vpop.f32.mrf.mxu0
        %v6007 = vadd.f32 %v5846, %v6006
        %v6008 = vpop.f32.mrf.mxu0
        %v6009 = vpop.f32.mrf.mxu0
        %v6010 = vadd.f32 %v5849, %v6009
        %v6011 = vpop.f32.mrf.mxu0
        %6012 = vmatprep.mubr.bf16.mxu0 %v5401
        %6013 = vmatmul.mubr.bf16.gmra.mxu0 %v5400
        %v6014 = vpop.f32.mrf.mxu0
        %v6015 = vadd.f32 %v5854, %v6014
        %v6016 = vpop.f32.mrf.mxu0
        %v6017 = vpop.f32.mrf.mxu0
        %v6018 = vadd.f32 %v5857, %v6017
        %v6019 = vpop.f32.mrf.mxu0
        %6020 = vmatprep.mubr.bf16.mxu0 %v5406
        %6021 = vmatmul.mubr.bf16.gmra.mxu0 %v5405
        %v6022 = vpop.f32.mrf.mxu0
        %v6023 = vadd.f32 %v5862, %v6022
        %v6024 = vpop.f32.mrf.mxu0
        %v6025 = vpop.f32.mrf.mxu0
        %v6026 = vadd.f32 %v5865, %v6025
        %v6027 = vpop.f32.mrf.mxu0
        %6028 = vmatprep.mubr.bf16.mxu0 %v5411
        %6029 = vmatmul.mubr.bf16.gmra.mxu0 %v5410
        %v6030 = vpop.f32.mrf.mxu0
        %v6031 = vadd.f32 %v5870, %v6030
        %v6032 = vpop.f32.mrf.mxu0
        %v6033 = vpop.f32.mrf.mxu0
        %v6034 = vadd.f32 %v5873, %v6033
        %v6035 = vpop.f32.mrf.mxu0
        %6036 = vmatprep.mubr.bf16.mxu0 %v5416
        %6037 = vmatmul.mubr.bf16.gmra.mxu0 %v5415
        %v6038 = vpop.f32.mrf.mxu0
        %v6039 = vadd.f32 %v5878, %v6038
        %v6040 = vpop.f32.mrf.mxu0
        %v6041 = vpop.f32.mrf.mxu0
        %v6042 = vadd.f32 %v5881, %v6041
        %v6043 = vpop.f32.mrf.mxu0
        %6044 = vmatprep.mubr.bf16.mxu0 %v5421
        %6045 = vmatmul.mubr.bf16.gmra.mxu0 %v5420
        %v6046 = vpop.f32.mrf.mxu0
        %v6047 = vadd.f32 %v5886, %v6046
        %v6048 = vpop.f32.mrf.mxu0
        %v6049 = vpop.f32.mrf.mxu0
        %v6050 = vadd.f32 %v5889, %v6049
        %v6051 = vpop.f32.mrf.mxu0
        %6052 = vmatprep.mubr.bf16.mxu0 %v5426
        %6053 = vmatmul.mubr.bf16.gmra.mxu0 %v5425
        %v6054 = vpop.f32.mrf.mxu0
        %v6055 = vadd.f32 %v5894, %v6054
        %v6056 = vpop.f32.mrf.mxu0
        %v6057 = vpop.f32.mrf.mxu0
        %v6058 = vadd.f32 %v5897, %v6057
        %v6059 = vpop.f32.mrf.mxu0
        %6060 = vmatprep.mubr.bf16.mxu0 %v5431
        %6061 = vmatmul.mubr.bf16.gmra.mxu0 %v5430
        %v6062 = vpop.f32.mrf.mxu0
        %v6063 = vadd.f32 %v5902, %v6062
        %v6064 = vpop.f32.mrf.mxu0
        %v6065 = vpop.f32.mrf.mxu0
        %v6066 = vadd.f32 %v5905, %v6065
        %v6067 = vpop.f32.mrf.mxu0
        %6068 = vmatprep.mubr.bf16.mxu0 %v5436
        %6069 = vmatmul.mubr.bf16.gmra.mxu0 %v5435
        %v6070 = vpop.f32.mrf.mxu0
        %v6071 = vadd.f32 %v5910, %v6070
        %v6072 = vpop.f32.mrf.mxu0
        %v6073 = vpop.f32.mrf.mxu0
        %v6074 = vadd.f32 %v5913, %v6073
        %v6075 = vpop.f32.mrf.mxu0
        %6076 = vmatprep.mubr.bf16.mxu0 %v5441
        %6077 = vmatmul.mubr.bf16.gmra.mxu0 %v5440
        %v6078 = vpop.f32.mrf.mxu0
        %v6079 = vadd.f32 %v5918, %v6078
        %v6080 = vpop.f32.mrf.mxu0
        %v6081 = vpop.f32.mrf.mxu0
        %v6082 = vadd.f32 %v5921, %v6081
        %v6083 = vpop.f32.mrf.mxu0
        %6084 = vdwg.mxu0
        %6085 = vmatprep.subr.bf16.mxu0 0
        %6086 = vmatpush1.bf16.msra.mxu0 %v5722
        %6087 = vmatprep.subr.bf16.mxu0 0
        %6088 = vmatpush1.bf16.msra.mxu0 %v5721
        %6089 = vmatprep.subr.bf16.mxu0 0
        %6090 = vmatpush1.bf16.msra.mxu0 %v5720
        %6091 = vmatprep.subr.bf16.mxu0 0
        %6092 = vmatpush1.bf16.msra.mxu0 %v5719
        %6093 = vmatprep.subr.bf16.mxu0 0
        %6094 = vmatpush1.bf16.msra.mxu0 %v5718
        %6095 = vmatprep.subr.bf16.mxu0 0
        %6096 = vmatpush1.bf16.msra.mxu0 %v5717
        %6097 = vmatprep.subr.bf16.mxu0 0
        %6098 = vmatpush1.bf16.msra.mxu0 %v5716
        %6099 = vmatprep.subr.bf16.mxu0 0
        %6100 = vmatpush1.bf16.msra.mxu0 %v5715
        %6101 = vmatprep.subr.bf16.mxu0 0
        %6102 = vmatpush2.bf16.msra.mxu0 0
        %6103 = vmatprep.subr.bf16.mxu0 0
        %6104 = vmatpush2.bf16.msra.mxu0 0
        %6105 = vmatprep.subr.bf16.mxu0 0
        %6106 = vmatpush2.bf16.msra.mxu0 0
        %6107 = vmatprep.subr.bf16.mxu0 0
        %6108 = vmatpush2.bf16.msra.mxu0 0
        %6109 = vmatprep.subr.bf16.mxu0 0
        %6110 = vmatpush2.bf16.msra.mxu0 0
        %6111 = vmatprep.subr.bf16.mxu0 0
        %6112 = vmatpush2.bf16.msra.mxu0 0
        %6113 = vmatprep.subr.bf16.mxu0 0
        %6114 = vmatpush2.bf16.msra.mxu0 0
        %6115 = vmatprep.subr.bf16.mxu0 0
        %6116 = vmatpush2.bf16.msra.mxu0 0
        %6117 = vmatprep.mubr.bf16.mxu0 0
        %6118 = vmatmul.mubr.bf16.gmra.mxu0 %v5367
        %v6119 = vpop.f32.mrf.mxu0
        %v6120 = vadd.f32 %v5959, %v6119
        %v6121 = vpop.f32.mrf.mxu0
        %v6122 = vpop.f32.mrf.mxu0
        %v6123 = vadd.f32 %v5962, %v6122
        %v6124 = vpop.f32.mrf.mxu0
        %6125 = vmatprep.mubr.bf16.mxu0 0
        %6126 = vmatmul.mubr.bf16.gmra.mxu0 %v5372
        %v6127 = vpop.f32.mrf.mxu0
        %v6128 = vadd.f32 %v5967, %v6127
        %v6129 = vpop.f32.mrf.mxu0
        %v6130 = vpop.f32.mrf.mxu0
        %v6131 = vadd.f32 %v5970, %v6130
        %v6132 = vpop.f32.mrf.mxu0
        %6133 = vmatprep.mubr.bf16.mxu0 0
        %6134 = vmatmul.mubr.bf16.gmra.mxu0 %v5377
        %v6135 = vpop.f32.mrf.mxu0
        %v6136 = vadd.f32 %v5975, %v6135
        %v6137 = vpop.f32.mrf.mxu0
        %v6138 = vpop.f32.mrf.mxu0
        %v6139 = vadd.f32 %v5978, %v6138
        %v6140 = vpop.f32.mrf.mxu0
        %6141 = vmatprep.mubr.bf16.mxu0 0
        %6142 = vmatmul.mubr.bf16.gmra.mxu0 %v5382
        %v6143 = vpop.f32.mrf.mxu0
        %v6144 = vadd.f32 %v5983, %v6143
        %v6145 = vpop.f32.mrf.mxu0
        %v6146 = vpop.f32.mrf.mxu0
        %v6147 = vadd.f32 %v5986, %v6146
        %v6148 = vpop.f32.mrf.mxu0
        %6149 = vmatprep.mubr.bf16.mxu0 0
        %6150 = vmatmul.mubr.bf16.gmra.mxu0 %v5387
        %v6151 = vpop.f32.mrf.mxu0
        %v6152 = vadd.f32 %v5991, %v6151
        %v6153 = vpop.f32.mrf.mxu0
        %v6154 = vpop.f32.mrf.mxu0
        %v6155 = vadd.f32 %v5994, %v6154
        %v6156 = vpop.f32.mrf.mxu0
        %6157 = vmatprep.mubr.bf16.mxu0 0
        %6158 = vmatmul.mubr.bf16.gmra.mxu0 %v5392
        %v6159 = vpop.f32.mrf.mxu0
        %v6160 = vadd.f32 %v5999, %v6159
        %v6161 = vpop.f32.mrf.mxu0
        %v6162 = vpop.f32.mrf.mxu0
        %v6163 = vadd.f32 %v6002, %v6162
        %v6164 = vpop.f32.mrf.mxu0
        %6165 = vmatprep.mubr.bf16.mxu0 0
        %6166 = vmatmul.mubr.bf16.gmra.mxu0 %v5397
        %v6167 = vpop.f32.mrf.mxu0
        %v6168 = vadd.f32 %v6007, %v6167
        %v6169 = vpop.f32.mrf.mxu0
        %v6170 = vpop.f32.mrf.mxu0
        %v6171 = vadd.f32 %v6010, %v6170
        %v6172 = vpop.f32.mrf.mxu0
        %6173 = vmatprep.mubr.bf16.mxu0 0
        %6174 = vmatmul.mubr.bf16.gmra.mxu0 %v5402
        %v6175 = vpop.f32.mrf.mxu0
        %v6176 = vadd.f32 %v6015, %v6175
        %v6177 = vpop.f32.mrf.mxu0
        %v6178 = vpop.f32.mrf.mxu0
        %v6179 = vadd.f32 %v6018, %v6178
        %v6180 = vpop.f32.mrf.mxu0
        %6181 = vmatprep.mubr.bf16.mxu0 0
        %6182 = vmatmul.mubr.bf16.gmra.mxu0 %v5407
        %v6183 = vpop.f32.mrf.mxu0
        %v6184 = vadd.f32 %v6023, %v6183
        %v6185 = vpop.f32.mrf.mxu0
        %v6186 = vpop.f32.mrf.mxu0
        %v6187 = vadd.f32 %v6026, %v6186
        %v6188 = vpop.f32.mrf.mxu0
        %6189 = vmatprep.mubr.bf16.mxu0 0
        %6190 = vmatmul.mubr.bf16.gmra.mxu0 %v5412
        %v6191 = vpop.f32.mrf.mxu0
        %v6192 = vadd.f32 %v6031, %v6191
        %v6193 = vpop.f32.mrf.mxu0
        %v6194 = vpop.f32.mrf.mxu0
        %v6195 = vadd.f32 %v6034, %v6194
        %v6196 = vpop.f32.mrf.mxu0
        %6197 = vmatprep.mubr.bf16.mxu0 0
        %6198 = vmatmul.mubr.bf16.gmra.mxu0 %v5417
        %v6199 = vpop.f32.mrf.mxu0
        %v6200 = vadd.f32 %v6039, %v6199
        %v6201 = vpop.f32.mrf.mxu0
        %v6202 = vpop.f32.mrf.mxu0
        %v6203 = vadd.f32 %v6042, %v6202
        %v6204 = vpop.f32.mrf.mxu0
        %6205 = vmatprep.mubr.bf16.mxu0 0
        %6206 = vmatmul.mubr.bf16.gmra.mxu0 %v5422
        %v6207 = vpop.f32.mrf.mxu0
        %v6208 = vadd.f32 %v6047, %v6207
        %v6209 = vpop.f32.mrf.mxu0
        %v6210 = vpop.f32.mrf.mxu0
        %v6211 = vadd.f32 %v6050, %v6210
        %v6212 = vpop.f32.mrf.mxu0
        %6213 = vmatprep.mubr.bf16.mxu0 0
        %6214 = vmatmul.mubr.bf16.gmra.mxu0 %v5427
        %v6215 = vpop.f32.mrf.mxu0
        %v6216 = vadd.f32 %v6055, %v6215
        %v6217 = vpop.f32.mrf.mxu0
        %v6218 = vpop.f32.mrf.mxu0
        %v6219 = vadd.f32 %v6058, %v6218
        %v6220 = vpop.f32.mrf.mxu0
        %6221 = vmatprep.mubr.bf16.mxu0 0
        %6222 = vmatmul.mubr.bf16.gmra.mxu0 %v5432
        %v6223 = vpop.f32.mrf.mxu0
        %v6224 = vadd.f32 %v6063, %v6223
        %v6225 = vpop.f32.mrf.mxu0
        %v6226 = vpop.f32.mrf.mxu0
        %v6227 = vadd.f32 %v6066, %v6226
        %v6228 = vpop.f32.mrf.mxu0
        %6229 = vmatprep.mubr.bf16.mxu0 0
        %6230 = vmatmul.mubr.bf16.gmra.mxu0 %v5437
        %v6231 = vpop.f32.mrf.mxu0
        %v6232 = vadd.f32 %v6071, %v6231
        %v6233 = vpop.f32.mrf.mxu0
        %v6234 = vpop.f32.mrf.mxu0
        %v6235 = vadd.f32 %v6074, %v6234
        %v6236 = vpop.f32.mrf.mxu0
        %6237 = vmatprep.mubr.bf16.mxu0 0
        %6238 = vmatmul.mubr.bf16.gmra.mxu0 %v5442
        %v6239 = vpop.f32.mrf.mxu0
        %v6240 = vadd.f32 %v6079, %v6239
        %v6241 = vpop.f32.mrf.mxu0
        %v6242 = vpop.f32.mrf.mxu0
        %v6243 = vadd.f32 %v6082, %v6242
        %v6244 = vpop.f32.mrf.mxu0
        %6245 = vdwg.mxu0
        %v6246 = vmax.f32 %v6120, 0.0
        %v6247 = vmax.f32 %v6123, 0.0
        %v6248 = vmax.f32 %v6128, 0.0
        %v6249 = vmax.f32 %v6131, 0.0
        %v6250 = vmax.f32 %v6136, 0.0
        %v6251 = vmax.f32 %v6139, 0.0
        %v6252 = vmax.f32 %v6144, 0.0
        %v6253 = vmax.f32 %v6147, 0.0
        %v6254 = vmax.f32 %v6152, 0.0
        %v6255 = vmax.f32 %v6155, 0.0
        %v6256 = vmax.f32 %v6160, 0.0
        %v6257 = vmax.f32 %v6163, 0.0
        %v6258 = vmax.f32 %v6168, 0.0
        %v6259 = vmax.f32 %v6171, 0.0
        %v6260 = vmax.f32 %v6176, 0.0
        %v6261 = vmax.f32 %v6179, 0.0
        %v6262 = vmax.f32 %v6184, 0.0
        %v6263 = vmax.f32 %v6187, 0.0
        %v6264 = vmax.f32 %v6192, 0.0
        %v6265 = vmax.f32 %v6195, 0.0
        %v6266 = vmax.f32 %v6200, 0.0
        %v6267 = vmax.f32 %v6203, 0.0
        %v6268 = vmax.f32 %v6208, 0.0
        %v6269 = vmax.f32 %v6211, 0.0
        %v6270 = vmax.f32 %v6216, 0.0
        %v6271 = vmax.f32 %v6219, 0.0
        %v6272 = vmax.f32 %v6224, 0.0
        %v6273 = vmax.f32 %v6227, 0.0
        %v6274 = vmax.f32 %v6232, 0.0
        %v6275 = vmax.f32 %v6235, 0.0
        %v6276 = vmax.f32 %v6240, 0.0
        %v6277 = vmax.f32 %v6243, 0.0
        %6278 = vst.msk [vmem:[%s366 + $0x1] sm:$0xff] %vm278, %v6246
        %6279 = vst.msk [vmem:[%s366 + $0x9] sm:$0xff] %vm278, %v6247
        %6280 = vst.msk [vmem:[%s366 + $0x19] sm:$0xff] %vm278, %v6248
        %6281 = vst.msk [vmem:[%s366 + $0x21] sm:$0xff] %vm278, %v6249
        %6282 = vst.msk [vmem:[%s366 + $0x31] sm:$0xff] %vm278, %v6250
        %6283 = vst.msk [vmem:[%s366 + $0x39] sm:$0xff] %vm278, %v6251
        %6284 = vst.msk [vmem:[%s366 + $0x49] sm:$0xff] %vm278, %v6252
        %6285 = vst.msk [vmem:[%s366 + $0x51] sm:$0xff] %vm278, %v6253
        %6286 = vst.msk [vmem:[%s366 + $0x61] sm:$0xff] %vm278, %v6254
        %6287 = vst.msk [vmem:[%s366 + $0x69] sm:$0xff] %vm278, %v6255
        %6288 = vst.msk [vmem:[%s366 + $0x79] sm:$0xff] %vm278, %v6256
        %6289 = vst.msk [vmem:[%s366 + $0x81] sm:$0xff] %vm278, %v6257
        %6290 = vst.msk [vmem:[%s366 + $0x91] sm:$0xff] %vm278, %v6258
        %6291 = vst.msk [vmem:[%s366 + $0x99] sm:$0xff] %vm278, %v6259
        %6292 = vst.msk [vmem:[%s366 + $0xa9] sm:$0xff] %vm278, %v6260
        %6293 = vst.msk [vmem:[%s366 + $0xb1] sm:$0xff] %vm278, %v6261
        %6294 = vst.msk [vmem:[%s366 + $0xc1] sm:$0xff] %vm278, %v6262
        %6295 = vst.msk [vmem:[%s366 + $0xc9] sm:$0xff] %vm278, %v6263
        %6296 = vst.msk [vmem:[%s366 + $0xd9] sm:$0xff] %vm278, %v6264
        %6297 = vst.msk [vmem:[%s366 + $0xe1] sm:$0xff] %vm278, %v6265
        %6298 = vst.msk [vmem:[%s366 + $0xf1] sm:$0xff] %vm278, %v6266
        %6299 = vst.msk [vmem:[%s366 + $0xf9] sm:$0xff] %vm278, %v6267
        %6300 = vst.msk [vmem:[%s366 + $0x109] sm:$0xff] %vm278, %v6268
        %6301 = vst.msk [vmem:[%s366 + $0x111] sm:$0xff] %vm278, %v6269
        %6302 = vst.msk [vmem:[%s366 + $0x121] sm:$0xff] %vm278, %v6270
        %6303 = vst.msk [vmem:[%s366 + $0x129] sm:$0xff] %vm278, %v6271
        %6304 = vst.msk [vmem:[%s366 + $0x139] sm:$0xff] %vm278, %v6272
        %6305 = vst.msk [vmem:[%s366 + $0x141] sm:$0xff] %vm278, %v6273
        %6306 = vst.msk [vmem:[%s366 + $0x151] sm:$0xff] %vm278, %v6274
        %6307 = vst.msk [vmem:[%s366 + $0x159] sm:$0xff] %vm278, %v6275
        %6308 = vst.msk [vmem:[%s366 + $0x169] sm:$0xff] %vm278, %v6276
        %6309 = vst.msk [vmem:[%s366 + $0x171] sm:$0xff] %vm278, %v6277
        %v6310 = vld [vmem:[#allocation2] sm:$0xff]
        %v6311 = vld [vmem:[#allocation2 + $0x8] sm:$0xff]
        %v6312 = vld [vmem:[#allocation2 + $0x18] sm:$0xff]
        %v6313 = vld [vmem:[#allocation2 + $0x20] sm:$0xff]
        %v6314 = vld [vmem:[#allocation2 + $0x30] sm:$0xff]
        %v6315 = vld [vmem:[#allocation2 + $0x38] sm:$0xff]
        %v6316 = vld [vmem:[#allocation2 + $0x48] sm:$0xff]
        %v6317 = vld [vmem:[#allocation2 + $0x50] sm:$0xff]
        %v6318 = vld [vmem:[#allocation2 + $0x60] sm:$0xff]
        %v6319 = vld [vmem:[#allocation2 + $0x68] sm:$0xff]
        %v6320 = vld [vmem:[#allocation2 + $0x78] sm:$0xff]
        %v6321 = vld [vmem:[#allocation2 + $0x80] sm:$0xff]
        %v6322 = vld [vmem:[#allocation2 + $0x90] sm:$0xff]
        %v6323 = vld [vmem:[#allocation2 + $0x98] sm:$0xff]
        %v6324 = vld [vmem:[#allocation2 + $0xa8] sm:$0xff]
        %v6325 = vld [vmem:[#allocation2 + $0xb0] sm:$0xff]
        %v6326 = vld [vmem:[#allocation2 + $0xc0] sm:$0xff]
        %v6327 = vld [vmem:[#allocation2 + $0xc8] sm:$0xff]
        %v6328 = vld [vmem:[#allocation2 + $0xd8] sm:$0xff]
        %v6329 = vld [vmem:[#allocation2 + $0xe0] sm:$0xff]
        %v6330 = vld [vmem:[#allocation2 + $0xf0] sm:$0xff]
        %v6331 = vld [vmem:[#allocation2 + $0xf8] sm:$0xff]
        %v6332 = vld [vmem:[#allocation2 + $0x108] sm:$0xff]
        %v6333 = vld [vmem:[#allocation2 + $0x110] sm:$0xff]
        %v6334 = vld [vmem:[#allocation2 + $0x120] sm:$0xff]
        %v6335 = vld [vmem:[#allocation2 + $0x128] sm:$0xff]
        %v6336 = vld [vmem:[#allocation2 + $0x138] sm:$0xff]
        %v6337 = vld [vmem:[#allocation2 + $0x140] sm:$0xff]
        %v6338 = vld [vmem:[#allocation2 + $0x150] sm:$0xff]
        %v6339 = vld [vmem:[#allocation2 + $0x158] sm:$0xff]
        %v6340 = vld [vmem:[#allocation2 + $0x168] sm:$0xff]
        %v6341 = vld [vmem:[#allocation2 + $0x170] sm:$0xff]
        %v6342 = vpack.c.bf16 %v6311, %v6310
        %v6343 = vpack.c.bf16 %v6313, %v6312
        %v6344 = vpack.c.bf16 %v6315, %v6314
        %v6345 = vpack.c.bf16 %v6317, %v6316
        %v6346 = vpack.c.bf16 %v6319, %v6318
        %v6347 = vpack.c.bf16 %v6321, %v6320
        %v6348 = vpack.c.bf16 %v6323, %v6322
        %v6349 = vpack.c.bf16 %v6325, %v6324
        %v6350 = vpack.c.bf16 %v6327, %v6326
        %v6351 = vpack.c.bf16 %v6329, %v6328
        %v6352 = vpack.c.bf16 %v6331, %v6330
        %v6353 = vpack.c.bf16 %v6333, %v6332
        %v6354 = vpack.c.bf16 %v6335, %v6334
        %v6355 = vpack.c.bf16 %v6337, %v6336
        %v6356 = vpack.c.bf16 %v6339, %v6338
        %v6357 = vpack.c.bf16 %v6341, %v6340
        %v6358 = vld [vmem:[#allocation2 + $0x1] sm:$0xff]
        %v6359 = vld [vmem:[#allocation2 + $0x9] sm:$0xff]
        %v6360 = vld [vmem:[#allocation2 + $0x19] sm:$0xff]
        %v6361 = vld [vmem:[#allocation2 + $0x21] sm:$0xff]
        %v6362 = vld [vmem:[#allocation2 + $0x31] sm:$0xff]
        %v6363 = vld [vmem:[#allocation2 + $0x39] sm:$0xff]
        %v6364 = vld [vmem:[#allocation2 + $0x49] sm:$0xff]
        %v6365 = vld [vmem:[#allocation2 + $0x51] sm:$0xff]
        %v6366 = vld [vmem:[#allocation2 + $0x61] sm:$0xff]
        %v6367 = vld [vmem:[#allocation2 + $0x69] sm:$0xff]
        %v6368 = vld [vmem:[#allocation2 + $0x79] sm:$0xff]
        %v6369 = vld [vmem:[#allocation2 + $0x81] sm:$0xff]
        %v6370 = vld [vmem:[#allocation2 + $0x91] sm:$0xff]
        %v6371 = vld [vmem:[#allocation2 + $0x99] sm:$0xff]
        %v6372 = vld [vmem:[#allocation2 + $0xa9] sm:$0xff]
        %v6373 = vld [vmem:[#allocation2 + $0xb1] sm:$0xff]
        %v6374 = vld [vmem:[#allocation2 + $0xc1] sm:$0xff]
        %v6375 = vld [vmem:[#allocation2 + $0xc9] sm:$0xff]
        %v6376 = vld [vmem:[#allocation2 + $0xd9] sm:$0xff]
        %v6377 = vld [vmem:[#allocation2 + $0xe1] sm:$0xff]
        %v6378 = vld [vmem:[#allocation2 + $0xf1] sm:$0xff]
        %v6379 = vld [vmem:[#allocation2 + $0xf9] sm:$0xff]
        %v6380 = vld [vmem:[#allocation2 + $0x109] sm:$0xff]
        %v6381 = vld [vmem:[#allocation2 + $0x111] sm:$0xff]
        %v6382 = vld [vmem:[#allocation2 + $0x121] sm:$0xff]
        %v6383 = vld [vmem:[#allocation2 + $0x129] sm:$0xff]
        %v6384 = vld [vmem:[#allocation2 + $0x139] sm:$0xff]
        %v6385 = vld [vmem:[#allocation2 + $0x141] sm:$0xff]
        %v6386 = vld [vmem:[#allocation2 + $0x151] sm:$0xff]
        %v6387 = vld [vmem:[#allocation2 + $0x159] sm:$0xff]
        %v6388 = vld [vmem:[#allocation2 + $0x169] sm:$0xff]
        %v6389 = vld [vmem:[#allocation2 + $0x171] sm:$0xff]
        %v6390 = vpack.c.bf16 %v6359, %v6358
        %v6391 = vpack.c.bf16 %v6361, %v6360
        %v6392 = vpack.c.bf16 %v6363, %v6362
        %v6393 = vpack.c.bf16 %v6365, %v6364
        %v6394 = vpack.c.bf16 %v6367, %v6366
        %v6395 = vpack.c.bf16 %v6369, %v6368
        %v6396 = vpack.c.bf16 %v6371, %v6370
        %v6397 = vpack.c.bf16 %v6373, %v6372
        %v6398 = vpack.c.bf16 %v6375, %v6374
        %v6399 = vpack.c.bf16 %v6377, %v6376
        %v6400 = vpack.c.bf16 %v6379, %v6378
        %v6401 = vpack.c.bf16 %v6381, %v6380
        %v6402 = vpack.c.bf16 %v6383, %v6382
        %v6403 = vpack.c.bf16 %v6385, %v6384
        %v6404 = vpack.c.bf16 %v6387, %v6386
        %v6405 = vpack.c.bf16 %v6389, %v6388
        %v6406 = vld [vmem:[#allocation2 + $0x2] sm:$0xff]
        %v6407 = vld [vmem:[#allocation2 + $0xa] sm:$0xff]
        %v6408 = vld [vmem:[#allocation2 + $0x1a] sm:$0xff]
        %v6409 = vld [vmem:[#allocation2 + $0x22] sm:$0xff]
        %v6410 = vld [vmem:[#allocation2 + $0x32] sm:$0xff]
        %v6411 = vld [vmem:[#allocation2 + $0x3a] sm:$0xff]
        %v6412 = vld [vmem:[#allocation2 + $0x4a] sm:$0xff]
        %v6413 = vld [vmem:[#allocation2 + $0x52] sm:$0xff]
        %v6414 = vld [vmem:[#allocation2 + $0x62] sm:$0xff]
        %v6415 = vld [vmem:[#allocation2 + $0x6a] sm:$0xff]
        %v6416 = vld [vmem:[#allocation2 + $0x7a] sm:$0xff]
        %v6417 = vld [vmem:[#allocation2 + $0x82] sm:$0xff]
        %v6418 = vld [vmem:[#allocation2 + $0x92] sm:$0xff]
        %v6419 = vld [vmem:[#allocation2 + $0x9a] sm:$0xff]
        %v6420 = vld [vmem:[#allocation2 + $0xaa] sm:$0xff]
        %v6421 = vld [vmem:[#allocation2 + $0xb2] sm:$0xff]
        %v6422 = vld [vmem:[#allocation2 + $0xc2] sm:$0xff]
        %v6423 = vld [vmem:[#allocation2 + $0xca] sm:$0xff]
        %v6424 = vld [vmem:[#allocation2 + $0xda] sm:$0xff]
        %v6425 = vld [vmem:[#allocation2 + $0xe2] sm:$0xff]
        %v6426 = vld [vmem:[#allocation2 + $0xf2] sm:$0xff]
        %v6427 = vld [vmem:[#allocation2 + $0xfa] sm:$0xff]
        %v6428 = vld [vmem:[#allocation2 + $0x10a] sm:$0xff]
        %v6429 = vld [vmem:[#allocation2 + $0x112] sm:$0xff]
        %v6430 = vld [vmem:[#allocation2 + $0x122] sm:$0xff]
        %v6431 = vld [vmem:[#allocation2 + $0x12a] sm:$0xff]
        %v6432 = vld [vmem:[#allocation2 + $0x13a] sm:$0xff]
        %v6433 = vld [vmem:[#allocation2 + $0x142] sm:$0xff]
        %v6434 = vld [vmem:[#allocation2 + $0x152] sm:$0xff]
        %v6435 = vld [vmem:[#allocation2 + $0x15a] sm:$0xff]
        %v6436 = vld [vmem:[#allocation2 + $0x16a] sm:$0xff]
        %v6437 = vld [vmem:[#allocation2 + $0x172] sm:$0xff]
        %v6438 = vpack.c.bf16 %v6407, %v6406
        %v6439 = vpack.c.bf16 %v6409, %v6408
        %v6440 = vpack.c.bf16 %v6411, %v6410
        %v6441 = vpack.c.bf16 %v6413, %v6412
        %v6442 = vpack.c.bf16 %v6415, %v6414
        %v6443 = vpack.c.bf16 %v6417, %v6416
        %v6444 = vpack.c.bf16 %v6419, %v6418
        %v6445 = vpack.c.bf16 %v6421, %v6420
        %v6446 = vpack.c.bf16 %v6423, %v6422
        %v6447 = vpack.c.bf16 %v6425, %v6424
        %v6448 = vpack.c.bf16 %v6427, %v6426
        %v6449 = vpack.c.bf16 %v6429, %v6428
        %v6450 = vpack.c.bf16 %v6431, %v6430
        %v6451 = vpack.c.bf16 %v6433, %v6432
        %v6452 = vpack.c.bf16 %v6435, %v6434
        %v6453 = vpack.c.bf16 %v6437, %v6436
        %v6454 = vld [vmem:[%s366] sm:$0xff]
        %v6455 = vld [vmem:[%s366 + $0x8] sm:$0xff]
        %v6456 = vld [vmem:[%s366 + $0x18] sm:$0xff]
        %v6457 = vld [vmem:[%s366 + $0x20] sm:$0xff]
        %v6458 = vld [vmem:[%s366 + $0x30] sm:$0xff]
        %v6459 = vld [vmem:[%s366 + $0x38] sm:$0xff]
        %v6460 = vld [vmem:[%s366 + $0x48] sm:$0xff]
        %v6461 = vld [vmem:[%s366 + $0x50] sm:$0xff]
        %v6462 = vld [vmem:[%s366 + $0x60] sm:$0xff]
        %v6463 = vld [vmem:[%s366 + $0x68] sm:$0xff]
        %v6464 = vld [vmem:[%s366 + $0x78] sm:$0xff]
        %v6465 = vld [vmem:[%s366 + $0x80] sm:$0xff]
        %v6466 = vld [vmem:[%s366 + $0x90] sm:$0xff]
        %v6467 = vld [vmem:[%s366 + $0x98] sm:$0xff]
        %v6468 = vld [vmem:[%s366 + $0xa8] sm:$0xff]
        %v6469 = vld [vmem:[%s366 + $0xb0] sm:$0xff]
        %v6470 = vld [vmem:[%s366 + $0xc0] sm:$0xff]
        %v6471 = vld [vmem:[%s366 + $0xc8] sm:$0xff]
        %v6472 = vld [vmem:[%s366 + $0xd8] sm:$0xff]
        %v6473 = vld [vmem:[%s366 + $0xe0] sm:$0xff]
        %v6474 = vld [vmem:[%s366 + $0xf0] sm:$0xff]
        %v6475 = vld [vmem:[%s366 + $0xf8] sm:$0xff]
        %v6476 = vld [vmem:[%s366 + $0x108] sm:$0xff]
        %v6477 = vld [vmem:[%s366 + $0x110] sm:$0xff]
        %v6478 = vld [vmem:[%s366 + $0x120] sm:$0xff]
        %v6479 = vld [vmem:[%s366 + $0x128] sm:$0xff]
        %v6480 = vld [vmem:[%s366 + $0x138] sm:$0xff]
        %v6481 = vld [vmem:[%s366 + $0x140] sm:$0xff]
        %v6482 = vld [vmem:[%s366 + $0x150] sm:$0xff]
        %v6483 = vld [vmem:[%s366 + $0x158] sm:$0xff]
        %v6484 = vld [vmem:[%s366 + $0x168] sm:$0xff]
        %v6485 = vld [vmem:[%s366 + $0x170] sm:$0xff]
        %v6486 = vpack.c.bf16 %v6455, %v6454
        %v6487 = vpack.c.bf16 %v6457, %v6456
        %v6488 = vpack.c.bf16 %v6459, %v6458
        %v6489 = vpack.c.bf16 %v6461, %v6460
        %v6490 = vpack.c.bf16 %v6463, %v6462
        %v6491 = vpack.c.bf16 %v6465, %v6464
        %v6492 = vpack.c.bf16 %v6467, %v6466
        %v6493 = vpack.c.bf16 %v6469, %v6468
        %v6494 = vpack.c.bf16 %v6471, %v6470
        %v6495 = vpack.c.bf16 %v6473, %v6472
        %v6496 = vpack.c.bf16 %v6475, %v6474
        %v6497 = vpack.c.bf16 %v6477, %v6476
        %v6498 = vpack.c.bf16 %v6479, %v6478
        %v6499 = vpack.c.bf16 %v6481, %v6480
        %v6500 = vpack.c.bf16 %v6483, %v6482
        %v6501 = vpack.c.bf16 %v6485, %v6484
        %v6502 = vld [vmem:[%s366 + $0x1] sm:$0xff]
        %v6503 = vld [vmem:[%s366 + $0x9] sm:$0xff]
        %v6504 = vld [vmem:[%s366 + $0x19] sm:$0xff]
        %v6505 = vld [vmem:[%s366 + $0x21] sm:$0xff]
        %v6506 = vld [vmem:[%s366 + $0x31] sm:$0xff]
        %v6507 = vld [vmem:[%s366 + $0x39] sm:$0xff]
        %v6508 = vld [vmem:[%s366 + $0x49] sm:$0xff]
        %v6509 = vld [vmem:[%s366 + $0x51] sm:$0xff]
        %v6510 = vld [vmem:[%s366 + $0x61] sm:$0xff]
        %v6511 = vld [vmem:[%s366 + $0x69] sm:$0xff]
        %v6512 = vld [vmem:[%s366 + $0x79] sm:$0xff]
        %v6513 = vld [vmem:[%s366 + $0x81] sm:$0xff]
        %v6514 = vld [vmem:[%s366 + $0x91] sm:$0xff]
        %v6515 = vld [vmem:[%s366 + $0x99] sm:$0xff]
        %v6516 = vld [vmem:[%s366 + $0xa9] sm:$0xff]
        %v6517 = vld [vmem:[%s366 + $0xb1] sm:$0xff]
        %v6518 = vld [vmem:[%s366 + $0xc1] sm:$0xff]
        %v6519 = vld [vmem:[%s366 + $0xc9] sm:$0xff]
        %v6520 = vld [vmem:[%s366 + $0xd9] sm:$0xff]
        %v6521 = vld [vmem:[%s366 + $0xe1] sm:$0xff]
        %v6522 = vld [vmem:[%s366 + $0xf1] sm:$0xff]
        %v6523 = vld [vmem:[%s366 + $0xf9] sm:$0xff]
        %v6524 = vld [vmem:[%s366 + $0x109] sm:$0xff]
        %v6525 = vld [vmem:[%s366 + $0x111] sm:$0xff]
        %v6526 = vld [vmem:[%s366 + $0x121] sm:$0xff]
        %v6527 = vld [vmem:[%s366 + $0x129] sm:$0xff]
        %v6528 = vld [vmem:[%s366 + $0x139] sm:$0xff]
        %v6529 = vld [vmem:[%s366 + $0x141] sm:$0xff]
        %v6530 = vld [vmem:[%s366 + $0x151] sm:$0xff]
        %v6531 = vld [vmem:[%s366 + $0x159] sm:$0xff]
        %v6532 = vld [vmem:[%s366 + $0x169] sm:$0xff]
        %v6533 = vld [vmem:[%s366 + $0x171] sm:$0xff]
        %v6534 = vpack.c.bf16 %v6503, %v6502
        %v6535 = vpack.c.bf16 %v6505, %v6504
        %v6536 = vpack.c.bf16 %v6507, %v6506
        %v6537 = vpack.c.bf16 %v6509, %v6508
        %v6538 = vpack.c.bf16 %v6511, %v6510
        %v6539 = vpack.c.bf16 %v6513, %v6512
        %v6540 = vpack.c.bf16 %v6515, %v6514
        %v6541 = vpack.c.bf16 %v6517, %v6516
        %v6542 = vpack.c.bf16 %v6519, %v6518
        %v6543 = vpack.c.bf16 %v6521, %v6520
        %v6544 = vpack.c.bf16 %v6523, %v6522
        %v6545 = vpack.c.bf16 %v6525, %v6524
        %v6546 = vpack.c.bf16 %v6527, %v6526
        %v6547 = vpack.c.bf16 %v6529, %v6528
        %v6548 = vpack.c.bf16 %v6531, %v6530
        %v6549 = vpack.c.bf16 %v6533, %v6532
        %v6550 = vld [vmem:[%s366 + $0x2] sm:$0xff]
        %v6551 = vld [vmem:[%s366 + $0xa] sm:$0xff]
        %v6552 = vld [vmem:[%s366 + $0x1a] sm:$0xff]
        %v6553 = vld [vmem:[%s366 + $0x22] sm:$0xff]
        %v6554 = vld [vmem:[%s366 + $0x32] sm:$0xff]
        %v6555 = vld [vmem:[%s366 + $0x3a] sm:$0xff]
        %v6556 = vld [vmem:[%s366 + $0x4a] sm:$0xff]
        %v6557 = vld [vmem:[%s366 + $0x52] sm:$0xff]
        %v6558 = vld [vmem:[%s366 + $0x62] sm:$0xff]
        %v6559 = vld [vmem:[%s366 + $0x6a] sm:$0xff]
        %v6560 = vld [vmem:[%s366 + $0x7a] sm:$0xff]
        %v6561 = vld [vmem:[%s366 + $0x82] sm:$0xff]
        %v6562 = vld [vmem:[%s366 + $0x92] sm:$0xff]
        %v6563 = vld [vmem:[%s366 + $0x9a] sm:$0xff]
        %v6564 = vld [vmem:[%s366 + $0xaa] sm:$0xff]
        %v6565 = vld [vmem:[%s366 + $0xb2] sm:$0xff]
        %v6566 = vld [vmem:[%s366 + $0xc2] sm:$0xff]
        %v6567 = vld [vmem:[%s366 + $0xca] sm:$0xff]
        %v6568 = vld [vmem:[%s366 + $0xda] sm:$0xff]
        %v6569 = vld [vmem:[%s366 + $0xe2] sm:$0xff]
        %v6570 = vld [vmem:[%s366 + $0xf2] sm:$0xff]
        %v6571 = vld [vmem:[%s366 + $0xfa] sm:$0xff]
        %v6572 = vld [vmem:[%s366 + $0x10a] sm:$0xff]
        %v6573 = vld [vmem:[%s366 + $0x112] sm:$0xff]
        %v6574 = vld [vmem:[%s366 + $0x122] sm:$0xff]
        %v6575 = vld [vmem:[%s366 + $0x12a] sm:$0xff]
        %v6576 = vld [vmem:[%s366 + $0x13a] sm:$0xff]
        %v6577 = vld [vmem:[%s366 + $0x142] sm:$0xff]
        %v6578 = vld [vmem:[%s366 + $0x152] sm:$0xff]
        %v6579 = vld [vmem:[%s366 + $0x15a] sm:$0xff]
        %v6580 = vld [vmem:[%s366 + $0x16a] sm:$0xff]
        %v6581 = vld [vmem:[%s366 + $0x172] sm:$0xff]
        %v6582 = vpack.c.bf16 %v6551, %v6550
        %v6583 = vpack.c.bf16 %v6553, %v6552
        %v6584 = vpack.c.bf16 %v6555, %v6554
        %v6585 = vpack.c.bf16 %v6557, %v6556
        %v6586 = vpack.c.bf16 %v6559, %v6558
        %v6587 = vpack.c.bf16 %v6561, %v6560
        %v6588 = vpack.c.bf16 %v6563, %v6562
        %v6589 = vpack.c.bf16 %v6565, %v6564
        %v6590 = vpack.c.bf16 %v6567, %v6566
        %v6591 = vpack.c.bf16 %v6569, %v6568
        %v6592 = vpack.c.bf16 %v6571, %v6570
        %v6593 = vpack.c.bf16 %v6573, %v6572
        %v6594 = vpack.c.bf16 %v6575, %v6574
        %v6595 = vpack.c.bf16 %v6577, %v6576
        %v6596 = vpack.c.bf16 %v6579, %v6578
        %v6597 = vpack.c.bf16 %v6581, %v6580
        %v6598 = vld [vmem:[%s688] sm:$0xff]
        %v6599 = vld [vmem:[%s688 + $0x8] sm:$0xff]
        %v6600 = vld [vmem:[%s688 + $0x18] sm:$0xff]
        %v6601 = vld [vmem:[%s688 + $0x20] sm:$0xff]
        %v6602 = vld [vmem:[%s688 + $0x30] sm:$0xff]
        %v6603 = vld [vmem:[%s688 + $0x38] sm:$0xff]
        %v6604 = vld [vmem:[%s688 + $0x48] sm:$0xff]
        %v6605 = vld [vmem:[%s688 + $0x50] sm:$0xff]
        %v6606 = vld [vmem:[%s688 + $0x60] sm:$0xff]
        %v6607 = vld [vmem:[%s688 + $0x68] sm:$0xff]
        %v6608 = vld [vmem:[%s688 + $0x78] sm:$0xff]
        %v6609 = vld [vmem:[%s688 + $0x80] sm:$0xff]
        %v6610 = vld [vmem:[%s688 + $0x90] sm:$0xff]
        %v6611 = vld [vmem:[%s688 + $0x98] sm:$0xff]
        %v6612 = vld [vmem:[%s688 + $0xa8] sm:$0xff]
        %v6613 = vld [vmem:[%s688 + $0xb0] sm:$0xff]
        %v6614 = vld [vmem:[%s688 + $0xc0] sm:$0xff]
        %v6615 = vld [vmem:[%s688 + $0xc8] sm:$0xff]
        %v6616 = vld [vmem:[%s688 + $0xd8] sm:$0xff]
        %v6617 = vld [vmem:[%s688 + $0xe0] sm:$0xff]
        %v6618 = vld [vmem:[%s688 + $0xf0] sm:$0xff]
        %v6619 = vld [vmem:[%s688 + $0xf8] sm:$0xff]
        %v6620 = vld [vmem:[%s688 + $0x108] sm:$0xff]
        %v6621 = vld [vmem:[%s688 + $0x110] sm:$0xff]
        %v6622 = vld [vmem:[%s688 + $0x120] sm:$0xff]
        %v6623 = vld [vmem:[%s688 + $0x128] sm:$0xff]
        %v6624 = vld [vmem:[%s688 + $0x138] sm:$0xff]
        %v6625 = vld [vmem:[%s688 + $0x140] sm:$0xff]
        %v6626 = vld [vmem:[%s688 + $0x150] sm:$0xff]
        %v6627 = vld [vmem:[%s688 + $0x158] sm:$0xff]
        %v6628 = vld [vmem:[%s688 + $0x168] sm:$0xff]
        %v6629 = vld [vmem:[%s688 + $0x170] sm:$0xff]
        %v6630 = vpack.c.bf16 %v6599, %v6598
        %v6631 = vpack.c.bf16 %v6601, %v6600
        %v6632 = vpack.c.bf16 %v6603, %v6602
        %v6633 = vpack.c.bf16 %v6605, %v6604
        %v6634 = vpack.c.bf16 %v6607, %v6606
        %v6635 = vpack.c.bf16 %v6609, %v6608
        %v6636 = vpack.c.bf16 %v6611, %v6610
        %v6637 = vpack.c.bf16 %v6613, %v6612
        %v6638 = vpack.c.bf16 %v6615, %v6614
        %v6639 = vpack.c.bf16 %v6617, %v6616
        %v6640 = vpack.c.bf16 %v6619, %v6618
        %v6641 = vpack.c.bf16 %v6621, %v6620
        %v6642 = vpack.c.bf16 %v6623, %v6622
        %v6643 = vpack.c.bf16 %v6625, %v6624
        %v6644 = vpack.c.bf16 %v6627, %v6626
        %v6645 = vpack.c.bf16 %v6629, %v6628
        %v6646 = vld [vmem:[%s688 + $0x1] sm:$0xff]
        %v6647 = vld [vmem:[%s688 + $0x9] sm:$0xff]
        %v6648 = vld [vmem:[%s688 + $0x19] sm:$0xff]
        %v6649 = vld [vmem:[%s688 + $0x21] sm:$0xff]
        %v6650 = vld [vmem:[%s688 + $0x31] sm:$0xff]
        %v6651 = vld [vmem:[%s688 + $0x39] sm:$0xff]
        %v6652 = vld [vmem:[%s688 + $0x49] sm:$0xff]
        %v6653 = vld [vmem:[%s688 + $0x51] sm:$0xff]
        %v6654 = vld [vmem:[%s688 + $0x61] sm:$0xff]
        %v6655 = vld [vmem:[%s688 + $0x69] sm:$0xff]
        %v6656 = vld [vmem:[%s688 + $0x79] sm:$0xff]
        %v6657 = vld [vmem:[%s688 + $0x81] sm:$0xff]
        %v6658 = vld [vmem:[%s688 + $0x91] sm:$0xff]
        %v6659 = vld [vmem:[%s688 + $0x99] sm:$0xff]
        %v6660 = vld [vmem:[%s688 + $0xa9] sm:$0xff]
        %v6661 = vld [vmem:[%s688 + $0xb1] sm:$0xff]
        %v6662 = vld [vmem:[%s688 + $0xc1] sm:$0xff]
        %v6663 = vld [vmem:[%s688 + $0xc9] sm:$0xff]
        %v6664 = vld [vmem:[%s688 + $0xd9] sm:$0xff]
        %v6665 = vld [vmem:[%s688 + $0xe1] sm:$0xff]
        %v6666 = vld [vmem:[%s688 + $0xf1] sm:$0xff]
        %v6667 = vld [vmem:[%s688 + $0xf9] sm:$0xff]
        %v6668 = vld [vmem:[%s688 + $0x109] sm:$0xff]
        %v6669 = vld [vmem:[%s688 + $0x111] sm:$0xff]
        %v6670 = vld [vmem:[%s688 + $0x121] sm:$0xff]
        %v6671 = vld [vmem:[%s688 + $0x129] sm:$0xff]
        %v6672 = vld [vmem:[%s688 + $0x139] sm:$0xff]
        %v6673 = vld [vmem:[%s688 + $0x141] sm:$0xff]
        %v6674 = vld [vmem:[%s688 + $0x151] sm:$0xff]
        %v6675 = vld [vmem:[%s688 + $0x159] sm:$0xff]
        %v6676 = vld [vmem:[%s688 + $0x169] sm:$0xff]
        %v6677 = vld [vmem:[%s688 + $0x171] sm:$0xff]
        %v6678 = vpack.c.bf16 %v6647, %v6646
        %v6679 = vpack.c.bf16 %v6649, %v6648
        %v6680 = vpack.c.bf16 %v6651, %v6650
        %v6681 = vpack.c.bf16 %v6653, %v6652
        %v6682 = vpack.c.bf16 %v6655, %v6654
        %v6683 = vpack.c.bf16 %v6657, %v6656
        %v6684 = vpack.c.bf16 %v6659, %v6658
        %v6685 = vpack.c.bf16 %v6661, %v6660
        %v6686 = vpack.c.bf16 %v6663, %v6662
        %v6687 = vpack.c.bf16 %v6665, %v6664
        %v6688 = vpack.c.bf16 %v6667, %v6666
        %v6689 = vpack.c.bf16 %v6669, %v6668
        %v6690 = vpack.c.bf16 %v6671, %v6670
        %v6691 = vpack.c.bf16 %v6673, %v6672
        %v6692 = vpack.c.bf16 %v6675, %v6674
        %v6693 = vpack.c.bf16 %v6677, %v6676
        %v6694 = vld [vmem:[%s688 + $0x2] sm:$0xff]
        %v6695 = vld [vmem:[%s688 + $0xa] sm:$0xff]
        %v6696 = vld [vmem:[%s688 + $0x1a] sm:$0xff]
        %v6697 = vld [vmem:[%s688 + $0x22] sm:$0xff]
        %v6698 = vld [vmem:[%s688 + $0x32] sm:$0xff]
        %v6699 = vld [vmem:[%s688 + $0x3a] sm:$0xff]
        %v6700 = vld [vmem:[%s688 + $0x4a] sm:$0xff]
        %v6701 = vld [vmem:[%s688 + $0x52] sm:$0xff]
        %v6702 = vld [vmem:[%s688 + $0x62] sm:$0xff]
        %v6703 = vld [vmem:[%s688 + $0x6a] sm:$0xff]
        %v6704 = vld [vmem:[%s688 + $0x7a] sm:$0xff]
        %v6705 = vld [vmem:[%s688 + $0x82] sm:$0xff]
        %v6706 = vld [vmem:[%s688 + $0x92] sm:$0xff]
        %v6707 = vld [vmem:[%s688 + $0x9a] sm:$0xff]
        %v6708 = vld [vmem:[%s688 + $0xaa] sm:$0xff]
        %v6709 = vld [vmem:[%s688 + $0xb2] sm:$0xff]
        %v6710 = vld [vmem:[%s688 + $0xc2] sm:$0xff]
        %v6711 = vld [vmem:[%s688 + $0xca] sm:$0xff]
        %v6712 = vld [vmem:[%s688 + $0xda] sm:$0xff]
        %v6713 = vld [vmem:[%s688 + $0xe2] sm:$0xff]
        %v6714 = vld [vmem:[%s688 + $0xf2] sm:$0xff]
        %v6715 = vld [vmem:[%s688 + $0xfa] sm:$0xff]
        %v6716 = vld [vmem:[%s688 + $0x10a] sm:$0xff]
        %v6717 = vld [vmem:[%s688 + $0x112] sm:$0xff]
        %v6718 = vld [vmem:[%s688 + $0x122] sm:$0xff]
        %v6719 = vld [vmem:[%s688 + $0x12a] sm:$0xff]
        %v6720 = vld [vmem:[%s688 + $0x13a] sm:$0xff]
        %v6721 = vld [vmem:[%s688 + $0x142] sm:$0xff]
        %v6722 = vld [vmem:[%s688 + $0x152] sm:$0xff]
        %v6723 = vld [vmem:[%s688 + $0x15a] sm:$0xff]
        %v6724 = vld [vmem:[%s688 + $0x16a] sm:$0xff]
        %v6725 = vld [vmem:[%s688 + $0x172] sm:$0xff]
        %v6726 = vpack.c.bf16 %v6695, %v6694
        %v6727 = vpack.c.bf16 %v6697, %v6696
        %v6728 = vpack.c.bf16 %v6699, %v6698
        %v6729 = vpack.c.bf16 %v6701, %v6700
        %v6730 = vpack.c.bf16 %v6703, %v6702
        %v6731 = vpack.c.bf16 %v6705, %v6704
        %v6732 = vpack.c.bf16 %v6707, %v6706
        %v6733 = vpack.c.bf16 %v6709, %v6708
        %v6734 = vpack.c.bf16 %v6711, %v6710
        %v6735 = vpack.c.bf16 %v6713, %v6712
        %v6736 = vpack.c.bf16 %v6715, %v6714
        %v6737 = vpack.c.bf16 %v6717, %v6716
        %v6738 = vpack.c.bf16 %v6719, %v6718
        %v6739 = vpack.c.bf16 %v6721, %v6720
        %v6740 = vpack.c.bf16 %v6723, %v6722
        %v6741 = vpack.c.bf16 %v6725, %v6724
        %6758 = vrot.lane.b32.xlu0 %v6390, 64
        %v6759 = vpop.permute.xlu0 %6758
        %6760 = vrot.lane.b32.xlu0 %v6391, 64
        %v6761 = vpop.permute.xlu0 %6760
        %6762 = vrot.lane.b32.xlu0 %v6392, 64
        %v6763 = vpop.permute.xlu0 %6762
        %6764 = vrot.lane.b32.xlu0 %v6393, 64
        %v6765 = vpop.permute.xlu0 %6764
        %6766 = vrot.lane.b32.xlu0 %v6394, 64
        %v6767 = vpop.permute.xlu0 %6766
        %6768 = vrot.lane.b32.xlu0 %v6395, 64
        %v6769 = vpop.permute.xlu0 %6768
        %6770 = vrot.lane.b32.xlu0 %v6396, 64
        %v6771 = vpop.permute.xlu0 %6770
        %6772 = vrot.lane.b32.xlu0 %v6397, 64
        %v6773 = vpop.permute.xlu0 %6772
        %6774 = vrot.lane.b32.xlu0 %v6398, 64
        %v6775 = vpop.permute.xlu0 %6774
        %6776 = vrot.lane.b32.xlu0 %v6399, 64
        %v6777 = vpop.permute.xlu0 %6776
        %6778 = vrot.lane.b32.xlu0 %v6400, 64
        %v6779 = vpop.permute.xlu0 %6778
        %6780 = vrot.lane.b32.xlu0 %v6401, 64
        %v6781 = vpop.permute.xlu0 %6780
        %6782 = vrot.lane.b32.xlu0 %v6402, 64
        %v6783 = vpop.permute.xlu0 %6782
        %6784 = vrot.lane.b32.xlu0 %v6403, 64
        %v6785 = vpop.permute.xlu0 %6784
        %6786 = vrot.lane.b32.xlu0 %v6404, 64
        %v6787 = vpop.permute.xlu0 %6786
        %6788 = vrot.lane.b32.xlu0 %v6405, 64
        %v6789 = vpop.permute.xlu0 %6788
        %v6792 = vsel %vm278, %v6342, %v6759
        %v6795 = vsel %vm278, %v6343, %v6761
        %v6798 = vsel %vm278, %v6344, %v6763
        %v6801 = vsel %vm278, %v6345, %v6765
        %v6804 = vsel %vm278, %v6346, %v6767
        %v6807 = vsel %vm278, %v6347, %v6769
        %v6810 = vsel %vm278, %v6348, %v6771
        %v6813 = vsel %vm278, %v6349, %v6773
        %v6816 = vsel %vm278, %v6350, %v6775
        %v6819 = vsel %vm278, %v6351, %v6777
        %v6822 = vsel %vm278, %v6352, %v6779
        %v6825 = vsel %vm278, %v6353, %v6781
        %v6828 = vsel %vm278, %v6354, %v6783
        %v6831 = vsel %vm278, %v6355, %v6785
        %v6834 = vsel %vm278, %v6356, %v6787
        %v6837 = vsel %vm278, %v6357, %v6789
        %v6854 = vunpack.c.l.b16 %v6792
        %v6855 = vunpack.c.h.b16 %v6792
        %v6856 = vunpack.c.l.b16 %v6795
        %v6857 = vunpack.c.h.b16 %v6795
        %v6858 = vunpack.c.l.b16 %v6798
        %v6859 = vunpack.c.h.b16 %v6798
        %v6860 = vunpack.c.l.b16 %v6801
        %v6861 = vunpack.c.h.b16 %v6801
        %v6862 = vunpack.c.l.b16 %v6804
        %v6863 = vunpack.c.h.b16 %v6804
        %v6864 = vunpack.c.l.b16 %v6807
        %v6865 = vunpack.c.h.b16 %v6807
        %v6866 = vunpack.c.l.b16 %v6810
        %v6867 = vunpack.c.h.b16 %v6810
        %v6868 = vunpack.c.l.b16 %v6813
        %v6869 = vunpack.c.h.b16 %v6813
        %v6870 = vunpack.c.l.b16 %v6816
        %v6871 = vunpack.c.h.b16 %v6816
        %v6872 = vunpack.c.l.b16 %v6819
        %v6873 = vunpack.c.h.b16 %v6819
        %v6874 = vunpack.c.l.b16 %v6822
        %v6875 = vunpack.c.h.b16 %v6822
        %v6876 = vunpack.c.l.b16 %v6825
        %v6877 = vunpack.c.h.b16 %v6825
        %v6878 = vunpack.c.l.b16 %v6828
        %v6879 = vunpack.c.h.b16 %v6828
        %v6880 = vunpack.c.l.b16 %v6831
        %v6881 = vunpack.c.h.b16 %v6831
        %v6882 = vunpack.c.l.b16 %v6834
        %v6883 = vunpack.c.h.b16 %v6834
        %v6884 = vunpack.c.l.b16 %v6837
        %v6885 = vunpack.c.h.b16 %v6837
        %v6886 = vpack.c.b16 %v6854, %v6854
        %v6887 = vpack.c.b16 %v6855, %v6855
        %v6888 = vpack.c.b16 %v6856, %v6856
        %v6889 = vpack.c.b16 %v6857, %v6857
        %v6890 = vpack.c.b16 %v6858, %v6858
        %v6891 = vpack.c.b16 %v6859, %v6859
        %v6892 = vpack.c.b16 %v6860, %v6860
        %v6893 = vpack.c.b16 %v6861, %v6861
        %v6894 = vpack.c.b16 %v6862, %v6862
        %v6895 = vpack.c.b16 %v6863, %v6863
        %v6896 = vpack.c.b16 %v6864, %v6864
        %v6897 = vpack.c.b16 %v6865, %v6865
        %v6898 = vpack.c.b16 %v6866, %v6866
        %v6899 = vpack.c.b16 %v6867, %v6867
        %v6900 = vpack.c.b16 %v6868, %v6868
        %v6901 = vpack.c.b16 %v6869, %v6869
        %v6902 = vpack.c.b16 %v6870, %v6870
        %v6903 = vpack.c.b16 %v6871, %v6871
        %v6904 = vpack.c.b16 %v6872, %v6872
        %v6905 = vpack.c.b16 %v6873, %v6873
        %v6906 = vpack.c.b16 %v6874, %v6874
        %v6907 = vpack.c.b16 %v6875, %v6875
        %v6908 = vpack.c.b16 %v6876, %v6876
        %v6909 = vpack.c.b16 %v6877, %v6877
        %v6910 = vpack.c.b16 %v6878, %v6878
        %v6911 = vpack.c.b16 %v6879, %v6879
        %v6912 = vpack.c.b16 %v6880, %v6880
        %v6913 = vpack.c.b16 %v6881, %v6881
        %v6914 = vpack.c.b16 %v6882, %v6882
        %v6915 = vpack.c.b16 %v6883, %v6883
        %v6916 = vpack.c.b16 %v6884, %v6884
        %v6917 = vpack.c.b16 %v6885, %v6885
        %6950 = vst [vmem:[#allocation3] sm:$0xf] %v6886
        %6951 = vst [vmem:[#allocation3 + $0x14] sm:$0xf] %v6887
        %6952 = vst [vmem:[#allocation3 + $0x28] sm:$0xf] %v6888
        %6953 = vst [vmem:[#allocation3 + $0x3c] sm:$0xf] %v6889
        %6954 = vst [vmem:[#allocation3 + $0x50] sm:$0xf] %v6890
        %6955 = vst [vmem:[#allocation3 + $0x64] sm:$0xf] %v6891
        %6956 = vst [vmem:[#allocation3 + $0x78] sm:$0xf] %v6892
        %6957 = vst [vmem:[#allocation3 + $0x8c] sm:$0xf] %v6893
        %6958 = vst [vmem:[#allocation3 + $0xa0] sm:$0xf] %v6894
        %6959 = vst [vmem:[#allocation3 + $0xb4] sm:$0xf] %v6895
        %6960 = vst [vmem:[#allocation3 + $0xc8] sm:$0xf] %v6896
        %6961 = vst [vmem:[#allocation3 + $0xdc] sm:$0xf] %v6897
        %6962 = vst [vmem:[#allocation3 + $0xf0] sm:$0xf] %v6898
        %6963 = vst [vmem:[#allocation3 + $0x104] sm:$0xf] %v6899
        %6964 = vst [vmem:[#allocation3 + $0x118] sm:$0xf] %v6900
        %6965 = vst [vmem:[#allocation3 + $0x12c] sm:$0xf] %v6901
        %6966 = vst [vmem:[#allocation3 + $0x140] sm:$0xf] %v6902
        %6967 = vst [vmem:[#allocation3 + $0x154] sm:$0xf] %v6903
        %6968 = vst [vmem:[#allocation3 + $0x168] sm:$0xf] %v6904
        %6969 = vst [vmem:[#allocation3 + $0x17c] sm:$0xf] %v6905
        %6970 = vst [vmem:[#allocation3 + $0x190] sm:$0xf] %v6906
        %6971 = vst [vmem:[#allocation3 + $0x1a4] sm:$0xf] %v6907
        %6972 = vst [vmem:[#allocation3 + $0x1b8] sm:$0xf] %v6908
        %6973 = vst [vmem:[#allocation3 + $0x1cc] sm:$0xf] %v6909
        %6974 = vst [vmem:[#allocation3 + $0x1e0] sm:$0xf] %v6910
        %6975 = vst [vmem:[#allocation3 + $0x1f4] sm:$0xf] %v6911
        %6976 = vst [vmem:[#allocation3 + $0x208] sm:$0xf] %v6912
        %6977 = vst [vmem:[#allocation3 + $0x21c] sm:$0xf] %v6913
        %6978 = vst [vmem:[#allocation3 + $0x230] sm:$0xf] %v6914
        %6979 = vst [vmem:[#allocation3 + $0x244] sm:$0xf] %v6915
        %6980 = vst [vmem:[#allocation3 + $0x258] sm:$0xf] %v6916
        %6981 = vst [vmem:[#allocation3 + $0x26c] sm:$0xf] %v6917
        %6998 = vrot.lane.b32.xlu0 %v6486, 64
        %v6999 = vpop.permute.xlu0 %6998
        %7000 = vrot.lane.b32.xlu0 %v6487, 64
        %v7001 = vpop.permute.xlu0 %7000
        %7002 = vrot.lane.b32.xlu0 %v6488, 64
        %v7003 = vpop.permute.xlu0 %7002
        %7004 = vrot.lane.b32.xlu0 %v6489, 64
        %v7005 = vpop.permute.xlu0 %7004
        %7006 = vrot.lane.b32.xlu0 %v6490, 64
        %v7007 = vpop.permute.xlu0 %7006
        %7008 = vrot.lane.b32.xlu0 %v6491, 64
        %v7009 = vpop.permute.xlu0 %7008
        %7010 = vrot.lane.b32.xlu0 %v6492, 64
        %v7011 = vpop.permute.xlu0 %7010
        %7012 = vrot.lane.b32.xlu0 %v6493, 64
        %v7013 = vpop.permute.xlu0 %7012
        %7014 = vrot.lane.b32.xlu0 %v6494, 64
        %v7015 = vpop.permute.xlu0 %7014
        %7016 = vrot.lane.b32.xlu0 %v6495, 64
        %v7017 = vpop.permute.xlu0 %7016
        %7018 = vrot.lane.b32.xlu0 %v6496, 64
        %v7019 = vpop.permute.xlu0 %7018
        %7020 = vrot.lane.b32.xlu0 %v6497, 64
        %v7021 = vpop.permute.xlu0 %7020
        %7022 = vrot.lane.b32.xlu0 %v6498, 64
        %v7023 = vpop.permute.xlu0 %7022
        %7024 = vrot.lane.b32.xlu0 %v6499, 64
        %v7025 = vpop.permute.xlu0 %7024
        %7026 = vrot.lane.b32.xlu0 %v6500, 64
        %v7027 = vpop.permute.xlu0 %7026
        %7028 = vrot.lane.b32.xlu0 %v6501, 64
        %v7029 = vpop.permute.xlu0 %7028
        %v7032 = vsel %vm278, %v6438, %v6999
        %v7035 = vsel %vm278, %v6439, %v7001
        %v7038 = vsel %vm278, %v6440, %v7003
        %v7041 = vsel %vm278, %v6441, %v7005
        %v7044 = vsel %vm278, %v6442, %v7007
        %v7047 = vsel %vm278, %v6443, %v7009
        %v7050 = vsel %vm278, %v6444, %v7011
        %v7053 = vsel %vm278, %v6445, %v7013
        %v7056 = vsel %vm278, %v6446, %v7015
        %v7059 = vsel %vm278, %v6447, %v7017
        %v7062 = vsel %vm278, %v6448, %v7019
        %v7065 = vsel %vm278, %v6449, %v7021
        %v7068 = vsel %vm278, %v6450, %v7023
        %v7071 = vsel %vm278, %v6451, %v7025
        %v7074 = vsel %vm278, %v6452, %v7027
        %v7077 = vsel %vm278, %v6453, %v7029
        %v7094 = vunpack.c.l.b16 %v7032
        %v7095 = vunpack.c.h.b16 %v7032
        %v7096 = vunpack.c.l.b16 %v7035
        %v7097 = vunpack.c.h.b16 %v7035
        %v7098 = vunpack.c.l.b16 %v7038
        %v7099 = vunpack.c.h.b16 %v7038
        %v7100 = vunpack.c.l.b16 %v7041
        %v7101 = vunpack.c.h.b16 %v7041
        %v7102 = vunpack.c.l.b16 %v7044
        %v7103 = vunpack.c.h.b16 %v7044
        %v7104 = vunpack.c.l.b16 %v7047
        %v7105 = vunpack.c.h.b16 %v7047
        %v7106 = vunpack.c.l.b16 %v7050
        %v7107 = vunpack.c.h.b16 %v7050
        %v7108 = vunpack.c.l.b16 %v7053
        %v7109 = vunpack.c.h.b16 %v7053
        %v7110 = vunpack.c.l.b16 %v7056
        %v7111 = vunpack.c.h.b16 %v7056
        %v7112 = vunpack.c.l.b16 %v7059
        %v7113 = vunpack.c.h.b16 %v7059
        %v7114 = vunpack.c.l.b16 %v7062
        %v7115 = vunpack.c.h.b16 %v7062
        %v7116 = vunpack.c.l.b16 %v7065
        %v7117 = vunpack.c.h.b16 %v7065
        %v7118 = vunpack.c.l.b16 %v7068
        %v7119 = vunpack.c.h.b16 %v7068
        %v7120 = vunpack.c.l.b16 %v7071
        %v7121 = vunpack.c.h.b16 %v7071
        %v7122 = vunpack.c.l.b16 %v7074
        %v7123 = vunpack.c.h.b16 %v7074
        %v7124 = vunpack.c.l.b16 %v7077
        %v7125 = vunpack.c.h.b16 %v7077
        %v7126 = vpack.c.b16 %v7094, %v7094
        %v7127 = vpack.c.b16 %v7095, %v7095
        %v7128 = vpack.c.b16 %v7096, %v7096
        %v7129 = vpack.c.b16 %v7097, %v7097
        %v7130 = vpack.c.b16 %v7098, %v7098
        %v7131 = vpack.c.b16 %v7099, %v7099
        %v7132 = vpack.c.b16 %v7100, %v7100
        %v7133 = vpack.c.b16 %v7101, %v7101
        %v7134 = vpack.c.b16 %v7102, %v7102
        %v7135 = vpack.c.b16 %v7103, %v7103
        %v7136 = vpack.c.b16 %v7104, %v7104
        %v7137 = vpack.c.b16 %v7105, %v7105
        %v7138 = vpack.c.b16 %v7106, %v7106
        %v7139 = vpack.c.b16 %v7107, %v7107
        %v7140 = vpack.c.b16 %v7108, %v7108
        %v7141 = vpack.c.b16 %v7109, %v7109
        %v7142 = vpack.c.b16 %v7110, %v7110
        %v7143 = vpack.c.b16 %v7111, %v7111
        %v7144 = vpack.c.b16 %v7112, %v7112
        %v7145 = vpack.c.b16 %v7113, %v7113
        %v7146 = vpack.c.b16 %v7114, %v7114
        %v7147 = vpack.c.b16 %v7115, %v7115
        %v7148 = vpack.c.b16 %v7116, %v7116
        %v7149 = vpack.c.b16 %v7117, %v7117
        %v7150 = vpack.c.b16 %v7118, %v7118
        %v7151 = vpack.c.b16 %v7119, %v7119
        %v7152 = vpack.c.b16 %v7120, %v7120
        %v7153 = vpack.c.b16 %v7121, %v7121
        %v7154 = vpack.c.b16 %v7122, %v7122
        %v7155 = vpack.c.b16 %v7123, %v7123
        %v7156 = vpack.c.b16 %v7124, %v7124
        %v7157 = vpack.c.b16 %v7125, %v7125
        %7190 = vst [vmem:[#allocation3 + $0x4] sm:$0xf] %v7126
        %7191 = vst [vmem:[#allocation3 + $0x18] sm:$0xf] %v7127
        %7192 = vst [vmem:[#allocation3 + $0x2c] sm:$0xf] %v7128
        %7193 = vst [vmem:[#allocation3 + $0x40] sm:$0xf] %v7129
        %7194 = vst [vmem:[#allocation3 + $0x54] sm:$0xf] %v7130
        %7195 = vst [vmem:[#allocation3 + $0x68] sm:$0xf] %v7131
        %7196 = vst [vmem:[#allocation3 + $0x7c] sm:$0xf] %v7132
        %7197 = vst [vmem:[#allocation3 + $0x90] sm:$0xf] %v7133
        %7198 = vst [vmem:[#allocation3 + $0xa4] sm:$0xf] %v7134
        %7199 = vst [vmem:[#allocation3 + $0xb8] sm:$0xf] %v7135
        %7200 = vst [vmem:[#allocation3 + $0xcc] sm:$0xf] %v7136
        %7201 = vst [vmem:[#allocation3 + $0xe0] sm:$0xf] %v7137
        %7202 = vst [vmem:[#allocation3 + $0xf4] sm:$0xf] %v7138
        %7203 = vst [vmem:[#allocation3 + $0x108] sm:$0xf] %v7139
        %7204 = vst [vmem:[#allocation3 + $0x11c] sm:$0xf] %v7140
        %7205 = vst [vmem:[#allocation3 + $0x130] sm:$0xf] %v7141
        %7206 = vst [vmem:[#allocation3 + $0x144] sm:$0xf] %v7142
        %7207 = vst [vmem:[#allocation3 + $0x158] sm:$0xf] %v7143
        %7208 = vst [vmem:[#allocation3 + $0x16c] sm:$0xf] %v7144
        %7209 = vst [vmem:[#allocation3 + $0x180] sm:$0xf] %v7145
        %7210 = vst [vmem:[#allocation3 + $0x194] sm:$0xf] %v7146
        %7211 = vst [vmem:[#allocation3 + $0x1a8] sm:$0xf] %v7147
        %7212 = vst [vmem:[#allocation3 + $0x1bc] sm:$0xf] %v7148
        %7213 = vst [vmem:[#allocation3 + $0x1d0] sm:$0xf] %v7149
        %7214 = vst [vmem:[#allocation3 + $0x1e4] sm:$0xf] %v7150
        %7215 = vst [vmem:[#allocation3 + $0x1f8] sm:$0xf] %v7151
        %7216 = vst [vmem:[#allocation3 + $0x20c] sm:$0xf] %v7152
        %7217 = vst [vmem:[#allocation3 + $0x220] sm:$0xf] %v7153
        %7218 = vst [vmem:[#allocation3 + $0x234] sm:$0xf] %v7154
        %7219 = vst [vmem:[#allocation3 + $0x248] sm:$0xf] %v7155
        %7220 = vst [vmem:[#allocation3 + $0x25c] sm:$0xf] %v7156
        %7221 = vst [vmem:[#allocation3 + $0x270] sm:$0xf] %v7157
        %7238 = vrot.lane.b32.xlu0 %v6582, 64
        %v7239 = vpop.permute.xlu0 %7238
        %7240 = vrot.lane.b32.xlu0 %v6583, 64
        %v7241 = vpop.permute.xlu0 %7240
        %7242 = vrot.lane.b32.xlu0 %v6584, 64
        %v7243 = vpop.permute.xlu0 %7242
        %7244 = vrot.lane.b32.xlu0 %v6585, 64
        %v7245 = vpop.permute.xlu0 %7244
        %7246 = vrot.lane.b32.xlu0 %v6586, 64
        %v7247 = vpop.permute.xlu0 %7246
        %7248 = vrot.lane.b32.xlu0 %v6587, 64
        %v7249 = vpop.permute.xlu0 %7248
        %7250 = vrot.lane.b32.xlu0 %v6588, 64
        %v7251 = vpop.permute.xlu0 %7250
        %7252 = vrot.lane.b32.xlu0 %v6589, 64
        %v7253 = vpop.permute.xlu0 %7252
        %7254 = vrot.lane.b32.xlu0 %v6590, 64
        %v7255 = vpop.permute.xlu0 %7254
        %7256 = vrot.lane.b32.xlu0 %v6591, 64
        %v7257 = vpop.permute.xlu0 %7256
        %7258 = vrot.lane.b32.xlu0 %v6592, 64
        %v7259 = vpop.permute.xlu0 %7258
        %7260 = vrot.lane.b32.xlu0 %v6593, 64
        %v7261 = vpop.permute.xlu0 %7260
        %7262 = vrot.lane.b32.xlu0 %v6594, 64
        %v7263 = vpop.permute.xlu0 %7262
        %7264 = vrot.lane.b32.xlu0 %v6595, 64
        %v7265 = vpop.permute.xlu0 %7264
        %7266 = vrot.lane.b32.xlu0 %v6596, 64
        %v7267 = vpop.permute.xlu0 %7266
        %7268 = vrot.lane.b32.xlu0 %v6597, 64
        %v7269 = vpop.permute.xlu0 %7268
        %v7272 = vsel %vm278, %v6534, %v7239
        %v7275 = vsel %vm278, %v6535, %v7241
        %v7278 = vsel %vm278, %v6536, %v7243
        %v7281 = vsel %vm278, %v6537, %v7245
        %v7284 = vsel %vm278, %v6538, %v7247
        %v7287 = vsel %vm278, %v6539, %v7249
        %v7290 = vsel %vm278, %v6540, %v7251
        %v7293 = vsel %vm278, %v6541, %v7253
        %v7296 = vsel %vm278, %v6542, %v7255
        %v7299 = vsel %vm278, %v6543, %v7257
        %v7302 = vsel %vm278, %v6544, %v7259
        %v7305 = vsel %vm278, %v6545, %v7261
        %v7308 = vsel %vm278, %v6546, %v7263
        %v7311 = vsel %vm278, %v6547, %v7265
        %v7314 = vsel %vm278, %v6548, %v7267
        %v7317 = vsel %vm278, %v6549, %v7269
        %v7334 = vunpack.c.l.b16 %v7272
        %v7335 = vunpack.c.h.b16 %v7272
        %v7336 = vunpack.c.l.b16 %v7275
        %v7337 = vunpack.c.h.b16 %v7275
        %v7338 = vunpack.c.l.b16 %v7278
        %v7339 = vunpack.c.h.b16 %v7278
        %v7340 = vunpack.c.l.b16 %v7281
        %v7341 = vunpack.c.h.b16 %v7281
        %v7342 = vunpack.c.l.b16 %v7284
        %v7343 = vunpack.c.h.b16 %v7284
        %v7344 = vunpack.c.l.b16 %v7287
        %v7345 = vunpack.c.h.b16 %v7287
        %v7346 = vunpack.c.l.b16 %v7290
        %v7347 = vunpack.c.h.b16 %v7290
        %v7348 = vunpack.c.l.b16 %v7293
        %v7349 = vunpack.c.h.b16 %v7293
        %v7350 = vunpack.c.l.b16 %v7296
        %v7351 = vunpack.c.h.b16 %v7296
        %v7352 = vunpack.c.l.b16 %v7299
        %v7353 = vunpack.c.h.b16 %v7299
        %v7354 = vunpack.c.l.b16 %v7302
        %v7355 = vunpack.c.h.b16 %v7302
        %v7356 = vunpack.c.l.b16 %v7305
        %v7357 = vunpack.c.h.b16 %v7305
        %v7358 = vunpack.c.l.b16 %v7308
        %v7359 = vunpack.c.h.b16 %v7308
        %v7360 = vunpack.c.l.b16 %v7311
        %v7361 = vunpack.c.h.b16 %v7311
        %v7362 = vunpack.c.l.b16 %v7314
        %v7363 = vunpack.c.h.b16 %v7314
        %v7364 = vunpack.c.l.b16 %v7317
        %v7365 = vunpack.c.h.b16 %v7317
        %v7366 = vpack.c.b16 %v7334, %v7334
        %v7367 = vpack.c.b16 %v7335, %v7335
        %v7368 = vpack.c.b16 %v7336, %v7336
        %v7369 = vpack.c.b16 %v7337, %v7337
        %v7370 = vpack.c.b16 %v7338, %v7338
        %v7371 = vpack.c.b16 %v7339, %v7339
        %v7372 = vpack.c.b16 %v7340, %v7340
        %v7373 = vpack.c.b16 %v7341, %v7341
        %v7374 = vpack.c.b16 %v7342, %v7342
        %v7375 = vpack.c.b16 %v7343, %v7343
        %v7376 = vpack.c.b16 %v7344, %v7344
        %v7377 = vpack.c.b16 %v7345, %v7345
        %v7378 = vpack.c.b16 %v7346, %v7346
        %v7379 = vpack.c.b16 %v7347, %v7347
        %v7380 = vpack.c.b16 %v7348, %v7348
        %v7381 = vpack.c.b16 %v7349, %v7349
        %v7382 = vpack.c.b16 %v7350, %v7350
        %v7383 = vpack.c.b16 %v7351, %v7351
        %v7384 = vpack.c.b16 %v7352, %v7352
        %v7385 = vpack.c.b16 %v7353, %v7353
        %v7386 = vpack.c.b16 %v7354, %v7354
        %v7387 = vpack.c.b16 %v7355, %v7355
        %v7388 = vpack.c.b16 %v7356, %v7356
        %v7389 = vpack.c.b16 %v7357, %v7357
        %v7390 = vpack.c.b16 %v7358, %v7358
        %v7391 = vpack.c.b16 %v7359, %v7359
        %v7392 = vpack.c.b16 %v7360, %v7360
        %v7393 = vpack.c.b16 %v7361, %v7361
        %v7394 = vpack.c.b16 %v7362, %v7362
        %v7395 = vpack.c.b16 %v7363, %v7363
        %v7396 = vpack.c.b16 %v7364, %v7364
        %v7397 = vpack.c.b16 %v7365, %v7365
        %7430 = vst [vmem:[#allocation3 + $0x8] sm:$0xf] %v7366
        %7431 = vst [vmem:[#allocation3 + $0x1c] sm:$0xf] %v7367
        %7432 = vst [vmem:[#allocation3 + $0x30] sm:$0xf] %v7368
        %7433 = vst [vmem:[#allocation3 + $0x44] sm:$0xf] %v7369
        %7434 = vst [vmem:[#allocation3 + $0x58] sm:$0xf] %v7370
        %7435 = vst [vmem:[#allocation3 + $0x6c] sm:$0xf] %v7371
        %7436 = vst [vmem:[#allocation3 + $0x80] sm:$0xf] %v7372
        %7437 = vst [vmem:[#allocation3 + $0x94] sm:$0xf] %v7373
        %7438 = vst [vmem:[#allocation3 + $0xa8] sm:$0xf] %v7374
        %7439 = vst [vmem:[#allocation3 + $0xbc] sm:$0xf] %v7375
        %7440 = vst [vmem:[#allocation3 + $0xd0] sm:$0xf] %v7376
        %7441 = vst [vmem:[#allocation3 + $0xe4] sm:$0xf] %v7377
        %7442 = vst [vmem:[#allocation3 + $0xf8] sm:$0xf] %v7378
        %7443 = vst [vmem:[#allocation3 + $0x10c] sm:$0xf] %v7379
        %7444 = vst [vmem:[#allocation3 + $0x120] sm:$0xf] %v7380
        %7445 = vst [vmem:[#allocation3 + $0x134] sm:$0xf] %v7381
        %7446 = vst [vmem:[#allocation3 + $0x148] sm:$0xf] %v7382
        %7447 = vst [vmem:[#allocation3 + $0x15c] sm:$0xf] %v7383
        %7448 = vst [vmem:[#allocation3 + $0x170] sm:$0xf] %v7384
        %7449 = vst [vmem:[#allocation3 + $0x184] sm:$0xf] %v7385
        %7450 = vst [vmem:[#allocation3 + $0x198] sm:$0xf] %v7386
        %7451 = vst [vmem:[#allocation3 + $0x1ac] sm:$0xf] %v7387
        %7452 = vst [vmem:[#allocation3 + $0x1c0] sm:$0xf] %v7388
        %7453 = vst [vmem:[#allocation3 + $0x1d4] sm:$0xf] %v7389
        %7454 = vst [vmem:[#allocation3 + $0x1e8] sm:$0xf] %v7390
        %7455 = vst [vmem:[#allocation3 + $0x1fc] sm:$0xf] %v7391
        %7456 = vst [vmem:[#allocation3 + $0x210] sm:$0xf] %v7392
        %7457 = vst [vmem:[#allocation3 + $0x224] sm:$0xf] %v7393
        %7458 = vst [vmem:[#allocation3 + $0x238] sm:$0xf] %v7394
        %7459 = vst [vmem:[#allocation3 + $0x24c] sm:$0xf] %v7395
        %7460 = vst [vmem:[#allocation3 + $0x260] sm:$0xf] %v7396
        %7461 = vst [vmem:[#allocation3 + $0x274] sm:$0xf] %v7397
        %7478 = vrot.lane.b32.xlu0 %v6678, 64
        %v7479 = vpop.permute.xlu0 %7478
        %7480 = vrot.lane.b32.xlu0 %v6679, 64
        %v7481 = vpop.permute.xlu0 %7480
        %7482 = vrot.lane.b32.xlu0 %v6680, 64
        %v7483 = vpop.permute.xlu0 %7482
        %7484 = vrot.lane.b32.xlu0 %v6681, 64
        %v7485 = vpop.permute.xlu0 %7484
        %7486 = vrot.lane.b32.xlu0 %v6682, 64
        %v7487 = vpop.permute.xlu0 %7486
        %7488 = vrot.lane.b32.xlu0 %v6683, 64
        %v7489 = vpop.permute.xlu0 %7488
        %7490 = vrot.lane.b32.xlu0 %v6684, 64
        %v7491 = vpop.permute.xlu0 %7490
        %7492 = vrot.lane.b32.xlu0 %v6685, 64
        %v7493 = vpop.permute.xlu0 %7492
        %7494 = vrot.lane.b32.xlu0 %v6686, 64
        %v7495 = vpop.permute.xlu0 %7494
        %7496 = vrot.lane.b32.xlu0 %v6687, 64
        %v7497 = vpop.permute.xlu0 %7496
        %7498 = vrot.lane.b32.xlu0 %v6688, 64
        %v7499 = vpop.permute.xlu0 %7498
        %7500 = vrot.lane.b32.xlu0 %v6689, 64
        %v7501 = vpop.permute.xlu0 %7500
        %7502 = vrot.lane.b32.xlu0 %v6690, 64
        %v7503 = vpop.permute.xlu0 %7502
        %7504 = vrot.lane.b32.xlu0 %v6691, 64
        %v7505 = vpop.permute.xlu0 %7504
        %7506 = vrot.lane.b32.xlu0 %v6692, 64
        %v7507 = vpop.permute.xlu0 %7506
        %7508 = vrot.lane.b32.xlu0 %v6693, 64
        %v7509 = vpop.permute.xlu0 %7508
        %v7512 = vsel %vm278, %v6630, %v7479
        %v7515 = vsel %vm278, %v6631, %v7481
        %v7518 = vsel %vm278, %v6632, %v7483
        %v7521 = vsel %vm278, %v6633, %v7485
        %v7524 = vsel %vm278, %v6634, %v7487
        %v7527 = vsel %vm278, %v6635, %v7489
        %v7530 = vsel %vm278, %v6636, %v7491
        %v7533 = vsel %vm278, %v6637, %v7493
        %v7536 = vsel %vm278, %v6638, %v7495
        %v7539 = vsel %vm278, %v6639, %v7497
        %v7542 = vsel %vm278, %v6640, %v7499
        %v7545 = vsel %vm278, %v6641, %v7501
        %v7548 = vsel %vm278, %v6642, %v7503
        %v7551 = vsel %vm278, %v6643, %v7505
        %v7554 = vsel %vm278, %v6644, %v7507
        %v7557 = vsel %vm278, %v6645, %v7509
        %v7574 = vunpack.c.l.b16 %v7512
        %v7575 = vunpack.c.h.b16 %v7512
        %v7576 = vunpack.c.l.b16 %v7515
        %v7577 = vunpack.c.h.b16 %v7515
        %v7578 = vunpack.c.l.b16 %v7518
        %v7579 = vunpack.c.h.b16 %v7518
        %v7580 = vunpack.c.l.b16 %v7521
        %v7581 = vunpack.c.h.b16 %v7521
        %v7582 = vunpack.c.l.b16 %v7524
        %v7583 = vunpack.c.h.b16 %v7524
        %v7584 = vunpack.c.l.b16 %v7527
        %v7585 = vunpack.c.h.b16 %v7527
        %v7586 = vunpack.c.l.b16 %v7530
        %v7587 = vunpack.c.h.b16 %v7530
        %v7588 = vunpack.c.l.b16 %v7533
        %v7589 = vunpack.c.h.b16 %v7533
        %v7590 = vunpack.c.l.b16 %v7536
        %v7591 = vunpack.c.h.b16 %v7536
        %v7592 = vunpack.c.l.b16 %v7539
        %v7593 = vunpack.c.h.b16 %v7539
        %v7594 = vunpack.c.l.b16 %v7542
        %v7595 = vunpack.c.h.b16 %v7542
        %v7596 = vunpack.c.l.b16 %v7545
        %v7597 = vunpack.c.h.b16 %v7545
        %v7598 = vunpack.c.l.b16 %v7548
        %v7599 = vunpack.c.h.b16 %v7548
        %v7600 = vunpack.c.l.b16 %v7551
        %v7601 = vunpack.c.h.b16 %v7551
        %v7602 = vunpack.c.l.b16 %v7554
        %v7603 = vunpack.c.h.b16 %v7554
        %v7604 = vunpack.c.l.b16 %v7557
        %v7605 = vunpack.c.h.b16 %v7557
        %v7606 = vpack.c.b16 %v7574, %v7574
        %v7607 = vpack.c.b16 %v7575, %v7575
        %v7608 = vpack.c.b16 %v7576, %v7576
        %v7609 = vpack.c.b16 %v7577, %v7577
        %v7610 = vpack.c.b16 %v7578, %v7578
        %v7611 = vpack.c.b16 %v7579, %v7579
        %v7612 = vpack.c.b16 %v7580, %v7580
        %v7613 = vpack.c.b16 %v7581, %v7581
        %v7614 = vpack.c.b16 %v7582, %v7582
        %v7615 = vpack.c.b16 %v7583, %v7583
        %v7616 = vpack.c.b16 %v7584, %v7584
        %v7617 = vpack.c.b16 %v7585, %v7585
        %v7618 = vpack.c.b16 %v7586, %v7586
        %v7619 = vpack.c.b16 %v7587, %v7587
        %v7620 = vpack.c.b16 %v7588, %v7588
        %v7621 = vpack.c.b16 %v7589, %v7589
        %v7622 = vpack.c.b16 %v7590, %v7590
        %v7623 = vpack.c.b16 %v7591, %v7591
        %v7624 = vpack.c.b16 %v7592, %v7592
        %v7625 = vpack.c.b16 %v7593, %v7593
        %v7626 = vpack.c.b16 %v7594, %v7594
        %v7627 = vpack.c.b16 %v7595, %v7595
        %v7628 = vpack.c.b16 %v7596, %v7596
        %v7629 = vpack.c.b16 %v7597, %v7597
        %v7630 = vpack.c.b16 %v7598, %v7598
        %v7631 = vpack.c.b16 %v7599, %v7599
        %v7632 = vpack.c.b16 %v7600, %v7600
        %v7633 = vpack.c.b16 %v7601, %v7601
        %v7634 = vpack.c.b16 %v7602, %v7602
        %v7635 = vpack.c.b16 %v7603, %v7603
        %v7636 = vpack.c.b16 %v7604, %v7604
        %v7637 = vpack.c.b16 %v7605, %v7605
        %7670 = vst [vmem:[#allocation3 + $0xc] sm:$0xf] %v7606
        %7671 = vst [vmem:[#allocation3 + $0x20] sm:$0xf] %v7607
        %7672 = vst [vmem:[#allocation3 + $0x34] sm:$0xf] %v7608
        %7673 = vst [vmem:[#allocation3 + $0x48] sm:$0xf] %v7609
        %7674 = vst [vmem:[#allocation3 + $0x5c] sm:$0xf] %v7610
        %7675 = vst [vmem:[#allocation3 + $0x70] sm:$0xf] %v7611
        %7676 = vst [vmem:[#allocation3 + $0x84] sm:$0xf] %v7612
        %7677 = vst [vmem:[#allocation3 + $0x98] sm:$0xf] %v7613
        %7678 = vst [vmem:[#allocation3 + $0xac] sm:$0xf] %v7614
        %7679 = vst [vmem:[#allocation3 + $0xc0] sm:$0xf] %v7615
        %7680 = vst [vmem:[#allocation3 + $0xd4] sm:$0xf] %v7616
        %7681 = vst [vmem:[#allocation3 + $0xe8] sm:$0xf] %v7617
        %7682 = vst [vmem:[#allocation3 + $0xfc] sm:$0xf] %v7618
        %7683 = vst [vmem:[#allocation3 + $0x110] sm:$0xf] %v7619
        %7684 = vst [vmem:[#allocation3 + $0x124] sm:$0xf] %v7620
        %7685 = vst [vmem:[#allocation3 + $0x138] sm:$0xf] %v7621
        %7686 = vst [vmem:[#allocation3 + $0x14c] sm:$0xf] %v7622
        %7687 = vst [vmem:[#allocation3 + $0x160] sm:$0xf] %v7623
        %7688 = vst [vmem:[#allocation3 + $0x174] sm:$0xf] %v7624
        %7689 = vst [vmem:[#allocation3 + $0x188] sm:$0xf] %v7625
        %7690 = vst [vmem:[#allocation3 + $0x19c] sm:$0xf] %v7626
        %7691 = vst [vmem:[#allocation3 + $0x1b0] sm:$0xf] %v7627
        %7692 = vst [vmem:[#allocation3 + $0x1c4] sm:$0xf] %v7628
        %7693 = vst [vmem:[#allocation3 + $0x1d8] sm:$0xf] %v7629
        %7694 = vst [vmem:[#allocation3 + $0x1ec] sm:$0xf] %v7630
        %7695 = vst [vmem:[#allocation3 + $0x200] sm:$0xf] %v7631
        %7696 = vst [vmem:[#allocation3 + $0x214] sm:$0xf] %v7632
        %7697 = vst [vmem:[#allocation3 + $0x228] sm:$0xf] %v7633
        %7698 = vst [vmem:[#allocation3 + $0x23c] sm:$0xf] %v7634
        %7699 = vst [vmem:[#allocation3 + $0x250] sm:$0xf] %v7635
        %7700 = vst [vmem:[#allocation3 + $0x264] sm:$0xf] %v7636
        %7701 = vst [vmem:[#allocation3 + $0x278] sm:$0xf] %v7637
        %v7703 = vsel %vm278, %v6726, 0
        %v7705 = vsel %vm278, %v6727, 0
        %v7707 = vsel %vm278, %v6728, 0
        %v7709 = vsel %vm278, %v6729, 0
        %v7711 = vsel %vm278, %v6730, 0
        %v7713 = vsel %vm278, %v6731, 0
        %v7715 = vsel %vm278, %v6732, 0
        %v7717 = vsel %vm278, %v6733, 0
        %v7719 = vsel %vm278, %v6734, 0
        %v7721 = vsel %vm278, %v6735, 0
        %v7723 = vsel %vm278, %v6736, 0
        %v7725 = vsel %vm278, %v6737, 0
        %v7727 = vsel %vm278, %v6738, 0
        %v7729 = vsel %vm278, %v6739, 0
        %v7731 = vsel %vm278, %v6740, 0
        %v7733 = vsel %vm278, %v6741, 0
        %v7750 = vunpack.c.l.b16 %v7703
        %v7751 = vunpack.c.h.b16 %v7703
        %v7752 = vunpack.c.l.b16 %v7705
        %v7753 = vunpack.c.h.b16 %v7705
        %v7754 = vunpack.c.l.b16 %v7707
        %v7755 = vunpack.c.h.b16 %v7707
        %v7756 = vunpack.c.l.b16 %v7709
        %v7757 = vunpack.c.h.b16 %v7709
        %v7758 = vunpack.c.l.b16 %v7711
        %v7759 = vunpack.c.h.b16 %v7711
        %v7760 = vunpack.c.l.b16 %v7713
        %v7761 = vunpack.c.h.b16 %v7713
        %v7762 = vunpack.c.l.b16 %v7715
        %v7763 = vunpack.c.h.b16 %v7715
        %v7764 = vunpack.c.l.b16 %v7717
        %v7765 = vunpack.c.h.b16 %v7717
        %v7766 = vunpack.c.l.b16 %v7719
        %v7767 = vunpack.c.h.b16 %v7719
        %v7768 = vunpack.c.l.b16 %v7721
        %v7769 = vunpack.c.h.b16 %v7721
        %v7770 = vunpack.c.l.b16 %v7723
        %v7771 = vunpack.c.h.b16 %v7723
        %v7772 = vunpack.c.l.b16 %v7725
        %v7773 = vunpack.c.h.b16 %v7725
        %v7774 = vunpack.c.l.b16 %v7727
        %v7775 = vunpack.c.h.b16 %v7727
        %v7776 = vunpack.c.l.b16 %v7729
        %v7777 = vunpack.c.h.b16 %v7729
        %v7778 = vunpack.c.l.b16 %v7731
        %v7779 = vunpack.c.h.b16 %v7731
        %v7780 = vunpack.c.l.b16 %v7733
        %v7781 = vunpack.c.h.b16 %v7733
        %v7782 = vpack.c.b16 %v7750, %v7750
        %v7783 = vpack.c.b16 %v7751, %v7751
        %v7784 = vpack.c.b16 %v7752, %v7752
        %v7785 = vpack.c.b16 %v7753, %v7753
        %v7786 = vpack.c.b16 %v7754, %v7754
        %v7787 = vpack.c.b16 %v7755, %v7755
        %v7788 = vpack.c.b16 %v7756, %v7756
        %v7789 = vpack.c.b16 %v7757, %v7757
        %v7790 = vpack.c.b16 %v7758, %v7758
        %v7791 = vpack.c.b16 %v7759, %v7759
        %v7792 = vpack.c.b16 %v7760, %v7760
        %v7793 = vpack.c.b16 %v7761, %v7761
        %v7794 = vpack.c.b16 %v7762, %v7762
        %v7795 = vpack.c.b16 %v7763, %v7763
        %v7796 = vpack.c.b16 %v7764, %v7764
        %v7797 = vpack.c.b16 %v7765, %v7765
        %v7798 = vpack.c.b16 %v7766, %v7766
        %v7799 = vpack.c.b16 %v7767, %v7767
        %v7800 = vpack.c.b16 %v7768, %v7768
        %v7801 = vpack.c.b16 %v7769, %v7769
        %v7802 = vpack.c.b16 %v7770, %v7770
        %v7803 = vpack.c.b16 %v7771, %v7771
        %v7804 = vpack.c.b16 %v7772, %v7772
        %v7805 = vpack.c.b16 %v7773, %v7773
        %v7806 = vpack.c.b16 %v7774, %v7774
        %v7807 = vpack.c.b16 %v7775, %v7775
        %v7808 = vpack.c.b16 %v7776, %v7776
        %v7809 = vpack.c.b16 %v7777, %v7777
        %v7810 = vpack.c.b16 %v7778, %v7778
        %v7811 = vpack.c.b16 %v7779, %v7779
        %v7812 = vpack.c.b16 %v7780, %v7780
        %v7813 = vpack.c.b16 %v7781, %v7781
        %7846 = vst [vmem:[#allocation3 + $0x10] sm:$0xf] %v7782
        %7847 = vst [vmem:[#allocation3 + $0x24] sm:$0xf] %v7783
        %7848 = vst [vmem:[#allocation3 + $0x38] sm:$0xf] %v7784
        %7849 = vst [vmem:[#allocation3 + $0x4c] sm:$0xf] %v7785
        %7850 = vst [vmem:[#allocation3 + $0x60] sm:$0xf] %v7786
        %7851 = vst [vmem:[#allocation3 + $0x74] sm:$0xf] %v7787
        %7852 = vst [vmem:[#allocation3 + $0x88] sm:$0xf] %v7788
        %7853 = vst [vmem:[#allocation3 + $0x9c] sm:$0xf] %v7789
        %7854 = vst [vmem:[#allocation3 + $0xb0] sm:$0xf] %v7790
        %7855 = vst [vmem:[#allocation3 + $0xc4] sm:$0xf] %v7791
        %7856 = vst [vmem:[#allocation3 + $0xd8] sm:$0xf] %v7792
        %7857 = vst [vmem:[#allocation3 + $0xec] sm:$0xf] %v7793
        %7858 = vst [vmem:[#allocation3 + $0x100] sm:$0xf] %v7794
        %7859 = vst [vmem:[#allocation3 + $0x114] sm:$0xf] %v7795
        %7860 = vst [vmem:[#allocation3 + $0x128] sm:$0xf] %v7796
        %7861 = vst [vmem:[#allocation3 + $0x13c] sm:$0xf] %v7797
        %7862 = vst [vmem:[#allocation3 + $0x150] sm:$0xf] %v7798
        %7863 = vst [vmem:[#allocation3 + $0x164] sm:$0xf] %v7799
        %7864 = vst [vmem:[#allocation3 + $0x178] sm:$0xf] %v7800
        %7865 = vst [vmem:[#allocation3 + $0x18c] sm:$0xf] %v7801
        %7866 = vst [vmem:[#allocation3 + $0x1a0] sm:$0xf] %v7802
        %7867 = vst [vmem:[#allocation3 + $0x1b4] sm:$0xf] %v7803
        %7868 = vst [vmem:[#allocation3 + $0x1c8] sm:$0xf] %v7804
        %7869 = vst [vmem:[#allocation3 + $0x1dc] sm:$0xf] %v7805
        %7870 = vst [vmem:[#allocation3 + $0x1f0] sm:$0xf] %v7806
        %7871 = vst [vmem:[#allocation3 + $0x204] sm:$0xf] %v7807
        %7872 = vst [vmem:[#allocation3 + $0x218] sm:$0xf] %v7808
        %7873 = vst [vmem:[#allocation3 + $0x22c] sm:$0xf] %v7809
        %7874 = vst [vmem:[#allocation3 + $0x240] sm:$0xf] %v7810
        %7875 = vst [vmem:[#allocation3 + $0x254] sm:$0xf] %v7811
        %7876 = vst [vmem:[#allocation3 + $0x268] sm:$0xf] %v7812
        %7877 = vst [vmem:[#allocation3 + $0x27c] sm:$0xf] %v7813
        %v7878 = vld [vmem:[#allocation3] sm:$0xff]
        %v7879 = vld [vmem:[#allocation3 + $0x8] sm:$0xff]
        %v7880 = vld [vmem:[#allocation3 + $0x10] sm:$0xf]
        %v7881 = vld [vmem:[#allocation3 + $0x14] sm:$0xff]
        %v7882 = vld [vmem:[#allocation3 + $0x1c] sm:$0xff]
        %v7883 = vld [vmem:[#allocation3 + $0x24] sm:$0xf]
        %v7884 = vld [vmem:[#allocation3 + $0x28] sm:$0xff]
        %v7885 = vld [vmem:[#allocation3 + $0x30] sm:$0xff]
        %v7886 = vld [vmem:[#allocation3 + $0x38] sm:$0xf]
        %v7887 = vld [vmem:[#allocation3 + $0x3c] sm:$0xff]
        %v7888 = vld [vmem:[#allocation3 + $0x44] sm:$0xff]
        %v7889 = vld [vmem:[#allocation3 + $0x4c] sm:$0xf]
        %v7890 = vld [vmem:[#allocation3 + $0x50] sm:$0xff]
        %v7891 = vld [vmem:[#allocation3 + $0x58] sm:$0xff]
        %v7892 = vld [vmem:[#allocation3 + $0x60] sm:$0xf]
        %v7893 = vld [vmem:[#allocation3 + $0x64] sm:$0xff]
        %v7894 = vld [vmem:[#allocation3 + $0x6c] sm:$0xff]
        %v7895 = vld [vmem:[#allocation3 + $0x74] sm:$0xf]
        %v7896 = vld [vmem:[#allocation3 + $0x78] sm:$0xff]
        %v7897 = vld [vmem:[#allocation3 + $0x80] sm:$0xff]
        %v7898 = vld [vmem:[#allocation3 + $0x88] sm:$0xf]
        %v7899 = vld [vmem:[#allocation3 + $0x8c] sm:$0xff]
        %v7900 = vld [vmem:[#allocation3 + $0x94] sm:$0xff]
        %v7901 = vld [vmem:[#allocation3 + $0x9c] sm:$0xf]
        %v7902 = vld [vmem:[#allocation3 + $0xa0] sm:$0xff]
        %v7903 = vld [vmem:[#allocation3 + $0xa8] sm:$0xff]
        %v7904 = vld [vmem:[#allocation3 + $0xb0] sm:$0xf]
        %v7905 = vld [vmem:[#allocation3 + $0xb4] sm:$0xff]
        %v7906 = vld [vmem:[#allocation3 + $0xbc] sm:$0xff]
        %v7907 = vld [vmem:[#allocation3 + $0xc4] sm:$0xf]
        %v7908 = vld [vmem:[#allocation3 + $0xc8] sm:$0xff]
        %v7909 = vld [vmem:[#allocation3 + $0xd0] sm:$0xff]
        %v7910 = vld [vmem:[#allocation3 + $0xd8] sm:$0xf]
        %v7911 = vld [vmem:[#allocation3 + $0xdc] sm:$0xff]
        %v7912 = vld [vmem:[#allocation3 + $0xe4] sm:$0xff]
        %v7913 = vld [vmem:[#allocation3 + $0xec] sm:$0xf]
        %v7914 = vld [vmem:[#allocation3 + $0xf0] sm:$0xff]
        %v7915 = vld [vmem:[#allocation3 + $0xf8] sm:$0xff]
        %v7916 = vld [vmem:[#allocation3 + $0x100] sm:$0xf]
        %v7917 = vld [vmem:[#allocation3 + $0x104] sm:$0xff]
        %v7918 = vld [vmem:[#allocation3 + $0x10c] sm:$0xff]
        %v7919 = vld [vmem:[#allocation3 + $0x114] sm:$0xf]
        %v7920 = vld [vmem:[#allocation3 + $0x118] sm:$0xff]
        %v7921 = vld [vmem:[#allocation3 + $0x120] sm:$0xff]
        %v7922 = vld [vmem:[#allocation3 + $0x128] sm:$0xf]
        %v7923 = vld [vmem:[#allocation3 + $0x12c] sm:$0xff]
        %v7924 = vld [vmem:[#allocation3 + $0x134] sm:$0xff]
        %v7925 = vld [vmem:[#allocation3 + $0x13c] sm:$0xf]
        %v7926 = vld [vmem:[#allocation3 + $0x140] sm:$0xff]
        %v7927 = vld [vmem:[#allocation3 + $0x148] sm:$0xff]
        %v7928 = vld [vmem:[#allocation3 + $0x150] sm:$0xf]
        %v7929 = vld [vmem:[#allocation3 + $0x154] sm:$0xff]
        %v7930 = vld [vmem:[#allocation3 + $0x15c] sm:$0xff]
        %v7931 = vld [vmem:[#allocation3 + $0x164] sm:$0xf]
        %v7932 = vld [vmem:[#allocation3 + $0x168] sm:$0xff]
        %v7933 = vld [vmem:[#allocation3 + $0x170] sm:$0xff]
        %v7934 = vld [vmem:[#allocation3 + $0x178] sm:$0xf]
        %v7935 = vld [vmem:[#allocation3 + $0x17c] sm:$0xff]
        %v7936 = vld [vmem:[#allocation3 + $0x184] sm:$0xff]
        %v7937 = vld [vmem:[#allocation3 + $0x18c] sm:$0xf]
        %v7938 = vld [vmem:[#allocation3 + $0x190] sm:$0xff]
        %v7939 = vld [vmem:[#allocation3 + $0x198] sm:$0xff]
        %v7940 = vld [vmem:[#allocation3 + $0x1a0] sm:$0xf]
        %v7941 = vld [vmem:[#allocation3 + $0x1a4] sm:$0xff]
        %v7942 = vld [vmem:[#allocation3 + $0x1ac] sm:$0xff]
        %v7943 = vld [vmem:[#allocation3 + $0x1b4] sm:$0xf]
        %v7944 = vld [vmem:[#allocation3 + $0x1b8] sm:$0xff]
        %v7945 = vld [vmem:[#allocation3 + $0x1c0] sm:$0xff]
        %v7946 = vld [vmem:[#allocation3 + $0x1c8] sm:$0xf]
        %v7947 = vld [vmem:[#allocation3 + $0x1cc] sm:$0xff]
        %v7948 = vld [vmem:[#allocation3 + $0x1d4] sm:$0xff]
        %v7949 = vld [vmem:[#allocation3 + $0x1dc] sm:$0xf]
        %v7950 = vld [vmem:[#allocation3 + $0x1e0] sm:$0xff]
        %v7951 = vld [vmem:[#allocation3 + $0x1e8] sm:$0xff]
        %v7952 = vld [vmem:[#allocation3 + $0x1f0] sm:$0xf]
        %v7953 = vld [vmem:[#allocation3 + $0x1f4] sm:$0xff]
        %v7954 = vld [vmem:[#allocation3 + $0x1fc] sm:$0xff]
        %v7955 = vld [vmem:[#allocation3 + $0x204] sm:$0xf]
        %v7956 = vld [vmem:[#allocation3 + $0x208] sm:$0xff]
        %v7957 = vld [vmem:[#allocation3 + $0x210] sm:$0xff]
        %v7958 = vld [vmem:[#allocation3 + $0x218] sm:$0xf]
        %v7959 = vld [vmem:[#allocation3 + $0x21c] sm:$0xff]
        %v7960 = vld [vmem:[#allocation3 + $0x224] sm:$0xff]
        %v7961 = vld [vmem:[#allocation3 + $0x22c] sm:$0xf]
        %v7962 = vld [vmem:[#allocation3 + $0x230] sm:$0xff]
        %v7963 = vld [vmem:[#allocation3 + $0x238] sm:$0xff]
        %v7964 = vld [vmem:[#allocation3 + $0x240] sm:$0xf]
        %v7965 = vld [vmem:[#allocation3 + $0x244] sm:$0xff]
        %v7966 = vld [vmem:[#allocation3 + $0x24c] sm:$0xff]
        %v7967 = vld [vmem:[#allocation3 + $0x254] sm:$0xf]
        %v7968 = vld [vmem:[#allocation3 + $0x258] sm:$0xff]
        %v7969 = vld [vmem:[#allocation3 + $0x260] sm:$0xff]
        %v7970 = vld [vmem:[#allocation3 + $0x268] sm:$0xf]
        %v7971 = vld [vmem:[#allocation3 + $0x26c] sm:$0xff]
        %v7972 = vld [vmem:[#allocation3 + $0x274] sm:$0xff]
        %v7973 = vld [vmem:[#allocation3 + $0x27c] sm:$0xf]
        %v7974 = vld [vmem:[%s5] sm:$0xf]
        %v7975 = vld [vmem:[%s5 + $0x4] sm:$0xf]
        %v7976 = vld [vmem:[%s5 + $0x8] sm:$0xf]
        %v7977 = vld [vmem:[%s5 + $0xc] sm:$0xf]
        %v7978 = vld [vmem:[%s5 + $0x10] sm:$0xf]
        %v7979 = vld [vmem:[%s5 + $0x14] sm:$0xf]
        %v7980 = vld [vmem:[%s5 + $0x18] sm:$0xf]
        %v7981 = vld [vmem:[%s5 + $0x1c] sm:$0xf]
        %v7982 = vld [vmem:[%s5 + $0x20] sm:$0xf]
        %v7983 = vld [vmem:[%s5 + $0x24] sm:$0xf]
        %v7984 = vld [vmem:[%s5 + $0x28] sm:$0xf]
        %v7985 = vld [vmem:[%s5 + $0x2c] sm:$0xf]
        %v7986 = vld [vmem:[%s5 + $0x30] sm:$0xf]
        %v7987 = vld [vmem:[%s5 + $0x34] sm:$0xf]
        %v7988 = vld [vmem:[%s5 + $0x38] sm:$0xf]
        %v7989 = vld [vmem:[%s5 + $0x3c] sm:$0xf]
        %v7990 = vld [vmem:[%s5 + $0x40] sm:$0xf]
        %v7991 = vld [vmem:[%s5 + $0x44] sm:$0xf]
        %v7992 = vld [vmem:[%s5 + $0x48] sm:$0xf]
        %v7993 = vld [vmem:[%s5 + $0x4c] sm:$0xf]
        %v7994 = vld [vmem:[%s5 + $0x50] sm:$0xf]
        %v7995 = vld [vmem:[%s5 + $0x54] sm:$0xf]
        %v7996 = vld [vmem:[%s5 + $0x58] sm:$0xf]
        %v7997 = vld [vmem:[%s5 + $0x5c] sm:$0xf]
        %v7998 = vld [vmem:[%s5 + $0x60] sm:$0xf]
        %v7999 = vld [vmem:[%s5 + $0x64] sm:$0xf]
        %v8000 = vld [vmem:[%s5 + $0x68] sm:$0xf]
        %v8001 = vld [vmem:[%s5 + $0x6c] sm:$0xf]
        %v8002 = vld [vmem:[%s5 + $0x70] sm:$0xf]
        %v8003 = vld [vmem:[%s5 + $0x74] sm:$0xf]
        %v8004 = vld [vmem:[%s5 + $0x78] sm:$0xf]
        %v8005 = vld [vmem:[%s5 + $0x7c] sm:$0xf]
        %v8006 = vld [vmem:[%s5 + $0x80] sm:$0xf]
        %v8007 = vld [vmem:[%s5 + $0x84] sm:$0xf]
        %v8008 = vld [vmem:[%s5 + $0x88] sm:$0xf]
        %v8009 = vld [vmem:[%s5 + $0x8c] sm:$0xf]
        %v8010 = vld [vmem:[%s5 + $0x90] sm:$0xf]
        %v8011 = vld [vmem:[%s5 + $0x94] sm:$0xf]
        %v8012 = vld [vmem:[%s5 + $0x98] sm:$0xf]
        %v8013 = vld [vmem:[%s5 + $0x9c] sm:$0xf]
        %v8014 = vld [vmem:[%s5 + $0xa0] sm:$0xf]
        %v8015 = vld [vmem:[%s5 + $0xa4] sm:$0xf]
        %v8016 = vld [vmem:[%s5 + $0xa8] sm:$0xf]
        %v8017 = vld [vmem:[%s5 + $0xac] sm:$0xf]
        %v8018 = vld [vmem:[%s5 + $0xb0] sm:$0xf]
        %v8019 = vld [vmem:[%s5 + $0xb4] sm:$0xf]
        %v8020 = vld [vmem:[%s5 + $0xb8] sm:$0xf]
        %v8021 = vld [vmem:[%s5 + $0xbc] sm:$0xf]
        %v8022 = vld [vmem:[%s5 + $0xc0] sm:$0xf]
        %v8023 = vld [vmem:[%s5 + $0xc4] sm:$0xf]
        %v8024 = vld [vmem:[%s5 + $0xc8] sm:$0xf]
        %v8025 = vld [vmem:[%s5 + $0xcc] sm:$0xf]
        %v8026 = vld [vmem:[%s5 + $0xd0] sm:$0xf]
        %v8027 = vld [vmem:[%s5 + $0xd4] sm:$0xf]
        %v8028 = vld [vmem:[%s5 + $0xd8] sm:$0xf]
        %v8029 = vld [vmem:[%s5 + $0xdc] sm:$0xf]
        %v8030 = vld [vmem:[%s5 + $0xe0] sm:$0xf]
        %v8031 = vld [vmem:[%s5 + $0xe4] sm:$0xf]
        %v8032 = vld [vmem:[%s5 + $0xe8] sm:$0xf]
        %v8033 = vld [vmem:[%s5 + $0xec] sm:$0xf]
        %v8034 = vld [vmem:[%s5 + $0xf0] sm:$0xf]
        %v8035 = vld [vmem:[%s5 + $0xf4] sm:$0xf]
        %v8036 = vld [vmem:[%s5 + $0xf8] sm:$0xf]
        %v8037 = vld [vmem:[%s5 + $0xfc] sm:$0xf]
        %v8038 = vld [vmem:[%s5 + $0x100] sm:$0xf]
        %v8039 = vld [vmem:[%s5 + $0x104] sm:$0xf]
        %v8040 = vld [vmem:[%s5 + $0x108] sm:$0xf]
        %v8041 = vld [vmem:[%s5 + $0x10c] sm:$0xf]
        %v8042 = vld [vmem:[%s5 + $0x110] sm:$0xf]
        %v8043 = vld [vmem:[%s5 + $0x114] sm:$0xf]
        %v8044 = vld [vmem:[%s5 + $0x118] sm:$0xf]
        %v8045 = vld [vmem:[%s5 + $0x11c] sm:$0xf]
        %v8046 = vld [vmem:[%s5 + $0x120] sm:$0xf]
        %v8047 = vld [vmem:[%s5 + $0x124] sm:$0xf]
        %v8048 = vld [vmem:[%s5 + $0x128] sm:$0xf]
        %v8049 = vld [vmem:[%s5 + $0x12c] sm:$0xf]
        %v8050 = vld [vmem:[%s5 + $0x130] sm:$0xf]
        %v8051 = vld [vmem:[%s5 + $0x134] sm:$0xf]
        %v8052 = vld [vmem:[%s5 + $0x138] sm:$0xf]
        %v8053 = vld [vmem:[%s5 + $0x13c] sm:$0xf]
        %v8054 = vld [vmem:[%s6] sm:$0x1]
        %v8056 = vlaneseq
        %v8057 = vshrl.u32 %v8056, 7
        %v8058 = vsub.s32 0, %v8057
        %v8059 = vrot.slane %v8054, %v8058
        %v8157 = vunpack.c.l.b16 %v7878
        %v8158 = vunpack.c.h.b16 %v7878
        %v8159 = vunpack.c.l.b16 %v7879
        %v8160 = vunpack.c.h.b16 %v7879
        %v8161 = vunpack.c.l.b16 %v7880
        %v8162 = vunpack.c.l.b16 %v7881
        %v8163 = vunpack.c.h.b16 %v7881
        %v8164 = vunpack.c.l.b16 %v7882
        %v8165 = vunpack.c.h.b16 %v7882
        %v8166 = vunpack.c.l.b16 %v7883
        %v8167 = vunpack.c.l.b16 %v7884
        %v8168 = vunpack.c.h.b16 %v7884
        %v8169 = vunpack.c.l.b16 %v7885
        %v8170 = vunpack.c.h.b16 %v7885
        %v8171 = vunpack.c.l.b16 %v7886
        %v8172 = vunpack.c.l.b16 %v7887
        %v8173 = vunpack.c.h.b16 %v7887
        %v8174 = vunpack.c.l.b16 %v7888
        %v8175 = vunpack.c.h.b16 %v7888
        %v8176 = vunpack.c.l.b16 %v7889
        %v8177 = vunpack.c.l.b16 %v7890
        %v8178 = vunpack.c.h.b16 %v7890
        %v8179 = vunpack.c.l.b16 %v7891
        %v8180 = vunpack.c.h.b16 %v7891
        %v8181 = vunpack.c.l.b16 %v7892
        %v8182 = vunpack.c.l.b16 %v7893
        %v8183 = vunpack.c.h.b16 %v7893
        %v8184 = vunpack.c.l.b16 %v7894
        %v8185 = vunpack.c.h.b16 %v7894
        %v8186 = vunpack.c.l.b16 %v7895
        %v8187 = vunpack.c.l.b16 %v7896
        %v8188 = vunpack.c.h.b16 %v7896
        %v8189 = vunpack.c.l.b16 %v7897
        %v8190 = vunpack.c.h.b16 %v7897
        %v8191 = vunpack.c.l.b16 %v7898
        %v8192 = vunpack.c.l.b16 %v7899
        %v8193 = vunpack.c.h.b16 %v7899
        %v8194 = vunpack.c.l.b16 %v7900
        %v8195 = vunpack.c.h.b16 %v7900
        %v8196 = vunpack.c.l.b16 %v7901
        %v8197 = vunpack.c.l.b16 %v7902
        %v8198 = vunpack.c.h.b16 %v7902
        %v8199 = vunpack.c.l.b16 %v7903
        %v8200 = vunpack.c.h.b16 %v7903
        %v8201 = vunpack.c.l.b16 %v7904
        %v8202 = vunpack.c.l.b16 %v7905
        %v8203 = vunpack.c.h.b16 %v7905
        %v8204 = vunpack.c.l.b16 %v7906
        %v8205 = vunpack.c.h.b16 %v7906
        %v8206 = vunpack.c.l.b16 %v7907
        %v8207 = vunpack.c.l.b16 %v7908
        %v8208 = vunpack.c.h.b16 %v7908
        %v8209 = vunpack.c.l.b16 %v7909
        %v8210 = vunpack.c.h.b16 %v7909
        %v8211 = vunpack.c.l.b16 %v7910
        %v8212 = vunpack.c.l.b16 %v7911
        %v8213 = vunpack.c.h.b16 %v7911
        %v8214 = vunpack.c.l.b16 %v7912
        %v8215 = vunpack.c.h.b16 %v7912
        %v8216 = vunpack.c.l.b16 %v7913
        %v8217 = vunpack.c.l.b16 %v7914
        %v8218 = vunpack.c.h.b16 %v7914
        %v8219 = vunpack.c.l.b16 %v7915
        %v8220 = vunpack.c.h.b16 %v7915
        %v8221 = vunpack.c.l.b16 %v7916
        %v8222 = vunpack.c.l.b16 %v7917
        %v8223 = vunpack.c.h.b16 %v7917
        %v8224 = vunpack.c.l.b16 %v7918
        %v8225 = vunpack.c.h.b16 %v7918
        %v8226 = vunpack.c.l.b16 %v7919
        %v8227 = vunpack.c.l.b16 %v7920
        %v8228 = vunpack.c.h.b16 %v7920
        %v8229 = vunpack.c.l.b16 %v7921
        %v8230 = vunpack.c.h.b16 %v7921
        %v8231 = vunpack.c.l.b16 %v7922
        %v8232 = vunpack.c.l.b16 %v7923
        %v8233 = vunpack.c.h.b16 %v7923
        %v8234 = vunpack.c.l.b16 %v7924
        %v8235 = vunpack.c.h.b16 %v7924
        %v8236 = vunpack.c.l.b16 %v7925
        %v8237 = vunpack.c.l.b16 %v7926
        %v8238 = vunpack.c.h.b16 %v7926
        %v8239 = vunpack.c.l.b16 %v7927
        %v8240 = vunpack.c.h.b16 %v7927
        %v8241 = vunpack.c.l.b16 %v7928
        %v8242 = vunpack.c.l.b16 %v7929
        %v8243 = vunpack.c.h.b16 %v7929
        %v8244 = vunpack.c.l.b16 %v7930
        %v8245 = vunpack.c.h.b16 %v7930
        %v8246 = vunpack.c.l.b16 %v7931
        %v8247 = vunpack.c.l.b16 %v7932
        %v8248 = vunpack.c.h.b16 %v7932
        %v8249 = vunpack.c.l.b16 %v7933
        %v8250 = vunpack.c.h.b16 %v7933
        %v8251 = vunpack.c.l.b16 %v7934
        %v8252 = vunpack.c.l.b16 %v7935
        %v8253 = vunpack.c.h.b16 %v7935
        %v8254 = vunpack.c.l.b16 %v7936
        %v8255 = vunpack.c.h.b16 %v7936
        %v8256 = vunpack.c.l.b16 %v7937
        %v8257 = vunpack.c.l.b16 %v7938
        %v8258 = vunpack.c.h.b16 %v7938
        %v8259 = vunpack.c.l.b16 %v7939
        %v8260 = vunpack.c.h.b16 %v7939
        %v8261 = vunpack.c.l.b16 %v7940
        %v8262 = vunpack.c.l.b16 %v7941
        %v8263 = vunpack.c.h.b16 %v7941
        %v8264 = vunpack.c.l.b16 %v7942
        %v8265 = vunpack.c.h.b16 %v7942
        %v8266 = vunpack.c.l.b16 %v7943
        %v8267 = vunpack.c.l.b16 %v7944
        %v8268 = vunpack.c.h.b16 %v7944
        %v8269 = vunpack.c.l.b16 %v7945
        %v8270 = vunpack.c.h.b16 %v7945
        %v8271 = vunpack.c.l.b16 %v7946
        %v8272 = vunpack.c.l.b16 %v7947
        %v8273 = vunpack.c.h.b16 %v7947
        %v8274 = vunpack.c.l.b16 %v7948
        %v8275 = vunpack.c.h.b16 %v7948
        %v8276 = vunpack.c.l.b16 %v7949
        %v8277 = vunpack.c.l.b16 %v7950
        %v8278 = vunpack.c.h.b16 %v7950
        %v8279 = vunpack.c.l.b16 %v7951
        %v8280 = vunpack.c.h.b16 %v7951
        %v8281 = vunpack.c.l.b16 %v7952
        %v8282 = vunpack.c.l.b16 %v7953
        %v8283 = vunpack.c.h.b16 %v7953
        %v8284 = vunpack.c.l.b16 %v7954
        %v8285 = vunpack.c.h.b16 %v7954
        %v8286 = vunpack.c.l.b16 %v7955
        %v8287 = vunpack.c.l.b16 %v7956
        %v8288 = vunpack.c.h.b16 %v7956
        %v8289 = vunpack.c.l.b16 %v7957
        %v8290 = vunpack.c.h.b16 %v7957
        %v8291 = vunpack.c.l.b16 %v7958
        %v8292 = vunpack.c.l.b16 %v7959
        %v8293 = vunpack.c.h.b16 %v7959
        %v8294 = vunpack.c.l.b16 %v7960
        %v8295 = vunpack.c.h.b16 %v7960
        %v8296 = vunpack.c.l.b16 %v7961
        %v8297 = vunpack.c.l.b16 %v7962
        %v8298 = vunpack.c.h.b16 %v7962
        %v8299 = vunpack.c.l.b16 %v7963
        %v8300 = vunpack.c.h.b16 %v7963
        %v8301 = vunpack.c.l.b16 %v7964
        %v8302 = vunpack.c.l.b16 %v7965
        %v8303 = vunpack.c.h.b16 %v7965
        %v8304 = vunpack.c.l.b16 %v7966
        %v8305 = vunpack.c.h.b16 %v7966
        %v8306 = vunpack.c.l.b16 %v7967
        %v8307 = vunpack.c.l.b16 %v7968
        %v8308 = vunpack.c.h.b16 %v7968
        %v8309 = vunpack.c.l.b16 %v7969
        %v8310 = vunpack.c.h.b16 %v7969
        %v8311 = vunpack.c.l.b16 %v7970
        %v8312 = vunpack.c.l.b16 %v7971
        %v8313 = vunpack.c.h.b16 %v7971
        %v8314 = vunpack.c.l.b16 %v7972
        %v8315 = vunpack.c.h.b16 %v7972
        %v8316 = vunpack.c.l.b16 %v7973
        %v8317 = vpack.c.b16 %v8162, %v8157
        %v8318 = vpack.c.b16 %v8163, %v8158
        %v8319 = vpack.c.b16 %v8164, %v8159
        %v8320 = vpack.c.b16 %v8165, %v8160
        %v8321 = vpack.c.b16 %v8166, %v8161
        %v8322 = vpack.c.b16 %v8172, %v8167
        %v8323 = vpack.c.b16 %v8173, %v8168
        %v8324 = vpack.c.b16 %v8174, %v8169
        %v8325 = vpack.c.b16 %v8175, %v8170
        %v8326 = vpack.c.b16 %v8176, %v8171
        %v8327 = vpack.c.b16 %v8182, %v8177
        %v8328 = vpack.c.b16 %v8183, %v8178
        %v8329 = vpack.c.b16 %v8184, %v8179
        %v8330 = vpack.c.b16 %v8185, %v8180
        %v8331 = vpack.c.b16 %v8186, %v8181
        %v8332 = vpack.c.b16 %v8192, %v8187
        %v8333 = vpack.c.b16 %v8193, %v8188
        %v8334 = vpack.c.b16 %v8194, %v8189
        %v8335 = vpack.c.b16 %v8195, %v8190
        %v8336 = vpack.c.b16 %v8196, %v8191
        %v8337 = vpack.c.b16 %v8202, %v8197
        %v8338 = vpack.c.b16 %v8203, %v8198
        %v8339 = vpack.c.b16 %v8204, %v8199
        %v8340 = vpack.c.b16 %v8205, %v8200
        %v8341 = vpack.c.b16 %v8206, %v8201
        %v8342 = vpack.c.b16 %v8212, %v8207
        %v8343 = vpack.c.b16 %v8213, %v8208
        %v8344 = vpack.c.b16 %v8214, %v8209
        %v8345 = vpack.c.b16 %v8215, %v8210
        %v8346 = vpack.c.b16 %v8216, %v8211
        %v8347 = vpack.c.b16 %v8222, %v8217
        %v8348 = vpack.c.b16 %v8223, %v8218
        %v8349 = vpack.c.b16 %v8224, %v8219
        %v8350 = vpack.c.b16 %v8225, %v8220
        %v8351 = vpack.c.b16 %v8226, %v8221
        %v8352 = vpack.c.b16 %v8232, %v8227
        %v8353 = vpack.c.b16 %v8233, %v8228
        %v8354 = vpack.c.b16 %v8234, %v8229
        %v8355 = vpack.c.b16 %v8235, %v8230
        %v8356 = vpack.c.b16 %v8236, %v8231
        %v8357 = vpack.c.b16 %v8242, %v8237
        %v8358 = vpack.c.b16 %v8243, %v8238
        %v8359 = vpack.c.b16 %v8244, %v8239
        %v8360 = vpack.c.b16 %v8245, %v8240
        %v8361 = vpack.c.b16 %v8246, %v8241
        %v8362 = vpack.c.b16 %v8252, %v8247
        %v8363 = vpack.c.b16 %v8253, %v8248
        %v8364 = vpack.c.b16 %v8254, %v8249
        %v8365 = vpack.c.b16 %v8255, %v8250
        %v8366 = vpack.c.b16 %v8256, %v8251
        %v8367 = vpack.c.b16 %v8262, %v8257
        %v8368 = vpack.c.b16 %v8263, %v8258
        %v8369 = vpack.c.b16 %v8264, %v8259
        %v8370 = vpack.c.b16 %v8265, %v8260
        %v8371 = vpack.c.b16 %v8266, %v8261
        %v8372 = vpack.c.b16 %v8272, %v8267
        %v8373 = vpack.c.b16 %v8273, %v8268
        %v8374 = vpack.c.b16 %v8274, %v8269
        %v8375 = vpack.c.b16 %v8275, %v8270
        %v8376 = vpack.c.b16 %v8276, %v8271
        %v8377 = vpack.c.b16 %v8282, %v8277
        %v8378 = vpack.c.b16 %v8283, %v8278
        %v8379 = vpack.c.b16 %v8284, %v8279
        %v8380 = vpack.c.b16 %v8285, %v8280
        %v8381 = vpack.c.b16 %v8286, %v8281
        %v8382 = vpack.c.b16 %v8292, %v8287
        %v8383 = vpack.c.b16 %v8293, %v8288
        %v8384 = vpack.c.b16 %v8294, %v8289
        %v8385 = vpack.c.b16 %v8295, %v8290
        %v8386 = vpack.c.b16 %v8296, %v8291
        %v8387 = vpack.c.b16 %v8302, %v8297
        %v8388 = vpack.c.b16 %v8303, %v8298
        %v8389 = vpack.c.b16 %v8304, %v8299
        %v8390 = vpack.c.b16 %v8305, %v8300
        %v8391 = vpack.c.b16 %v8306, %v8301
        %v8392 = vpack.c.b16 %v8312, %v8307
        %v8393 = vpack.c.b16 %v8313, %v8308
        %v8394 = vpack.c.b16 %v8314, %v8309
        %v8395 = vpack.c.b16 %v8315, %v8310
        %v8396 = vpack.c.b16 %v8316, %v8311
        %v8557 = vunpack.c.l.b16 %v7974
        %v8558 = vunpack.c.l.b16 %v7975
        %v8559 = vunpack.c.l.b16 %v7976
        %v8560 = vunpack.c.l.b16 %v7977
        %v8561 = vunpack.c.l.b16 %v7978
        %v8562 = vunpack.c.l.b16 %v7979
        %v8563 = vunpack.c.l.b16 %v7980
        %v8564 = vunpack.c.l.b16 %v7981
        %v8565 = vunpack.c.l.b16 %v7982
        %v8566 = vunpack.c.l.b16 %v7983
        %v8567 = vunpack.c.l.b16 %v7984
        %v8568 = vunpack.c.l.b16 %v7985
        %v8569 = vunpack.c.l.b16 %v7986
        %v8570 = vunpack.c.l.b16 %v7987
        %v8571 = vunpack.c.l.b16 %v7988
        %v8572 = vunpack.c.l.b16 %v7989
        %v8573 = vunpack.c.l.b16 %v7990
        %v8574 = vunpack.c.l.b16 %v7991
        %v8575 = vunpack.c.l.b16 %v7992
        %v8576 = vunpack.c.l.b16 %v7993
        %v8577 = vunpack.c.l.b16 %v7994
        %v8578 = vunpack.c.l.b16 %v7995
        %v8579 = vunpack.c.l.b16 %v7996
        %v8580 = vunpack.c.l.b16 %v7997
        %v8581 = vunpack.c.l.b16 %v7998
        %v8582 = vunpack.c.l.b16 %v7999
        %v8583 = vunpack.c.l.b16 %v8000
        %v8584 = vunpack.c.l.b16 %v8001
        %v8585 = vunpack.c.l.b16 %v8002
        %v8586 = vunpack.c.l.b16 %v8003
        %v8587 = vunpack.c.l.b16 %v8004
        %v8588 = vunpack.c.l.b16 %v8005
        %v8589 = vunpack.c.l.b16 %v8006
        %v8590 = vunpack.c.l.b16 %v8007
        %v8591 = vunpack.c.l.b16 %v8008
        %v8592 = vunpack.c.l.b16 %v8009
        %v8593 = vunpack.c.l.b16 %v8010
        %v8594 = vunpack.c.l.b16 %v8011
        %v8595 = vunpack.c.l.b16 %v8012
        %v8596 = vunpack.c.l.b16 %v8013
        %v8597 = vunpack.c.l.b16 %v8014
        %v8598 = vunpack.c.l.b16 %v8015
        %v8599 = vunpack.c.l.b16 %v8016
        %v8600 = vunpack.c.l.b16 %v8017
        %v8601 = vunpack.c.l.b16 %v8018
        %v8602 = vunpack.c.l.b16 %v8019
        %v8603 = vunpack.c.l.b16 %v8020
        %v8604 = vunpack.c.l.b16 %v8021
        %v8605 = vunpack.c.l.b16 %v8022
        %v8606 = vunpack.c.l.b16 %v8023
        %v8607 = vunpack.c.l.b16 %v8024
        %v8608 = vunpack.c.l.b16 %v8025
        %v8609 = vunpack.c.l.b16 %v8026
        %v8610 = vunpack.c.l.b16 %v8027
        %v8611 = vunpack.c.l.b16 %v8028
        %v8612 = vunpack.c.l.b16 %v8029
        %v8613 = vunpack.c.l.b16 %v8030
        %v8614 = vunpack.c.l.b16 %v8031
        %v8615 = vunpack.c.l.b16 %v8032
        %v8616 = vunpack.c.l.b16 %v8033
        %v8617 = vunpack.c.l.b16 %v8034
        %v8618 = vunpack.c.l.b16 %v8035
        %v8619 = vunpack.c.l.b16 %v8036
        %v8620 = vunpack.c.l.b16 %v8037
        %v8621 = vunpack.c.l.b16 %v8038
        %v8622 = vunpack.c.l.b16 %v8039
        %v8623 = vunpack.c.l.b16 %v8040
        %v8624 = vunpack.c.l.b16 %v8041
        %v8625 = vunpack.c.l.b16 %v8042
        %v8626 = vunpack.c.l.b16 %v8043
        %v8627 = vunpack.c.l.b16 %v8044
        %v8628 = vunpack.c.l.b16 %v8045
        %v8629 = vunpack.c.l.b16 %v8046
        %v8630 = vunpack.c.l.b16 %v8047
        %v8631 = vunpack.c.l.b16 %v8048
        %v8632 = vunpack.c.l.b16 %v8049
        %v8633 = vunpack.c.l.b16 %v8050
        %v8634 = vunpack.c.l.b16 %v8051
        %v8635 = vunpack.c.l.b16 %v8052
        %v8636 = vunpack.c.l.b16 %v8053
        %v8637 = vpack.c.b16 %v8558, %v8557
        %v8638 = vpack.c.b16 %v8560, %v8559
        %v8639 = vpack.c.b16 %v8562, %v8561
        %v8640 = vpack.c.b16 %v8564, %v8563
        %v8641 = vpack.c.b16 %v8566, %v8565
        %v8642 = vpack.c.b16 %v8568, %v8567
        %v8643 = vpack.c.b16 %v8570, %v8569
        %v8644 = vpack.c.b16 %v8572, %v8571
        %v8645 = vpack.c.b16 %v8574, %v8573
        %v8646 = vpack.c.b16 %v8576, %v8575
        %v8647 = vpack.c.b16 %v8578, %v8577
        %v8648 = vpack.c.b16 %v8580, %v8579
        %v8649 = vpack.c.b16 %v8582, %v8581
        %v8650 = vpack.c.b16 %v8584, %v8583
        %v8651 = vpack.c.b16 %v8586, %v8585
        %v8652 = vpack.c.b16 %v8588, %v8587
        %v8653 = vpack.c.b16 %v8590, %v8589
        %v8654 = vpack.c.b16 %v8592, %v8591
        %v8655 = vpack.c.b16 %v8594, %v8593
        %v8656 = vpack.c.b16 %v8596, %v8595
        %v8657 = vpack.c.b16 %v8598, %v8597
        %v8658 = vpack.c.b16 %v8600, %v8599
        %v8659 = vpack.c.b16 %v8602, %v8601
        %v8660 = vpack.c.b16 %v8604, %v8603
        %v8661 = vpack.c.b16 %v8606, %v8605
        %v8662 = vpack.c.b16 %v8608, %v8607
        %v8663 = vpack.c.b16 %v8610, %v8609
        %v8664 = vpack.c.b16 %v8612, %v8611
        %v8665 = vpack.c.b16 %v8614, %v8613
        %v8666 = vpack.c.b16 %v8616, %v8615
        %v8667 = vpack.c.b16 %v8618, %v8617
        %v8668 = vpack.c.b16 %v8620, %v8619
        %v8669 = vpack.c.b16 %v8622, %v8621
        %v8670 = vpack.c.b16 %v8624, %v8623
        %v8671 = vpack.c.b16 %v8626, %v8625
        %v8672 = vpack.c.b16 %v8628, %v8627
        %v8673 = vpack.c.b16 %v8630, %v8629
        %v8674 = vpack.c.b16 %v8632, %v8631
        %v8675 = vpack.c.b16 %v8634, %v8633
        %v8676 = vpack.c.b16 %v8636, %v8635
        %8717 = vmatprep.subr.bf16.mxu0 0
        %8718 = vmatpush1.bf16.msra.mxu0 %v8644
        %8719 = vmatprep.subr.bf16.mxu0 0
        %8720 = vmatpush1.bf16.msra.mxu0 %v8643
        %8721 = vmatprep.subr.bf16.mxu0 0
        %8722 = vmatpush1.bf16.msra.mxu0 %v8642
        %8723 = vmatprep.subr.bf16.mxu0 0
        %8724 = vmatpush1.bf16.msra.mxu0 %v8641
        %8725 = vmatprep.subr.bf16.mxu0 0
        %8726 = vmatpush1.bf16.msra.mxu0 %v8640
        %8727 = vmatprep.subr.bf16.mxu0 0
        %8728 = vmatpush1.bf16.msra.mxu0 %v8639
        %8729 = vmatprep.subr.bf16.mxu0 0
        %8730 = vmatpush1.bf16.msra.mxu0 %v8638
        %8731 = vmatprep.subr.bf16.mxu0 0
        %8732 = vmatpush1.bf16.msra.mxu0 %v8637
        %8733 = vmatprep.subr.bf16.mxu0 0
        %8734 = vmatpush2.bf16.msra.mxu0 %v8652
        %8735 = vmatprep.subr.bf16.mxu0 0
        %8736 = vmatpush2.bf16.msra.mxu0 %v8651
        %8737 = vmatprep.subr.bf16.mxu0 0
        %8738 = vmatpush2.bf16.msra.mxu0 %v8650
        %8739 = vmatprep.subr.bf16.mxu0 0
        %8740 = vmatpush2.bf16.msra.mxu0 %v8649
        %8741 = vmatprep.subr.bf16.mxu0 0
        %8742 = vmatpush2.bf16.msra.mxu0 %v8648
        %8743 = vmatprep.subr.bf16.mxu0 0
        %8744 = vmatpush2.bf16.msra.mxu0 %v8647
        %8745 = vmatprep.subr.bf16.mxu0 0
        %8746 = vmatpush2.bf16.msra.mxu0 %v8646
        %8747 = vmatprep.subr.bf16.mxu0 0
        %8748 = vmatpush2.bf16.msra.mxu0 %v8645
        %8749 = vmatprep.mubr.bf16.mxu0 %v8318
        %8750 = vmatmul.mubr.bf16.gmra.mxu0 %v8317
        %v8751 = vpop.f32.mrf.mxu0
        %v8752 = vadd.f32 %v8059, %v8751
        %v8753 = vpop.f32.mrf.mxu0
        %v8754 = vpop.f32.mrf.mxu0
        %v8755 = vadd.f32 %v8059, %v8754
        %v8756 = vpop.f32.mrf.mxu0
        %8757 = vmatprep.mubr.bf16.mxu0 %v8323
        %8758 = vmatmul.mubr.bf16.gmra.mxu0 %v8322
        %v8759 = vpop.f32.mrf.mxu0
        %v8760 = vadd.f32 %v8059, %v8759
        %v8761 = vpop.f32.mrf.mxu0
        %v8762 = vpop.f32.mrf.mxu0
        %v8763 = vadd.f32 %v8059, %v8762
        %v8764 = vpop.f32.mrf.mxu0
        %8765 = vmatprep.mubr.bf16.mxu0 %v8328
        %8766 = vmatmul.mubr.bf16.gmra.mxu0 %v8327
        %v8767 = vpop.f32.mrf.mxu0
        %v8768 = vadd.f32 %v8059, %v8767
        %v8769 = vpop.f32.mrf.mxu0
        %v8770 = vpop.f32.mrf.mxu0
        %v8771 = vadd.f32 %v8059, %v8770
        %v8772 = vpop.f32.mrf.mxu0
        %8773 = vmatprep.mubr.bf16.mxu0 %v8333
        %8774 = vmatmul.mubr.bf16.gmra.mxu0 %v8332
        %v8775 = vpop.f32.mrf.mxu0
        %v8776 = vadd.f32 %v8059, %v8775
        %v8777 = vpop.f32.mrf.mxu0
        %v8778 = vpop.f32.mrf.mxu0
        %v8779 = vadd.f32 %v8059, %v8778
        %v8780 = vpop.f32.mrf.mxu0
        %8781 = vmatprep.mubr.bf16.mxu0 %v8338
        %8782 = vmatmul.mubr.bf16.gmra.mxu0 %v8337
        %v8783 = vpop.f32.mrf.mxu0
        %v8784 = vadd.f32 %v8059, %v8783
        %v8785 = vpop.f32.mrf.mxu0
        %v8786 = vpop.f32.mrf.mxu0
        %v8787 = vadd.f32 %v8059, %v8786
        %v8788 = vpop.f32.mrf.mxu0
        %8789 = vmatprep.mubr.bf16.mxu0 %v8343
        %8790 = vmatmul.mubr.bf16.gmra.mxu0 %v8342
        %v8791 = vpop.f32.mrf.mxu0
        %v8792 = vadd.f32 %v8059, %v8791
        %v8793 = vpop.f32.mrf.mxu0
        %v8794 = vpop.f32.mrf.mxu0
        %v8795 = vadd.f32 %v8059, %v8794
        %v8796 = vpop.f32.mrf.mxu0
        %8797 = vmatprep.mubr.bf16.mxu0 %v8348
        %8798 = vmatmul.mubr.bf16.gmra.mxu0 %v8347
        %v8799 = vpop.f32.mrf.mxu0
        %v8800 = vadd.f32 %v8059, %v8799
        %v8801 = vpop.f32.mrf.mxu0
        %v8802 = vpop.f32.mrf.mxu0
        %v8803 = vadd.f32 %v8059, %v8802
        %v8804 = vpop.f32.mrf.mxu0
        %8805 = vmatprep.mubr.bf16.mxu0 %v8353
        %8806 = vmatmul.mubr.bf16.gmra.mxu0 %v8352
        %v8807 = vpop.f32.mrf.mxu0
        %v8808 = vadd.f32 %v8059, %v8807
        %v8809 = vpop.f32.mrf.mxu0
        %v8810 = vpop.f32.mrf.mxu0
        %v8811 = vadd.f32 %v8059, %v8810
        %v8812 = vpop.f32.mrf.mxu0
        %8813 = vmatprep.mubr.bf16.mxu0 %v8358
        %8814 = vmatmul.mubr.bf16.gmra.mxu0 %v8357
        %v8815 = vpop.f32.mrf.mxu0
        %v8816 = vadd.f32 %v8059, %v8815
        %v8817 = vpop.f32.mrf.mxu0
        %v8818 = vpop.f32.mrf.mxu0
        %v8819 = vadd.f32 %v8059, %v8818
        %v8820 = vpop.f32.mrf.mxu0
        %8821 = vmatprep.mubr.bf16.mxu0 %v8363
        %8822 = vmatmul.mubr.bf16.gmra.mxu0 %v8362
        %v8823 = vpop.f32.mrf.mxu0
        %v8824 = vadd.f32 %v8059, %v8823
        %v8825 = vpop.f32.mrf.mxu0
        %v8826 = vpop.f32.mrf.mxu0
        %v8827 = vadd.f32 %v8059, %v8826
        %v8828 = vpop.f32.mrf.mxu0
        %8829 = vmatprep.mubr.bf16.mxu0 %v8368
        %8830 = vmatmul.mubr.bf16.gmra.mxu0 %v8367
        %v8831 = vpop.f32.mrf.mxu0
        %v8832 = vadd.f32 %v8059, %v8831
        %v8833 = vpop.f32.mrf.mxu0
        %v8834 = vpop.f32.mrf.mxu0
        %v8835 = vadd.f32 %v8059, %v8834
        %v8836 = vpop.f32.mrf.mxu0
        %8837 = vmatprep.mubr.bf16.mxu0 %v8373
        %8838 = vmatmul.mubr.bf16.gmra.mxu0 %v8372
        %v8839 = vpop.f32.mrf.mxu0
        %v8840 = vadd.f32 %v8059, %v8839
        %v8841 = vpop.f32.mrf.mxu0
        %v8842 = vpop.f32.mrf.mxu0
        %v8843 = vadd.f32 %v8059, %v8842
        %v8844 = vpop.f32.mrf.mxu0
        %8845 = vmatprep.mubr.bf16.mxu0 %v8378
        %8846 = vmatmul.mubr.bf16.gmra.mxu0 %v8377
        %v8847 = vpop.f32.mrf.mxu0
        %v8848 = vadd.f32 %v8059, %v8847
        %v8849 = vpop.f32.mrf.mxu0
        %v8850 = vpop.f32.mrf.mxu0
        %v8851 = vadd.f32 %v8059, %v8850
        %v8852 = vpop.f32.mrf.mxu0
        %8853 = vmatprep.mubr.bf16.mxu0 %v8383
        %8854 = vmatmul.mubr.bf16.gmra.mxu0 %v8382
        %v8855 = vpop.f32.mrf.mxu0
        %v8856 = vadd.f32 %v8059, %v8855
        %v8857 = vpop.f32.mrf.mxu0
        %v8858 = vpop.f32.mrf.mxu0
        %v8859 = vadd.f32 %v8059, %v8858
        %v8860 = vpop.f32.mrf.mxu0
        %8861 = vmatprep.mubr.bf16.mxu0 %v8388
        %8862 = vmatmul.mubr.bf16.gmra.mxu0 %v8387
        %v8863 = vpop.f32.mrf.mxu0
        %v8864 = vadd.f32 %v8059, %v8863
        %v8865 = vpop.f32.mrf.mxu0
        %v8866 = vpop.f32.mrf.mxu0
        %v8867 = vadd.f32 %v8059, %v8866
        %v8868 = vpop.f32.mrf.mxu0
        %8869 = vmatprep.mubr.bf16.mxu0 %v8393
        %8870 = vmatmul.mubr.bf16.gmra.mxu0 %v8392
        %v8871 = vpop.f32.mrf.mxu0
        %v8872 = vadd.f32 %v8059, %v8871
        %v8873 = vpop.f32.mrf.mxu0
        %v8874 = vpop.f32.mrf.mxu0
        %v8875 = vadd.f32 %v8059, %v8874
        %v8876 = vpop.f32.mrf.mxu0
        %8877 = vdwg.mxu0
        %8878 = vmatprep.subr.bf16.mxu0 0
        %8879 = vmatpush1.bf16.msra.mxu0 %v8660
        %8880 = vmatprep.subr.bf16.mxu0 0
        %8881 = vmatpush1.bf16.msra.mxu0 %v8659
        %8882 = vmatprep.subr.bf16.mxu0 0
        %8883 = vmatpush1.bf16.msra.mxu0 %v8658
        %8884 = vmatprep.subr.bf16.mxu0 0
        %8885 = vmatpush1.bf16.msra.mxu0 %v8657
        %8886 = vmatprep.subr.bf16.mxu0 0
        %8887 = vmatpush1.bf16.msra.mxu0 %v8656
        %8888 = vmatprep.subr.bf16.mxu0 0
        %8889 = vmatpush1.bf16.msra.mxu0 %v8655
        %8890 = vmatprep.subr.bf16.mxu0 0
        %8891 = vmatpush1.bf16.msra.mxu0 %v8654
        %8892 = vmatprep.subr.bf16.mxu0 0
        %8893 = vmatpush1.bf16.msra.mxu0 %v8653
        %8894 = vmatprep.subr.bf16.mxu0 0
        %8895 = vmatpush2.bf16.msra.mxu0 %v8668
        %8896 = vmatprep.subr.bf16.mxu0 0
        %8897 = vmatpush2.bf16.msra.mxu0 %v8667
        %8898 = vmatprep.subr.bf16.mxu0 0
        %8899 = vmatpush2.bf16.msra.mxu0 %v8666
        %8900 = vmatprep.subr.bf16.mxu0 0
        %8901 = vmatpush2.bf16.msra.mxu0 %v8665
        %8902 = vmatprep.subr.bf16.mxu0 0
        %8903 = vmatpush2.bf16.msra.mxu0 %v8664
        %8904 = vmatprep.subr.bf16.mxu0 0
        %8905 = vmatpush2.bf16.msra.mxu0 %v8663
        %8906 = vmatprep.subr.bf16.mxu0 0
        %8907 = vmatpush2.bf16.msra.mxu0 %v8662
        %8908 = vmatprep.subr.bf16.mxu0 0
        %8909 = vmatpush2.bf16.msra.mxu0 %v8661
        %8910 = vmatprep.mubr.bf16.mxu0 %v8320
        %8911 = vmatmul.mubr.bf16.gmra.mxu0 %v8319
        %v8912 = vpop.f32.mrf.mxu0
        %v8913 = vadd.f32 %v8752, %v8912
        %v8914 = vpop.f32.mrf.mxu0
        %v8915 = vpop.f32.mrf.mxu0
        %v8916 = vadd.f32 %v8755, %v8915
        %v8917 = vpop.f32.mrf.mxu0
        %8918 = vmatprep.mubr.bf16.mxu0 %v8325
        %8919 = vmatmul.mubr.bf16.gmra.mxu0 %v8324
        %v8920 = vpop.f32.mrf.mxu0
        %v8921 = vadd.f32 %v8760, %v8920
        %v8922 = vpop.f32.mrf.mxu0
        %v8923 = vpop.f32.mrf.mxu0
        %v8924 = vadd.f32 %v8763, %v8923
        %v8925 = vpop.f32.mrf.mxu0
        %8926 = vmatprep.mubr.bf16.mxu0 %v8330
        %8927 = vmatmul.mubr.bf16.gmra.mxu0 %v8329
        %v8928 = vpop.f32.mrf.mxu0
        %v8929 = vadd.f32 %v8768, %v8928
        %v8930 = vpop.f32.mrf.mxu0
        %v8931 = vpop.f32.mrf.mxu0
        %v8932 = vadd.f32 %v8771, %v8931
        %v8933 = vpop.f32.mrf.mxu0
        %8934 = vmatprep.mubr.bf16.mxu0 %v8335
        %8935 = vmatmul.mubr.bf16.gmra.mxu0 %v8334
        %v8936 = vpop.f32.mrf.mxu0
        %v8937 = vadd.f32 %v8776, %v8936
        %v8938 = vpop.f32.mrf.mxu0
        %v8939 = vpop.f32.mrf.mxu0
        %v8940 = vadd.f32 %v8779, %v8939
        %v8941 = vpop.f32.mrf.mxu0
        %8942 = vmatprep.mubr.bf16.mxu0 %v8340
        %8943 = vmatmul.mubr.bf16.gmra.mxu0 %v8339
        %v8944 = vpop.f32.mrf.mxu0
        %v8945 = vadd.f32 %v8784, %v8944
        %v8946 = vpop.f32.mrf.mxu0
        %v8947 = vpop.f32.mrf.mxu0
        %v8948 = vadd.f32 %v8787, %v8947
        %v8949 = vpop.f32.mrf.mxu0
        %8950 = vmatprep.mubr.bf16.mxu0 %v8345
        %8951 = vmatmul.mubr.bf16.gmra.mxu0 %v8344
        %v8952 = vpop.f32.mrf.mxu0
        %v8953 = vadd.f32 %v8792, %v8952
        %v8954 = vpop.f32.mrf.mxu0
        %v8955 = vpop.f32.mrf.mxu0
        %v8956 = vadd.f32 %v8795, %v8955
        %v8957 = vpop.f32.mrf.mxu0
        %8958 = vmatprep.mubr.bf16.mxu0 %v8350
        %8959 = vmatmul.mubr.bf16.gmra.mxu0 %v8349
        %v8960 = vpop.f32.mrf.mxu0
        %v8961 = vadd.f32 %v8800, %v8960
        %v8962 = vpop.f32.mrf.mxu0
        %v8963 = vpop.f32.mrf.mxu0
        %v8964 = vadd.f32 %v8803, %v8963
        %v8965 = vpop.f32.mrf.mxu0
        %8966 = vmatprep.mubr.bf16.mxu0 %v8355
        %8967 = vmatmul.mubr.bf16.gmra.mxu0 %v8354
        %v8968 = vpop.f32.mrf.mxu0
        %v8969 = vadd.f32 %v8808, %v8968
        %v8970 = vpop.f32.mrf.mxu0
        %v8971 = vpop.f32.mrf.mxu0
        %v8972 = vadd.f32 %v8811, %v8971
        %v8973 = vpop.f32.mrf.mxu0
        %8974 = vmatprep.mubr.bf16.mxu0 %v8360
        %8975 = vmatmul.mubr.bf16.gmra.mxu0 %v8359
        %v8976 = vpop.f32.mrf.mxu0
        %v8977 = vadd.f32 %v8816, %v8976
        %v8978 = vpop.f32.mrf.mxu0
        %v8979 = vpop.f32.mrf.mxu0
        %v8980 = vadd.f32 %v8819, %v8979
        %v8981 = vpop.f32.mrf.mxu0
        %8982 = vmatprep.mubr.bf16.mxu0 %v8365
        %8983 = vmatmul.mubr.bf16.gmra.mxu0 %v8364
        %v8984 = vpop.f32.mrf.mxu0
        %v8985 = vadd.f32 %v8824, %v8984
        %v8986 = vpop.f32.mrf.mxu0
        %v8987 = vpop.f32.mrf.mxu0
        %v8988 = vadd.f32 %v8827, %v8987
        %v8989 = vpop.f32.mrf.mxu0
        %8990 = vmatprep.mubr.bf16.mxu0 %v8370
        %8991 = vmatmul.mubr.bf16.gmra.mxu0 %v8369
        %v8992 = vpop.f32.mrf.mxu0
        %v8993 = vadd.f32 %v8832, %v8992
        %v8994 = vpop.f32.mrf.mxu0
        %v8995 = vpop.f32.mrf.mxu0
        %v8996 = vadd.f32 %v8835, %v8995
        %v8997 = vpop.f32.mrf.mxu0
        %8998 = vmatprep.mubr.bf16.mxu0 %v8375
        %8999 = vmatmul.mubr.bf16.gmra.mxu0 %v8374
        %v9000 = vpop.f32.mrf.mxu0
        %v9001 = vadd.f32 %v8840, %v9000
        %v9002 = vpop.f32.mrf.mxu0
        %v9003 = vpop.f32.mrf.mxu0
        %v9004 = vadd.f32 %v8843, %v9003
        %v9005 = vpop.f32.mrf.mxu0
        %9006 = vmatprep.mubr.bf16.mxu0 %v8380
        %9007 = vmatmul.mubr.bf16.gmra.mxu0 %v8379
        %v9008 = vpop.f32.mrf.mxu0
        %v9009 = vadd.f32 %v8848, %v9008
        %v9010 = vpop.f32.mrf.mxu0
        %v9011 = vpop.f32.mrf.mxu0
        %v9012 = vadd.f32 %v8851, %v9011
        %v9013 = vpop.f32.mrf.mxu0
        %9014 = vmatprep.mubr.bf16.mxu0 %v8385
        %9015 = vmatmul.mubr.bf16.gmra.mxu0 %v8384
        %v9016 = vpop.f32.mrf.mxu0
        %v9017 = vadd.f32 %v8856, %v9016
        %v9018 = vpop.f32.mrf.mxu0
        %v9019 = vpop.f32.mrf.mxu0
        %v9020 = vadd.f32 %v8859, %v9019
        %v9021 = vpop.f32.mrf.mxu0
        %9022 = vmatprep.mubr.bf16.mxu0 %v8390
        %9023 = vmatmul.mubr.bf16.gmra.mxu0 %v8389
        %v9024 = vpop.f32.mrf.mxu0
        %v9025 = vadd.f32 %v8864, %v9024
        %v9026 = vpop.f32.mrf.mxu0
        %v9027 = vpop.f32.mrf.mxu0
        %v9028 = vadd.f32 %v8867, %v9027
        %v9029 = vpop.f32.mrf.mxu0
        %9030 = vmatprep.mubr.bf16.mxu0 %v8395
        %9031 = vmatmul.mubr.bf16.gmra.mxu0 %v8394
        %v9032 = vpop.f32.mrf.mxu0
        %v9033 = vadd.f32 %v8872, %v9032
        %v9034 = vpop.f32.mrf.mxu0
        %v9035 = vpop.f32.mrf.mxu0
        %v9036 = vadd.f32 %v8875, %v9035
        %v9037 = vpop.f32.mrf.mxu0
        %9038 = vdwg.mxu0
        %9039 = vmatprep.subr.bf16.mxu0 0
        %9040 = vmatpush1.bf16.msra.mxu0 %v8676
        %9041 = vmatprep.subr.bf16.mxu0 0
        %9042 = vmatpush1.bf16.msra.mxu0 %v8675
        %9043 = vmatprep.subr.bf16.mxu0 0
        %9044 = vmatpush1.bf16.msra.mxu0 %v8674
        %9045 = vmatprep.subr.bf16.mxu0 0
        %9046 = vmatpush1.bf16.msra.mxu0 %v8673
        %9047 = vmatprep.subr.bf16.mxu0 0
        %9048 = vmatpush1.bf16.msra.mxu0 %v8672
        %9049 = vmatprep.subr.bf16.mxu0 0
        %9050 = vmatpush1.bf16.msra.mxu0 %v8671
        %9051 = vmatprep.subr.bf16.mxu0 0
        %9052 = vmatpush1.bf16.msra.mxu0 %v8670
        %9053 = vmatprep.subr.bf16.mxu0 0
        %9054 = vmatpush1.bf16.msra.mxu0 %v8669
        %9055 = vmatprep.subr.bf16.mxu0 0
        %9056 = vmatpush2.bf16.msra.mxu0 0
        %9057 = vmatprep.subr.bf16.mxu0 0
        %9058 = vmatpush2.bf16.msra.mxu0 0
        %9059 = vmatprep.subr.bf16.mxu0 0
        %9060 = vmatpush2.bf16.msra.mxu0 0
        %9061 = vmatprep.subr.bf16.mxu0 0
        %9062 = vmatpush2.bf16.msra.mxu0 0
        %9063 = vmatprep.subr.bf16.mxu0 0
        %9064 = vmatpush2.bf16.msra.mxu0 0
        %9065 = vmatprep.subr.bf16.mxu0 0
        %9066 = vmatpush2.bf16.msra.mxu0 0
        %9067 = vmatprep.subr.bf16.mxu0 0
        %9068 = vmatpush2.bf16.msra.mxu0 0
        %9069 = vmatprep.subr.bf16.mxu0 0
        %9070 = vmatpush2.bf16.msra.mxu0 0
        %9071 = vmatprep.mubr.bf16.mxu0 0
        %9072 = vmatmul.mubr.bf16.gmra.mxu0 %v8321
        %v9073 = vpop.f32.mrf.mxu0
        %v9074 = vadd.f32 %v8913, %v9073
        %v9075 = vpop.f32.mrf.mxu0
        %v9076 = vpop.f32.mrf.mxu0
        %v9077 = vadd.f32 %v8916, %v9076
        %v9078 = vpop.f32.mrf.mxu0
        %9079 = vmatprep.mubr.bf16.mxu0 0
        %9080 = vmatmul.mubr.bf16.gmra.mxu0 %v8326
        %v9081 = vpop.f32.mrf.mxu0
        %v9082 = vadd.f32 %v8921, %v9081
        %v9083 = vpop.f32.mrf.mxu0
        %v9084 = vpop.f32.mrf.mxu0
        %v9085 = vadd.f32 %v8924, %v9084
        %v9086 = vpop.f32.mrf.mxu0
        %9087 = vmatprep.mubr.bf16.mxu0 0
        %9088 = vmatmul.mubr.bf16.gmra.mxu0 %v8331
        %v9089 = vpop.f32.mrf.mxu0
        %v9090 = vadd.f32 %v8929, %v9089
        %v9091 = vpop.f32.mrf.mxu0
        %v9092 = vpop.f32.mrf.mxu0
        %v9093 = vadd.f32 %v8932, %v9092
        %v9094 = vpop.f32.mrf.mxu0
        %9095 = vmatprep.mubr.bf16.mxu0 0
        %9096 = vmatmul.mubr.bf16.gmra.mxu0 %v8336
        %v9097 = vpop.f32.mrf.mxu0
        %v9098 = vadd.f32 %v8937, %v9097
        %v9099 = vpop.f32.mrf.mxu0
        %v9100 = vpop.f32.mrf.mxu0
        %v9101 = vadd.f32 %v8940, %v9100
        %v9102 = vpop.f32.mrf.mxu0
        %9103 = vmatprep.mubr.bf16.mxu0 0
        %9104 = vmatmul.mubr.bf16.gmra.mxu0 %v8341
        %v9105 = vpop.f32.mrf.mxu0
        %v9106 = vadd.f32 %v8945, %v9105
        %v9107 = vpop.f32.mrf.mxu0
        %v9108 = vpop.f32.mrf.mxu0
        %v9109 = vadd.f32 %v8948, %v9108
        %v9110 = vpop.f32.mrf.mxu0
        %9111 = vmatprep.mubr.bf16.mxu0 0
        %9112 = vmatmul.mubr.bf16.gmra.mxu0 %v8346
        %v9113 = vpop.f32.mrf.mxu0
        %v9114 = vadd.f32 %v8953, %v9113
        %v9115 = vpop.f32.mrf.mxu0
        %v9116 = vpop.f32.mrf.mxu0
        %v9117 = vadd.f32 %v8956, %v9116
        %v9118 = vpop.f32.mrf.mxu0
        %9119 = vmatprep.mubr.bf16.mxu0 0
        %9120 = vmatmul.mubr.bf16.gmra.mxu0 %v8351
        %v9121 = vpop.f32.mrf.mxu0
        %v9122 = vadd.f32 %v8961, %v9121
        %v9123 = vpop.f32.mrf.mxu0
        %v9124 = vpop.f32.mrf.mxu0
        %v9125 = vadd.f32 %v8964, %v9124
        %v9126 = vpop.f32.mrf.mxu0
        %9127 = vmatprep.mubr.bf16.mxu0 0
        %9128 = vmatmul.mubr.bf16.gmra.mxu0 %v8356
        %v9129 = vpop.f32.mrf.mxu0
        %v9130 = vadd.f32 %v8969, %v9129
        %v9131 = vpop.f32.mrf.mxu0
        %v9132 = vpop.f32.mrf.mxu0
        %v9133 = vadd.f32 %v8972, %v9132
        %v9134 = vpop.f32.mrf.mxu0
        %9135 = vmatprep.mubr.bf16.mxu0 0
        %9136 = vmatmul.mubr.bf16.gmra.mxu0 %v8361
        %v9137 = vpop.f32.mrf.mxu0
        %v9138 = vadd.f32 %v8977, %v9137
        %v9139 = vpop.f32.mrf.mxu0
        %v9140 = vpop.f32.mrf.mxu0
        %v9141 = vadd.f32 %v8980, %v9140
        %v9142 = vpop.f32.mrf.mxu0
        %9143 = vmatprep.mubr.bf16.mxu0 0
        %9144 = vmatmul.mubr.bf16.gmra.mxu0 %v8366
        %v9145 = vpop.f32.mrf.mxu0
        %v9146 = vadd.f32 %v8985, %v9145
        %v9147 = vpop.f32.mrf.mxu0
        %v9148 = vpop.f32.mrf.mxu0
        %v9149 = vadd.f32 %v8988, %v9148
        %v9150 = vpop.f32.mrf.mxu0
        %9151 = vmatprep.mubr.bf16.mxu0 0
        %9152 = vmatmul.mubr.bf16.gmra.mxu0 %v8371
        %v9153 = vpop.f32.mrf.mxu0
        %v9154 = vadd.f32 %v8993, %v9153
        %v9155 = vpop.f32.mrf.mxu0
        %v9156 = vpop.f32.mrf.mxu0
        %v9157 = vadd.f32 %v8996, %v9156
        %v9158 = vpop.f32.mrf.mxu0
        %9159 = vmatprep.mubr.bf16.mxu0 0
        %9160 = vmatmul.mubr.bf16.gmra.mxu0 %v8376
        %v9161 = vpop.f32.mrf.mxu0
        %v9162 = vadd.f32 %v9001, %v9161
        %v9163 = vpop.f32.mrf.mxu0
        %v9164 = vpop.f32.mrf.mxu0
        %v9165 = vadd.f32 %v9004, %v9164
        %v9166 = vpop.f32.mrf.mxu0
        %9167 = vmatprep.mubr.bf16.mxu0 0
        %9168 = vmatmul.mubr.bf16.gmra.mxu0 %v8381
        %v9169 = vpop.f32.mrf.mxu0
        %v9170 = vadd.f32 %v9009, %v9169
        %v9171 = vpop.f32.mrf.mxu0
        %v9172 = vpop.f32.mrf.mxu0
        %v9173 = vadd.f32 %v9012, %v9172
        %v9174 = vpop.f32.mrf.mxu0
        %9175 = vmatprep.mubr.bf16.mxu0 0
        %9176 = vmatmul.mubr.bf16.gmra.mxu0 %v8386
        %v9177 = vpop.f32.mrf.mxu0
        %v9178 = vadd.f32 %v9017, %v9177
        %v9179 = vpop.f32.mrf.mxu0
        %v9180 = vpop.f32.mrf.mxu0
        %v9181 = vadd.f32 %v9020, %v9180
        %v9182 = vpop.f32.mrf.mxu0
        %9183 = vmatprep.mubr.bf16.mxu0 0
        %9184 = vmatmul.mubr.bf16.gmra.mxu0 %v8391
        %v9185 = vpop.f32.mrf.mxu0
        %v9186 = vadd.f32 %v9025, %v9185
        %v9187 = vpop.f32.mrf.mxu0
        %v9188 = vpop.f32.mrf.mxu0
        %v9189 = vadd.f32 %v9028, %v9188
        %v9190 = vpop.f32.mrf.mxu0
        %9191 = vmatprep.mubr.bf16.mxu0 0
        %9192 = vmatmul.mubr.bf16.gmra.mxu0 %v8396
        %v9193 = vpop.f32.mrf.mxu0
        %v9194 = vadd.f32 %v9033, %v9193
        %v9195 = vpop.f32.mrf.mxu0
        %v9196 = vpop.f32.mrf.mxu0
        %v9197 = vadd.f32 %v9036, %v9196
        %v9198 = vpop.f32.mrf.mxu0
        %9199 = vdwg.mxu0
        %9200 = vst [vmem:[%s271] sm:$0xff] %v9074
        %9201 = vst [vmem:[%s271 + $0x8] sm:$0xff] %v9077
        %9202 = vst [vmem:[%s271 + $0x10] sm:$0xff] %v9082
        %9203 = vst [vmem:[%s271 + $0x18] sm:$0xff] %v9085
        %9204 = vst [vmem:[%s271 + $0x20] sm:$0xff] %v9090
        %9205 = vst [vmem:[%s271 + $0x28] sm:$0xff] %v9093
        %9206 = vst [vmem:[%s271 + $0x30] sm:$0xff] %v9098
        %9207 = vst [vmem:[%s271 + $0x38] sm:$0xff] %v9101
        %9208 = vst [vmem:[%s271 + $0x40] sm:$0xff] %v9106
        %9209 = vst [vmem:[%s271 + $0x48] sm:$0xff] %v9109
        %9210 = vst [vmem:[%s271 + $0x50] sm:$0xff] %v9114
        %9211 = vst [vmem:[%s271 + $0x58] sm:$0xff] %v9117
        %9212 = vst [vmem:[%s271 + $0x60] sm:$0xff] %v9122
        %9213 = vst [vmem:[%s271 + $0x68] sm:$0xff] %v9125
        %9214 = vst [vmem:[%s271 + $0x70] sm:$0xff] %v9130
        %9215 = vst [vmem:[%s271 + $0x78] sm:$0xff] %v9133
        %9216 = vst [vmem:[%s271 + $0x80] sm:$0xff] %v9138
        %9217 = vst [vmem:[%s271 + $0x88] sm:$0xff] %v9141
        %9218 = vst [vmem:[%s271 + $0x90] sm:$0xff] %v9146
        %9219 = vst [vmem:[%s271 + $0x98] sm:$0xff] %v9149
        %9220 = vst [vmem:[%s271 + $0xa0] sm:$0xff] %v9154
        %9221 = vst [vmem:[%s271 + $0xa8] sm:$0xff] %v9157
        %9222 = vst [vmem:[%s271 + $0xb0] sm:$0xff] %v9162
        %9223 = vst [vmem:[%s271 + $0xb8] sm:$0xff] %v9165
        %9224 = vst [vmem:[%s271 + $0xc0] sm:$0xff] %v9170
        %9225 = vst [vmem:[%s271 + $0xc8] sm:$0xff] %v9173
        %9226 = vst [vmem:[%s271 + $0xd0] sm:$0xff] %v9178
        %9227 = vst [vmem:[%s271 + $0xd8] sm:$0xff] %v9181
        %9228 = vst [vmem:[%s271 + $0xe0] sm:$0xff] %v9186
        %9229 = vst [vmem:[%s271 + $0xe8] sm:$0xff] %v9189
        %9230 = vst [vmem:[%s271 + $0xf0] sm:$0xff] %v9194
        %9231 = vst [vmem:[%s271 + $0xf8] sm:$0xff] %v9197
        %s9232 = sand.u32 %s181, 1
        %s9233 = scalar_lea.sflag [#allocation5], %s9232
        %s9234 = sand.u32 %s181, 1
        %s9235 = smul.addr %s9234, 256
        %s9236 = scalar_lea.vmem [#allocation4], %s9235
        // Predicated region
        $region49: #{tpu_custom_call.1} parent=47 // pred_check
          %p9237 = pneg %p191
        $region50: #{tpu_custom_call.1} parent=47 // pred_check_branch
          %9239 = sbr.rel (%p9237) target = $region52
        $region51: #{tpu_custom_call.1} parent=47 // pred_region
          %s9241 = ssub.s32 4096, 4096
          %9242 = vsyncadd %s9233, %s9241
          %s9243 = smul.addr %s21, 32
          %s9244 = smul.addr %s9243, 128
          %s9245 = scalar_lea.hbm %s7, %s9244
          %s9246 = sshll.u32 %s9236, 4
          %s9247 = int_to_ptr.vmem [resolvable:$true] %s9246
          %9252 = dma.vmem_to_hbm [thread:$0]  %s9247, 4096, %s9245, %s9233, 128, 128, 8
        $region52: #{tpu_custom_call.1} parent=47 // pred_fallthru
          _
      $region48: #{tpu_custom_call.1} parent=5 // pred_fallthru
        _
      %p9253 = scmp.le.s32.totalorder 2, %s16
      // Predicated region
      $region53: #{tpu_custom_call.1} parent=5 // pred_check
        %p9254 = pneg %p9253
      $region54: #{tpu_custom_call.1} parent=5 // pred_check_branch
        %9256 = sbr.rel (%p9254) target = $region56
      $region55: #{tpu_custom_call.1} parent=5 // pred_region
        %s9257 = ssub.s32 %s16, 2
        // Predicated region
        $region57: #{tpu_custom_call.1} parent=55 // pred_check
          %p9258 = pneg %p197
        $region58: #{tpu_custom_call.1} parent=55 // pred_check_branch
          %9260 = sbr.rel (%p9258) target = $region60
        $region59: #{tpu_custom_call.1} parent=55 // pred_region
          %s9261 = sand.u32 %s182, 1
          %s9262 = scalar_lea.sflag [#allocation5], %s9261
          %s9263 = sand.u32 %s182, 1
          %s9264 = smul.addr %s9263, 256
          %s9265 = scalar_lea.vmem [#allocation4], %s9264
          %9266 = dma.done %s9262, 4096
        $region60: #{tpu_custom_call.1} parent=55 // pred_fallthru
          _
      $region56: #{tpu_custom_call.1} parent=5 // pred_fallthru
        _
    $region6: #{tpu_custom_call.1} parent=1 // loop_footer
      %s20 = sadd.s32 1, %s16
    $region7: #{tpu_custom_call.1} parent=1 // loop_footer_branch
      %15 = sbr.rel target = $region3
    $region8: #{tpu_custom_call.1} parent=1 // loop_exit
      _
    %9267 = vsyncpa [#allocation5], 1
    %s9268 = scalar_lea.sflag [#allocation5], 1
    %9269 = vsyncpa %s9268, 1

</llo_original>
